<compile_context>
chip_gen: v7x
topology: tpu7x:2x2x1
jax: 0.10.0
libtpu: 0.0.40
codegen_flags: <defaults>
</compile_context>

<pallas_src>
import functools

import jax
import jax.numpy as jnp
from jax.experimental import pallas as pl
from jax.experimental.pallas import tpu as pltpu


def _round_up(x, m):
    return ((x + m - 1) // m) * m


# ----------------------------------------------------------------------------
# Wrapper-side (tiny) preprocessing for the lane-dense rotation
# ----------------------------------------------------------------------------
def _compact_rep(node_rep, transpose, rbd_pad):
    """Compact per-diagonal rotation weights via one vectorized gather.

    repc[n, t*B*D + b*D + i] = rep_eff[n, b, i, i + (t - (D-1))]   (0 if j OOB)
    rep_eff = node_rep, or node_rep with its last two axes swapped (built by an
    index swap -- no [N,B,D,D] transposed copy is materialized).
    """
    N, B, D, _ = node_rep.shape
    T = 2 * D - 1
    i = jnp.arange(D)
    t = jnp.arange(T)
    j = i[None, :] + (t[:, None] - (D - 1))            # [T, D]
    valid = (j >= 0) & (j < D)
    jc = jnp.clip(j, 0, D - 1)
    ib = jnp.broadcast_to(i[None, :], (T, D))
    rows, cols = (jc, ib) if transpose else (ib, jc)
    vals = node_rep[:, :, rows, cols]                  # [N, B, T, D]
    vals = jnp.where(valid[None, None], vals, 0.0)
    repc = jnp.transpose(vals, (0, 2, 1, 3)).reshape(N, T * B * D)
    repc = repc.astype(jnp.float32)
    pad = rbd_pad - repc.shape[1]
    if pad:
        repc = jnp.pad(repc, ((0, 0), (0, pad)))
    return repc                                        # [N, rbd_pad]


def _expansion_matrix(B, D, C, rbd_pad):
    """Fused 0/1 matrix [rbd_pad, n_delta*dim] broadcasting compact weights over
    the C channel lanes:
      (repc @ expand)[:, t*dim + col] == rep_eff[:, b(col), i(col), i(col)+delta_t]
    """
    dim = B * D * C
    n_delta = 2 * D - 1
    cols = jnp.arange(dim)
    col_bi = (cols // (D * C)) * D + (cols // C) % D   # b*D + i per flat column
    t = jnp.arange(n_delta)
    target = t[:, None] * (B * D) + col_bi[None, :]    # [n_delta, dim]
    r = jnp.arange(rbd_pad)
    expand = (r[:, None, None] == target[None]).astype(jnp.float32)
    return expand.reshape(rbd_pad, n_delta * dim)      # [rbd_pad, n_delta*dim]


# ----------------------------------------------------------------------------
# In-kernel lane-dense bundle rotation (f32):
#   out[:, (b,i,c)] = sum_j rep_eff[:, b, i, j] * x[:, (b,j,c)]   on flat [T, dim]
# One fused expansion matmul per tile; lane shifts via pltpu.roll (wrapped lanes
# always carry zero weight, so the cyclic wrap is harmless).
# ----------------------------------------------------------------------------
def _rotate_lane_dense(x32, repc, expand_ref, bundle_dim, chan):
    dim = x32.shape[-1]
    n_delta = 2 * bundle_dim - 1
    w_all = jnp.dot(repc, expand_ref[...], preferred_element_type=jnp.float32)
    out = jnp.zeros(x32.shape, jnp.float32)
    for t in range(n_delta):
        delta = t - (bundle_dim - 1)
        w = w_all[:, t * dim:(t + 1) * dim]            # lane-aligned static slice
        k = (delta * chan) % dim
        # xs[:, q] = x[:, (q + k) % dim]
        xs = x32 if k == 0 else pltpu.roll(x32, dim - k, axis=1)
        out = out + w * xs
    return out


# ----------------------------------------------------------------------------
# GELU (exact erf formulation, matching PyTorch nn.GELU default) via a rational
# erf approximation (|err| < 1.5e-7); reciprocal + exp land on the EUP slot.
# ----------------------------------------------------------------------------
def _erf_approx(x):
    a1, a2, a3, a4, a5 = 0.254829592, -0.284496736, 1.421413741, -1.453152027, 1.061405429
    p = 0.3275911
    s = jnp.where(x >= 0.0, 1.0, -1.0)
    ax = jnp.abs(x)
    t = pl.reciprocal(1.0 + p * ax, approx=True)
    poly = ((((a5 * t + a4) * t + a3) * t + a2) * t + a1) * t
    return s * (1.0 - poly * jnp.exp(-ax * ax))


def _gelu_exact(x):
    return 0.5 * x * (1.0 + _erf_approx(x * 0.7071067811865476))


# ----------------------------------------------------------------------------
# Pass A: rotate + E^T projection + heat-kernel scaling.
# Grid (num_splits, tiles_per_core): leading axis "parallel" (v7x megacore) with
# per-split partial [Kp, dim] outputs; inner axis "arbitrary" accumulates rows
# directly into the resident output block.
# ----------------------------------------------------------------------------
def _proj_kernel(repc_ref, x_ref, e_ref, expand_ref, scale_ref, proj_ref, *,
                 bundle_dim, chan, tile_n, tiles_per_core, n_rows, needs_mask):
    c = pl.program_id(0)
    i = pl.program_id(1)

    @pl.when(i == 0)
    def _init():
        proj_ref[...] = jnp.zeros_like(proj_ref)

    x32 = x_ref[...].astype(jnp.float32)                             # [T, dim]
    h = _rotate_lane_dense(x32, repc_ref[...], expand_ref, bundle_dim, chan)
    e = e_ref[...]                                                   # [T, Kp] bf16
    if needs_mask:                                                   # ragged row tail only
        row0 = (c * tiles_per_core + i) * tile_n
        rh = row0 + jax.lax.broadcasted_iota(jnp.int32, h.shape, 0)
        re = row0 + jax.lax.broadcasted_iota(jnp.int32, e.shape, 0)
        h = jnp.where(rh < n_rows, h, 0.0)
        e = jnp.where(re < n_rows, e, jnp.zeros_like(e))
    # proj += E_tile^T @ h_tile  (bf16 operands, f32 accumulation in the output).
    proj_ref[...] += jax.lax.dot_general(
        e, h.astype(jnp.bfloat16), (((0,), (0,)), ((), ())),
        preferred_element_type=jnp.float32)

    @pl.when(i == pl.num_programs(1) - 1)
    def _finalize():
        proj_ref[...] = proj_ref[...] * scale_ref[...]


# ----------------------------------------------------------------------------
# Pass B: expansion + FFN + inverse rotation (row-parallel).
# ----------------------------------------------------------------------------
def _ffn_rotate_tail(z, repct, expand_ref, w2_ref, b2_ref, bundle_dim, chan, out_dtype):
    a = _gelu_exact(z)                                               # [T, hidden] f32
    h2 = jnp.dot(a.astype(jnp.bfloat16), w2_ref[...],
                 preferred_element_type=jnp.float32) + b2_ref[...]   # [T, dim] f32
    out = _rotate_lane_dense(h2, repct, expand_ref, bundle_dim, chan)
    return out.astype(out_dtype)


def _out_kernel_fused(e_ref, repct_ref, wc_ref, b1_ref, w2_ref, b2_ref, expand_ref,
                      out_ref, *, bundle_dim, chan):
    # Wc = proj_scaled @ w1 pre-folded in the wrapper:  z = E @ Wc + b1
    z = jnp.dot(e_ref[...], wc_ref[...], preferred_element_type=jnp.float32) + b1_ref[...]
    out_ref[...] = _ffn_rotate_tail(z, repct_ref[...], expand_ref, w2_ref, b2_ref,
                                    bundle_dim, chan, out_ref.dtype)


def _out_kernel_unfused(e_ref, repct_ref, proj_ref, w1_ref, b1_ref, w2_ref, b2_ref,
                        expand_ref, out_ref, *, bundle_dim, chan):
    h1 = jnp.dot(e_ref[...], proj_ref[...], preferred_element_type=jnp.float32)
    z = jnp.dot(h1.astype(jnp.bfloat16), w1_ref[...],
                preferred_element_type=jnp.float32) + b1_ref[...]
    out_ref[...] = _ffn_rotate_tail(z, repct_ref[...], expand_ref, w2_ref, b2_ref,
                                    bundle_dim, chan, out_ref.dtype)


# ----------------------------------------------------------------------------
# SpecBUNNModule.forward wrapper (graph arg unused, as in the PyTorch module)
# ----------------------------------------------------------------------------
@functools.partial(jax.jit, static_argnames=("max_eigs", "tile_n"))
def spec_bunn_forward(params, x, node_rep, eig_vecs, eig_vals, *, max_eigs=500,
                      tile_n=512):
    N, dim = x.shape
    out_dtype = x.dtype
    B = node_rep.shape[1]
    D = node_rep.shape[-1]
    C = dim // (B * D)
    n_delta = 2 * D - 1
    rbd_pad = _round_up(n_delta * B * D, 8)
    hidden = params["w1"].shape[1]

    # Eig-vectors: chop to max_eigs, pad K to a lane multiple, stream as bf16.
    E = eig_vecs[:, :max_eigs]
    K = E.shape[1]
    Kp = _round_up(K, 128)
    ev = eig_vals[:K].astype(jnp.float32)
    if Kp > K:
        E = jnp.pad(E, ((0, 0), (0, Kp - K)))
        ev = jnp.pad(ev, (0, Kp - K))
    E16 = E.astype(jnp.bfloat16)   # no-op if the caller already holds bf16 E
    x16 = x.astype(jnp.bfloat16)

    # Heat-kernel scale [Kp, dim]; b-major columns match reshape(N, B, D, C).
    tau_relu = jnp.maximum(params["tau"], 0.0)
    expo = jnp.exp(-ev[:, None] * tau_relu[None, :])                  # [Kp, B]
    scale = jnp.broadcast_to(expo[:, :, None], (Kp, B, D * C)).reshape(Kp, dim)
    scale = scale.astype(jnp.float32)

    # Compact rotation weights (forward / transposed) + fused 0/1 expansion constant.
    repc = _compact_rep(node_rep, transpose=False, rbd_pad=rbd_pad)   # [N, rbd_pad] f32
    repct = _compact_rep(node_rep, transpose=True, rbd_pad=rbd_pad)
    expand_all = _expansion_matrix(B, D, C, rbd_pad)                  # [rbd_pad, n_delta*dim]

    # Grids.  No row padding: ragged tails are masked inside pass A and dropped
    # by the clipped output writeback in pass B.
    n_tiles = pl.cdiv(N, tile_n)
    num_splits = 2 if n_tiles >= 2 else 1      # both v7x TCs share pass A's reduction
    tiles_per_core = pl.cdiv(n_tiles, num_splits)
    needs_mask = (num_splits * tiles_per_core * tile_n) != N

    row_map = lambda c, i: (c * tiles_per_core + i, 0)
    const2 = lambda c, i: (0, 0)

    # ---------------- Pass A: rotate + E^T projection + heat-kernel scale ------
    # NOTE: the dot_general contracts axis 0 of both tiles; if a bundle dump ever
    # shows an explicit vxpose here, swap the accumulation orientation.
    parts = pl.pallas_call(
        functools.partial(_proj_kernel, bundle_dim=D, chan=C, tile_n=tile_n,
                          tiles_per_core=tiles_per_core, n_rows=N,
                          needs_mask=needs_mask),
        out_shape=jax.ShapeDtypeStruct((num_splits * Kp, dim), jnp.float32),
        grid=(num_splits, tiles_per_core),
        in_specs=[
            pl.BlockSpec((tile_n, rbd_pad), row_map),
            pl.BlockSpec((tile_n, dim), row_map),
            pl.BlockSpec((tile_n, Kp), row_map),
            pl.BlockSpec((rbd_pad, n_delta * dim), const2),
            pl.BlockSpec((Kp, dim), const2),
        ],
        out_specs=pl.BlockSpec((Kp, dim), lambda c, i: (c, 0)),
        compiler_params=pltpu.CompilerParams(
            dimension_semantics=("parallel", "arbitrary")),
    )(repc, x16, E16, expand_all, scale)

    proj = parts.reshape(num_splits, Kp, dim).sum(axis=0)             # [Kp, dim] f32

    # ---------------- Pass B: E-expansion + FFN + inverse rotation --------------
    b1 = params["b1"].astype(jnp.float32)
    b2 = params["b2"].astype(jnp.float32)
    w2_16 = params["w2"].astype(jnp.bfloat16)

    # Fold proj into the first FFN layer only when it reduces MXU work.
    fuse_w1 = (hidden <= dim) or (Kp * (hidden - dim) < dim * hidden)
    if fuse_w1:
        wc = jnp.dot(proj, params["w1"],
                     precision=jax.lax.Precision.HIGHEST).astype(jnp.bfloat16)
        kernel_b = functools.partial(_out_kernel_fused, bundle_dim=D, chan=C)
        operands = (E16, repct, wc, b1, w2_16, b2, expand_all)
        mid_specs = [pl.BlockSpec((Kp, hidden), lambda i: (0, 0))]
    else:
        kernel_b = functools.partial(_out_kernel_unfused, bundle_dim=D, chan=C)
        operands = (E16, repct, proj.astype(jnp.bfloat16),
                    params["w1"].astype(jnp.bfloat16), b1, w2_16, b2, expand_all)
        mid_specs = [pl.BlockSpec((Kp, dim), lambda i: (0, 0)),
                     pl.BlockSpec((dim, hidden), lambda i: (0, 0))]

    out = pl.pallas_call(
        kernel_b,
        out_shape=jax.ShapeDtypeStruct((N, dim), out_dtype),
        grid=(n_tiles,),
        in_specs=[
            pl.BlockSpec((tile_n, Kp), lambda i: (i, 0)),
            pl.BlockSpec((tile_n, rbd_pad), lambda i: (i, 0)),
            *mid_specs,
            pl.BlockSpec((1, hidden), lambda i: (0, 0)),
            pl.BlockSpec((hidden, dim), lambda i: (0, 0)),
            pl.BlockSpec((1, dim), lambda i: (0, 0)),
            pl.BlockSpec((rbd_pad, n_delta * dim), lambda i: (0, 0)),
        ],
        out_specs=pl.BlockSpec((tile_n, dim), lambda i: (i, 0)),
        compiler_params=pltpu.CompilerParams(dimension_semantics=("parallel",)),
    )(*operands)

    return out


# ----------------------------------------------------------------------------
# Pure-JAX reference (mirrors the PyTorch einsum graph) for a correctness check
# ----------------------------------------------------------------------------
def reference_forward(params, x, node_rep, eig_vecs, eig_vals, max_eigs=500):
    N, dim = x.shape
    B, D = node_rep.shape[1], node_rep.shape[-1]
    C = dim // (B * D)
    hp = jax.lax.Precision.HIGHEST
    vf = x.reshape(N, B, D, C)
    vf = jnp.einsum("abcd,abde->abce", node_rep, vf, precision=hp)
    h = vf.reshape(N, dim)
    E = eig_vecs[:, :max_eigs]
    K = E.shape[1]
    proj = jnp.einsum("nk,nd->kd", E, h, precision=hp).reshape(K, B, D, C)
    expo = jnp.exp(-eig_vals[:K, None] * jnp.maximum(params["tau"], 0.0)[None, :])
    evol = proj * expo[:, :, None, None]
    h = jnp.einsum("nk,kbdc->nbdc", E, evol, precision=hp).reshape(N, dim)
    h = jnp.dot(h, params["w1"], precision=hp) + params["b1"][0]
    h = 0.5 * h * (1.0 + jax.scipy.special.erf(h / jnp.sqrt(2.0)))
    h = jnp.dot(h, params["w2"], precision=hp) + params["b2"][0]
    vf = h.reshape(N, B, D, C)
    vf = jnp.einsum("abdc,abde->abce", node_rep, vf, precision=hp)   # node_rep^T
    return vf.reshape(N, dim)


if __name__ == "__main__":
    # Small, lane-aligned shapes consistent with the module.
    N = 1024               # num_nodes
    B = 2                  # num_bundles
    D = 2                  # bundle_dim
    C = 32                 # per-bundle channels
    dim = B * D * C        # 128
    hidden = 2 * dim       # hidden_dim_multiplier = 2 -> 256
    K = 128                # num_eigs (<= max_eigs=500)
    tau0 = 0.1
    tile_n = 512

    key = jax.random.PRNGKey(0)
    ks = jax.random.split(key, 10)

    x = jax.random.normal(ks[0], (N, dim), jnp.float32)
    node_rep = jax.random.normal(ks[1], (N, B, D, D), jnp.float32)
    eig_vecs = jax.random.normal(ks[2], (N, K), jnp.float32) / jnp.sqrt(N)
    eig_vals = jnp.abs(jax.random.normal(ks[3], (K,), jnp.float32))

    # Deterministic parameter init (shapes from __init__; not a checkpoint load)
    b1_bound = 1.0 / jnp.sqrt(dim)
    b2_bound = 1.0 / jnp.sqrt(hidden)
    params = {
        # tau_method='fixed', learn_tau=True: rand([num_bundles]) - 0.5 + tau
        "tau": jax.random.uniform(ks[4], (B,), jnp.float32) - 0.5 + tau0,
        # linear_1: dim -> hidden  (stored as [in, out] for h @ W)
        "w1": jax.random.uniform(ks[5], (dim, hidden), jnp.float32,
                                 minval=-b1_bound, maxval=b1_bound),
        "b1": jax.random.uniform(ks[6], (1, hidden), jnp.float32,
                                 minval=-b1_bound, maxval=b1_bound),
        # linear_2: hidden -> dim
        "w2": jax.random.uniform(ks[7], (hidden, dim), jnp.float32,
                                 minval=-b2_bound, maxval=b2_bound),
        "b2": jax.random.uniform(ks[8], (1, dim), jnp.float32,
                                 minval=-b2_bound, maxval=b2_bound),
    }

    out = spec_bunn_forward(params, x, node_rep, eig_vecs, eig_vals,
                            max_eigs=500, tile_n=tile_n)
    out = jax.block_until_ready(out)

    ref = reference_forward(params, x, node_rep, eig_vecs, eig_vals, max_eigs=500)
    assert out.shape == (N, dim) and out.dtype == jnp.float32
    max_err = float(jnp.max(jnp.abs(out - ref)))
    # bf16-streamed operands (E, x, FFN weights) with f32 accumulation: tolerance
    # slightly looser than the pure-f32 version (observed error is well below it).
    assert jnp.allclose(out, ref, atol=2e-2, rtol=2e-2), \
        f"mismatch vs reference (max abs err {max_err})"

    print("KERNEL_OK")
</pallas_src>

<mosaic_0001>
module attributes {stable_mosaic.version = 11 : i64} {
  func.func @_proj_kernel(%arg0: i32, %arg1: i32, %arg2: memref<512x16xf32, #tpu.memory_space<vmem>>, %arg3: memref<512x128xbf16, #tpu.memory_space<vmem>>, %arg4: memref<512x128xbf16, #tpu.memory_space<vmem>>, %arg5: memref<16x384xf32, #tpu.memory_space<vmem>>, %arg6: memref<128x128xf32, #tpu.memory_space<vmem>>, %arg7: memref<128x128xf32, #tpu.memory_space<vmem>>) attributes {dimension_semantics = [#tpu.dimension_semantics<parallel>, #tpu.dimension_semantics<arbitrary>], iteration_bounds = array<i64: 2, 1>, scalar_prefetch = 0 : i64, scratch_operands = 0 : i64, tpu.core_type = #tpu.core_type<tc>, window_params = [{transform_indices = @transform_0, window_bounds = array<i64: 512, 16>}, {transform_indices = @transform_1, window_bounds = array<i64: 512, 128>}, {transform_indices = @transform_2, window_bounds = array<i64: 512, 128>}, {pipeline_mode = #tpu.pipeline_mode<synchronous>, transform_indices = @transform_3, window_bounds = array<i64: 16, 384>}, {pipeline_mode = #tpu.pipeline_mode<synchronous>, transform_indices = @transform_4, window_bounds = array<i64: 128, 128>}, {transform_indices = @transform_5, window_bounds = array<i64: 128, 128>}]} {
    %c0_i32 = arith.constant 0 : i32
    %0 = arith.cmpi eq, %arg1, %c0_i32 : i32
    %1 = arith.extui %0 : i1 to i32
    %c0_i32_0 = arith.constant 0 : i32
    %2 = arith.cmpi ne, %1, %c0_i32_0 : i32
    scf.if %2 {
      %cst_16 = arith.constant 0.000000e+00 : f32
      %29 = vector.broadcast %cst_16 : f32 to vector<128x128xf32>
      %c0_17 = arith.constant 0 : index
      %c0_18 = arith.constant 0 : index
      %30 = vector.load %arg7[%c0_17, %c0_18] : memref<128x128xf32, #tpu.memory_space<vmem>>, vector<128x128xf32>
      tpu.vector_store %arg7[%c0_17, %c0_18], %29 {strides = array<i32>} : memref<128x128xf32, #tpu.memory_space<vmem>>, vector<128x128xf32>,
    } else {
    }
    %c0 = arith.constant 0 : index
    %c0_1 = arith.constant 0 : index
    %3 = vector.load %arg3[%c0, %c0_1] : memref<512x128xbf16, #tpu.memory_space<vmem>>, vector<512x128xbf16>
    %4 = arith.extf %3 : vector<512x128xbf16> to vector<512x128xf32>
    %c0_2 = arith.constant 0 : index
    %c0_3 = arith.constant 0 : index
    %5 = vector.load %arg2[%c0_2, %c0_3] : memref<512x16xf32, #tpu.memory_space<vmem>>, vector<512x16xf32>
    %c0_4 = arith.constant 0 : index
    %c0_5 = arith.constant 0 : index
    %6 = vector.load %arg5[%c0_4, %c0_5] : memref<16x384xf32, #tpu.memory_space<vmem>>, vector<16x384xf32>
    %cst = arith.constant dense<0.000000e+00> : vector<512x384xf32>
    %7 = tpu.matmul %5, %6, %cst {dimension_numbers = #tpu.dot_dimension_numbers<[1], [0], [0], [1], [0, 0, 1, 1], [], []>} : vector<512x16xf32>, vector<16x384xf32>, vector<512x384xf32> -> vector<512x384xf32>
    %cst_6 = arith.constant 0.000000e+00 : f32
    %8 = vector.broadcast %cst_6 : f32 to vector<512x128xf32>
    %9 = vector.extract_strided_slice %7 {offsets = [0, 0], sizes = [512, 128], strides = [1, 1]} : vector<512x384xf32> to vector<512x128xf32>
    %c32_i32 = arith.constant 32 : i32
    %10 = tpu.dynamic_rotate %4 by %c32_i32 dim 1 : vector<512x128xf32>, i32 -> vector<512x128xf32>
    %11 = arith.mulf %9, %10 : vector<512x128xf32>
    %12 = arith.addf %8, %11 : vector<512x128xf32>
    %13 = vector.extract_strided_slice %7 {offsets = [0, 128], sizes = [512, 128], strides = [1, 1]} : vector<512x384xf32> to vector<512x128xf32>
    %14 = arith.mulf %13, %4 : vector<512x128xf32>
    %15 = arith.addf %12, %14 : vector<512x128xf32>
    %16 = vector.extract_strided_slice %7 {offsets = [0, 256], sizes = [512, 128], strides = [1, 1]} : vector<512x384xf32> to vector<512x128xf32>
    %c96_i32 = arith.constant 96 : i32
    %17 = tpu.dynamic_rotate %4 by %c96_i32 dim 1 : vector<512x128xf32>, i32 -> vector<512x128xf32>
    %18 = arith.mulf %16, %17 : vector<512x128xf32>
    %19 = arith.addf %15, %18 : vector<512x128xf32>
    %c0_7 = arith.constant 0 : index
    %c0_8 = arith.constant 0 : index
    %20 = vector.load %arg4[%c0_7, %c0_8] : memref<512x128xbf16, #tpu.memory_space<vmem>>, vector<512x128xbf16>
    %c0_9 = arith.constant 0 : index
    %c0_10 = arith.constant 0 : index
    %21 = vector.load %arg7[%c0_9, %c0_10] : memref<128x128xf32, #tpu.memory_space<vmem>>, vector<128x128xf32>
    %22 = arith.truncf %19 : vector<512x128xf32> to vector<512x128xbf16>
    %cst_11 = arith.constant dense<0.000000e+00> : vector<128x128xf32>
    %23 = tpu.matmul %20, %22, %cst_11 {dimension_numbers = #tpu.dot_dimension_numbers<[0], [0], [1], [1], [0, 1, 1, 1], [], []>} : vector<512x128xbf16>, vector<512x128xbf16>, vector<128x128xf32> -> vector<128x128xf32>
    %24 = arith.addf %21, %23 : vector<128x128xf32>
    %c0_12 = arith.constant 0 : index
    %c0_13 = arith.constant 0 : index
    %25 = vector.load %arg7[%c0_12, %c0_13] : memref<128x128xf32, #tpu.memory_space<vmem>>, vector<128x128xf32>
    tpu.vector_store %arg7[%c0_12, %c0_13], %24 {strides = array<i32>} : memref<128x128xf32, #tpu.memory_space<vmem>>, vector<128x128xf32>,
    %c0_i32_14 = arith.constant 0 : i32
    %26 = arith.cmpi eq, %arg1, %c0_i32_14 : i32
    %27 = arith.extui %26 : i1 to i32
    %c0_i32_15 = arith.constant 0 : i32
    %28 = arith.cmpi ne, %27, %c0_i32_15 : i32
    scf.if %28 {
      %c0_16 = arith.constant 0 : index
      %c0_17 = arith.constant 0 : index
      %29 = vector.load %arg7[%c0_16, %c0_17] : memref<128x128xf32, #tpu.memory_space<vmem>>, vector<128x128xf32>
      %c0_18 = arith.constant 0 : index
      %c0_19 = arith.constant 0 : index
      %30 = vector.load %arg6[%c0_18, %c0_19] : memref<128x128xf32, #tpu.memory_space<vmem>>, vector<128x128xf32>
      %31 = arith.mulf %29, %30 : vector<128x128xf32>
      %c0_20 = arith.constant 0 : index
      %c0_21 = arith.constant 0 : index
      %32 = vector.load %arg7[%c0_20, %c0_21] : memref<128x128xf32, #tpu.memory_space<vmem>>, vector<128x128xf32>
      tpu.vector_store %arg7[%c0_20, %c0_21], %31 {strides = array<i32>} : memref<128x128xf32, #tpu.memory_space<vmem>>, vector<128x128xf32>,
    } else {
    }
    return
  }
  func.func @transform_0(%arg0: i32, %arg1: i32) -> (i32, i32) {
    %c1_i32 = arith.constant 1 : i32
    %0 = arith.muli %arg0, %c1_i32 : i32
    %1 = arith.addi %0, %arg1 : i32
    %c0_i32 = arith.constant 0 : i32
    %c0_i32_0 = arith.constant 0 : i32
    return %1, %c0_i32 : i32, i32
  }
  func.func @transform_1(%arg0: i32, %arg1: i32) -> (i32, i32) {
    %c1_i32 = arith.constant 1 : i32
    %0 = arith.muli %arg0, %c1_i32 : i32
    %1 = arith.addi %0, %arg1 : i32
    %c0_i32 = arith.constant 0 : i32
    %c0_i32_0 = arith.constant 0 : i32
    return %1, %c0_i32 : i32, i32
  }
  func.func @transform_2(%arg0: i32, %arg1: i32) -> (i32, i32) {
    %c1_i32 = arith.constant 1 : i32
    %0 = arith.muli %arg0, %c1_i32 : i32
    %1 = arith.addi %0, %arg1 : i32
    %c0_i32 = arith.constant 0 : i32
    %c0_i32_0 = arith.constant 0 : i32
    return %1, %c0_i32 : i32, i32
  }
  func.func @transform_3(%arg0: i32, %arg1: i32) -> (i32, i32) {
    %c0_i32 = arith.constant 0 : i32
    %c0_i32_0 = arith.constant 0 : i32
    %c0_i32_1 = arith.constant 0 : i32
    return %c0_i32, %c0_i32_0 : i32, i32
  }
  func.func @transform_4(%arg0: i32, %arg1: i32) -> (i32, i32) {
    %c0_i32 = arith.constant 0 : i32
    %c0_i32_0 = arith.constant 0 : i32
    %c0_i32_1 = arith.constant 0 : i32
    return %c0_i32, %c0_i32_0 : i32, i32
  }
  func.func @transform_5(%arg0: i32, %arg1: i32) -> (i32, i32) {
    %c0_i32 = arith.constant 0 : i32
    %c0_i32_0 = arith.constant 0 : i32
    return %arg0, %c0_i32 : i32, i32
  }
}

module attributes {stable_mosaic.version = 11 : i64} {
  func.func @_out_kernel_fused(%arg0: i32, %arg1: memref<512x128xbf16, #tpu.memory_space<vmem>>, %arg2: memref<512x16xf32, #tpu.memory_space<vmem>>, %arg3: memref<128x256xbf16, #tpu.memory_space<vmem>>, %arg4: memref<1x256xf32, #tpu.memory_space<vmem>>, %arg5: memref<256x128xbf16, #tpu.memory_space<vmem>>, %arg6: memref<1x128xf32, #tpu.memory_space<vmem>>, %arg7: memref<16x384xf32, #tpu.memory_space<vmem>>, %arg8: memref<512x128xf32, #tpu.memory_space<vmem>>) attributes {dimension_semantics = [#tpu.dimension_semantics<parallel>], iteration_bounds = array<i64: 2>, scalar_prefetch = 0 : i64, scratch_operands = 0 : i64, tpu.core_type = #tpu.core_type<tc>, window_params = [{transform_indices = @transform_0, window_bounds = array<i64: 512, 128>}, {transform_indices = @transform_1, window_bounds = array<i64: 512, 16>}, {pipeline_mode = #tpu.pipeline_mode<synchronous>, transform_indices = @transform_2, window_bounds = array<i64: 128, 256>}, {pipeline_mode = #tpu.pipeline_mode<synchronous>, transform_indices = @transform_3, window_bounds = array<i64: 1, 256>}, {pipeline_mode = #tpu.pipeline_mode<synchronous>, transform_indices = @transform_4, window_bounds = array<i64: 256, 128>}, {pipeline_mode = #tpu.pipeline_mode<synchronous>, transform_indices = @transform_5, window_bounds = array<i64: 1, 128>}, {pipeline_mode = #tpu.pipeline_mode<synchronous>, transform_indices = @transform_6, window_bounds = array<i64: 16, 384>}, {transform_indices = @transform_7, window_bounds = array<i64: 512, 128>}]} {
    %c0 = arith.constant 0 : index
    %c0_0 = arith.constant 0 : index
    %0 = vector.load %arg1[%c0, %c0_0] : memref<512x128xbf16, #tpu.memory_space<vmem>>, vector<512x128xbf16>
    %c0_1 = arith.constant 0 : index
    %c0_2 = arith.constant 0 : index
    %1 = vector.load %arg3[%c0_1, %c0_2] : memref<128x256xbf16, #tpu.memory_space<vmem>>, vector<128x256xbf16>
    %cst = arith.constant dense<0.000000e+00> : vector<512x256xf32>
    %2 = tpu.matmul %0, %1, %cst {dimension_numbers = #tpu.dot_dimension_numbers<[1], [0], [0], [1], [0, 0, 1, 1], [], []>} : vector<512x128xbf16>, vector<128x256xbf16>, vector<512x256xf32> -> vector<512x256xf32>
    %c0_3 = arith.constant 0 : index
    %c0_4 = arith.constant 0 : index
    %3 = vector.load %arg4[%c0_3, %c0_4] : memref<1x256xf32, #tpu.memory_space<vmem>>, vector<1x256xf32>
    %4 = vector.broadcast %3 : vector<1x256xf32> to vector<512x256xf32>
    %5 = arith.addf %2, %4 : vector<512x256xf32>
    %c0_5 = arith.constant 0 : index
    %c0_6 = arith.constant 0 : index
    %6 = vector.load %arg2[%c0_5, %c0_6] : memref<512x16xf32, #tpu.memory_space<vmem>>, vector<512x16xf32>
    %cst_7 = arith.constant 5.000000e-01 : f32
    %7 = vector.broadcast %cst_7 : f32 to vector<512x256xf32>
    %8 = arith.mulf %7, %5 : vector<512x256xf32>
    %cst_8 = arith.constant 0.707106769 : f32
    %9 = vector.broadcast %cst_8 : f32 to vector<512x256xf32>
    %10 = arith.mulf %5, %9 : vector<512x256xf32>
    %cst_9 = arith.constant 0.000000e+00 : f32
    %11 = vector.broadcast %cst_9 : f32 to vector<512x256xf32>
    %12 = arith.cmpf oge, %10, %11 : vector<512x256xf32>
    %cst_10 = arith.constant 1.000000e+00 : f32
    %cst_11 = arith.constant -1.000000e+00 : f32
    %13 = vector.broadcast %cst_10 : f32 to vector<512x256xf32>
    %14 = vector.broadcast %cst_11 : f32 to vector<512x256xf32>
    %15 = arith.select %12, %13, %14 : vector<512x256xi1>, vector<512x256xf32>
    %16 = math.absf %10 : vector<512x256xf32>
    %cst_12 = arith.constant 0.327591091 : f32
    %17 = vector.broadcast %cst_12 : f32 to vector<512x256xf32>
    %18 = arith.mulf %17, %16 : vector<512x256xf32>
    %cst_13 = arith.constant 1.000000e+00 : f32
    %19 = vector.broadcast %cst_13 : f32 to vector<512x256xf32>
    %20 = arith.addf %19, %18 : vector<512x256xf32>
    %21 = tpu.reciprocal %20 {approx = true} : vector<512x256xf32> -> vector<512x256xf32>
    %cst_14 = arith.constant 1.06140542 : f32
    %22 = vector.broadcast %cst_14 : f32 to vector<512x256xf32>
    %23 = arith.mulf %22, %21 : vector<512x256xf32>
    %cst_15 = arith.constant -1.45315206 : f32
    %24 = vector.broadcast %cst_15 : f32 to vector<512x256xf32>
    %25 = arith.addf %23, %24 : vector<512x256xf32>
    %26 = arith.mulf %25, %21 : vector<512x256xf32>
    %cst_16 = arith.constant 1.42141378 : f32
    %27 = vector.broadcast %cst_16 : f32 to vector<512x256xf32>
    %28 = arith.addf %26, %27 : vector<512x256xf32>
    %29 = arith.mulf %28, %21 : vector<512x256xf32>
    %cst_17 = arith.constant -0.284496725 : f32
    %30 = vector.broadcast %cst_17 : f32 to vector<512x256xf32>
    %31 = arith.addf %29, %30 : vector<512x256xf32>
    %32 = arith.mulf %31, %21 : vector<512x256xf32>
    %cst_18 = arith.constant 0.254829586 : f32
    %33 = vector.broadcast %cst_18 : f32 to vector<512x256xf32>
    %34 = arith.addf %32, %33 : vector<512x256xf32>
    %35 = arith.mulf %34, %21 : vector<512x256xf32>
    %cst_19 = arith.constant 0.000000e+00 : f32
    %36 = vector.broadcast %cst_19 : f32 to vector<512x256xf32>
    %37 = arith.subf %36, %16 : vector<512x256xf32>
    %38 = arith.mulf %37, %16 : vector<512x256xf32>
    %39 = math.exp %38 : vector<512x256xf32>
    %40 = arith.mulf %35, %39 : vector<512x256xf32>
    %cst_20 = arith.constant 1.000000e+00 : f32
    %41 = vector.broadcast %cst_20 : f32 to vector<512x256xf32>
    %42 = arith.subf %41, %40 : vector<512x256xf32>
    %43 = arith.mulf %15, %42 : vector<512x256xf32>
    %cst_21 = arith.constant 1.000000e+00 : f32
    %44 = vector.broadcast %cst_21 : f32 to vector<512x256xf32>
    %45 = arith.addf %44, %43 : vector<512x256xf32>
    %46 = arith.mulf %8, %45 : vector<512x256xf32>
    %47 = arith.truncf %46 : vector<512x256xf32> to vector<512x256xbf16>
    %c0_22 = arith.constant 0 : index
    %c0_23 = arith.constant 0 : index
    %48 = vector.load %arg5[%c0_22, %c0_23] : memref<256x128xbf16, #tpu.memory_space<vmem>>, vector<256x128xbf16>
    %cst_24 = arith.constant dense<0.000000e+00> : vector<512x128xf32>
    %49 = tpu.matmul %47, %48, %cst_24 {dimension_numbers = #tpu.dot_dimension_numbers<[1], [0], [0], [1], [0, 0, 1, 1], [], []>} : vector<512x256xbf16>, vector<256x128xbf16>, vector<512x128xf32> -> vector<512x128xf32>
    %c0_25 = arith.constant 0 : index
    %c0_26 = arith.constant 0 : index
    %50 = vector.load %arg6[%c0_25, %c0_26] : memref<1x128xf32, #tpu.memory_space<vmem>>, vector<1x128xf32>
    %51 = vector.broadcast %50 : vector<1x128xf32> to vector<512x128xf32>
    %52 = arith.addf %49, %51 : vector<512x128xf32>
    %c0_27 = arith.constant 0 : index
    %c0_28 = arith.constant 0 : index
    %53 = vector.load %arg7[%c0_27, %c0_28] : memref<16x384xf32, #tpu.memory_space<vmem>>, vector<16x384xf32>
    %cst_29 = arith.constant dense<0.000000e+00> : vector<512x384xf32>
    %54 = tpu.matmul %6, %53, %cst_29 {dimension_numbers = #tpu.dot_dimension_numbers<[1], [0], [0], [1], [0, 0, 1, 1], [], []>} : vector<512x16xf32>, vector<16x384xf32>, vector<512x384xf32> -> vector<512x384xf32>
    %cst_30 = arith.constant 0.000000e+00 : f32
    %55 = vector.broadcast %cst_30 : f32 to vector<512x128xf32>
    %56 = vector.extract_strided_slice %54 {offsets = [0, 0], sizes = [512, 128], strides = [1, 1]} : vector<512x384xf32> to vector<512x128xf32>
    %c32_i32 = arith.constant 32 : i32
    %57 = tpu.dynamic_rotate %52 by %c32_i32 dim 1 : vector<512x128xf32>, i32 -> vector<512x128xf32>
    %58 = arith.mulf %56, %57 : vector<512x128xf32>
    %59 = arith.addf %55, %58 : vector<512x128xf32>
    %60 = vector.extract_strided_slice %54 {offsets = [0, 128], sizes = [512, 128], strides = [1, 1]} : vector<512x384xf32> to vector<512x128xf32>
    %61 = arith.mulf %60, %52 : vector<512x128xf32>
    %62 = arith.addf %59, %61 : vector<512x128xf32>
    %63 = vector.extract_strided_slice %54 {offsets = [0, 256], sizes = [512, 128], strides = [1, 1]} : vector<512x384xf32> to vector<512x128xf32>
    %c96_i32 = arith.constant 96 : i32
    %64 = tpu.dynamic_rotate %52 by %c96_i32 dim 1 : vector<512x128xf32>, i32 -> vector<512x128xf32>
    %65 = arith.mulf %63, %64 : vector<512x128xf32>
    %66 = arith.addf %62, %65 : vector<512x128xf32>
    %c0_31 = arith.constant 0 : index
    %c0_32 = arith.constant 0 : index
    %67 = vector.load %arg8[%c0_31, %c0_32] : memref<512x128xf32, #tpu.memory_space<vmem>>, vector<512x128xf32>
    tpu.vector_store %arg8[%c0_31, %c0_32], %66 {strides = array<i32>} : memref<512x128xf32, #tpu.memory_space<vmem>>, vector<512x128xf32>,
    return
  }
  func.func @transform_0(%arg0: i32) -> (i32, i32) {
    %c0_i32 = arith.constant 0 : i32
    %c0_i32_0 = arith.constant 0 : i32
    return %arg0, %c0_i32 : i32, i32
  }
  func.func @transform_1(%arg0: i32) -> (i32, i32) {
    %c0_i32 = arith.constant 0 : i32
    %c0_i32_0 = arith.constant 0 : i32
    return %arg0, %c0_i32 : i32, i32
  }
  func.func @transform_2(%arg0: i32) -> (i32, i32) {
    %c0_i32 = arith.constant 0 : i32
    %c0_i32_0 = arith.constant 0 : i32
    %c0_i32_1 = arith.constant 0 : i32
    return %c0_i32, %c0_i32_0 : i32, i32
  }
  func.func @transform_3(%arg0: i32) -> (i32, i32) {
    %c0_i32 = arith.constant 0 : i32
    %c0_i32_0 = arith.constant 0 : i32
    %c0_i32_1 = arith.constant 0 : i32
    return %c0_i32, %c0_i32_0 : i32, i32
  }
  func.func @transform_4(%arg0: i32) -> (i32, i32) {
    %c0_i32 = arith.constant 0 : i32
    %c0_i32_0 = arith.constant 0 : i32
    %c0_i32_1 = arith.constant 0 : i32
    return %c0_i32, %c0_i32_0 : i32, i32
  }
  func.func @transform_5(%arg0: i32) -> (i32, i32) {
    %c0_i32 = arith.constant 0 : i32
    %c0_i32_0 = arith.constant 0 : i32
    %c0_i32_1 = arith.constant 0 : i32
    return %c0_i32, %c0_i32_0 : i32, i32
  }
  func.func @transform_6(%arg0: i32) -> (i32, i32) {
    %c0_i32 = arith.constant 0 : i32
    %c0_i32_0 = arith.constant 0 : i32
    %c0_i32_1 = arith.constant 0 : i32
    return %c0_i32, %c0_i32_0 : i32, i32
  }
  func.func @transform_7(%arg0: i32) -> (i32, i32) {
    %c0_i32 = arith.constant 0 : i32
    %c0_i32_0 = arith.constant 0 : i32
    return %arg0, %c0_i32 : i32, i32
  }
}

</mosaic_0001>

<llo_original>
// kernel: neg.0
$region0: #{neg.0}
  #allocation0 [shape = 's32[1]{0}', space=sflag, size = 0x4, scoped, tag = 'scoped memory for neg.0']
  %s0 = inlined_call_operand.vmem [shape: f32[128], index: 0, kind: input, shape index: {}]
  %s1 = inlined_call_operand.vmem [shape: f32[128], index: 1, kind: output, shape index: {}]
  %v2 = vld [vmem:[%s0] sm:$0x1]
  %3 = xla_tuple %v2
  %4 = xla_tuple %3
  %v5 = vxor.u32 %v2, 2147483648
  %6 = xla_tuple %v5
  %7 = vst [vmem:[%s1] sm:$0x1] %v5

// kernel: spec_bunn_forward.2
$region0: #{spec_bunn_forward.2}
  #allocation0 [shape = 'u32[]', space=smem, size = 0x4, offset = 0x4, fixed_abs, tag = 'smem constant byte address 0x4 - core index']
  #allocation1 [shape = 'u32[144,128]{1,0:T(1,128)}', space=vmem, size = 0x12000, scoped, tag = 'internal scratch']
  %s0 = inlined_call_operand.vmem [shape: f32[1024,16], index: 0, kind: input, shape index: {}]
  %s1 = inlined_call_operand.vmem [shape: bf16[1024,128], index: 1, kind: input, shape index: {}]
  %s2 = inlined_call_operand.vmem [shape: bf16[1024,128], index: 2, kind: input, shape index: {}]
  %s3 = inlined_call_operand.vmem [shape: f32[16,384], index: 3, kind: input, shape index: {}]
  %s4 = inlined_call_operand.vmem [shape: f32[128,128], index: 4, kind: input, shape index: {}]
  %s5 = inlined_call_operand.vmem [shape: f32[256,128], index: 5, kind: output, shape index: {}]
  %s6 = sld [smem:[#allocation0]]
  $region61: #{spec_bunn_forward.2} parent=0
    _
  %s8 = ssub.s32 1, %s6
  %s9 = scalar_select 0, %s8, %s6
  loop: start=0, step=1, limit=4
  $region2: #{spec_bunn_forward.2} parent=0 // loop_pre_header
    _
  $region3: #{spec_bunn_forward.2} parent=0 // loop_header
    %s11 = sphi 0, %s15
    %p12 = scmp.ge.s32.totalorder %s11, 4
    %s18 = sphi 0, %s30
    %s19 = sphi 0, %s26
    %s20 = sphi 0, %s18
    %s21 = sphi 0, %s19
    %s22 = sphi 0, %s20
    %s23 = sphi 0, %s21
    %s35 = sphi 0, %s37
    %s38 = sphi 0, %s35
    %s39 = sphi 0, %s38
    %s55 = sphi 0, %s39
    %s63 = sphi 0, %s65
    %s66 = sphi 0, %s63
    %s67 = sphi 0, %s66
    %s83 = sphi 0, %s67
    %s91 = sphi 0, %s93
    %s94 = sphi 0, %s91
    %s95 = sphi 0, %s94
    %s111 = sphi 0, %s95
    %s115 = sphi 0, %s115
    %s117 = sphi 0, %s115
    %s118 = sphi 0, %s117
    %s132 = sphi 0, %s118
    %s136 = sphi 0, %s136
    %s138 = sphi 0, %s136
    %s139 = sphi 0, %s138
    %s153 = sphi 0, %s139
    %s159 = sphi 0, %s161
    %s162 = sphi 0, %s159
    %s163 = sphi 0, %s162
    %s179 = sphi 0, %s163
  $region4: #{spec_bunn_forward.2} parent=0 // loop_header_branch
    %14 = sbr.rel (%p12) target = $region8
  $region5: #{spec_bunn_forward.2} parent=0 // loop_body
    %s16 = ssub.s32 %s11, 1
    %s17 = ssub.s32 %s11, 2
    %s24 = sadd.s32 1, %s19
    %p25 = scmp.ge.s32.totalorder %s24, 1
    %s26 = scalar_select %p25, 0, %s24
    %s27 = sadd.s32 1, %s18
    %s28 = scalar_select %p25, %s27, %s18
    %p29 = scmp.ge.s32.totalorder %s28, 2
    %s30 = scalar_select %p29, 0, %s28
    %s31 = sadd.s32 %s18, %s19
    %s32 = sadd.s32 %s30, %s26
    %s33 = ssub.s32 %s31, %s32
    %p34 = scmp.eq.s32.totalorder %s33, 0
    %s36 = sadd.s32 %s35, 1
    %s37 = scalar_select %p34, %s35, %s36
    %p40 = pneg %p34
    %p41 = scmp.eq.s32.totalorder %s11, 1
    %p42 = por %p40, %p41
    %p43 = scmp.ne.s32.totalorder %s35, %s38
    %p44 = scmp.eq.s32.totalorder %s11, 0
    %p45 = por %p43, %p44
    %p46 = scmp.ne.s32.totalorder %s35, %s38
    %p47 = scmp.eq.s32.totalorder %s16, 1
    %p48 = por %p46, %p47
    %p49 = scmp.ne.s32.totalorder %s38, %s39
    %p50 = scmp.eq.s32.totalorder %s16, 0
    %p51 = por %p49, %p50
    %p52 = scmp.ne.s32.totalorder %s38, %s39
    %p53 = scmp.eq.s32.totalorder %s17, 1
    %p54 = por %p52, %p53
    %p56 = scmp.ne.s32.totalorder %s39, %s55
    %p57 = scmp.eq.s32.totalorder %s17, 0
    %p58 = por %p56, %p57
    %s59 = sadd.s32 %s18, %s19
    %s60 = sadd.s32 %s30, %s26
    %s61 = ssub.s32 %s59, %s60
    %p62 = scmp.eq.s32.totalorder %s61, 0
    %s64 = sadd.s32 %s63, 1
    %s65 = scalar_select %p62, %s63, %s64
    %p68 = pneg %p62
    %p69 = scmp.eq.s32.totalorder %s11, 1
    %p70 = por %p68, %p69
    %p71 = scmp.ne.s32.totalorder %s63, %s66
    %p72 = scmp.eq.s32.totalorder %s11, 0
    %p73 = por %p71, %p72
    %p74 = scmp.ne.s32.totalorder %s63, %s66
    %p75 = scmp.eq.s32.totalorder %s16, 1
    %p76 = por %p74, %p75
    %p77 = scmp.ne.s32.totalorder %s66, %s67
    %p78 = scmp.eq.s32.totalorder %s16, 0
    %p79 = por %p77, %p78
    %p80 = scmp.ne.s32.totalorder %s66, %s67
    %p81 = scmp.eq.s32.totalorder %s17, 1
    %p82 = por %p80, %p81
    %p84 = scmp.ne.s32.totalorder %s67, %s83
    %p85 = scmp.eq.s32.totalorder %s17, 0
    %p86 = por %p84, %p85
    %s87 = sadd.s32 %s18, %s19
    %s88 = sadd.s32 %s30, %s26
    %s89 = ssub.s32 %s87, %s88
    %p90 = scmp.eq.s32.totalorder %s89, 0
    %s92 = sadd.s32 %s91, 1
    %s93 = scalar_select %p90, %s91, %s92
    %p96 = pneg %p90
    %p97 = scmp.eq.s32.totalorder %s11, 1
    %p98 = por %p96, %p97
    %p99 = scmp.ne.s32.totalorder %s91, %s94
    %p100 = scmp.eq.s32.totalorder %s11, 0
    %p101 = por %p99, %p100
    %p102 = scmp.ne.s32.totalorder %s91, %s94
    %p103 = scmp.eq.s32.totalorder %s16, 1
    %p104 = por %p102, %p103
    %p105 = scmp.ne.s32.totalorder %s94, %s95
    %p106 = scmp.eq.s32.totalorder %s16, 0
    %p107 = por %p105, %p106
    %p108 = scmp.ne.s32.totalorder %s94, %s95
    %p109 = scmp.eq.s32.totalorder %s17, 1
    %p110 = por %p108, %p109
    %p112 = scmp.ne.s32.totalorder %s95, %s111
    %p113 = scmp.eq.s32.totalorder %s17, 0
    %p114 = por %p112, %p113
    %s116 = sadd.s32 %s115, 1
    %p119 = scmp.eq.s32.totalorder %s11, 1
    %p120 = scmp.ne.s32.totalorder %s115, %s117
    %p121 = scmp.eq.s32.totalorder %s11, 0
    %p122 = por %p120, %p121
    %p123 = scmp.ne.s32.totalorder %s115, %s117
    %p124 = scmp.eq.s32.totalorder %s16, 1
    %p125 = por %p123, %p124
    %p126 = scmp.ne.s32.totalorder %s117, %s118
    %p127 = scmp.eq.s32.totalorder %s16, 0
    %p128 = por %p126, %p127
    %p129 = scmp.ne.s32.totalorder %s117, %s118
    %p130 = scmp.eq.s32.totalorder %s17, 1
    %p131 = por %p129, %p130
    %p133 = scmp.ne.s32.totalorder %s118, %s132
    %p134 = scmp.eq.s32.totalorder %s17, 0
    %p135 = por %p133, %p134
    %s137 = sadd.s32 %s136, 1
    %p140 = scmp.eq.s32.totalorder %s11, 1
    %p141 = scmp.ne.s32.totalorder %s136, %s138
    %p142 = scmp.eq.s32.totalorder %s11, 0
    %p143 = por %p141, %p142
    %p144 = scmp.ne.s32.totalorder %s136, %s138
    %p145 = scmp.eq.s32.totalorder %s16, 1
    %p146 = por %p144, %p145
    %p147 = scmp.ne.s32.totalorder %s138, %s139
    %p148 = scmp.eq.s32.totalorder %s16, 0
    %p149 = por %p147, %p148
    %p150 = scmp.ne.s32.totalorder %s138, %s139
    %p151 = scmp.eq.s32.totalorder %s17, 1
    %p152 = por %p150, %p151
    %p154 = scmp.ne.s32.totalorder %s139, %s153
    %p155 = scmp.eq.s32.totalorder %s17, 0
    %p156 = por %p154, %p155
    %s157 = ssub.s32 %s18, %s30
    %p158 = scmp.eq.s32.totalorder %s157, 0
    %s160 = sadd.s32 %s159, 1
    %s161 = scalar_select %p158, %s159, %s160
    %p164 = pneg %p158
    %p165 = scmp.eq.s32.totalorder %s11, 1
    %p166 = por %p164, %p165
    %p167 = scmp.ne.s32.totalorder %s159, %s162
    %p168 = scmp.eq.s32.totalorder %s11, 0
    %p169 = por %p167, %p168
    %p170 = scmp.ne.s32.totalorder %s159, %s162
    %p171 = scmp.eq.s32.totalorder %s16, 1
    %p172 = por %p170, %p171
    %p173 = scmp.ne.s32.totalorder %s162, %s163
    %p174 = scmp.eq.s32.totalorder %s16, 0
    %p175 = por %p173, %p174
    %p176 = scmp.ne.s32.totalorder %s162, %s163
    %p177 = scmp.eq.s32.totalorder %s17, 1
    %p178 = por %p176, %p177
    %p180 = scmp.ne.s32.totalorder %s163, %s179
    %p181 = scmp.eq.s32.totalorder %s17, 0
    %p182 = por %p180, %p181
    %p183 = scmp.le.s32.totalorder 1, %s11
    %p184 = scmp.lt.s32.totalorder %s11, 3
    %p185 = pnand %p183, %p184
    %p186 = pneg %p185
    // Predicated region
    $region9: #{spec_bunn_forward.2} parent=5 // pred_check
      _
    $region10: #{spec_bunn_forward.2} parent=5 // pred_check_branch
      %188 = sbr.rel (%p185) target = $region12
    $region11: #{spec_bunn_forward.2} parent=5 // pred_region
      %s189 = ssub.s32 %s11, 1
      // Predicated region
      $region13: #{spec_bunn_forward.2} parent=11 // pred_check
        %p190 = pneg %p128
      $region14: #{spec_bunn_forward.2} parent=11 // pred_check_branch
        %192 = sbr.rel (%p190) target = $region16
      $region15: #{spec_bunn_forward.2} parent=11 // pred_region
        _
      $region16: #{spec_bunn_forward.2} parent=11 // pred_fallthru
        _
      // Predicated region
      $region17: #{spec_bunn_forward.2} parent=11 // pred_check
        %p193 = pneg %p149
      $region18: #{spec_bunn_forward.2} parent=11 // pred_check_branch
        %195 = sbr.rel (%p193) target = $region20
      $region19: #{spec_bunn_forward.2} parent=11 // pred_region
        _
      $region20: #{spec_bunn_forward.2} parent=11 // pred_fallthru
        _
    $region12: #{spec_bunn_forward.2} parent=5 // pred_fallthru
      _
    %p196 = scmp.lt.s32.totalorder %s11, 2
    // Predicated region
    $region21: #{spec_bunn_forward.2} parent=5 // pred_check
      %p197 = pneg %p196
    $region22: #{spec_bunn_forward.2} parent=5 // pred_check_branch
      %199 = sbr.rel (%p197) target = $region24
    $region23: #{spec_bunn_forward.2} parent=5 // pred_region
      // Predicated region
      $region25: #{spec_bunn_forward.2} parent=23 // pred_check
        %p200 = pneg %p45
      $region26: #{spec_bunn_forward.2} parent=23 // pred_check_branch
        %202 = sbr.rel (%p200) target = $region28
      $region27: #{spec_bunn_forward.2} parent=23 // pred_region
        %s203 = sadd.s32 %s18, %s19
        %s204 = smul.u32 64, %s203
        %p205 = scmp.lt.s32.totalorder %s204, 127
        %s206 = scalar_select %p205, %s204, 127
        %s207 = smul.addr %s206, 8
        %s208 = scalar_lea.vmem %s0, %s207
        %s209 = sadd.s32 %s18, %s19
        %s210 = smul.u32 64, %s209
      $region28: #{spec_bunn_forward.2} parent=23 // pred_fallthru
        _
      // Predicated region
      $region29: #{spec_bunn_forward.2} parent=23 // pred_check
        %p211 = pneg %p73
      $region30: #{spec_bunn_forward.2} parent=23 // pred_check_branch
        %213 = sbr.rel (%p211) target = $region32
      $region31: #{spec_bunn_forward.2} parent=23 // pred_region
        %s214 = sadd.s32 %s18, %s19
        %s215 = smul.u32 64, %s214
        %p216 = scmp.lt.s32.totalorder %s215, 127
        %s217 = scalar_select %p216, %s215, 127
        %s218 = smul.addr %s217, 4
        %s219 = scalar_lea.vmem %s1, %s218
        %s220 = sadd.s32 %s18, %s19
        %s221 = smul.u32 64, %s220
      $region32: #{spec_bunn_forward.2} parent=23 // pred_fallthru
        _
      // Predicated region
      $region33: #{spec_bunn_forward.2} parent=23 // pred_check
        %p222 = pneg %p101
      $region34: #{spec_bunn_forward.2} parent=23 // pred_check_branch
        %224 = sbr.rel (%p222) target = $region36
      $region35: #{spec_bunn_forward.2} parent=23 // pred_region
        %s225 = sadd.s32 %s18, %s19
        %s226 = smul.u32 64, %s225
        %p227 = scmp.lt.s32.totalorder %s226, 127
        %s228 = scalar_select %p227, %s226, 127
        %s229 = smul.addr %s228, 4
        %s230 = scalar_lea.vmem %s2, %s229
        %s231 = sadd.s32 %s18, %s19
        %s232 = smul.u32 64, %s231
      $region36: #{spec_bunn_forward.2} parent=23 // pred_fallthru
        _
    $region24: #{spec_bunn_forward.2} parent=5 // pred_fallthru
      _
    %p233 = scmp.le.s32.totalorder 1, %s11
    %p234 = scmp.lt.s32.totalorder %s11, 3
    %p235 = pnand %p233, %p234
    %p236 = pneg %p235
    // Predicated region
    $region37: #{spec_bunn_forward.2} parent=5 // pred_check
      _
    $region38: #{spec_bunn_forward.2} parent=5 // pred_check_branch
      %238 = sbr.rel (%p235) target = $region40
    $region39: #{spec_bunn_forward.2} parent=5 // pred_region
      %s239 = ssub.s32 %s11, 1
      %s240 = sadd.s32 %s20, %s21
      %s241 = smul.u32 64, %s240
      %p242 = scmp.lt.s32.totalorder %s241, 127
      %s243 = scalar_select %p242, %s241, 127
      %s244 = smul.addr %s243, 8
      %s245 = scalar_lea.vmem %s0, %s244
      %p246 = pneg %p51
      %p247 = pneg %p48
      %s248 = sadd.s32 %s20, %s21
      %s249 = smul.u32 64, %s248
      %p250 = scmp.lt.s32.totalorder %s249, 127
      %s251 = scalar_select %p250, %s249, 127
      %s252 = smul.addr %s251, 4
      %s253 = scalar_lea.vmem %s1, %s252
      %p254 = pneg %p79
      %p255 = pneg %p76
      %s256 = sadd.s32 %s20, %s21
      %s257 = smul.u32 64, %s256
      %p258 = scmp.lt.s32.totalorder %s257, 127
      %s259 = scalar_select %p258, %s257, 127
      %s260 = smul.addr %s259, 4
      %s261 = scalar_lea.vmem %s2, %s260
      %p262 = pneg %p107
      %p263 = pneg %p104
      %p264 = pneg %p128
      %p265 = pneg %p125
      %p266 = pneg %p149
      %p267 = pneg %p146
      %p268 = pneg %p175
      %p269 = pneg %p172
      %s270 = smul.u32 16, %s20
      %p271 = scmp.lt.s32.totalorder %s270, 31
      %s272 = scalar_select %p271, %s270, 31
      %s273 = smul.addr %s272, 8
      %s274 = scalar_lea.vmem %s5, %s273
      %s275 = sadd.s32 %s20, %s21
      %s276 = smul.u32 64, %s275
      %p277 = scmp.lt.s32.totalorder %s276, 127
      %s278 = scalar_select %p277, %s276, 127
      %s279 = smul.addr %s278, 8
      %s280 = scalar_lea.vmem %s0, %s279
      %s281 = sadd.s32 %s20, %s21
      %s282 = smul.u32 64, %s281
      %s283 = sadd.s32 %s20, %s21
      %s284 = smul.u32 64, %s283
      %p285 = scmp.lt.s32.totalorder %s284, 127
      %s286 = scalar_select %p285, %s284, 127
      %s287 = smul.addr %s286, 4
      %s288 = scalar_lea.vmem %s1, %s287
      %s289 = sadd.s32 %s20, %s21
      %s290 = smul.u32 64, %s289
      %s291 = sadd.s32 %s20, %s21
      %s292 = smul.u32 64, %s291
      %p293 = scmp.lt.s32.totalorder %s292, 127
      %s294 = scalar_select %p293, %s292, 127
      %s295 = smul.addr %s294, 4
      %s296 = scalar_lea.vmem %s2, %s295
      %s297 = sadd.s32 %s20, %s21
      %s298 = smul.u32 64, %s297
      %s299 = smul.u32 16, %s20
      %p300 = scmp.lt.s32.totalorder %s299, 31
      %s301 = scalar_select %p300, %s299, 31
      %s302 = smul.addr %s301, 8
      %s303 = scalar_lea.vmem %s5, %s302
      %s304 = smul.u32 16, %s20
      %p306 = scmp.eq.s32.totalorder %s21, 0
      // Predicated region
      $region41: #{spec_bunn_forward.2} parent=39 // pred_check
        %p307 = pneg %p306
      $region42: #{spec_bunn_forward.2} parent=39 // pred_check_branch
        %309 = sbr.rel (%p307) target = $region44
      $region43: #{spec_bunn_forward.2} parent=39 // pred_region
        %310 = vst [vmem:[%s303] sm:$0xff] 0.0
        %311 = vst [vmem:[%s303 + $0x8] sm:$0xff] 0.0
        %312 = vst [vmem:[%s303 + $0x10] sm:$0xff] 0.0
        %313 = vst [vmem:[%s303 + $0x18] sm:$0xff] 0.0
        %314 = vst [vmem:[%s303 + $0x20] sm:$0xff] 0.0
        %315 = vst [vmem:[%s303 + $0x28] sm:$0xff] 0.0
        %316 = vst [vmem:[%s303 + $0x30] sm:$0xff] 0.0
        %317 = vst [vmem:[%s303 + $0x38] sm:$0xff] 0.0
        %318 = vst [vmem:[%s303 + $0x40] sm:$0xff] 0.0
        %319 = vst [vmem:[%s303 + $0x48] sm:$0xff] 0.0
        %320 = vst [vmem:[%s303 + $0x50] sm:$0xff] 0.0
        %321 = vst [vmem:[%s303 + $0x58] sm:$0xff] 0.0
        %322 = vst [vmem:[%s303 + $0x60] sm:$0xff] 0.0
        %323 = vst [vmem:[%s303 + $0x68] sm:$0xff] 0.0
        %324 = vst [vmem:[%s303 + $0x70] sm:$0xff] 0.0
        %325 = vst [vmem:[%s303 + $0x78] sm:$0xff] 0.0
      $region44: #{spec_bunn_forward.2} parent=39 // pred_fallthru
        _
      %v326 = vld [vmem:[%s288] sm:$0xf]
      %v327 = vld [vmem:[%s288 + $0x4] sm:$0xf]
      %v328 = vld [vmem:[%s288 + $0x8] sm:$0xf]
      %v329 = vld [vmem:[%s288 + $0xc] sm:$0xf]
      %v330 = vld [vmem:[%s288 + $0x10] sm:$0xf]
      %v331 = vld [vmem:[%s288 + $0x14] sm:$0xf]
      %v332 = vld [vmem:[%s288 + $0x18] sm:$0xf]
      %v333 = vld [vmem:[%s288 + $0x1c] sm:$0xf]
      %v334 = vld [vmem:[%s288 + $0x20] sm:$0xf]
      %v335 = vld [vmem:[%s288 + $0x24] sm:$0xf]
      %v336 = vld [vmem:[%s288 + $0x28] sm:$0xf]
      %v337 = vld [vmem:[%s288 + $0x2c] sm:$0xf]
      %v338 = vld [vmem:[%s288 + $0x30] sm:$0xf]
      %v339 = vld [vmem:[%s288 + $0x34] sm:$0xf]
      %v340 = vld [vmem:[%s288 + $0x38] sm:$0xf]
      %v341 = vld [vmem:[%s288 + $0x3c] sm:$0xf]
      %v342 = vld [vmem:[%s288 + $0x40] sm:$0xf]
      %v343 = vld [vmem:[%s288 + $0x44] sm:$0xf]
      %v344 = vld [vmem:[%s288 + $0x48] sm:$0xf]
      %v345 = vld [vmem:[%s288 + $0x4c] sm:$0xf]
      %v346 = vld [vmem:[%s288 + $0x50] sm:$0xf]
      %v347 = vld [vmem:[%s288 + $0x54] sm:$0xf]
      %v348 = vld [vmem:[%s288 + $0x58] sm:$0xf]
      %v349 = vld [vmem:[%s288 + $0x5c] sm:$0xf]
      %v350 = vld [vmem:[%s288 + $0x60] sm:$0xf]
      %v351 = vld [vmem:[%s288 + $0x64] sm:$0xf]
      %v352 = vld [vmem:[%s288 + $0x68] sm:$0xf]
      %v353 = vld [vmem:[%s288 + $0x6c] sm:$0xf]
      %v354 = vld [vmem:[%s288 + $0x70] sm:$0xf]
      %v355 = vld [vmem:[%s288 + $0x74] sm:$0xf]
      %v356 = vld [vmem:[%s288 + $0x78] sm:$0xf]
      %v357 = vld [vmem:[%s288 + $0x7c] sm:$0xf]
      %v358 = vld [vmem:[%s288 + $0x80] sm:$0xf]
      %v359 = vld [vmem:[%s288 + $0x84] sm:$0xf]
      %v360 = vld [vmem:[%s288 + $0x88] sm:$0xf]
      %v361 = vld [vmem:[%s288 + $0x8c] sm:$0xf]
      %v362 = vld [vmem:[%s288 + $0x90] sm:$0xf]
      %v363 = vld [vmem:[%s288 + $0x94] sm:$0xf]
      %v364 = vld [vmem:[%s288 + $0x98] sm:$0xf]
      %v365 = vld [vmem:[%s288 + $0x9c] sm:$0xf]
      %v366 = vld [vmem:[%s288 + $0xa0] sm:$0xf]
      %v367 = vld [vmem:[%s288 + $0xa4] sm:$0xf]
      %v368 = vld [vmem:[%s288 + $0xa8] sm:$0xf]
      %v369 = vld [vmem:[%s288 + $0xac] sm:$0xf]
      %v370 = vld [vmem:[%s288 + $0xb0] sm:$0xf]
      %v371 = vld [vmem:[%s288 + $0xb4] sm:$0xf]
      %v372 = vld [vmem:[%s288 + $0xb8] sm:$0xf]
      %v373 = vld [vmem:[%s288 + $0xbc] sm:$0xf]
      %v374 = vld [vmem:[%s288 + $0xc0] sm:$0xf]
      %v375 = vld [vmem:[%s288 + $0xc4] sm:$0xf]
      %v376 = vld [vmem:[%s288 + $0xc8] sm:$0xf]
      %v377 = vld [vmem:[%s288 + $0xcc] sm:$0xf]
      %v378 = vld [vmem:[%s288 + $0xd0] sm:$0xf]
      %v379 = vld [vmem:[%s288 + $0xd4] sm:$0xf]
      %v380 = vld [vmem:[%s288 + $0xd8] sm:$0xf]
      %v381 = vld [vmem:[%s288 + $0xdc] sm:$0xf]
      %v382 = vld [vmem:[%s288 + $0xe0] sm:$0xf]
      %v383 = vld [vmem:[%s288 + $0xe4] sm:$0xf]
      %v384 = vld [vmem:[%s288 + $0xe8] sm:$0xf]
      %v385 = vld [vmem:[%s288 + $0xec] sm:$0xf]
      %v386 = vld [vmem:[%s288 + $0xf0] sm:$0xf]
      %v387 = vld [vmem:[%s288 + $0xf4] sm:$0xf]
      %v388 = vld [vmem:[%s288 + $0xf8] sm:$0xf]
      %v389 = vld [vmem:[%s288 + $0xfc] sm:$0xf]
      %v390 = vunpack.c.l.bf16 %v326
      %v391 = vunpack.c.l.bf16 %v327
      %v392 = vunpack.c.l.bf16 %v328
      %v393 = vunpack.c.l.bf16 %v329
      %v394 = vunpack.c.l.bf16 %v330
      %v395 = vunpack.c.l.bf16 %v331
      %v396 = vunpack.c.l.bf16 %v332
      %v397 = vunpack.c.l.bf16 %v333
      %v398 = vunpack.c.l.bf16 %v334
      %v399 = vunpack.c.l.bf16 %v335
      %v400 = vunpack.c.l.bf16 %v336
      %v401 = vunpack.c.l.bf16 %v337
      %v402 = vunpack.c.l.bf16 %v338
      %v403 = vunpack.c.l.bf16 %v339
      %v404 = vunpack.c.l.bf16 %v340
      %v405 = vunpack.c.l.bf16 %v341
      %v406 = vunpack.c.l.bf16 %v342
      %v407 = vunpack.c.l.bf16 %v343
      %v408 = vunpack.c.l.bf16 %v344
      %v409 = vunpack.c.l.bf16 %v345
      %v410 = vunpack.c.l.bf16 %v346
      %v411 = vunpack.c.l.bf16 %v347
      %v412 = vunpack.c.l.bf16 %v348
      %v413 = vunpack.c.l.bf16 %v349
      %v414 = vunpack.c.l.bf16 %v350
      %v415 = vunpack.c.l.bf16 %v351
      %v416 = vunpack.c.l.bf16 %v352
      %v417 = vunpack.c.l.bf16 %v353
      %v418 = vunpack.c.l.bf16 %v354
      %v419 = vunpack.c.l.bf16 %v355
      %v420 = vunpack.c.l.bf16 %v356
      %v421 = vunpack.c.l.bf16 %v357
      %v422 = vunpack.c.l.bf16 %v358
      %v423 = vunpack.c.l.bf16 %v359
      %v424 = vunpack.c.l.bf16 %v360
      %v425 = vunpack.c.l.bf16 %v361
      %v426 = vunpack.c.l.bf16 %v362
      %v427 = vunpack.c.l.bf16 %v363
      %v428 = vunpack.c.l.bf16 %v364
      %v429 = vunpack.c.l.bf16 %v365
      %v430 = vunpack.c.l.bf16 %v366
      %v431 = vunpack.c.l.bf16 %v367
      %v432 = vunpack.c.l.bf16 %v368
      %v433 = vunpack.c.l.bf16 %v369
      %v434 = vunpack.c.l.bf16 %v370
      %v435 = vunpack.c.l.bf16 %v371
      %v436 = vunpack.c.l.bf16 %v372
      %v437 = vunpack.c.l.bf16 %v373
      %v438 = vunpack.c.l.bf16 %v374
      %v439 = vunpack.c.l.bf16 %v375
      %v440 = vunpack.c.l.bf16 %v376
      %v441 = vunpack.c.l.bf16 %v377
      %v442 = vunpack.c.l.bf16 %v378
      %v443 = vunpack.c.l.bf16 %v379
      %v444 = vunpack.c.l.bf16 %v380
      %v445 = vunpack.c.l.bf16 %v381
      %v446 = vunpack.c.l.bf16 %v382
      %v447 = vunpack.c.l.bf16 %v383
      %v448 = vunpack.c.l.bf16 %v384
      %v449 = vunpack.c.l.bf16 %v385
      %v450 = vunpack.c.l.bf16 %v386
      %v451 = vunpack.c.l.bf16 %v387
      %v452 = vunpack.c.l.bf16 %v388
      %v453 = vunpack.c.l.bf16 %v389
      %v454 = vld [vmem:[%s280] sm:$0xff]
      %v455 = vld [vmem:[%s280 + $0x8] sm:$0xff]
      %v456 = vld [vmem:[%s280 + $0x10] sm:$0xff]
      %v457 = vld [vmem:[%s280 + $0x18] sm:$0xff]
      %v458 = vld [vmem:[%s280 + $0x20] sm:$0xff]
      %v459 = vld [vmem:[%s280 + $0x28] sm:$0xff]
      %v460 = vld [vmem:[%s280 + $0x30] sm:$0xff]
      %v461 = vld [vmem:[%s280 + $0x38] sm:$0xff]
      %v462 = vld [vmem:[%s280 + $0x40] sm:$0xff]
      %v463 = vld [vmem:[%s280 + $0x48] sm:$0xff]
      %v464 = vld [vmem:[%s280 + $0x50] sm:$0xff]
      %v465 = vld [vmem:[%s280 + $0x58] sm:$0xff]
      %v466 = vld [vmem:[%s280 + $0x60] sm:$0xff]
      %v467 = vld [vmem:[%s280 + $0x68] sm:$0xff]
      %v468 = vld [vmem:[%s280 + $0x70] sm:$0xff]
      %v469 = vld [vmem:[%s280 + $0x78] sm:$0xff]
      %v470 = vld [vmem:[%s280 + $0x80] sm:$0xff]
      %v471 = vld [vmem:[%s280 + $0x88] sm:$0xff]
      %v472 = vld [vmem:[%s280 + $0x90] sm:$0xff]
      %v473 = vld [vmem:[%s280 + $0x98] sm:$0xff]
      %v474 = vld [vmem:[%s280 + $0xa0] sm:$0xff]
      %v475 = vld [vmem:[%s280 + $0xa8] sm:$0xff]
      %v476 = vld [vmem:[%s280 + $0xb0] sm:$0xff]
      %v477 = vld [vmem:[%s280 + $0xb8] sm:$0xff]
      %v478 = vld [vmem:[%s280 + $0xc0] sm:$0xff]
      %v479 = vld [vmem:[%s280 + $0xc8] sm:$0xff]
      %v480 = vld [vmem:[%s280 + $0xd0] sm:$0xff]
      %v481 = vld [vmem:[%s280 + $0xd8] sm:$0xff]
      %v482 = vld [vmem:[%s280 + $0xe0] sm:$0xff]
      %v483 = vld [vmem:[%s280 + $0xe8] sm:$0xff]
      %v484 = vld [vmem:[%s280 + $0xf0] sm:$0xff]
      %v485 = vld [vmem:[%s280 + $0xf8] sm:$0xff]
      %v486 = vld [vmem:[%s280 + $0x100] sm:$0xff]
      %v487 = vld [vmem:[%s280 + $0x108] sm:$0xff]
      %v488 = vld [vmem:[%s280 + $0x110] sm:$0xff]
      %v489 = vld [vmem:[%s280 + $0x118] sm:$0xff]
      %v490 = vld [vmem:[%s280 + $0x120] sm:$0xff]
      %v491 = vld [vmem:[%s280 + $0x128] sm:$0xff]
      %v492 = vld [vmem:[%s280 + $0x130] sm:$0xff]
      %v493 = vld [vmem:[%s280 + $0x138] sm:$0xff]
      %v494 = vld [vmem:[%s280 + $0x140] sm:$0xff]
      %v495 = vld [vmem:[%s280 + $0x148] sm:$0xff]
      %v496 = vld [vmem:[%s280 + $0x150] sm:$0xff]
      %v497 = vld [vmem:[%s280 + $0x158] sm:$0xff]
      %v498 = vld [vmem:[%s280 + $0x160] sm:$0xff]
      %v499 = vld [vmem:[%s280 + $0x168] sm:$0xff]
      %v500 = vld [vmem:[%s280 + $0x170] sm:$0xff]
      %v501 = vld [vmem:[%s280 + $0x178] sm:$0xff]
      %v502 = vld [vmem:[%s280 + $0x180] sm:$0xff]
      %v503 = vld [vmem:[%s280 + $0x188] sm:$0xff]
      %v504 = vld [vmem:[%s280 + $0x190] sm:$0xff]
      %v505 = vld [vmem:[%s280 + $0x198] sm:$0xff]
      %v506 = vld [vmem:[%s280 + $0x1a0] sm:$0xff]
      %v507 = vld [vmem:[%s280 + $0x1a8] sm:$0xff]
      %v508 = vld [vmem:[%s280 + $0x1b0] sm:$0xff]
      %v509 = vld [vmem:[%s280 + $0x1b8] sm:$0xff]
      %v510 = vld [vmem:[%s280 + $0x1c0] sm:$0xff]
      %v511 = vld [vmem:[%s280 + $0x1c8] sm:$0xff]
      %v512 = vld [vmem:[%s280 + $0x1d0] sm:$0xff]
      %v513 = vld [vmem:[%s280 + $0x1d8] sm:$0xff]
      %v514 = vld [vmem:[%s280 + $0x1e0] sm:$0xff]
      %v515 = vld [vmem:[%s280 + $0x1e8] sm:$0xff]
      %v516 = vld [vmem:[%s280 + $0x1f0] sm:$0xff]
      %v517 = vld [vmem:[%s280 + $0x1f8] sm:$0xff]
      %v518 = vld [vmem:[%s3] sm:$0xff]
      %v519 = vld [vmem:[%s3 + $0x8] sm:$0xff]
      %v520 = vld [vmem:[%s3 + $0x10] sm:$0xff]
      %v521 = vld [vmem:[%s3 + $0x18] sm:$0xff]
      %v522 = vld [vmem:[%s3 + $0x20] sm:$0xff]
      %v523 = vld [vmem:[%s3 + $0x28] sm:$0xff]
      %vm524 = vcmask 130048
      %v526 = vsel %vm524, %v454, 0
      %v529 = vsel %vm524, %v455, 0
      %v532 = vsel %vm524, %v456, 0
      %v535 = vsel %vm524, %v457, 0
      %v538 = vsel %vm524, %v458, 0
      %v541 = vsel %vm524, %v459, 0
      %v544 = vsel %vm524, %v460, 0
      %v547 = vsel %vm524, %v461, 0
      %v550 = vsel %vm524, %v462, 0
      %v553 = vsel %vm524, %v463, 0
      %v556 = vsel %vm524, %v464, 0
      %v559 = vsel %vm524, %v465, 0
      %v562 = vsel %vm524, %v466, 0
      %v565 = vsel %vm524, %v467, 0
      %v568 = vsel %vm524, %v468, 0
      %v571 = vsel %vm524, %v469, 0
      %v574 = vsel %vm524, %v470, 0
      %v577 = vsel %vm524, %v471, 0
      %v580 = vsel %vm524, %v472, 0
      %v583 = vsel %vm524, %v473, 0
      %v586 = vsel %vm524, %v474, 0
      %v589 = vsel %vm524, %v475, 0
      %v592 = vsel %vm524, %v476, 0
      %v595 = vsel %vm524, %v477, 0
      %v598 = vsel %vm524, %v478, 0
      %v601 = vsel %vm524, %v479, 0
      %v604 = vsel %vm524, %v480, 0
      %v607 = vsel %vm524, %v481, 0
      %v610 = vsel %vm524, %v482, 0
      %v613 = vsel %vm524, %v483, 0
      %v616 = vsel %vm524, %v484, 0
      %v619 = vsel %vm524, %v485, 0
      %v622 = vsel %vm524, %v486, 0
      %v625 = vsel %vm524, %v487, 0
      %v628 = vsel %vm524, %v488, 0
      %v631 = vsel %vm524, %v489, 0
      %v634 = vsel %vm524, %v490, 0
      %v637 = vsel %vm524, %v491, 0
      %v640 = vsel %vm524, %v492, 0
      %v643 = vsel %vm524, %v493, 0
      %v646 = vsel %vm524, %v494, 0
      %v649 = vsel %vm524, %v495, 0
      %v652 = vsel %vm524, %v496, 0
      %v655 = vsel %vm524, %v497, 0
      %v658 = vsel %vm524, %v498, 0
      %v661 = vsel %vm524, %v499, 0
      %v664 = vsel %vm524, %v500, 0
      %v667 = vsel %vm524, %v501, 0
      %v670 = vsel %vm524, %v502, 0
      %v673 = vsel %vm524, %v503, 0
      %v676 = vsel %vm524, %v504, 0
      %v679 = vsel %vm524, %v505, 0
      %v682 = vsel %vm524, %v506, 0
      %v685 = vsel %vm524, %v507, 0
      %v688 = vsel %vm524, %v508, 0
      %v691 = vsel %vm524, %v509, 0
      %v694 = vsel %vm524, %v510, 0
      %v697 = vsel %vm524, %v511, 0
      %v700 = vsel %vm524, %v512, 0
      %v703 = vsel %vm524, %v513, 0
      %v706 = vsel %vm524, %v514, 0
      %v709 = vsel %vm524, %v515, 0
      %v712 = vsel %vm524, %v516, 0
      %v715 = vsel %vm524, %v517, 0
      %717 = vmatprep.subr.mxu0 %v519
      %718 = vmatpush1.msra.mxu0 %v518
      %719 = vmatprep.subr.mxu0 %v522
      %720 = vmatpush1.msra.mxu0 %v521
      %721 = vmatprep.subr.mxu0 0.0
      %722 = vmatpush1.msra.mxu0 0.0
      %723 = vmatprep.subr.mxu0 0.0
      %724 = vmatpush1.msra.mxu0 0.0
      %725 = vmatprep.subr.mxu0 0.0
      %726 = vmatpush1.msra.mxu0 0.0
      %727 = vmatprep.subr.mxu0 0.0
      %728 = vmatpush1.msra.mxu0 0.0
      %729 = vmatprep.subr.mxu0 0.0
      %730 = vmatpush1.msra.mxu0 0.0
      %731 = vmatprep.subr.mxu0 0.0
      %732 = vmatpush1.msra.mxu0 0.0
      %733 = vmatprep.subr.mxu0 0.0
      %734 = vmatpush1.msra.mxu0 0.0
      %735 = vmatprep.subr.mxu0 0.0
      %736 = vmatpush1.msra.mxu0 0.0
      %737 = vmatprep.subr.mxu0 0.0
      %738 = vmatpush1.msra.mxu0 0.0
      %739 = vmatprep.subr.mxu0 0.0
      %740 = vmatpush1.msra.mxu0 0.0
      %741 = vmatprep.subr.mxu0 0.0
      %742 = vmatpush1.msra.mxu0 0.0
      %743 = vmatprep.subr.mxu0 0.0
      %744 = vmatpush1.msra.mxu0 0.0
      %745 = vmatprep.subr.mxu0 0.0
      %746 = vmatpush1.msra.mxu0 0.0
      %747 = vmatprep.subr.mxu0 0.0
      %748 = vmatpush1.msra.mxu0 0.0
      %749 = vmatprep.subr.mxu0 0.0
      %750 = vmatpush1.msra.mxu0 0.0
      %751 = vmatprep.subr.mxu0 0.0
      %752 = vmatpush1.msra.mxu0 0.0
      %753 = vmatprep.subr.mxu0 0.0
      %754 = vmatpush1.msra.mxu0 0.0
      %755 = vmatprep.subr.mxu0 0.0
      %756 = vmatpush1.msra.mxu0 0.0
      %757 = vmatprep.subr.mxu0 0.0
      %758 = vmatpush1.msra.mxu0 0.0
      %759 = vmatprep.subr.mxu0 0.0
      %760 = vmatpush1.msra.mxu0 0.0
      %761 = vmatprep.subr.mxu0 0.0
      %762 = vmatpush1.msra.mxu0 0.0
      %763 = vmatprep.subr.mxu0 0.0
      %764 = vmatpush1.msra.mxu0 0.0
      %765 = vmatprep.subr.mxu0 0.0
      %766 = vmatpush1.msra.mxu0 0.0
      %767 = vmatprep.subr.mxu0 0.0
      %768 = vmatpush1.msra.mxu0 0.0
      %769 = vmatprep.subr.mxu0 0.0
      %770 = vmatpush1.msra.mxu0 0.0
      %771 = vmatprep.subr.mxu0 0.0
      %772 = vmatpush1.msra.mxu0 0.0
      %773 = vmatprep.subr.mxu0 0.0
      %774 = vmatpush1.msra.mxu0 0.0
      %775 = vmatprep.subr.mxu0 0.0
      %776 = vmatpush1.msra.mxu0 0.0
      %777 = vmatprep.subr.mxu0 0.0
      %778 = vmatpush1.msra.mxu0 0.0
      %779 = vmatprep.subr.mxu0 0.0
      %780 = vmatpush1.msra.mxu0 0.0
      %781 = vmatprep.mubr.f32.mxu0 0.0
      %782 = vmatmul.mubr.f32.gmra.mrb[0].mxu0 %v526
      %v783 = vpop.f32.mrb[0].mxu0
      %v784 = vadd.f32 0.0, %v783
      %v785 = vpop.f32.mrb[0].mxu0
      %v786 = vadd.f32 0.0, %v785
      %787 = vmatprep.mubr.f32.mxu0 0.0
      %788 = vmatmul.mubr.f32.gmra.mrb[0].mxu0 %v529
      %v789 = vpop.f32.mrb[0].mxu0
      %v790 = vadd.f32 0.0, %v789
      %v791 = vpop.f32.mrb[0].mxu0
      %v792 = vadd.f32 0.0, %v791
      %793 = vmatprep.mubr.f32.mxu0 0.0
      %794 = vmatmul.mubr.f32.gmra.mrb[0].mxu0 %v532
      %v795 = vpop.f32.mrb[0].mxu0
      %v796 = vadd.f32 0.0, %v795
      %v797 = vpop.f32.mrb[0].mxu0
      %v798 = vadd.f32 0.0, %v797
      %799 = vmatprep.mubr.f32.mxu0 0.0
      %800 = vmatmul.mubr.f32.gmra.mrb[0].mxu0 %v535
      %v801 = vpop.f32.mrb[0].mxu0
      %v802 = vadd.f32 0.0, %v801
      %v803 = vpop.f32.mrb[0].mxu0
      %v804 = vadd.f32 0.0, %v803
      %805 = vmatprep.mubr.f32.mxu0 0.0
      %806 = vmatmul.mubr.f32.gmra.mrb[0].mxu0 %v538
      %v807 = vpop.f32.mrb[0].mxu0
      %v808 = vadd.f32 0.0, %v807
      %v809 = vpop.f32.mrb[0].mxu0
      %v810 = vadd.f32 0.0, %v809
      %811 = vmatprep.mubr.f32.mxu0 0.0
      %812 = vmatmul.mubr.f32.gmra.mrb[0].mxu0 %v541
      %v813 = vpop.f32.mrb[0].mxu0
      %v814 = vadd.f32 0.0, %v813
      %v815 = vpop.f32.mrb[0].mxu0
      %v816 = vadd.f32 0.0, %v815
      %817 = vmatprep.mubr.f32.mxu0 0.0
      %818 = vmatmul.mubr.f32.gmra.mrb[0].mxu0 %v544
      %v819 = vpop.f32.mrb[0].mxu0
      %v820 = vadd.f32 0.0, %v819
      %v821 = vpop.f32.mrb[0].mxu0
      %v822 = vadd.f32 0.0, %v821
      %823 = vmatprep.mubr.f32.mxu0 0.0
      %824 = vmatmul.mubr.f32.gmra.mrb[0].mxu0 %v547
      %v825 = vpop.f32.mrb[0].mxu0
      %v826 = vadd.f32 0.0, %v825
      %v827 = vpop.f32.mrb[0].mxu0
      %v828 = vadd.f32 0.0, %v827
      %829 = vmatprep.mubr.f32.mxu0 0.0
      %830 = vmatmul.mubr.f32.gmra.mrb[0].mxu0 %v550
      %v831 = vpop.f32.mrb[0].mxu0
      %v832 = vadd.f32 0.0, %v831
      %v833 = vpop.f32.mrb[0].mxu0
      %v834 = vadd.f32 0.0, %v833
      %835 = vmatprep.mubr.f32.mxu0 0.0
      %836 = vmatmul.mubr.f32.gmra.mrb[0].mxu0 %v553
      %v837 = vpop.f32.mrb[0].mxu0
      %v838 = vadd.f32 0.0, %v837
      %v839 = vpop.f32.mrb[0].mxu0
      %v840 = vadd.f32 0.0, %v839
      %841 = vmatprep.mubr.f32.mxu0 0.0
      %842 = vmatmul.mubr.f32.gmra.mrb[0].mxu0 %v556
      %v843 = vpop.f32.mrb[0].mxu0
      %v844 = vadd.f32 0.0, %v843
      %v845 = vpop.f32.mrb[0].mxu0
      %v846 = vadd.f32 0.0, %v845
      %847 = vmatprep.mubr.f32.mxu0 0.0
      %848 = vmatmul.mubr.f32.gmra.mrb[0].mxu0 %v559
      %v849 = vpop.f32.mrb[0].mxu0
      %v850 = vadd.f32 0.0, %v849
      %v851 = vpop.f32.mrb[0].mxu0
      %v852 = vadd.f32 0.0, %v851
      %853 = vmatprep.mubr.f32.mxu0 0.0
      %854 = vmatmul.mubr.f32.gmra.mrb[0].mxu0 %v562
      %v855 = vpop.f32.mrb[0].mxu0
      %v856 = vadd.f32 0.0, %v855
      %v857 = vpop.f32.mrb[0].mxu0
      %v858 = vadd.f32 0.0, %v857
      %859 = vmatprep.mubr.f32.mxu0 0.0
      %860 = vmatmul.mubr.f32.gmra.mrb[0].mxu0 %v565
      %v861 = vpop.f32.mrb[0].mxu0
      %v862 = vadd.f32 0.0, %v861
      %v863 = vpop.f32.mrb[0].mxu0
      %v864 = vadd.f32 0.0, %v863
      %865 = vmatprep.mubr.f32.mxu0 0.0
      %866 = vmatmul.mubr.f32.gmra.mrb[0].mxu0 %v568
      %v867 = vpop.f32.mrb[0].mxu0
      %v868 = vadd.f32 0.0, %v867
      %v869 = vpop.f32.mrb[0].mxu0
      %v870 = vadd.f32 0.0, %v869
      %871 = vmatprep.mubr.f32.mxu0 0.0
      %872 = vmatmul.mubr.f32.gmra.mrb[0].mxu0 %v571
      %v873 = vpop.f32.mrb[0].mxu0
      %v874 = vadd.f32 0.0, %v873
      %v875 = vpop.f32.mrb[0].mxu0
      %v876 = vadd.f32 0.0, %v875
      %877 = vmatprep.mubr.f32.mxu0 0.0
      %878 = vmatmul.mubr.f32.gmra.mrb[0].mxu0 %v574
      %v879 = vpop.f32.mrb[0].mxu0
      %v880 = vadd.f32 0.0, %v879
      %v881 = vpop.f32.mrb[0].mxu0
      %v882 = vadd.f32 0.0, %v881
      %883 = vmatprep.mubr.f32.mxu0 0.0
      %884 = vmatmul.mubr.f32.gmra.mrb[0].mxu0 %v577
      %v885 = vpop.f32.mrb[0].mxu0
      %v886 = vadd.f32 0.0, %v885
      %v887 = vpop.f32.mrb[0].mxu0
      %v888 = vadd.f32 0.0, %v887
      %889 = vmatprep.mubr.f32.mxu0 0.0
      %890 = vmatmul.mubr.f32.gmra.mrb[0].mxu0 %v580
      %v891 = vpop.f32.mrb[0].mxu0
      %v892 = vadd.f32 0.0, %v891
      %v893 = vpop.f32.mrb[0].mxu0
      %v894 = vadd.f32 0.0, %v893
      %895 = vmatprep.mubr.f32.mxu0 0.0
      %896 = vmatmul.mubr.f32.gmra.mrb[0].mxu0 %v583
      %v897 = vpop.f32.mrb[0].mxu0
      %v898 = vadd.f32 0.0, %v897
      %v899 = vpop.f32.mrb[0].mxu0
      %v900 = vadd.f32 0.0, %v899
      %901 = vmatprep.mubr.f32.mxu0 0.0
      %902 = vmatmul.mubr.f32.gmra.mrb[0].mxu0 %v586
      %v903 = vpop.f32.mrb[0].mxu0
      %v904 = vadd.f32 0.0, %v903
      %v905 = vpop.f32.mrb[0].mxu0
      %v906 = vadd.f32 0.0, %v905
      %907 = vmatprep.mubr.f32.mxu0 0.0
      %908 = vmatmul.mubr.f32.gmra.mrb[0].mxu0 %v589
      %v909 = vpop.f32.mrb[0].mxu0
      %v910 = vadd.f32 0.0, %v909
      %v911 = vpop.f32.mrb[0].mxu0
      %v912 = vadd.f32 0.0, %v911
      %913 = vmatprep.mubr.f32.mxu0 0.0
      %914 = vmatmul.mubr.f32.gmra.mrb[0].mxu0 %v592
      %v915 = vpop.f32.mrb[0].mxu0
      %v916 = vadd.f32 0.0, %v915
      %v917 = vpop.f32.mrb[0].mxu0
      %v918 = vadd.f32 0.0, %v917
      %919 = vmatprep.mubr.f32.mxu0 0.0
      %920 = vmatmul.mubr.f32.gmra.mrb[0].mxu0 %v595
      %v921 = vpop.f32.mrb[0].mxu0
      %v922 = vadd.f32 0.0, %v921
      %v923 = vpop.f32.mrb[0].mxu0
      %v924 = vadd.f32 0.0, %v923
      %925 = vmatprep.mubr.f32.mxu0 0.0
      %926 = vmatmul.mubr.f32.gmra.mrb[0].mxu0 %v598
      %v927 = vpop.f32.mrb[0].mxu0
      %v928 = vadd.f32 0.0, %v927
      %v929 = vpop.f32.mrb[0].mxu0
      %v930 = vadd.f32 0.0, %v929
      %931 = vmatprep.mubr.f32.mxu0 0.0
      %932 = vmatmul.mubr.f32.gmra.mrb[0].mxu0 %v601
      %v933 = vpop.f32.mrb[0].mxu0
      %v934 = vadd.f32 0.0, %v933
      %v935 = vpop.f32.mrb[0].mxu0
      %v936 = vadd.f32 0.0, %v935
      %937 = vmatprep.mubr.f32.mxu0 0.0
      %938 = vmatmul.mubr.f32.gmra.mrb[0].mxu0 %v604
      %v939 = vpop.f32.mrb[0].mxu0
      %v940 = vadd.f32 0.0, %v939
      %v941 = vpop.f32.mrb[0].mxu0
      %v942 = vadd.f32 0.0, %v941
      %943 = vmatprep.mubr.f32.mxu0 0.0
      %944 = vmatmul.mubr.f32.gmra.mrb[0].mxu0 %v607
      %v945 = vpop.f32.mrb[0].mxu0
      %v946 = vadd.f32 0.0, %v945
      %v947 = vpop.f32.mrb[0].mxu0
      %v948 = vadd.f32 0.0, %v947
      %949 = vmatprep.mubr.f32.mxu0 0.0
      %950 = vmatmul.mubr.f32.gmra.mrb[0].mxu0 %v610
      %v951 = vpop.f32.mrb[0].mxu0
      %v952 = vadd.f32 0.0, %v951
      %v953 = vpop.f32.mrb[0].mxu0
      %v954 = vadd.f32 0.0, %v953
      %955 = vmatprep.mubr.f32.mxu0 0.0
      %956 = vmatmul.mubr.f32.gmra.mrb[0].mxu0 %v613
      %v957 = vpop.f32.mrb[0].mxu0
      %v958 = vadd.f32 0.0, %v957
      %v959 = vpop.f32.mrb[0].mxu0
      %v960 = vadd.f32 0.0, %v959
      %961 = vmatprep.mubr.f32.mxu0 0.0
      %962 = vmatmul.mubr.f32.gmra.mrb[0].mxu0 %v616
      %v963 = vpop.f32.mrb[0].mxu0
      %v964 = vadd.f32 0.0, %v963
      %v965 = vpop.f32.mrb[0].mxu0
      %v966 = vadd.f32 0.0, %v965
      %967 = vmatprep.mubr.f32.mxu0 0.0
      %968 = vmatmul.mubr.f32.gmra.mrb[0].mxu0 %v619
      %v969 = vpop.f32.mrb[0].mxu0
      %v970 = vadd.f32 0.0, %v969
      %v971 = vpop.f32.mrb[0].mxu0
      %v972 = vadd.f32 0.0, %v971
      %973 = vmatprep.mubr.f32.mxu0 0.0
      %974 = vmatmul.mubr.f32.gmra.mrb[0].mxu0 %v622
      %v975 = vpop.f32.mrb[0].mxu0
      %v976 = vadd.f32 0.0, %v975
      %v977 = vpop.f32.mrb[0].mxu0
      %v978 = vadd.f32 0.0, %v977
      %979 = vmatprep.mubr.f32.mxu0 0.0
      %980 = vmatmul.mubr.f32.gmra.mrb[0].mxu0 %v625
      %v981 = vpop.f32.mrb[0].mxu0
      %v982 = vadd.f32 0.0, %v981
      %v983 = vpop.f32.mrb[0].mxu0
      %v984 = vadd.f32 0.0, %v983
      %985 = vmatprep.mubr.f32.mxu0 0.0
      %986 = vmatmul.mubr.f32.gmra.mrb[0].mxu0 %v628
      %v987 = vpop.f32.mrb[0].mxu0
      %v988 = vadd.f32 0.0, %v987
      %v989 = vpop.f32.mrb[0].mxu0
      %v990 = vadd.f32 0.0, %v989
      %991 = vmatprep.mubr.f32.mxu0 0.0
      %992 = vmatmul.mubr.f32.gmra.mrb[0].mxu0 %v631
      %v993 = vpop.f32.mrb[0].mxu0
      %v994 = vadd.f32 0.0, %v993
      %v995 = vpop.f32.mrb[0].mxu0
      %v996 = vadd.f32 0.0, %v995
      %997 = vmatprep.mubr.f32.mxu0 0.0
      %998 = vmatmul.mubr.f32.gmra.mrb[0].mxu0 %v634
      %v999 = vpop.f32.mrb[0].mxu0
      %v1000 = vadd.f32 0.0, %v999
      %v1001 = vpop.f32.mrb[0].mxu0
      %v1002 = vadd.f32 0.0, %v1001
      %1003 = vmatprep.mubr.f32.mxu0 0.0
      %1004 = vmatmul.mubr.f32.gmra.mrb[0].mxu0 %v637
      %v1005 = vpop.f32.mrb[0].mxu0
      %v1006 = vadd.f32 0.0, %v1005
      %v1007 = vpop.f32.mrb[0].mxu0
      %v1008 = vadd.f32 0.0, %v1007
      %1009 = vmatprep.mubr.f32.mxu0 0.0
      %1010 = vmatmul.mubr.f32.gmra.mrb[0].mxu0 %v640
      %v1011 = vpop.f32.mrb[0].mxu0
      %v1012 = vadd.f32 0.0, %v1011
      %v1013 = vpop.f32.mrb[0].mxu0
      %v1014 = vadd.f32 0.0, %v1013
      %1015 = vmatprep.mubr.f32.mxu0 0.0
      %1016 = vmatmul.mubr.f32.gmra.mrb[0].mxu0 %v643
      %v1017 = vpop.f32.mrb[0].mxu0
      %v1018 = vadd.f32 0.0, %v1017
      %v1019 = vpop.f32.mrb[0].mxu0
      %v1020 = vadd.f32 0.0, %v1019
      %1021 = vmatprep.mubr.f32.mxu0 0.0
      %1022 = vmatmul.mubr.f32.gmra.mrb[0].mxu0 %v646
      %v1023 = vpop.f32.mrb[0].mxu0
      %v1024 = vadd.f32 0.0, %v1023
      %v1025 = vpop.f32.mrb[0].mxu0
      %v1026 = vadd.f32 0.0, %v1025
      %1027 = vmatprep.mubr.f32.mxu0 0.0
      %1028 = vmatmul.mubr.f32.gmra.mrb[0].mxu0 %v649
      %v1029 = vpop.f32.mrb[0].mxu0
      %v1030 = vadd.f32 0.0, %v1029
      %v1031 = vpop.f32.mrb[0].mxu0
      %v1032 = vadd.f32 0.0, %v1031
      %1033 = vmatprep.mubr.f32.mxu0 0.0
      %1034 = vmatmul.mubr.f32.gmra.mrb[0].mxu0 %v652
      %v1035 = vpop.f32.mrb[0].mxu0
      %v1036 = vadd.f32 0.0, %v1035
      %v1037 = vpop.f32.mrb[0].mxu0
      %v1038 = vadd.f32 0.0, %v1037
      %1039 = vmatprep.mubr.f32.mxu0 0.0
      %1040 = vmatmul.mubr.f32.gmra.mrb[0].mxu0 %v655
      %v1041 = vpop.f32.mrb[0].mxu0
      %v1042 = vadd.f32 0.0, %v1041
      %v1043 = vpop.f32.mrb[0].mxu0
      %v1044 = vadd.f32 0.0, %v1043
      %1045 = vmatprep.mubr.f32.mxu0 0.0
      %1046 = vmatmul.mubr.f32.gmra.mrb[0].mxu0 %v658
      %v1047 = vpop.f32.mrb[0].mxu0
      %v1048 = vadd.f32 0.0, %v1047
      %v1049 = vpop.f32.mrb[0].mxu0
      %v1050 = vadd.f32 0.0, %v1049
      %1051 = vmatprep.mubr.f32.mxu0 0.0
      %1052 = vmatmul.mubr.f32.gmra.mrb[0].mxu0 %v661
      %v1053 = vpop.f32.mrb[0].mxu0
      %v1054 = vadd.f32 0.0, %v1053
      %v1055 = vpop.f32.mrb[0].mxu0
      %v1056 = vadd.f32 0.0, %v1055
      %1057 = vmatprep.mubr.f32.mxu0 0.0
      %1058 = vmatmul.mubr.f32.gmra.mrb[0].mxu0 %v664
      %v1059 = vpop.f32.mrb[0].mxu0
      %v1060 = vadd.f32 0.0, %v1059
      %v1061 = vpop.f32.mrb[0].mxu0
      %v1062 = vadd.f32 0.0, %v1061
      %1063 = vmatprep.mubr.f32.mxu0 0.0
      %1064 = vmatmul.mubr.f32.gmra.mrb[0].mxu0 %v667
      %v1065 = vpop.f32.mrb[0].mxu0
      %v1066 = vadd.f32 0.0, %v1065
      %v1067 = vpop.f32.mrb[0].mxu0
      %v1068 = vadd.f32 0.0, %v1067
      %1069 = vmatprep.mubr.f32.mxu0 0.0
      %1070 = vmatmul.mubr.f32.gmra.mrb[0].mxu0 %v670
      %v1071 = vpop.f32.mrb[0].mxu0
      %v1072 = vadd.f32 0.0, %v1071
      %v1073 = vpop.f32.mrb[0].mxu0
      %v1074 = vadd.f32 0.0, %v1073
      %1075 = vmatprep.mubr.f32.mxu0 0.0
      %1076 = vmatmul.mubr.f32.gmra.mrb[0].mxu0 %v673
      %v1077 = vpop.f32.mrb[0].mxu0
      %v1078 = vadd.f32 0.0, %v1077
      %v1079 = vpop.f32.mrb[0].mxu0
      %v1080 = vadd.f32 0.0, %v1079
      %1081 = vmatprep.mubr.f32.mxu0 0.0
      %1082 = vmatmul.mubr.f32.gmra.mrb[0].mxu0 %v676
      %v1083 = vpop.f32.mrb[0].mxu0
      %v1084 = vadd.f32 0.0, %v1083
      %v1085 = vpop.f32.mrb[0].mxu0
      %v1086 = vadd.f32 0.0, %v1085
      %1087 = vmatprep.mubr.f32.mxu0 0.0
      %1088 = vmatmul.mubr.f32.gmra.mrb[0].mxu0 %v679
      %v1089 = vpop.f32.mrb[0].mxu0
      %v1090 = vadd.f32 0.0, %v1089
      %v1091 = vpop.f32.mrb[0].mxu0
      %v1092 = vadd.f32 0.0, %v1091
      %1093 = vmatprep.mubr.f32.mxu0 0.0
      %1094 = vmatmul.mubr.f32.gmra.mrb[0].mxu0 %v682
      %v1095 = vpop.f32.mrb[0].mxu0
      %v1096 = vadd.f32 0.0, %v1095
      %v1097 = vpop.f32.mrb[0].mxu0
      %v1098 = vadd.f32 0.0, %v1097
      %1099 = vmatprep.mubr.f32.mxu0 0.0
      %1100 = vmatmul.mubr.f32.gmra.mrb[0].mxu0 %v685
      %v1101 = vpop.f32.mrb[0].mxu0
      %v1102 = vadd.f32 0.0, %v1101
      %v1103 = vpop.f32.mrb[0].mxu0
      %v1104 = vadd.f32 0.0, %v1103
      %1105 = vmatprep.mubr.f32.mxu0 0.0
      %1106 = vmatmul.mubr.f32.gmra.mrb[0].mxu0 %v688
      %v1107 = vpop.f32.mrb[0].mxu0
      %v1108 = vadd.f32 0.0, %v1107
      %v1109 = vpop.f32.mrb[0].mxu0
      %v1110 = vadd.f32 0.0, %v1109
      %1111 = vmatprep.mubr.f32.mxu0 0.0
      %1112 = vmatmul.mubr.f32.gmra.mrb[0].mxu0 %v691
      %v1113 = vpop.f32.mrb[0].mxu0
      %v1114 = vadd.f32 0.0, %v1113
      %v1115 = vpop.f32.mrb[0].mxu0
      %v1116 = vadd.f32 0.0, %v1115
      %1117 = vmatprep.mubr.f32.mxu0 0.0
      %1118 = vmatmul.mubr.f32.gmra.mrb[0].mxu0 %v694
      %v1119 = vpop.f32.mrb[0].mxu0
      %v1120 = vadd.f32 0.0, %v1119
      %v1121 = vpop.f32.mrb[0].mxu0
      %v1122 = vadd.f32 0.0, %v1121
      %1123 = vmatprep.mubr.f32.mxu0 0.0
      %1124 = vmatmul.mubr.f32.gmra.mrb[0].mxu0 %v697
      %v1125 = vpop.f32.mrb[0].mxu0
      %v1126 = vadd.f32 0.0, %v1125
      %v1127 = vpop.f32.mrb[0].mxu0
      %v1128 = vadd.f32 0.0, %v1127
      %1129 = vmatprep.mubr.f32.mxu0 0.0
      %1130 = vmatmul.mubr.f32.gmra.mrb[0].mxu0 %v700
      %v1131 = vpop.f32.mrb[0].mxu0
      %v1132 = vadd.f32 0.0, %v1131
      %v1133 = vpop.f32.mrb[0].mxu0
      %v1134 = vadd.f32 0.0, %v1133
      %1135 = vmatprep.mubr.f32.mxu0 0.0
      %1136 = vmatmul.mubr.f32.gmra.mrb[0].mxu0 %v703
      %v1137 = vpop.f32.mrb[0].mxu0
      %v1138 = vadd.f32 0.0, %v1137
      %v1139 = vpop.f32.mrb[0].mxu0
      %v1140 = vadd.f32 0.0, %v1139
      %1141 = vmatprep.mubr.f32.mxu0 0.0
      %1142 = vmatmul.mubr.f32.gmra.mrb[0].mxu0 %v706
      %v1143 = vpop.f32.mrb[0].mxu0
      %v1144 = vadd.f32 0.0, %v1143
      %v1145 = vpop.f32.mrb[0].mxu0
      %v1146 = vadd.f32 0.0, %v1145
      %1147 = vmatprep.mubr.f32.mxu0 0.0
      %1148 = vmatmul.mubr.f32.gmra.mrb[0].mxu0 %v709
      %v1149 = vpop.f32.mrb[0].mxu0
      %v1150 = vadd.f32 0.0, %v1149
      %v1151 = vpop.f32.mrb[0].mxu0
      %v1152 = vadd.f32 0.0, %v1151
      %1153 = vmatprep.mubr.f32.mxu0 0.0
      %1154 = vmatmul.mubr.f32.gmra.mrb[0].mxu0 %v712
      %v1155 = vpop.f32.mrb[0].mxu0
      %v1156 = vadd.f32 0.0, %v1155
      %v1157 = vpop.f32.mrb[0].mxu0
      %v1158 = vadd.f32 0.0, %v1157
      %1159 = vmatprep.mubr.f32.mxu0 0.0
      %1160 = vmatmul.mubr.f32.gmra.mrb[0].mxu0 %v715
      %v1161 = vpop.f32.mrb[0].mxu0
      %v1162 = vadd.f32 0.0, %v1161
      %v1163 = vpop.f32.mrb[0].mxu0
      %v1164 = vadd.f32 0.0, %v1163
      %1165 = vdwg.mxu0
      %1166 = vmatprep.subr.mxu0 0.0
      %1167 = vmatpush1.msra.mxu0 %v520
      %1168 = vmatprep.subr.mxu0 0.0
      %1169 = vmatpush1.msra.mxu0 %v523
      %1170 = vmatprep.subr.mxu0 0.0
      %1171 = vmatpush1.msra.mxu0 0.0
      %1172 = vmatprep.subr.mxu0 0.0
      %1173 = vmatpush1.msra.mxu0 0.0
      %1174 = vmatprep.subr.mxu0 0.0
      %1175 = vmatpush1.msra.mxu0 0.0
      %1176 = vmatprep.subr.mxu0 0.0
      %1177 = vmatpush1.msra.mxu0 0.0
      %1178 = vmatprep.subr.mxu0 0.0
      %1179 = vmatpush1.msra.mxu0 0.0
      %1180 = vmatprep.subr.mxu0 0.0
      %1181 = vmatpush1.msra.mxu0 0.0
      %1182 = vmatprep.subr.mxu0 0.0
      %1183 = vmatpush1.msra.mxu0 0.0
      %1184 = vmatprep.subr.mxu0 0.0
      %1185 = vmatpush1.msra.mxu0 0.0
      %1186 = vmatprep.subr.mxu0 0.0
      %1187 = vmatpush1.msra.mxu0 0.0
      %1188 = vmatprep.subr.mxu0 0.0
      %1189 = vmatpush1.msra.mxu0 0.0
      %1190 = vmatprep.subr.mxu0 0.0
      %1191 = vmatpush1.msra.mxu0 0.0
      %1192 = vmatprep.subr.mxu0 0.0
      %1193 = vmatpush1.msra.mxu0 0.0
      %1194 = vmatprep.subr.mxu0 0.0
      %1195 = vmatpush1.msra.mxu0 0.0
      %1196 = vmatprep.subr.mxu0 0.0
      %1197 = vmatpush1.msra.mxu0 0.0
      %1198 = vmatprep.subr.mxu0 0.0
      %1199 = vmatpush1.msra.mxu0 0.0
      %1200 = vmatprep.subr.mxu0 0.0
      %1201 = vmatpush1.msra.mxu0 0.0
      %1202 = vmatprep.subr.mxu0 0.0
      %1203 = vmatpush1.msra.mxu0 0.0
      %1204 = vmatprep.subr.mxu0 0.0
      %1205 = vmatpush1.msra.mxu0 0.0
      %1206 = vmatprep.subr.mxu0 0.0
      %1207 = vmatpush1.msra.mxu0 0.0
      %1208 = vmatprep.subr.mxu0 0.0
      %1209 = vmatpush1.msra.mxu0 0.0
      %1210 = vmatprep.subr.mxu0 0.0
      %1211 = vmatpush1.msra.mxu0 0.0
      %1212 = vmatprep.subr.mxu0 0.0
      %1213 = vmatpush1.msra.mxu0 0.0
      %1214 = vmatprep.subr.mxu0 0.0
      %1215 = vmatpush1.msra.mxu0 0.0
      %1216 = vmatprep.subr.mxu0 0.0
      %1217 = vmatpush1.msra.mxu0 0.0
      %1218 = vmatprep.subr.mxu0 0.0
      %1219 = vmatpush1.msra.mxu0 0.0
      %1220 = vmatprep.subr.mxu0 0.0
      %1221 = vmatpush1.msra.mxu0 0.0
      %1222 = vmatprep.subr.mxu0 0.0
      %1223 = vmatpush1.msra.mxu0 0.0
      %1224 = vmatprep.subr.mxu0 0.0
      %1225 = vmatpush1.msra.mxu0 0.0
      %1226 = vmatprep.subr.mxu0 0.0
      %1227 = vmatpush1.msra.mxu0 0.0
      %1228 = vmatprep.subr.mxu0 0.0
      %1229 = vmatpush1.msra.mxu0 0.0
      %1230 = vmatprep.mubr.f32.mxu0 0.0
      %1231 = vmatmul.mubr.f32.gmra.mrb[0].mxu0 %v526
      %v1232 = vpop.f32.mrb[0].mxu0
      %v1233 = vadd.f32 0.0, %v1232
      %v1234 = vpop.f32.mrb[0].mxu0
      %1235 = vmatprep.mubr.f32.mxu0 0.0
      %1236 = vmatmul.mubr.f32.gmra.mrb[0].mxu0 %v529
      %v1237 = vpop.f32.mrb[0].mxu0
      %v1238 = vadd.f32 0.0, %v1237
      %v1239 = vpop.f32.mrb[0].mxu0
      %1240 = vmatprep.mubr.f32.mxu0 0.0
      %1241 = vmatmul.mubr.f32.gmra.mrb[0].mxu0 %v532
      %v1242 = vpop.f32.mrb[0].mxu0
      %v1243 = vadd.f32 0.0, %v1242
      %v1244 = vpop.f32.mrb[0].mxu0
      %1245 = vmatprep.mubr.f32.mxu0 0.0
      %1246 = vmatmul.mubr.f32.gmra.mrb[0].mxu0 %v535
      %v1247 = vpop.f32.mrb[0].mxu0
      %v1248 = vadd.f32 0.0, %v1247
      %v1249 = vpop.f32.mrb[0].mxu0
      %1250 = vmatprep.mubr.f32.mxu0 0.0
      %1251 = vmatmul.mubr.f32.gmra.mrb[0].mxu0 %v538
      %v1252 = vpop.f32.mrb[0].mxu0
      %v1253 = vadd.f32 0.0, %v1252
      %v1254 = vpop.f32.mrb[0].mxu0
      %1255 = vmatprep.mubr.f32.mxu0 0.0
      %1256 = vmatmul.mubr.f32.gmra.mrb[0].mxu0 %v541
      %v1257 = vpop.f32.mrb[0].mxu0
      %v1258 = vadd.f32 0.0, %v1257
      %v1259 = vpop.f32.mrb[0].mxu0
      %1260 = vmatprep.mubr.f32.mxu0 0.0
      %1261 = vmatmul.mubr.f32.gmra.mrb[0].mxu0 %v544
      %v1262 = vpop.f32.mrb[0].mxu0
      %v1263 = vadd.f32 0.0, %v1262
      %v1264 = vpop.f32.mrb[0].mxu0
      %1265 = vmatprep.mubr.f32.mxu0 0.0
      %1266 = vmatmul.mubr.f32.gmra.mrb[0].mxu0 %v547
      %v1267 = vpop.f32.mrb[0].mxu0
      %v1268 = vadd.f32 0.0, %v1267
      %v1269 = vpop.f32.mrb[0].mxu0
      %1270 = vmatprep.mubr.f32.mxu0 0.0
      %1271 = vmatmul.mubr.f32.gmra.mrb[0].mxu0 %v550
      %v1272 = vpop.f32.mrb[0].mxu0
      %v1273 = vadd.f32 0.0, %v1272
      %v1274 = vpop.f32.mrb[0].mxu0
      %1275 = vmatprep.mubr.f32.mxu0 0.0
      %1276 = vmatmul.mubr.f32.gmra.mrb[0].mxu0 %v553
      %v1277 = vpop.f32.mrb[0].mxu0
      %v1278 = vadd.f32 0.0, %v1277
      %v1279 = vpop.f32.mrb[0].mxu0
      %1280 = vmatprep.mubr.f32.mxu0 0.0
      %1281 = vmatmul.mubr.f32.gmra.mrb[0].mxu0 %v556
      %v1282 = vpop.f32.mrb[0].mxu0
      %v1283 = vadd.f32 0.0, %v1282
      %v1284 = vpop.f32.mrb[0].mxu0
      %1285 = vmatprep.mubr.f32.mxu0 0.0
      %1286 = vmatmul.mubr.f32.gmra.mrb[0].mxu0 %v559
      %v1287 = vpop.f32.mrb[0].mxu0
      %v1288 = vadd.f32 0.0, %v1287
      %v1289 = vpop.f32.mrb[0].mxu0
      %1290 = vmatprep.mubr.f32.mxu0 0.0
      %1291 = vmatmul.mubr.f32.gmra.mrb[0].mxu0 %v562
      %v1292 = vpop.f32.mrb[0].mxu0
      %v1293 = vadd.f32 0.0, %v1292
      %v1294 = vpop.f32.mrb[0].mxu0
      %1295 = vmatprep.mubr.f32.mxu0 0.0
      %1296 = vmatmul.mubr.f32.gmra.mrb[0].mxu0 %v565
      %v1297 = vpop.f32.mrb[0].mxu0
      %v1298 = vadd.f32 0.0, %v1297
      %v1299 = vpop.f32.mrb[0].mxu0
      %1300 = vmatprep.mubr.f32.mxu0 0.0
      %1301 = vmatmul.mubr.f32.gmra.mrb[0].mxu0 %v568
      %v1302 = vpop.f32.mrb[0].mxu0
      %v1303 = vadd.f32 0.0, %v1302
      %v1304 = vpop.f32.mrb[0].mxu0
      %1305 = vmatprep.mubr.f32.mxu0 0.0
      %1306 = vmatmul.mubr.f32.gmra.mrb[0].mxu0 %v571
      %v1307 = vpop.f32.mrb[0].mxu0
      %v1308 = vadd.f32 0.0, %v1307
      %v1309 = vpop.f32.mrb[0].mxu0
      %1310 = vmatprep.mubr.f32.mxu0 0.0
      %1311 = vmatmul.mubr.f32.gmra.mrb[0].mxu0 %v574
      %v1312 = vpop.f32.mrb[0].mxu0
      %v1313 = vadd.f32 0.0, %v1312
      %v1314 = vpop.f32.mrb[0].mxu0
      %1315 = vmatprep.mubr.f32.mxu0 0.0
      %1316 = vmatmul.mubr.f32.gmra.mrb[0].mxu0 %v577
      %v1317 = vpop.f32.mrb[0].mxu0
      %v1318 = vadd.f32 0.0, %v1317
      %v1319 = vpop.f32.mrb[0].mxu0
      %1320 = vmatprep.mubr.f32.mxu0 0.0
      %1321 = vmatmul.mubr.f32.gmra.mrb[0].mxu0 %v580
      %v1322 = vpop.f32.mrb[0].mxu0
      %v1323 = vadd.f32 0.0, %v1322
      %v1324 = vpop.f32.mrb[0].mxu0
      %1325 = vmatprep.mubr.f32.mxu0 0.0
      %1326 = vmatmul.mubr.f32.gmra.mrb[0].mxu0 %v583
      %v1327 = vpop.f32.mrb[0].mxu0
      %v1328 = vadd.f32 0.0, %v1327
      %v1329 = vpop.f32.mrb[0].mxu0
      %1330 = vmatprep.mubr.f32.mxu0 0.0
      %1331 = vmatmul.mubr.f32.gmra.mrb[0].mxu0 %v586
      %v1332 = vpop.f32.mrb[0].mxu0
      %v1333 = vadd.f32 0.0, %v1332
      %v1334 = vpop.f32.mrb[0].mxu0
      %1335 = vmatprep.mubr.f32.mxu0 0.0
      %1336 = vmatmul.mubr.f32.gmra.mrb[0].mxu0 %v589
      %v1337 = vpop.f32.mrb[0].mxu0
      %v1338 = vadd.f32 0.0, %v1337
      %v1339 = vpop.f32.mrb[0].mxu0
      %1340 = vmatprep.mubr.f32.mxu0 0.0
      %1341 = vmatmul.mubr.f32.gmra.mrb[0].mxu0 %v592
      %v1342 = vpop.f32.mrb[0].mxu0
      %v1343 = vadd.f32 0.0, %v1342
      %v1344 = vpop.f32.mrb[0].mxu0
      %1345 = vmatprep.mubr.f32.mxu0 0.0
      %1346 = vmatmul.mubr.f32.gmra.mrb[0].mxu0 %v595
      %v1347 = vpop.f32.mrb[0].mxu0
      %v1348 = vadd.f32 0.0, %v1347
      %v1349 = vpop.f32.mrb[0].mxu0
      %1350 = vmatprep.mubr.f32.mxu0 0.0
      %1351 = vmatmul.mubr.f32.gmra.mrb[0].mxu0 %v598
      %v1352 = vpop.f32.mrb[0].mxu0
      %v1353 = vadd.f32 0.0, %v1352
      %v1354 = vpop.f32.mrb[0].mxu0
      %1355 = vmatprep.mubr.f32.mxu0 0.0
      %1356 = vmatmul.mubr.f32.gmra.mrb[0].mxu0 %v601
      %v1357 = vpop.f32.mrb[0].mxu0
      %v1358 = vadd.f32 0.0, %v1357
      %v1359 = vpop.f32.mrb[0].mxu0
      %1360 = vmatprep.mubr.f32.mxu0 0.0
      %1361 = vmatmul.mubr.f32.gmra.mrb[0].mxu0 %v604
      %v1362 = vpop.f32.mrb[0].mxu0
      %v1363 = vadd.f32 0.0, %v1362
      %v1364 = vpop.f32.mrb[0].mxu0
      %1365 = vmatprep.mubr.f32.mxu0 0.0
      %1366 = vmatmul.mubr.f32.gmra.mrb[0].mxu0 %v607
      %v1367 = vpop.f32.mrb[0].mxu0
      %v1368 = vadd.f32 0.0, %v1367
      %v1369 = vpop.f32.mrb[0].mxu0
      %1370 = vmatprep.mubr.f32.mxu0 0.0
      %1371 = vmatmul.mubr.f32.gmra.mrb[0].mxu0 %v610
      %v1372 = vpop.f32.mrb[0].mxu0
      %v1373 = vadd.f32 0.0, %v1372
      %v1374 = vpop.f32.mrb[0].mxu0
      %1375 = vmatprep.mubr.f32.mxu0 0.0
      %1376 = vmatmul.mubr.f32.gmra.mrb[0].mxu0 %v613
      %v1377 = vpop.f32.mrb[0].mxu0
      %v1378 = vadd.f32 0.0, %v1377
      %v1379 = vpop.f32.mrb[0].mxu0
      %1380 = vmatprep.mubr.f32.mxu0 0.0
      %1381 = vmatmul.mubr.f32.gmra.mrb[0].mxu0 %v616
      %v1382 = vpop.f32.mrb[0].mxu0
      %v1383 = vadd.f32 0.0, %v1382
      %v1384 = vpop.f32.mrb[0].mxu0
      %1385 = vmatprep.mubr.f32.mxu0 0.0
      %1386 = vmatmul.mubr.f32.gmra.mrb[0].mxu0 %v619
      %v1387 = vpop.f32.mrb[0].mxu0
      %v1388 = vadd.f32 0.0, %v1387
      %v1389 = vpop.f32.mrb[0].mxu0
      %1390 = vmatprep.mubr.f32.mxu0 0.0
      %1391 = vmatmul.mubr.f32.gmra.mrb[0].mxu0 %v622
      %v1392 = vpop.f32.mrb[0].mxu0
      %v1393 = vadd.f32 0.0, %v1392
      %v1394 = vpop.f32.mrb[0].mxu0
      %1395 = vmatprep.mubr.f32.mxu0 0.0
      %1396 = vmatmul.mubr.f32.gmra.mrb[0].mxu0 %v625
      %v1397 = vpop.f32.mrb[0].mxu0
      %v1398 = vadd.f32 0.0, %v1397
      %v1399 = vpop.f32.mrb[0].mxu0
      %1400 = vmatprep.mubr.f32.mxu0 0.0
      %1401 = vmatmul.mubr.f32.gmra.mrb[0].mxu0 %v628
      %v1402 = vpop.f32.mrb[0].mxu0
      %v1403 = vadd.f32 0.0, %v1402
      %v1404 = vpop.f32.mrb[0].mxu0
      %1405 = vmatprep.mubr.f32.mxu0 0.0
      %1406 = vmatmul.mubr.f32.gmra.mrb[0].mxu0 %v631
      %v1407 = vpop.f32.mrb[0].mxu0
      %v1408 = vadd.f32 0.0, %v1407
      %v1409 = vpop.f32.mrb[0].mxu0
      %1410 = vmatprep.mubr.f32.mxu0 0.0
      %1411 = vmatmul.mubr.f32.gmra.mrb[0].mxu0 %v634
      %v1412 = vpop.f32.mrb[0].mxu0
      %v1413 = vadd.f32 0.0, %v1412
      %v1414 = vpop.f32.mrb[0].mxu0
      %1415 = vmatprep.mubr.f32.mxu0 0.0
      %1416 = vmatmul.mubr.f32.gmra.mrb[0].mxu0 %v637
      %v1417 = vpop.f32.mrb[0].mxu0
      %v1418 = vadd.f32 0.0, %v1417
      %v1419 = vpop.f32.mrb[0].mxu0
      %1420 = vmatprep.mubr.f32.mxu0 0.0
      %1421 = vmatmul.mubr.f32.gmra.mrb[0].mxu0 %v640
      %v1422 = vpop.f32.mrb[0].mxu0
      %v1423 = vadd.f32 0.0, %v1422
      %v1424 = vpop.f32.mrb[0].mxu0
      %1425 = vmatprep.mubr.f32.mxu0 0.0
      %1426 = vmatmul.mubr.f32.gmra.mrb[0].mxu0 %v643
      %v1427 = vpop.f32.mrb[0].mxu0
      %v1428 = vadd.f32 0.0, %v1427
      %v1429 = vpop.f32.mrb[0].mxu0
      %1430 = vmatprep.mubr.f32.mxu0 0.0
      %1431 = vmatmul.mubr.f32.gmra.mrb[0].mxu0 %v646
      %v1432 = vpop.f32.mrb[0].mxu0
      %v1433 = vadd.f32 0.0, %v1432
      %v1434 = vpop.f32.mrb[0].mxu0
      %1435 = vmatprep.mubr.f32.mxu0 0.0
      %1436 = vmatmul.mubr.f32.gmra.mrb[0].mxu0 %v649
      %v1437 = vpop.f32.mrb[0].mxu0
      %v1438 = vadd.f32 0.0, %v1437
      %v1439 = vpop.f32.mrb[0].mxu0
      %1440 = vmatprep.mubr.f32.mxu0 0.0
      %1441 = vmatmul.mubr.f32.gmra.mrb[0].mxu0 %v652
      %v1442 = vpop.f32.mrb[0].mxu0
      %v1443 = vadd.f32 0.0, %v1442
      %v1444 = vpop.f32.mrb[0].mxu0
      %1445 = vmatprep.mubr.f32.mxu0 0.0
      %1446 = vmatmul.mubr.f32.gmra.mrb[0].mxu0 %v655
      %v1447 = vpop.f32.mrb[0].mxu0
      %v1448 = vadd.f32 0.0, %v1447
      %v1449 = vpop.f32.mrb[0].mxu0
      %1450 = vmatprep.mubr.f32.mxu0 0.0
      %1451 = vmatmul.mubr.f32.gmra.mrb[0].mxu0 %v658
      %v1452 = vpop.f32.mrb[0].mxu0
      %v1453 = vadd.f32 0.0, %v1452
      %v1454 = vpop.f32.mrb[0].mxu0
      %1455 = vmatprep.mubr.f32.mxu0 0.0
      %1456 = vmatmul.mubr.f32.gmra.mrb[0].mxu0 %v661
      %v1457 = vpop.f32.mrb[0].mxu0
      %v1458 = vadd.f32 0.0, %v1457
      %v1459 = vpop.f32.mrb[0].mxu0
      %1460 = vmatprep.mubr.f32.mxu0 0.0
      %1461 = vmatmul.mubr.f32.gmra.mrb[0].mxu0 %v664
      %v1462 = vpop.f32.mrb[0].mxu0
      %v1463 = vadd.f32 0.0, %v1462
      %v1464 = vpop.f32.mrb[0].mxu0
      %1465 = vmatprep.mubr.f32.mxu0 0.0
      %1466 = vmatmul.mubr.f32.gmra.mrb[0].mxu0 %v667
      %v1467 = vpop.f32.mrb[0].mxu0
      %v1468 = vadd.f32 0.0, %v1467
      %v1469 = vpop.f32.mrb[0].mxu0
      %1470 = vmatprep.mubr.f32.mxu0 0.0
      %1471 = vmatmul.mubr.f32.gmra.mrb[0].mxu0 %v670
      %v1472 = vpop.f32.mrb[0].mxu0
      %v1473 = vadd.f32 0.0, %v1472
      %v1474 = vpop.f32.mrb[0].mxu0
      %1475 = vmatprep.mubr.f32.mxu0 0.0
      %1476 = vmatmul.mubr.f32.gmra.mrb[0].mxu0 %v673
      %v1477 = vpop.f32.mrb[0].mxu0
      %v1478 = vadd.f32 0.0, %v1477
      %v1479 = vpop.f32.mrb[0].mxu0
      %1480 = vmatprep.mubr.f32.mxu0 0.0
      %1481 = vmatmul.mubr.f32.gmra.mrb[0].mxu0 %v676
      %v1482 = vpop.f32.mrb[0].mxu0
      %v1483 = vadd.f32 0.0, %v1482
      %v1484 = vpop.f32.mrb[0].mxu0
      %1485 = vmatprep.mubr.f32.mxu0 0.0
      %1486 = vmatmul.mubr.f32.gmra.mrb[0].mxu0 %v679
      %v1487 = vpop.f32.mrb[0].mxu0
      %v1488 = vadd.f32 0.0, %v1487
      %v1489 = vpop.f32.mrb[0].mxu0
      %1490 = vmatprep.mubr.f32.mxu0 0.0
      %1491 = vmatmul.mubr.f32.gmra.mrb[0].mxu0 %v682
      %v1492 = vpop.f32.mrb[0].mxu0
      %v1493 = vadd.f32 0.0, %v1492
      %v1494 = vpop.f32.mrb[0].mxu0
      %1495 = vmatprep.mubr.f32.mxu0 0.0
      %1496 = vmatmul.mubr.f32.gmra.mrb[0].mxu0 %v685
      %v1497 = vpop.f32.mrb[0].mxu0
      %v1498 = vadd.f32 0.0, %v1497
      %v1499 = vpop.f32.mrb[0].mxu0
      %1500 = vmatprep.mubr.f32.mxu0 0.0
      %1501 = vmatmul.mubr.f32.gmra.mrb[0].mxu0 %v688
      %v1502 = vpop.f32.mrb[0].mxu0
      %v1503 = vadd.f32 0.0, %v1502
      %v1504 = vpop.f32.mrb[0].mxu0
      %1505 = vmatprep.mubr.f32.mxu0 0.0
      %1506 = vmatmul.mubr.f32.gmra.mrb[0].mxu0 %v691
      %v1507 = vpop.f32.mrb[0].mxu0
      %v1508 = vadd.f32 0.0, %v1507
      %v1509 = vpop.f32.mrb[0].mxu0
      %1510 = vmatprep.mubr.f32.mxu0 0.0
      %1511 = vmatmul.mubr.f32.gmra.mrb[0].mxu0 %v694
      %v1512 = vpop.f32.mrb[0].mxu0
      %v1513 = vadd.f32 0.0, %v1512
      %v1514 = vpop.f32.mrb[0].mxu0
      %1515 = vmatprep.mubr.f32.mxu0 0.0
      %1516 = vmatmul.mubr.f32.gmra.mrb[0].mxu0 %v697
      %v1517 = vpop.f32.mrb[0].mxu0
      %v1518 = vadd.f32 0.0, %v1517
      %v1519 = vpop.f32.mrb[0].mxu0
      %1520 = vmatprep.mubr.f32.mxu0 0.0
      %1521 = vmatmul.mubr.f32.gmra.mrb[0].mxu0 %v700
      %v1522 = vpop.f32.mrb[0].mxu0
      %v1523 = vadd.f32 0.0, %v1522
      %v1524 = vpop.f32.mrb[0].mxu0
      %1525 = vmatprep.mubr.f32.mxu0 0.0
      %1526 = vmatmul.mubr.f32.gmra.mrb[0].mxu0 %v703
      %v1527 = vpop.f32.mrb[0].mxu0
      %v1528 = vadd.f32 0.0, %v1527
      %v1529 = vpop.f32.mrb[0].mxu0
      %1530 = vmatprep.mubr.f32.mxu0 0.0
      %1531 = vmatmul.mubr.f32.gmra.mrb[0].mxu0 %v706
      %v1532 = vpop.f32.mrb[0].mxu0
      %v1533 = vadd.f32 0.0, %v1532
      %v1534 = vpop.f32.mrb[0].mxu0
      %1535 = vmatprep.mubr.f32.mxu0 0.0
      %1536 = vmatmul.mubr.f32.gmra.mrb[0].mxu0 %v709
      %v1537 = vpop.f32.mrb[0].mxu0
      %v1538 = vadd.f32 0.0, %v1537
      %v1539 = vpop.f32.mrb[0].mxu0
      %1540 = vmatprep.mubr.f32.mxu0 0.0
      %1541 = vmatmul.mubr.f32.gmra.mrb[0].mxu0 %v712
      %v1542 = vpop.f32.mrb[0].mxu0
      %v1543 = vadd.f32 0.0, %v1542
      %v1544 = vpop.f32.mrb[0].mxu0
      %1545 = vmatprep.mubr.f32.mxu0 0.0
      %1546 = vmatmul.mubr.f32.gmra.mrb[0].mxu0 %v715
      %v1547 = vpop.f32.mrb[0].mxu0
      %v1548 = vadd.f32 0.0, %v1547
      %v1549 = vpop.f32.mrb[0].mxu0
      %1550 = vdwg.mxu0
      %1551 = vrot.lane.b32.xlu0 %v390, 32
      %v1552 = vpop.permute.xlu0 %1551
      %1553 = vrot.lane.b32.xlu0 %v391, 32
      %v1554 = vpop.permute.xlu0 %1553
      %1555 = vrot.lane.b32.xlu0 %v392, 32
      %v1556 = vpop.permute.xlu0 %1555
      %1557 = vrot.lane.b32.xlu0 %v393, 32
      %v1558 = vpop.permute.xlu0 %1557
      %1559 = vrot.lane.b32.xlu0 %v394, 32
      %v1560 = vpop.permute.xlu0 %1559
      %1561 = vrot.lane.b32.xlu0 %v395, 32
      %v1562 = vpop.permute.xlu0 %1561
      %1563 = vrot.lane.b32.xlu0 %v396, 32
      %v1564 = vpop.permute.xlu0 %1563
      %1565 = vrot.lane.b32.xlu0 %v397, 32
      %v1566 = vpop.permute.xlu0 %1565
      %1567 = vrot.lane.b32.xlu0 %v398, 32
      %v1568 = vpop.permute.xlu0 %1567
      %1569 = vrot.lane.b32.xlu0 %v399, 32
      %v1570 = vpop.permute.xlu0 %1569
      %1571 = vrot.lane.b32.xlu0 %v400, 32
      %v1572 = vpop.permute.xlu0 %1571
      %1573 = vrot.lane.b32.xlu0 %v401, 32
      %v1574 = vpop.permute.xlu0 %1573
      %1575 = vrot.lane.b32.xlu0 %v402, 32
      %v1576 = vpop.permute.xlu0 %1575
      %1577 = vrot.lane.b32.xlu0 %v403, 32
      %v1578 = vpop.permute.xlu0 %1577
      %1579 = vrot.lane.b32.xlu0 %v404, 32
      %v1580 = vpop.permute.xlu0 %1579
      %1581 = vrot.lane.b32.xlu0 %v405, 32
      %v1582 = vpop.permute.xlu0 %1581
      %1583 = vrot.lane.b32.xlu0 %v406, 32
      %v1584 = vpop.permute.xlu0 %1583
      %1585 = vrot.lane.b32.xlu0 %v407, 32
      %v1586 = vpop.permute.xlu0 %1585
      %1587 = vrot.lane.b32.xlu0 %v408, 32
      %v1588 = vpop.permute.xlu0 %1587
      %1589 = vrot.lane.b32.xlu0 %v409, 32
      %v1590 = vpop.permute.xlu0 %1589
      %1591 = vrot.lane.b32.xlu0 %v410, 32
      %v1592 = vpop.permute.xlu0 %1591
      %1593 = vrot.lane.b32.xlu0 %v411, 32
      %v1594 = vpop.permute.xlu0 %1593
      %1595 = vrot.lane.b32.xlu0 %v412, 32
      %v1596 = vpop.permute.xlu0 %1595
      %1597 = vrot.lane.b32.xlu0 %v413, 32
      %v1598 = vpop.permute.xlu0 %1597
      %1599 = vrot.lane.b32.xlu0 %v414, 32
      %v1600 = vpop.permute.xlu0 %1599
      %1601 = vrot.lane.b32.xlu0 %v415, 32
      %v1602 = vpop.permute.xlu0 %1601
      %1603 = vrot.lane.b32.xlu0 %v416, 32
      %v1604 = vpop.permute.xlu0 %1603
      %1605 = vrot.lane.b32.xlu0 %v417, 32
      %v1606 = vpop.permute.xlu0 %1605
      %1607 = vrot.lane.b32.xlu0 %v418, 32
      %v1608 = vpop.permute.xlu0 %1607
      %1609 = vrot.lane.b32.xlu0 %v419, 32
      %v1610 = vpop.permute.xlu0 %1609
      %1611 = vrot.lane.b32.xlu0 %v420, 32
      %v1612 = vpop.permute.xlu0 %1611
      %1613 = vrot.lane.b32.xlu0 %v421, 32
      %v1614 = vpop.permute.xlu0 %1613
      %1615 = vrot.lane.b32.xlu0 %v422, 32
      %v1616 = vpop.permute.xlu0 %1615
      %1617 = vrot.lane.b32.xlu0 %v423, 32
      %v1618 = vpop.permute.xlu0 %1617
      %1619 = vrot.lane.b32.xlu0 %v424, 32
      %v1620 = vpop.permute.xlu0 %1619
      %1621 = vrot.lane.b32.xlu0 %v425, 32
      %v1622 = vpop.permute.xlu0 %1621
      %1623 = vrot.lane.b32.xlu0 %v426, 32
      %v1624 = vpop.permute.xlu0 %1623
      %1625 = vrot.lane.b32.xlu0 %v427, 32
      %v1626 = vpop.permute.xlu0 %1625
      %1627 = vrot.lane.b32.xlu0 %v428, 32
      %v1628 = vpop.permute.xlu0 %1627
      %1629 = vrot.lane.b32.xlu0 %v429, 32
      %v1630 = vpop.permute.xlu0 %1629
      %1631 = vrot.lane.b32.xlu0 %v430, 32
      %v1632 = vpop.permute.xlu0 %1631
      %1633 = vrot.lane.b32.xlu0 %v431, 32
      %v1634 = vpop.permute.xlu0 %1633
      %1635 = vrot.lane.b32.xlu0 %v432, 32
      %v1636 = vpop.permute.xlu0 %1635
      %1637 = vrot.lane.b32.xlu0 %v433, 32
      %v1638 = vpop.permute.xlu0 %1637
      %1639 = vrot.lane.b32.xlu0 %v434, 32
      %v1640 = vpop.permute.xlu0 %1639
      %1641 = vrot.lane.b32.xlu0 %v435, 32
      %v1642 = vpop.permute.xlu0 %1641
      %1643 = vrot.lane.b32.xlu0 %v436, 32
      %v1644 = vpop.permute.xlu0 %1643
      %1645 = vrot.lane.b32.xlu0 %v437, 32
      %v1646 = vpop.permute.xlu0 %1645
      %1647 = vrot.lane.b32.xlu0 %v438, 32
      %v1648 = vpop.permute.xlu0 %1647
      %1649 = vrot.lane.b32.xlu0 %v439, 32
      %v1650 = vpop.permute.xlu0 %1649
      %1651 = vrot.lane.b32.xlu0 %v440, 32
      %v1652 = vpop.permute.xlu0 %1651
      %1653 = vrot.lane.b32.xlu0 %v441, 32
      %v1654 = vpop.permute.xlu0 %1653
      %1655 = vrot.lane.b32.xlu0 %v442, 32
      %v1656 = vpop.permute.xlu0 %1655
      %1657 = vrot.lane.b32.xlu0 %v443, 32
      %v1658 = vpop.permute.xlu0 %1657
      %1659 = vrot.lane.b32.xlu0 %v444, 32
      %v1660 = vpop.permute.xlu0 %1659
      %1661 = vrot.lane.b32.xlu0 %v445, 32
      %v1662 = vpop.permute.xlu0 %1661
      %1663 = vrot.lane.b32.xlu0 %v446, 32
      %v1664 = vpop.permute.xlu0 %1663
      %1665 = vrot.lane.b32.xlu0 %v447, 32
      %v1666 = vpop.permute.xlu0 %1665
      %1667 = vrot.lane.b32.xlu0 %v448, 32
      %v1668 = vpop.permute.xlu0 %1667
      %1669 = vrot.lane.b32.xlu0 %v449, 32
      %v1670 = vpop.permute.xlu0 %1669
      %1671 = vrot.lane.b32.xlu0 %v450, 32
      %v1672 = vpop.permute.xlu0 %1671
      %1673 = vrot.lane.b32.xlu0 %v451, 32
      %v1674 = vpop.permute.xlu0 %1673
      %1675 = vrot.lane.b32.xlu0 %v452, 32
      %v1676 = vpop.permute.xlu0 %1675
      %1677 = vrot.lane.b32.xlu0 %v453, 32
      %v1678 = vpop.permute.xlu0 %1677
      %v1679 = vmul.f32 %v784, %v1552
      %v1680 = vmul.f32 %v790, %v1554
      %v1681 = vmul.f32 %v796, %v1556
      %v1682 = vmul.f32 %v802, %v1558
      %v1683 = vmul.f32 %v808, %v1560
      %v1684 = vmul.f32 %v814, %v1562
      %v1685 = vmul.f32 %v820, %v1564
      %v1686 = vmul.f32 %v826, %v1566
      %v1687 = vmul.f32 %v832, %v1568
      %v1688 = vmul.f32 %v838, %v1570
      %v1689 = vmul.f32 %v844, %v1572
      %v1690 = vmul.f32 %v850, %v1574
      %v1691 = vmul.f32 %v856, %v1576
      %v1692 = vmul.f32 %v862, %v1578
      %v1693 = vmul.f32 %v868, %v1580
      %v1694 = vmul.f32 %v874, %v1582
      %v1695 = vmul.f32 %v880, %v1584
      %v1696 = vmul.f32 %v886, %v1586
      %v1697 = vmul.f32 %v892, %v1588
      %v1698 = vmul.f32 %v898, %v1590
      %v1699 = vmul.f32 %v904, %v1592
      %v1700 = vmul.f32 %v910, %v1594
      %v1701 = vmul.f32 %v916, %v1596
      %v1702 = vmul.f32 %v922, %v1598
      %v1703 = vmul.f32 %v928, %v1600
      %v1704 = vmul.f32 %v934, %v1602
      %v1705 = vmul.f32 %v940, %v1604
      %v1706 = vmul.f32 %v946, %v1606
      %v1707 = vmul.f32 %v952, %v1608
      %v1708 = vmul.f32 %v958, %v1610
      %v1709 = vmul.f32 %v964, %v1612
      %v1710 = vmul.f32 %v970, %v1614
      %v1711 = vmul.f32 %v976, %v1616
      %v1712 = vmul.f32 %v982, %v1618
      %v1713 = vmul.f32 %v988, %v1620
      %v1714 = vmul.f32 %v994, %v1622
      %v1715 = vmul.f32 %v1000, %v1624
      %v1716 = vmul.f32 %v1006, %v1626
      %v1717 = vmul.f32 %v1012, %v1628
      %v1718 = vmul.f32 %v1018, %v1630
      %v1719 = vmul.f32 %v1024, %v1632
      %v1720 = vmul.f32 %v1030, %v1634
      %v1721 = vmul.f32 %v1036, %v1636
      %v1722 = vmul.f32 %v1042, %v1638
      %v1723 = vmul.f32 %v1048, %v1640
      %v1724 = vmul.f32 %v1054, %v1642
      %v1725 = vmul.f32 %v1060, %v1644
      %v1726 = vmul.f32 %v1066, %v1646
      %v1727 = vmul.f32 %v1072, %v1648
      %v1728 = vmul.f32 %v1078, %v1650
      %v1729 = vmul.f32 %v1084, %v1652
      %v1730 = vmul.f32 %v1090, %v1654
      %v1731 = vmul.f32 %v1096, %v1656
      %v1732 = vmul.f32 %v1102, %v1658
      %v1733 = vmul.f32 %v1108, %v1660
      %v1734 = vmul.f32 %v1114, %v1662
      %v1735 = vmul.f32 %v1120, %v1664
      %v1736 = vmul.f32 %v1126, %v1666
      %v1737 = vmul.f32 %v1132, %v1668
      %v1738 = vmul.f32 %v1138, %v1670
      %v1739 = vmul.f32 %v1144, %v1672
      %v1740 = vmul.f32 %v1150, %v1674
      %v1741 = vmul.f32 %v1156, %v1676
      %v1742 = vmul.f32 %v1162, %v1678
      %v1743 = vadd.f32 %v1679, 0.0
      %v1744 = vadd.f32 %v1680, 0.0
      %v1745 = vadd.f32 %v1681, 0.0
      %v1746 = vadd.f32 %v1682, 0.0
      %v1747 = vadd.f32 %v1683, 0.0
      %v1748 = vadd.f32 %v1684, 0.0
      %v1749 = vadd.f32 %v1685, 0.0
      %v1750 = vadd.f32 %v1686, 0.0
      %v1751 = vadd.f32 %v1687, 0.0
      %v1752 = vadd.f32 %v1688, 0.0
      %v1753 = vadd.f32 %v1689, 0.0
      %v1754 = vadd.f32 %v1690, 0.0
      %v1755 = vadd.f32 %v1691, 0.0
      %v1756 = vadd.f32 %v1692, 0.0
      %v1757 = vadd.f32 %v1693, 0.0
      %v1758 = vadd.f32 %v1694, 0.0
      %v1759 = vadd.f32 %v1695, 0.0
      %v1760 = vadd.f32 %v1696, 0.0
      %v1761 = vadd.f32 %v1697, 0.0
      %v1762 = vadd.f32 %v1698, 0.0
      %v1763 = vadd.f32 %v1699, 0.0
      %v1764 = vadd.f32 %v1700, 0.0
      %v1765 = vadd.f32 %v1701, 0.0
      %v1766 = vadd.f32 %v1702, 0.0
      %v1767 = vadd.f32 %v1703, 0.0
      %v1768 = vadd.f32 %v1704, 0.0
      %v1769 = vadd.f32 %v1705, 0.0
      %v1770 = vadd.f32 %v1706, 0.0
      %v1771 = vadd.f32 %v1707, 0.0
      %v1772 = vadd.f32 %v1708, 0.0
      %v1773 = vadd.f32 %v1709, 0.0
      %v1774 = vadd.f32 %v1710, 0.0
      %v1775 = vadd.f32 %v1711, 0.0
      %v1776 = vadd.f32 %v1712, 0.0
      %v1777 = vadd.f32 %v1713, 0.0
      %v1778 = vadd.f32 %v1714, 0.0
      %v1779 = vadd.f32 %v1715, 0.0
      %v1780 = vadd.f32 %v1716, 0.0
      %v1781 = vadd.f32 %v1717, 0.0
      %v1782 = vadd.f32 %v1718, 0.0
      %v1783 = vadd.f32 %v1719, 0.0
      %v1784 = vadd.f32 %v1720, 0.0
      %v1785 = vadd.f32 %v1721, 0.0
      %v1786 = vadd.f32 %v1722, 0.0
      %v1787 = vadd.f32 %v1723, 0.0
      %v1788 = vadd.f32 %v1724, 0.0
      %v1789 = vadd.f32 %v1725, 0.0
      %v1790 = vadd.f32 %v1726, 0.0
      %v1791 = vadd.f32 %v1727, 0.0
      %v1792 = vadd.f32 %v1728, 0.0
      %v1793 = vadd.f32 %v1729, 0.0
      %v1794 = vadd.f32 %v1730, 0.0
      %v1795 = vadd.f32 %v1731, 0.0
      %v1796 = vadd.f32 %v1732, 0.0
      %v1797 = vadd.f32 %v1733, 0.0
      %v1798 = vadd.f32 %v1734, 0.0
      %v1799 = vadd.f32 %v1735, 0.0
      %v1800 = vadd.f32 %v1736, 0.0
      %v1801 = vadd.f32 %v1737, 0.0
      %v1802 = vadd.f32 %v1738, 0.0
      %v1803 = vadd.f32 %v1739, 0.0
      %v1804 = vadd.f32 %v1740, 0.0
      %v1805 = vadd.f32 %v1741, 0.0
      %v1806 = vadd.f32 %v1742, 0.0
      %v1807 = vmul.f32 %v786, %v390
      %v1808 = vmul.f32 %v792, %v391
      %v1809 = vmul.f32 %v798, %v392
      %v1810 = vmul.f32 %v804, %v393
      %v1811 = vmul.f32 %v810, %v394
      %v1812 = vmul.f32 %v816, %v395
      %v1813 = vmul.f32 %v822, %v396
      %v1814 = vmul.f32 %v828, %v397
      %v1815 = vmul.f32 %v834, %v398
      %v1816 = vmul.f32 %v840, %v399
      %v1817 = vmul.f32 %v846, %v400
      %v1818 = vmul.f32 %v852, %v401
      %v1819 = vmul.f32 %v858, %v402
      %v1820 = vmul.f32 %v864, %v403
      %v1821 = vmul.f32 %v870, %v404
      %v1822 = vmul.f32 %v876, %v405
      %v1823 = vmul.f32 %v882, %v406
      %v1824 = vmul.f32 %v888, %v407
      %v1825 = vmul.f32 %v894, %v408
      %v1826 = vmul.f32 %v900, %v409
      %v1827 = vmul.f32 %v906, %v410
      %v1828 = vmul.f32 %v912, %v411
      %v1829 = vmul.f32 %v918, %v412
      %v1830 = vmul.f32 %v924, %v413
      %v1831 = vmul.f32 %v930, %v414
      %v1832 = vmul.f32 %v936, %v415
      %v1833 = vmul.f32 %v942, %v416
      %v1834 = vmul.f32 %v948, %v417
      %v1835 = vmul.f32 %v954, %v418
      %v1836 = vmul.f32 %v960, %v419
      %v1837 = vmul.f32 %v966, %v420
      %v1838 = vmul.f32 %v972, %v421
      %v1839 = vmul.f32 %v978, %v422
      %v1840 = vmul.f32 %v984, %v423
      %v1841 = vmul.f32 %v990, %v424
      %v1842 = vmul.f32 %v996, %v425
      %v1843 = vmul.f32 %v1002, %v426
      %v1844 = vmul.f32 %v1008, %v427
      %v1845 = vmul.f32 %v1014, %v428
      %v1846 = vmul.f32 %v1020, %v429
      %v1847 = vmul.f32 %v1026, %v430
      %v1848 = vmul.f32 %v1032, %v431
      %v1849 = vmul.f32 %v1038, %v432
      %v1850 = vmul.f32 %v1044, %v433
      %v1851 = vmul.f32 %v1050, %v434
      %v1852 = vmul.f32 %v1056, %v435
      %v1853 = vmul.f32 %v1062, %v436
      %v1854 = vmul.f32 %v1068, %v437
      %v1855 = vmul.f32 %v1074, %v438
      %v1856 = vmul.f32 %v1080, %v439
      %v1857 = vmul.f32 %v1086, %v440
      %v1858 = vmul.f32 %v1092, %v441
      %v1859 = vmul.f32 %v1098, %v442
      %v1860 = vmul.f32 %v1104, %v443
      %v1861 = vmul.f32 %v1110, %v444
      %v1862 = vmul.f32 %v1116, %v445
      %v1863 = vmul.f32 %v1122, %v446
      %v1864 = vmul.f32 %v1128, %v447
      %v1865 = vmul.f32 %v1134, %v448
      %v1866 = vmul.f32 %v1140, %v449
      %v1867 = vmul.f32 %v1146, %v450
      %v1868 = vmul.f32 %v1152, %v451
      %v1869 = vmul.f32 %v1158, %v452
      %v1870 = vmul.f32 %v1164, %v453
      %v1871 = vadd.f32 %v1743, %v1807
      %v1872 = vadd.f32 %v1744, %v1808
      %v1873 = vadd.f32 %v1745, %v1809
      %v1874 = vadd.f32 %v1746, %v1810
      %v1875 = vadd.f32 %v1747, %v1811
      %v1876 = vadd.f32 %v1748, %v1812
      %v1877 = vadd.f32 %v1749, %v1813
      %v1878 = vadd.f32 %v1750, %v1814
      %v1879 = vadd.f32 %v1751, %v1815
      %v1880 = vadd.f32 %v1752, %v1816
      %v1881 = vadd.f32 %v1753, %v1817
      %v1882 = vadd.f32 %v1754, %v1818
      %v1883 = vadd.f32 %v1755, %v1819
      %v1884 = vadd.f32 %v1756, %v1820
      %v1885 = vadd.f32 %v1757, %v1821
      %v1886 = vadd.f32 %v1758, %v1822
      %v1887 = vadd.f32 %v1759, %v1823
      %v1888 = vadd.f32 %v1760, %v1824
      %v1889 = vadd.f32 %v1761, %v1825
      %v1890 = vadd.f32 %v1762, %v1826
      %v1891 = vadd.f32 %v1763, %v1827
      %v1892 = vadd.f32 %v1764, %v1828
      %v1893 = vadd.f32 %v1765, %v1829
      %v1894 = vadd.f32 %v1766, %v1830
      %v1895 = vadd.f32 %v1767, %v1831
      %v1896 = vadd.f32 %v1768, %v1832
      %v1897 = vadd.f32 %v1769, %v1833
      %v1898 = vadd.f32 %v1770, %v1834
      %v1899 = vadd.f32 %v1771, %v1835
      %v1900 = vadd.f32 %v1772, %v1836
      %v1901 = vadd.f32 %v1773, %v1837
      %v1902 = vadd.f32 %v1774, %v1838
      %v1903 = vadd.f32 %v1775, %v1839
      %v1904 = vadd.f32 %v1776, %v1840
      %v1905 = vadd.f32 %v1777, %v1841
      %v1906 = vadd.f32 %v1778, %v1842
      %v1907 = vadd.f32 %v1779, %v1843
      %v1908 = vadd.f32 %v1780, %v1844
      %v1909 = vadd.f32 %v1781, %v1845
      %v1910 = vadd.f32 %v1782, %v1846
      %v1911 = vadd.f32 %v1783, %v1847
      %v1912 = vadd.f32 %v1784, %v1848
      %v1913 = vadd.f32 %v1785, %v1849
      %v1914 = vadd.f32 %v1786, %v1850
      %v1915 = vadd.f32 %v1787, %v1851
      %v1916 = vadd.f32 %v1788, %v1852
      %v1917 = vadd.f32 %v1789, %v1853
      %v1918 = vadd.f32 %v1790, %v1854
      %v1919 = vadd.f32 %v1791, %v1855
      %v1920 = vadd.f32 %v1792, %v1856
      %v1921 = vadd.f32 %v1793, %v1857
      %v1922 = vadd.f32 %v1794, %v1858
      %v1923 = vadd.f32 %v1795, %v1859
      %v1924 = vadd.f32 %v1796, %v1860
      %v1925 = vadd.f32 %v1797, %v1861
      %v1926 = vadd.f32 %v1798, %v1862
      %v1927 = vadd.f32 %v1799, %v1863
      %v1928 = vadd.f32 %v1800, %v1864
      %v1929 = vadd.f32 %v1801, %v1865
      %v1930 = vadd.f32 %v1802, %v1866
      %v1931 = vadd.f32 %v1803, %v1867
      %v1932 = vadd.f32 %v1804, %v1868
      %v1933 = vadd.f32 %v1805, %v1869
      %v1934 = vadd.f32 %v1806, %v1870
      %1935 = vrot.lane.b32.xlu0 %v390, 96
      %v1936 = vpop.permute.xlu0 %1935
      %1937 = vrot.lane.b32.xlu0 %v391, 96
      %v1938 = vpop.permute.xlu0 %1937
      %1939 = vrot.lane.b32.xlu0 %v392, 96
      %v1940 = vpop.permute.xlu0 %1939
      %1941 = vrot.lane.b32.xlu0 %v393, 96
      %v1942 = vpop.permute.xlu0 %1941
      %1943 = vrot.lane.b32.xlu0 %v394, 96
      %v1944 = vpop.permute.xlu0 %1943
      %1945 = vrot.lane.b32.xlu0 %v395, 96
      %v1946 = vpop.permute.xlu0 %1945
      %1947 = vrot.lane.b32.xlu0 %v396, 96
      %v1948 = vpop.permute.xlu0 %1947
      %1949 = vrot.lane.b32.xlu0 %v397, 96
      %v1950 = vpop.permute.xlu0 %1949
      %1951 = vrot.lane.b32.xlu0 %v398, 96
      %v1952 = vpop.permute.xlu0 %1951
      %1953 = vrot.lane.b32.xlu0 %v399, 96
      %v1954 = vpop.permute.xlu0 %1953
      %1955 = vrot.lane.b32.xlu0 %v400, 96
      %v1956 = vpop.permute.xlu0 %1955
      %1957 = vrot.lane.b32.xlu0 %v401, 96
      %v1958 = vpop.permute.xlu0 %1957
      %1959 = vrot.lane.b32.xlu0 %v402, 96
      %v1960 = vpop.permute.xlu0 %1959
      %1961 = vrot.lane.b32.xlu0 %v403, 96
      %v1962 = vpop.permute.xlu0 %1961
      %1963 = vrot.lane.b32.xlu0 %v404, 96
      %v1964 = vpop.permute.xlu0 %1963
      %1965 = vrot.lane.b32.xlu0 %v405, 96
      %v1966 = vpop.permute.xlu0 %1965
      %1967 = vrot.lane.b32.xlu0 %v406, 96
      %v1968 = vpop.permute.xlu0 %1967
      %1969 = vrot.lane.b32.xlu0 %v407, 96
      %v1970 = vpop.permute.xlu0 %1969
      %1971 = vrot.lane.b32.xlu0 %v408, 96
      %v1972 = vpop.permute.xlu0 %1971
      %1973 = vrot.lane.b32.xlu0 %v409, 96
      %v1974 = vpop.permute.xlu0 %1973
      %1975 = vrot.lane.b32.xlu0 %v410, 96
      %v1976 = vpop.permute.xlu0 %1975
      %1977 = vrot.lane.b32.xlu0 %v411, 96
      %v1978 = vpop.permute.xlu0 %1977
      %1979 = vrot.lane.b32.xlu0 %v412, 96
      %v1980 = vpop.permute.xlu0 %1979
      %1981 = vrot.lane.b32.xlu0 %v413, 96
      %v1982 = vpop.permute.xlu0 %1981
      %1983 = vrot.lane.b32.xlu0 %v414, 96
      %v1984 = vpop.permute.xlu0 %1983
      %1985 = vrot.lane.b32.xlu0 %v415, 96
      %v1986 = vpop.permute.xlu0 %1985
      %1987 = vrot.lane.b32.xlu0 %v416, 96
      %v1988 = vpop.permute.xlu0 %1987
      %1989 = vrot.lane.b32.xlu0 %v417, 96
      %v1990 = vpop.permute.xlu0 %1989
      %1991 = vrot.lane.b32.xlu0 %v418, 96
      %v1992 = vpop.permute.xlu0 %1991
      %1993 = vrot.lane.b32.xlu0 %v419, 96
      %v1994 = vpop.permute.xlu0 %1993
      %1995 = vrot.lane.b32.xlu0 %v420, 96
      %v1996 = vpop.permute.xlu0 %1995
      %1997 = vrot.lane.b32.xlu0 %v421, 96
      %v1998 = vpop.permute.xlu0 %1997
      %1999 = vrot.lane.b32.xlu0 %v422, 96
      %v2000 = vpop.permute.xlu0 %1999
      %2001 = vrot.lane.b32.xlu0 %v423, 96
      %v2002 = vpop.permute.xlu0 %2001
      %2003 = vrot.lane.b32.xlu0 %v424, 96
      %v2004 = vpop.permute.xlu0 %2003
      %2005 = vrot.lane.b32.xlu0 %v425, 96
      %v2006 = vpop.permute.xlu0 %2005
      %2007 = vrot.lane.b32.xlu0 %v426, 96
      %v2008 = vpop.permute.xlu0 %2007
      %2009 = vrot.lane.b32.xlu0 %v427, 96
      %v2010 = vpop.permute.xlu0 %2009
      %2011 = vrot.lane.b32.xlu0 %v428, 96
      %v2012 = vpop.permute.xlu0 %2011
      %2013 = vrot.lane.b32.xlu0 %v429, 96
      %v2014 = vpop.permute.xlu0 %2013
      %2015 = vrot.lane.b32.xlu0 %v430, 96
      %v2016 = vpop.permute.xlu0 %2015
      %2017 = vrot.lane.b32.xlu0 %v431, 96
      %v2018 = vpop.permute.xlu0 %2017
      %2019 = vrot.lane.b32.xlu0 %v432, 96
      %v2020 = vpop.permute.xlu0 %2019
      %2021 = vrot.lane.b32.xlu0 %v433, 96
      %v2022 = vpop.permute.xlu0 %2021
      %2023 = vrot.lane.b32.xlu0 %v434, 96
      %v2024 = vpop.permute.xlu0 %2023
      %2025 = vrot.lane.b32.xlu0 %v435, 96
      %v2026 = vpop.permute.xlu0 %2025
      %2027 = vrot.lane.b32.xlu0 %v436, 96
      %v2028 = vpop.permute.xlu0 %2027
      %2029 = vrot.lane.b32.xlu0 %v437, 96
      %v2030 = vpop.permute.xlu0 %2029
      %2031 = vrot.lane.b32.xlu0 %v438, 96
      %v2032 = vpop.permute.xlu0 %2031
      %2033 = vrot.lane.b32.xlu0 %v439, 96
      %v2034 = vpop.permute.xlu0 %2033
      %2035 = vrot.lane.b32.xlu0 %v440, 96
      %v2036 = vpop.permute.xlu0 %2035
      %2037 = vrot.lane.b32.xlu0 %v441, 96
      %v2038 = vpop.permute.xlu0 %2037
      %2039 = vrot.lane.b32.xlu0 %v442, 96
      %v2040 = vpop.permute.xlu0 %2039
      %2041 = vrot.lane.b32.xlu0 %v443, 96
      %v2042 = vpop.permute.xlu0 %2041
      %2043 = vrot.lane.b32.xlu0 %v444, 96
      %v2044 = vpop.permute.xlu0 %2043
      %2045 = vrot.lane.b32.xlu0 %v445, 96
      %v2046 = vpop.permute.xlu0 %2045
      %2047 = vrot.lane.b32.xlu0 %v446, 96
      %v2048 = vpop.permute.xlu0 %2047
      %2049 = vrot.lane.b32.xlu0 %v447, 96
      %v2050 = vpop.permute.xlu0 %2049
      %2051 = vrot.lane.b32.xlu0 %v448, 96
      %v2052 = vpop.permute.xlu0 %2051
      %2053 = vrot.lane.b32.xlu0 %v449, 96
      %v2054 = vpop.permute.xlu0 %2053
      %2055 = vrot.lane.b32.xlu0 %v450, 96
      %v2056 = vpop.permute.xlu0 %2055
      %2057 = vrot.lane.b32.xlu0 %v451, 96
      %v2058 = vpop.permute.xlu0 %2057
      %2059 = vrot.lane.b32.xlu0 %v452, 96
      %v2060 = vpop.permute.xlu0 %2059
      %2061 = vrot.lane.b32.xlu0 %v453, 96
      %v2062 = vpop.permute.xlu0 %2061
      %v2063 = vmul.f32 %v1233, %v1936
      %v2064 = vmul.f32 %v1238, %v1938
      %v2065 = vmul.f32 %v1243, %v1940
      %v2066 = vmul.f32 %v1248, %v1942
      %v2067 = vmul.f32 %v1253, %v1944
      %v2068 = vmul.f32 %v1258, %v1946
      %v2069 = vmul.f32 %v1263, %v1948
      %v2070 = vmul.f32 %v1268, %v1950
      %v2071 = vmul.f32 %v1273, %v1952
      %v2072 = vmul.f32 %v1278, %v1954
      %v2073 = vmul.f32 %v1283, %v1956
      %v2074 = vmul.f32 %v1288, %v1958
      %v2075 = vmul.f32 %v1293, %v1960
      %v2076 = vmul.f32 %v1298, %v1962
      %v2077 = vmul.f32 %v1303, %v1964
      %v2078 = vmul.f32 %v1308, %v1966
      %v2079 = vmul.f32 %v1313, %v1968
      %v2080 = vmul.f32 %v1318, %v1970
      %v2081 = vmul.f32 %v1323, %v1972
      %v2082 = vmul.f32 %v1328, %v1974
      %v2083 = vmul.f32 %v1333, %v1976
      %v2084 = vmul.f32 %v1338, %v1978
      %v2085 = vmul.f32 %v1343, %v1980
      %v2086 = vmul.f32 %v1348, %v1982
      %v2087 = vmul.f32 %v1353, %v1984
      %v2088 = vmul.f32 %v1358, %v1986
      %v2089 = vmul.f32 %v1363, %v1988
      %v2090 = vmul.f32 %v1368, %v1990
      %v2091 = vmul.f32 %v1373, %v1992
      %v2092 = vmul.f32 %v1378, %v1994
      %v2093 = vmul.f32 %v1383, %v1996
      %v2094 = vmul.f32 %v1388, %v1998
      %v2095 = vmul.f32 %v1393, %v2000
      %v2096 = vmul.f32 %v1398, %v2002
      %v2097 = vmul.f32 %v1403, %v2004
      %v2098 = vmul.f32 %v1408, %v2006
      %v2099 = vmul.f32 %v1413, %v2008
      %v2100 = vmul.f32 %v1418, %v2010
      %v2101 = vmul.f32 %v1423, %v2012
      %v2102 = vmul.f32 %v1428, %v2014
      %v2103 = vmul.f32 %v1433, %v2016
      %v2104 = vmul.f32 %v1438, %v2018
      %v2105 = vmul.f32 %v1443, %v2020
      %v2106 = vmul.f32 %v1448, %v2022
      %v2107 = vmul.f32 %v1453, %v2024
      %v2108 = vmul.f32 %v1458, %v2026
      %v2109 = vmul.f32 %v1463, %v2028
      %v2110 = vmul.f32 %v1468, %v2030
      %v2111 = vmul.f32 %v1473, %v2032
      %v2112 = vmul.f32 %v1478, %v2034
      %v2113 = vmul.f32 %v1483, %v2036
      %v2114 = vmul.f32 %v1488, %v2038
      %v2115 = vmul.f32 %v1493, %v2040
      %v2116 = vmul.f32 %v1498, %v2042
      %v2117 = vmul.f32 %v1503, %v2044
      %v2118 = vmul.f32 %v1508, %v2046
      %v2119 = vmul.f32 %v1513, %v2048
      %v2120 = vmul.f32 %v1518, %v2050
      %v2121 = vmul.f32 %v1523, %v2052
      %v2122 = vmul.f32 %v1528, %v2054
      %v2123 = vmul.f32 %v1533, %v2056
      %v2124 = vmul.f32 %v1538, %v2058
      %v2125 = vmul.f32 %v1543, %v2060
      %v2126 = vmul.f32 %v1548, %v2062
      %v2127 = vadd.f32 %v1871, %v2063
      %v2128 = vadd.f32 %v1872, %v2064
      %v2129 = vadd.f32 %v1873, %v2065
      %v2130 = vadd.f32 %v1874, %v2066
      %v2131 = vadd.f32 %v1875, %v2067
      %v2132 = vadd.f32 %v1876, %v2068
      %v2133 = vadd.f32 %v1877, %v2069
      %v2134 = vadd.f32 %v1878, %v2070
      %v2135 = vadd.f32 %v1879, %v2071
      %v2136 = vadd.f32 %v1880, %v2072
      %v2137 = vadd.f32 %v1881, %v2073
      %v2138 = vadd.f32 %v1882, %v2074
      %v2139 = vadd.f32 %v1883, %v2075
      %v2140 = vadd.f32 %v1884, %v2076
      %v2141 = vadd.f32 %v1885, %v2077
      %v2142 = vadd.f32 %v1886, %v2078
      %v2143 = vadd.f32 %v1887, %v2079
      %v2144 = vadd.f32 %v1888, %v2080
      %v2145 = vadd.f32 %v1889, %v2081
      %v2146 = vadd.f32 %v1890, %v2082
      %v2147 = vadd.f32 %v1891, %v2083
      %v2148 = vadd.f32 %v1892, %v2084
      %v2149 = vadd.f32 %v1893, %v2085
      %v2150 = vadd.f32 %v1894, %v2086
      %v2151 = vadd.f32 %v1895, %v2087
      %v2152 = vadd.f32 %v1896, %v2088
      %v2153 = vadd.f32 %v1897, %v2089
      %v2154 = vadd.f32 %v1898, %v2090
      %v2155 = vadd.f32 %v1899, %v2091
      %v2156 = vadd.f32 %v1900, %v2092
      %v2157 = vadd.f32 %v1901, %v2093
      %v2158 = vadd.f32 %v1902, %v2094
      %v2159 = vadd.f32 %v1903, %v2095
      %v2160 = vadd.f32 %v1904, %v2096
      %v2161 = vadd.f32 %v1905, %v2097
      %v2162 = vadd.f32 %v1906, %v2098
      %v2163 = vadd.f32 %v1907, %v2099
      %v2164 = vadd.f32 %v1908, %v2100
      %v2165 = vadd.f32 %v1909, %v2101
      %v2166 = vadd.f32 %v1910, %v2102
      %v2167 = vadd.f32 %v1911, %v2103
      %v2168 = vadd.f32 %v1912, %v2104
      %v2169 = vadd.f32 %v1913, %v2105
      %v2170 = vadd.f32 %v1914, %v2106
      %v2171 = vadd.f32 %v1915, %v2107
      %v2172 = vadd.f32 %v1916, %v2108
      %v2173 = vadd.f32 %v1917, %v2109
      %v2174 = vadd.f32 %v1918, %v2110
      %v2175 = vadd.f32 %v1919, %v2111
      %v2176 = vadd.f32 %v1920, %v2112
      %v2177 = vadd.f32 %v1921, %v2113
      %v2178 = vadd.f32 %v1922, %v2114
      %v2179 = vadd.f32 %v1923, %v2115
      %v2180 = vadd.f32 %v1924, %v2116
      %v2181 = vadd.f32 %v1925, %v2117
      %v2182 = vadd.f32 %v1926, %v2118
      %v2183 = vadd.f32 %v1927, %v2119
      %v2184 = vadd.f32 %v1928, %v2120
      %v2185 = vadd.f32 %v1929, %v2121
      %v2186 = vadd.f32 %v1930, %v2122
      %v2187 = vadd.f32 %v1931, %v2123
      %v2188 = vadd.f32 %v1932, %v2124
      %v2189 = vadd.f32 %v1933, %v2125
      %v2190 = vadd.f32 %v1934, %v2126
      %v2191 = vld [vmem:[%s296] sm:$0xf]
      %v2192 = vld [vmem:[%s296 + $0x4] sm:$0xf]
      %v2193 = vld [vmem:[%s296 + $0x8] sm:$0xf]
      %v2194 = vld [vmem:[%s296 + $0xc] sm:$0xf]
      %v2195 = vld [vmem:[%s296 + $0x10] sm:$0xf]
      %v2196 = vld [vmem:[%s296 + $0x14] sm:$0xf]
      %v2197 = vld [vmem:[%s296 + $0x18] sm:$0xf]
      %v2198 = vld [vmem:[%s296 + $0x1c] sm:$0xf]
      %v2199 = vld [vmem:[%s296 + $0x20] sm:$0xf]
      %v2200 = vld [vmem:[%s296 + $0x24] sm:$0xf]
      %v2201 = vld [vmem:[%s296 + $0x28] sm:$0xf]
      %v2202 = vld [vmem:[%s296 + $0x2c] sm:$0xf]
      %v2203 = vld [vmem:[%s296 + $0x30] sm:$0xf]
      %v2204 = vld [vmem:[%s296 + $0x34] sm:$0xf]
      %v2205 = vld [vmem:[%s296 + $0x38] sm:$0xf]
      %v2206 = vld [vmem:[%s296 + $0x3c] sm:$0xf]
      %v2207 = vld [vmem:[%s296 + $0x40] sm:$0xf]
      %v2208 = vld [vmem:[%s296 + $0x44] sm:$0xf]
      %v2209 = vld [vmem:[%s296 + $0x48] sm:$0xf]
      %v2210 = vld [vmem:[%s296 + $0x4c] sm:$0xf]
      %v2211 = vld [vmem:[%s296 + $0x50] sm:$0xf]
      %v2212 = vld [vmem:[%s296 + $0x54] sm:$0xf]
      %v2213 = vld [vmem:[%s296 + $0x58] sm:$0xf]
      %v2214 = vld [vmem:[%s296 + $0x5c] sm:$0xf]
      %v2215 = vld [vmem:[%s296 + $0x60] sm:$0xf]
      %v2216 = vld [vmem:[%s296 + $0x64] sm:$0xf]
      %v2217 = vld [vmem:[%s296 + $0x68] sm:$0xf]
      %v2218 = vld [vmem:[%s296 + $0x6c] sm:$0xf]
      %v2219 = vld [vmem:[%s296 + $0x70] sm:$0xf]
      %v2220 = vld [vmem:[%s296 + $0x74] sm:$0xf]
      %v2221 = vld [vmem:[%s296 + $0x78] sm:$0xf]
      %v2222 = vld [vmem:[%s296 + $0x7c] sm:$0xf]
      %v2223 = vld [vmem:[%s296 + $0x80] sm:$0xf]
      %v2224 = vld [vmem:[%s296 + $0x84] sm:$0xf]
      %v2225 = vld [vmem:[%s296 + $0x88] sm:$0xf]
      %v2226 = vld [vmem:[%s296 + $0x8c] sm:$0xf]
      %v2227 = vld [vmem:[%s296 + $0x90] sm:$0xf]
      %v2228 = vld [vmem:[%s296 + $0x94] sm:$0xf]
      %v2229 = vld [vmem:[%s296 + $0x98] sm:$0xf]
      %v2230 = vld [vmem:[%s296 + $0x9c] sm:$0xf]
      %v2231 = vld [vmem:[%s296 + $0xa0] sm:$0xf]
      %v2232 = vld [vmem:[%s296 + $0xa4] sm:$0xf]
      %v2233 = vld [vmem:[%s296 + $0xa8] sm:$0xf]
      %v2234 = vld [vmem:[%s296 + $0xac] sm:$0xf]
      %v2235 = vld [vmem:[%s296 + $0xb0] sm:$0xf]
      %v2236 = vld [vmem:[%s296 + $0xb4] sm:$0xf]
      %v2237 = vld [vmem:[%s296 + $0xb8] sm:$0xf]
      %v2238 = vld [vmem:[%s296 + $0xbc] sm:$0xf]
      %v2239 = vld [vmem:[%s296 + $0xc0] sm:$0xf]
      %v2240 = vld [vmem:[%s296 + $0xc4] sm:$0xf]
      %v2241 = vld [vmem:[%s296 + $0xc8] sm:$0xf]
      %v2242 = vld [vmem:[%s296 + $0xcc] sm:$0xf]
      %v2243 = vld [vmem:[%s296 + $0xd0] sm:$0xf]
      %v2244 = vld [vmem:[%s296 + $0xd4] sm:$0xf]
      %v2245 = vld [vmem:[%s296 + $0xd8] sm:$0xf]
      %v2246 = vld [vmem:[%s296 + $0xdc] sm:$0xf]
      %v2247 = vld [vmem:[%s296 + $0xe0] sm:$0xf]
      %v2248 = vld [vmem:[%s296 + $0xe4] sm:$0xf]
      %v2249 = vld [vmem:[%s296 + $0xe8] sm:$0xf]
      %v2250 = vld [vmem:[%s296 + $0xec] sm:$0xf]
      %v2251 = vld [vmem:[%s296 + $0xf0] sm:$0xf]
      %v2252 = vld [vmem:[%s296 + $0xf4] sm:$0xf]
      %v2253 = vld [vmem:[%s296 + $0xf8] sm:$0xf]
      %v2254 = vld [vmem:[%s296 + $0xfc] sm:$0xf]
      %v2255 = vld [vmem:[%s303] sm:$0xff]
      %v2256 = vld [vmem:[%s303 + $0x8] sm:$0xff]
      %v2257 = vld [vmem:[%s303 + $0x10] sm:$0xff]
      %v2258 = vld [vmem:[%s303 + $0x18] sm:$0xff]
      %v2259 = vld [vmem:[%s303 + $0x20] sm:$0xff]
      %v2260 = vld [vmem:[%s303 + $0x28] sm:$0xff]
      %v2261 = vld [vmem:[%s303 + $0x30] sm:$0xff]
      %v2262 = vld [vmem:[%s303 + $0x38] sm:$0xff]
      %v2263 = vld [vmem:[%s303 + $0x40] sm:$0xff]
      %v2264 = vld [vmem:[%s303 + $0x48] sm:$0xff]
      %v2265 = vld [vmem:[%s303 + $0x50] sm:$0xff]
      %v2266 = vld [vmem:[%s303 + $0x58] sm:$0xff]
      %v2267 = vld [vmem:[%s303 + $0x60] sm:$0xff]
      %v2268 = vld [vmem:[%s303 + $0x68] sm:$0xff]
      %v2269 = vld [vmem:[%s303 + $0x70] sm:$0xff]
      %v2270 = vld [vmem:[%s303 + $0x78] sm:$0xff]
      %v2271 = vpack.c.bf16 %v2128, %v2127
      %v2272 = vpack.c.bf16 %v2130, %v2129
      %v2273 = vpack.c.bf16 %v2132, %v2131
      %v2274 = vpack.c.bf16 %v2134, %v2133
      %v2275 = vpack.c.bf16 %v2136, %v2135
      %v2276 = vpack.c.bf16 %v2138, %v2137
      %v2277 = vpack.c.bf16 %v2140, %v2139
      %v2278 = vpack.c.bf16 %v2142, %v2141
      %v2279 = vpack.c.bf16 %v2144, %v2143
      %v2280 = vpack.c.bf16 %v2146, %v2145
      %v2281 = vpack.c.bf16 %v2148, %v2147
      %v2282 = vpack.c.bf16 %v2150, %v2149
      %v2283 = vpack.c.bf16 %v2152, %v2151
      %v2284 = vpack.c.bf16 %v2154, %v2153
      %v2285 = vpack.c.bf16 %v2156, %v2155
      %v2286 = vpack.c.bf16 %v2158, %v2157
      %v2287 = vpack.c.bf16 %v2160, %v2159
      %v2288 = vpack.c.bf16 %v2162, %v2161
      %v2289 = vpack.c.bf16 %v2164, %v2163
      %v2290 = vpack.c.bf16 %v2166, %v2165
      %v2291 = vpack.c.bf16 %v2168, %v2167
      %v2292 = vpack.c.bf16 %v2170, %v2169
      %v2293 = vpack.c.bf16 %v2172, %v2171
      %v2294 = vpack.c.bf16 %v2174, %v2173
      %v2295 = vpack.c.bf16 %v2176, %v2175
      %v2296 = vpack.c.bf16 %v2178, %v2177
      %v2297 = vpack.c.bf16 %v2180, %v2179
      %v2298 = vpack.c.bf16 %v2182, %v2181
      %v2299 = vpack.c.bf16 %v2184, %v2183
      %v2300 = vpack.c.bf16 %v2186, %v2185
      %v2301 = vpack.c.bf16 %v2188, %v2187
      %v2302 = vpack.c.bf16 %v2190, %v2189
      %v2367 = vunpack.c.l.b16 %v2191
      %v2368 = vunpack.c.l.b16 %v2192
      %v2369 = vunpack.c.l.b16 %v2193
      %v2370 = vunpack.c.l.b16 %v2194
      %v2371 = vunpack.c.l.b16 %v2195
      %v2372 = vunpack.c.l.b16 %v2196
      %v2373 = vunpack.c.l.b16 %v2197
      %v2374 = vunpack.c.l.b16 %v2198
      %v2375 = vunpack.c.l.b16 %v2199
      %v2376 = vunpack.c.l.b16 %v2200
      %v2377 = vunpack.c.l.b16 %v2201
      %v2378 = vunpack.c.l.b16 %v2202
      %v2379 = vunpack.c.l.b16 %v2203
      %v2380 = vunpack.c.l.b16 %v2204
      %v2381 = vunpack.c.l.b16 %v2205
      %v2382 = vunpack.c.l.b16 %v2206
      %v2383 = vunpack.c.l.b16 %v2207
      %v2384 = vunpack.c.l.b16 %v2208
      %v2385 = vunpack.c.l.b16 %v2209
      %v2386 = vunpack.c.l.b16 %v2210
      %v2387 = vunpack.c.l.b16 %v2211
      %v2388 = vunpack.c.l.b16 %v2212
      %v2389 = vunpack.c.l.b16 %v2213
      %v2390 = vunpack.c.l.b16 %v2214
      %v2391 = vunpack.c.l.b16 %v2215
      %v2392 = vunpack.c.l.b16 %v2216
      %v2393 = vunpack.c.l.b16 %v2217
      %v2394 = vunpack.c.l.b16 %v2218
      %v2395 = vunpack.c.l.b16 %v2219
      %v2396 = vunpack.c.l.b16 %v2220
      %v2397 = vunpack.c.l.b16 %v2221
      %v2398 = vunpack.c.l.b16 %v2222
      %v2399 = vunpack.c.l.b16 %v2223
      %v2400 = vunpack.c.l.b16 %v2224
      %v2401 = vunpack.c.l.b16 %v2225
      %v2402 = vunpack.c.l.b16 %v2226
      %v2403 = vunpack.c.l.b16 %v2227
      %v2404 = vunpack.c.l.b16 %v2228
      %v2405 = vunpack.c.l.b16 %v2229
      %v2406 = vunpack.c.l.b16 %v2230
      %v2407 = vunpack.c.l.b16 %v2231
      %v2408 = vunpack.c.l.b16 %v2232
      %v2409 = vunpack.c.l.b16 %v2233
      %v2410 = vunpack.c.l.b16 %v2234
      %v2411 = vunpack.c.l.b16 %v2235
      %v2412 = vunpack.c.l.b16 %v2236
      %v2413 = vunpack.c.l.b16 %v2237
      %v2414 = vunpack.c.l.b16 %v2238
      %v2415 = vunpack.c.l.b16 %v2239
      %v2416 = vunpack.c.l.b16 %v2240
      %v2417 = vunpack.c.l.b16 %v2241
      %v2418 = vunpack.c.l.b16 %v2242
      %v2419 = vunpack.c.l.b16 %v2243
      %v2420 = vunpack.c.l.b16 %v2244
      %v2421 = vunpack.c.l.b16 %v2245
      %v2422 = vunpack.c.l.b16 %v2246
      %v2423 = vunpack.c.l.b16 %v2247
      %v2424 = vunpack.c.l.b16 %v2248
      %v2425 = vunpack.c.l.b16 %v2249
      %v2426 = vunpack.c.l.b16 %v2250
      %v2427 = vunpack.c.l.b16 %v2251
      %v2428 = vunpack.c.l.b16 %v2252
      %v2429 = vunpack.c.l.b16 %v2253
      %v2430 = vunpack.c.l.b16 %v2254
      %v2431 = vpack.c.b16 %v2368, %v2367
      %v2432 = vpack.c.b16 %v2370, %v2369
      %v2433 = vpack.c.b16 %v2372, %v2371
      %v2434 = vpack.c.b16 %v2374, %v2373
      %v2435 = vpack.c.b16 %v2376, %v2375
      %v2436 = vpack.c.b16 %v2378, %v2377
      %v2437 = vpack.c.b16 %v2380, %v2379
      %v2438 = vpack.c.b16 %v2382, %v2381
      %v2439 = vpack.c.b16 %v2384, %v2383
      %v2440 = vpack.c.b16 %v2386, %v2385
      %v2441 = vpack.c.b16 %v2388, %v2387
      %v2442 = vpack.c.b16 %v2390, %v2389
      %v2443 = vpack.c.b16 %v2392, %v2391
      %v2444 = vpack.c.b16 %v2394, %v2393
      %v2445 = vpack.c.b16 %v2396, %v2395
      %v2446 = vpack.c.b16 %v2398, %v2397
      %v2447 = vpack.c.b16 %v2400, %v2399
      %v2448 = vpack.c.b16 %v2402, %v2401
      %v2449 = vpack.c.b16 %v2404, %v2403
      %v2450 = vpack.c.b16 %v2406, %v2405
      %v2451 = vpack.c.b16 %v2408, %v2407
      %v2452 = vpack.c.b16 %v2410, %v2409
      %v2453 = vpack.c.b16 %v2412, %v2411
      %v2454 = vpack.c.b16 %v2414, %v2413
      %v2455 = vpack.c.b16 %v2416, %v2415
      %v2456 = vpack.c.b16 %v2418, %v2417
      %v2457 = vpack.c.b16 %v2420, %v2419
      %v2458 = vpack.c.b16 %v2422, %v2421
      %v2459 = vpack.c.b16 %v2424, %v2423
      %v2460 = vpack.c.b16 %v2426, %v2425
      %v2461 = vpack.c.b16 %v2428, %v2427
      %v2462 = vpack.c.b16 %v2430, %v2429
      %2495 = vxpose.xlu0.c.b16.start [1/8] %v2431, 128
      %2496 = vxpose.xlu0.c.b16.cont [2/8] %v2432, 128
      %2497 = vxpose.xlu0.c.b16.cont [3/8] %v2433, 128
      %2498 = vxpose.xlu0.c.b16.cont [4/8] %v2434, 128
      %2499 = vxpose.xlu0.c.b16.cont [5/8] %v2435, 128
      %2500 = vxpose.xlu0.c.b16.cont [6/8] %v2436, 128
      %2501 = vxpose.xlu0.c.b16.cont [7/8] %v2437, 128
      %2502 = vxpose.xlu0.c.b16.end [8/8] %v2438, 128
      %v2503 = vpop.trf.xlu0
      %v2504 = vpop.trf.xlu0
      %v2505 = vpop.trf.xlu0
      %v2506 = vpop.trf.xlu0
      %v2507 = vpop.trf.xlu0
      %v2508 = vpop.trf.xlu0
      %v2509 = vpop.trf.xlu0
      %v2510 = vpop.trf.xlu0
      %2511 = vxpose.xlu0.c.b16.start [1/8] %v2439, 128
      %2512 = vxpose.xlu0.c.b16.cont [2/8] %v2440, 128
      %2513 = vxpose.xlu0.c.b16.cont [3/8] %v2441, 128
      %2514 = vxpose.xlu0.c.b16.cont [4/8] %v2442, 128
      %2515 = vxpose.xlu0.c.b16.cont [5/8] %v2443, 128
      %2516 = vxpose.xlu0.c.b16.cont [6/8] %v2444, 128
      %2517 = vxpose.xlu0.c.b16.cont [7/8] %v2445, 128
      %2518 = vxpose.xlu0.c.b16.end [8/8] %v2446, 128
      %v2519 = vpop.trf.xlu0
      %v2520 = vpop.trf.xlu0
      %v2521 = vpop.trf.xlu0
      %v2522 = vpop.trf.xlu0
      %v2523 = vpop.trf.xlu0
      %v2524 = vpop.trf.xlu0
      %v2525 = vpop.trf.xlu0
      %v2526 = vpop.trf.xlu0
      %2527 = vxpose.xlu0.c.b16.start [1/8] %v2447, 128
      %2528 = vxpose.xlu0.c.b16.cont [2/8] %v2448, 128
      %2529 = vxpose.xlu0.c.b16.cont [3/8] %v2449, 128
      %2530 = vxpose.xlu0.c.b16.cont [4/8] %v2450, 128
      %2531 = vxpose.xlu0.c.b16.cont [5/8] %v2451, 128
      %2532 = vxpose.xlu0.c.b16.cont [6/8] %v2452, 128
      %2533 = vxpose.xlu0.c.b16.cont [7/8] %v2453, 128
      %2534 = vxpose.xlu0.c.b16.end [8/8] %v2454, 128
      %v2535 = vpop.trf.xlu0
      %v2536 = vpop.trf.xlu0
      %v2537 = vpop.trf.xlu0
      %v2538 = vpop.trf.xlu0
      %v2539 = vpop.trf.xlu0
      %v2540 = vpop.trf.xlu0
      %v2541 = vpop.trf.xlu0
      %v2542 = vpop.trf.xlu0
      %2543 = vxpose.xlu0.c.b16.start [1/8] %v2455, 128
      %2544 = vxpose.xlu0.c.b16.cont [2/8] %v2456, 128
      %2545 = vxpose.xlu0.c.b16.cont [3/8] %v2457, 128
      %2546 = vxpose.xlu0.c.b16.cont [4/8] %v2458, 128
      %2547 = vxpose.xlu0.c.b16.cont [5/8] %v2459, 128
      %2548 = vxpose.xlu0.c.b16.cont [6/8] %v2460, 128
      %2549 = vxpose.xlu0.c.b16.cont [7/8] %v2461, 128
      %2550 = vxpose.xlu0.c.b16.end [8/8] %v2462, 128
      %v2551 = vpop.trf.xlu0
      %v2552 = vpop.trf.xlu0
      %v2553 = vpop.trf.xlu0
      %v2554 = vpop.trf.xlu0
      %v2555 = vpop.trf.xlu0
      %v2556 = vpop.trf.xlu0
      %v2557 = vpop.trf.xlu0
      %v2558 = vpop.trf.xlu0
      %2559 = vmatprep.subr.bf16.mxu0 0
      %2560 = vmatpush1.bf16.msra.mxu0 %v2271
      %2561 = vmatprep.subr.bf16.mxu0 0
      %2562 = vmatpush1.bf16.msra.mxu0 %v2272
      %2563 = vmatprep.subr.bf16.mxu0 0
      %2564 = vmatpush1.bf16.msra.mxu0 %v2273
      %2565 = vmatprep.subr.bf16.mxu0 0
      %2566 = vmatpush1.bf16.msra.mxu0 %v2274
      %2567 = vmatprep.subr.bf16.mxu0 0
      %2568 = vmatpush1.bf16.msra.mxu0 %v2275
      %2569 = vmatprep.subr.bf16.mxu0 0
      %2570 = vmatpush1.bf16.msra.mxu0 %v2276
      %2571 = vmatprep.subr.bf16.mxu0 0
      %2572 = vmatpush1.bf16.msra.mxu0 %v2277
      %2573 = vmatprep.subr.bf16.mxu0 0
      %2574 = vmatpush1.bf16.msra.mxu0 %v2278
      %2575 = vmatprep.subr.bf16.mxu0 0
      %2576 = vmatpush1.bf16.msra.mxu0 %v2279
      %2577 = vmatprep.subr.bf16.mxu0 0
      %2578 = vmatpush1.bf16.msra.mxu0 %v2280
      %2579 = vmatprep.subr.bf16.mxu0 0
      %2580 = vmatpush1.bf16.msra.mxu0 %v2281
      %2581 = vmatprep.subr.bf16.mxu0 0
      %2582 = vmatpush1.bf16.msra.mxu0 %v2282
      %2583 = vmatprep.subr.bf16.mxu0 0
      %2584 = vmatpush1.bf16.msra.mxu0 %v2283
      %2585 = vmatprep.subr.bf16.mxu0 0
      %2586 = vmatpush1.bf16.msra.mxu0 %v2284
      %2587 = vmatprep.subr.bf16.mxu0 0
      %2588 = vmatpush1.bf16.msra.mxu0 %v2285
      %2589 = vmatprep.subr.bf16.mxu0 0
      %2590 = vmatpush1.bf16.msra.mxu0 %v2286
      %2591 = vmatprep.mubr.bf16.mxu0 %v2519
      %2592 = vmatmul.mubr.bf16.gmra.mrb[0].mxu0 %v2503
      %v2593 = vpop.f32.mrb[0].mxu0
      %v2594 = vadd.f32 0.0, %v2593
      %v2595 = vpop.f32.mrb[0].mxu0
      %v2596 = vpop.f32.mrb[0].mxu0
      %v2597 = vadd.f32 0.0, %v2596
      %v2598 = vpop.f32.mrb[0].mxu0
      %2599 = vmatprep.mubr.bf16.mxu0 %v2520
      %2600 = vmatmul.mubr.bf16.gmra.mrb[0].mxu0 %v2504
      %v2601 = vpop.f32.mrb[0].mxu0
      %v2602 = vadd.f32 0.0, %v2601
      %v2603 = vpop.f32.mrb[0].mxu0
      %v2604 = vpop.f32.mrb[0].mxu0
      %v2605 = vadd.f32 0.0, %v2604
      %v2606 = vpop.f32.mrb[0].mxu0
      %2607 = vmatprep.mubr.bf16.mxu0 %v2521
      %2608 = vmatmul.mubr.bf16.gmra.mrb[0].mxu0 %v2505
      %v2609 = vpop.f32.mrb[0].mxu0
      %v2610 = vadd.f32 0.0, %v2609
      %v2611 = vpop.f32.mrb[0].mxu0
      %v2612 = vpop.f32.mrb[0].mxu0
      %v2613 = vadd.f32 0.0, %v2612
      %v2614 = vpop.f32.mrb[0].mxu0
      %2615 = vmatprep.mubr.bf16.mxu0 %v2522
      %2616 = vmatmul.mubr.bf16.gmra.mrb[0].mxu0 %v2506
      %v2617 = vpop.f32.mrb[0].mxu0
      %v2618 = vadd.f32 0.0, %v2617
      %v2619 = vpop.f32.mrb[0].mxu0
      %v2620 = vpop.f32.mrb[0].mxu0
      %v2621 = vadd.f32 0.0, %v2620
      %v2622 = vpop.f32.mrb[0].mxu0
      %2623 = vmatprep.mubr.bf16.mxu0 %v2523
      %2624 = vmatmul.mubr.bf16.gmra.mrb[0].mxu0 %v2507
      %v2625 = vpop.f32.mrb[0].mxu0
      %v2626 = vadd.f32 0.0, %v2625
      %v2627 = vpop.f32.mrb[0].mxu0
      %v2628 = vpop.f32.mrb[0].mxu0
      %v2629 = vadd.f32 0.0, %v2628
      %v2630 = vpop.f32.mrb[0].mxu0
      %2631 = vmatprep.mubr.bf16.mxu0 %v2524
      %2632 = vmatmul.mubr.bf16.gmra.mrb[0].mxu0 %v2508
      %v2633 = vpop.f32.mrb[0].mxu0
      %v2634 = vadd.f32 0.0, %v2633
      %v2635 = vpop.f32.mrb[0].mxu0
      %v2636 = vpop.f32.mrb[0].mxu0
      %v2637 = vadd.f32 0.0, %v2636
      %v2638 = vpop.f32.mrb[0].mxu0
      %2639 = vmatprep.mubr.bf16.mxu0 %v2525
      %2640 = vmatmul.mubr.bf16.gmra.mrb[0].mxu0 %v2509
      %v2641 = vpop.f32.mrb[0].mxu0
      %v2642 = vadd.f32 0.0, %v2641
      %v2643 = vpop.f32.mrb[0].mxu0
      %v2644 = vpop.f32.mrb[0].mxu0
      %v2645 = vadd.f32 0.0, %v2644
      %v2646 = vpop.f32.mrb[0].mxu0
      %2647 = vmatprep.mubr.bf16.mxu0 %v2526
      %2648 = vmatmul.mubr.bf16.gmra.mrb[0].mxu0 %v2510
      %v2649 = vpop.f32.mrb[0].mxu0
      %v2650 = vadd.f32 0.0, %v2649
      %v2651 = vpop.f32.mrb[0].mxu0
      %v2652 = vpop.f32.mrb[0].mxu0
      %v2653 = vadd.f32 0.0, %v2652
      %v2654 = vpop.f32.mrb[0].mxu0
      %2655 = vdwg.mxu0
      %2656 = vmatprep.subr.bf16.mxu0 0
      %2657 = vmatpush1.bf16.msra.mxu0 %v2287
      %2658 = vmatprep.subr.bf16.mxu0 0
      %2659 = vmatpush1.bf16.msra.mxu0 %v2288
      %2660 = vmatprep.subr.bf16.mxu0 0
      %2661 = vmatpush1.bf16.msra.mxu0 %v2289
      %2662 = vmatprep.subr.bf16.mxu0 0
      %2663 = vmatpush1.bf16.msra.mxu0 %v2290
      %2664 = vmatprep.subr.bf16.mxu0 0
      %2665 = vmatpush1.bf16.msra.mxu0 %v2291
      %2666 = vmatprep.subr.bf16.mxu0 0
      %2667 = vmatpush1.bf16.msra.mxu0 %v2292
      %2668 = vmatprep.subr.bf16.mxu0 0
      %2669 = vmatpush1.bf16.msra.mxu0 %v2293
      %2670 = vmatprep.subr.bf16.mxu0 0
      %2671 = vmatpush1.bf16.msra.mxu0 %v2294
      %2672 = vmatprep.subr.bf16.mxu0 0
      %2673 = vmatpush1.bf16.msra.mxu0 %v2295
      %2674 = vmatprep.subr.bf16.mxu0 0
      %2675 = vmatpush1.bf16.msra.mxu0 %v2296
      %2676 = vmatprep.subr.bf16.mxu0 0
      %2677 = vmatpush1.bf16.msra.mxu0 %v2297
      %2678 = vmatprep.subr.bf16.mxu0 0
      %2679 = vmatpush1.bf16.msra.mxu0 %v2298
      %2680 = vmatprep.subr.bf16.mxu0 0
      %2681 = vmatpush1.bf16.msra.mxu0 %v2299
      %2682 = vmatprep.subr.bf16.mxu0 0
      %2683 = vmatpush1.bf16.msra.mxu0 %v2300
      %2684 = vmatprep.subr.bf16.mxu0 0
      %2685 = vmatpush1.bf16.msra.mxu0 %v2301
      %2686 = vmatprep.subr.bf16.mxu0 0
      %2687 = vmatpush1.bf16.msra.mxu0 %v2302
      %2688 = vmatprep.mubr.bf16.mxu0 %v2551
      %2689 = vmatmul.mubr.bf16.gmra.mrb[0].mxu0 %v2535
      %v2690 = vpop.f32.mrb[0].mxu0
      %v2691 = vadd.f32 %v2594, %v2690
      %v2692 = vpop.f32.mrb[0].mxu0
      %v2693 = vpop.f32.mrb[0].mxu0
      %v2694 = vadd.f32 %v2597, %v2693
      %v2695 = vpop.f32.mrb[0].mxu0
      %2696 = vmatprep.mubr.bf16.mxu0 %v2552
      %2697 = vmatmul.mubr.bf16.gmra.mrb[0].mxu0 %v2536
      %v2698 = vpop.f32.mrb[0].mxu0
      %v2699 = vadd.f32 %v2602, %v2698
      %v2700 = vpop.f32.mrb[0].mxu0
      %v2701 = vpop.f32.mrb[0].mxu0
      %v2702 = vadd.f32 %v2605, %v2701
      %v2703 = vpop.f32.mrb[0].mxu0
      %2704 = vmatprep.mubr.bf16.mxu0 %v2553
      %2705 = vmatmul.mubr.bf16.gmra.mrb[0].mxu0 %v2537
      %v2706 = vpop.f32.mrb[0].mxu0
      %v2707 = vadd.f32 %v2610, %v2706
      %v2708 = vpop.f32.mrb[0].mxu0
      %v2709 = vpop.f32.mrb[0].mxu0
      %v2710 = vadd.f32 %v2613, %v2709
      %v2711 = vpop.f32.mrb[0].mxu0
      %2712 = vmatprep.mubr.bf16.mxu0 %v2554
      %2713 = vmatmul.mubr.bf16.gmra.mrb[0].mxu0 %v2538
      %v2714 = vpop.f32.mrb[0].mxu0
      %v2715 = vadd.f32 %v2618, %v2714
      %v2716 = vpop.f32.mrb[0].mxu0
      %v2717 = vpop.f32.mrb[0].mxu0
      %v2718 = vadd.f32 %v2621, %v2717
      %v2719 = vpop.f32.mrb[0].mxu0
      %2720 = vmatprep.mubr.bf16.mxu0 %v2555
      %2721 = vmatmul.mubr.bf16.gmra.mrb[0].mxu0 %v2539
      %v2722 = vpop.f32.mrb[0].mxu0
      %v2723 = vadd.f32 %v2626, %v2722
      %v2724 = vpop.f32.mrb[0].mxu0
      %v2725 = vpop.f32.mrb[0].mxu0
      %v2726 = vadd.f32 %v2629, %v2725
      %v2727 = vpop.f32.mrb[0].mxu0
      %2728 = vmatprep.mubr.bf16.mxu0 %v2556
      %2729 = vmatmul.mubr.bf16.gmra.mrb[0].mxu0 %v2540
      %v2730 = vpop.f32.mrb[0].mxu0
      %v2731 = vadd.f32 %v2634, %v2730
      %v2732 = vpop.f32.mrb[0].mxu0
      %v2733 = vpop.f32.mrb[0].mxu0
      %v2734 = vadd.f32 %v2637, %v2733
      %v2735 = vpop.f32.mrb[0].mxu0
      %2736 = vmatprep.mubr.bf16.mxu0 %v2557
      %2737 = vmatmul.mubr.bf16.gmra.mrb[0].mxu0 %v2541
      %v2738 = vpop.f32.mrb[0].mxu0
      %v2739 = vadd.f32 %v2642, %v2738
      %v2740 = vpop.f32.mrb[0].mxu0
      %v2741 = vpop.f32.mrb[0].mxu0
      %v2742 = vadd.f32 %v2645, %v2741
      %v2743 = vpop.f32.mrb[0].mxu0
      %2744 = vmatprep.mubr.bf16.mxu0 %v2558
      %2745 = vmatmul.mubr.bf16.gmra.mrb[0].mxu0 %v2542
      %v2746 = vpop.f32.mrb[0].mxu0
      %v2747 = vadd.f32 %v2650, %v2746
      %v2748 = vpop.f32.mrb[0].mxu0
      %v2749 = vpop.f32.mrb[0].mxu0
      %v2750 = vadd.f32 %v2653, %v2749
      %v2751 = vpop.f32.mrb[0].mxu0
      %2752 = vdwg.mxu0
      %v2753 = vadd.f32 %v2255, %v2691
      %v2754 = vadd.f32 %v2256, %v2694
      %v2755 = vadd.f32 %v2257, %v2699
      %v2756 = vadd.f32 %v2258, %v2702
      %v2757 = vadd.f32 %v2259, %v2707
      %v2758 = vadd.f32 %v2260, %v2710
      %v2759 = vadd.f32 %v2261, %v2715
      %v2760 = vadd.f32 %v2262, %v2718
      %v2761 = vadd.f32 %v2263, %v2723
      %v2762 = vadd.f32 %v2264, %v2726
      %v2763 = vadd.f32 %v2265, %v2731
      %v2764 = vadd.f32 %v2266, %v2734
      %v2765 = vadd.f32 %v2267, %v2739
      %v2766 = vadd.f32 %v2268, %v2742
      %v2767 = vadd.f32 %v2269, %v2747
      %v2768 = vadd.f32 %v2270, %v2750
      %2769 = vst [vmem:[%s303] sm:$0xff] %v2753
      %2770 = vst [vmem:[%s303 + $0x8] sm:$0xff] %v2754
      %2771 = vst [vmem:[%s303 + $0x10] sm:$0xff] %v2755
      %2772 = vst [vmem:[%s303 + $0x18] sm:$0xff] %v2756
      %2773 = vst [vmem:[%s303 + $0x20] sm:$0xff] %v2757
      %2774 = vst [vmem:[%s303 + $0x28] sm:$0xff] %v2758
      %2775 = vst [vmem:[%s303 + $0x30] sm:$0xff] %v2759
      %2776 = vst [vmem:[%s303 + $0x38] sm:$0xff] %v2760
      %2777 = vst [vmem:[%s303 + $0x40] sm:$0xff] %v2761
      %2778 = vst [vmem:[%s303 + $0x48] sm:$0xff] %v2762
      %2779 = vst [vmem:[%s303 + $0x50] sm:$0xff] %v2763
      %2780 = vst [vmem:[%s303 + $0x58] sm:$0xff] %v2764
      %2781 = vst [vmem:[%s303 + $0x60] sm:$0xff] %v2765
      %2782 = vst [vmem:[%s303 + $0x68] sm:$0xff] %v2766
      %2783 = vst [vmem:[%s303 + $0x70] sm:$0xff] %v2767
      %2784 = vst [vmem:[%s303 + $0x78] sm:$0xff] %v2768
      // Predicated region
      $region45: #{spec_bunn_forward.2} parent=39 // pred_check
        %p2785 = pneg %p306
      $region46: #{spec_bunn_forward.2} parent=39 // pred_check_branch
        %2787 = sbr.rel (%p2785) target = $region48
      $region47: #{spec_bunn_forward.2} parent=39 // pred_region
        %v2788 = vld [vmem:[%s303] sm:$0xff]
        %v2789 = vld [vmem:[%s303 + $0x8] sm:$0xff]
        %v2790 = vld [vmem:[%s303 + $0x10] sm:$0xff]
        %v2791 = vld [vmem:[%s303 + $0x18] sm:$0xff]
        %v2792 = vld [vmem:[%s303 + $0x20] sm:$0xff]
        %v2793 = vld [vmem:[%s303 + $0x28] sm:$0xff]
        %v2794 = vld [vmem:[%s303 + $0x30] sm:$0xff]
        %v2795 = vld [vmem:[%s303 + $0x38] sm:$0xff]
        %v2796 = vld [vmem:[%s303 + $0x40] sm:$0xff]
        %v2797 = vld [vmem:[%s303 + $0x48] sm:$0xff]
        %v2798 = vld [vmem:[%s303 + $0x50] sm:$0xff]
        %v2799 = vld [vmem:[%s303 + $0x58] sm:$0xff]
        %v2800 = vld [vmem:[%s303 + $0x60] sm:$0xff]
        %v2801 = vld [vmem:[%s303 + $0x68] sm:$0xff]
        %v2802 = vld [vmem:[%s303 + $0x70] sm:$0xff]
        %v2803 = vld [vmem:[%s303 + $0x78] sm:$0xff]
        %v2804 = vld [vmem:[%s4] sm:$0xff]
        %v2805 = vld [vmem:[%s4 + $0x8] sm:$0xff]
        %v2806 = vld [vmem:[%s4 + $0x10] sm:$0xff]
        %v2807 = vld [vmem:[%s4 + $0x18] sm:$0xff]
        %v2808 = vld [vmem:[%s4 + $0x20] sm:$0xff]
        %v2809 = vld [vmem:[%s4 + $0x28] sm:$0xff]
        %v2810 = vld [vmem:[%s4 + $0x30] sm:$0xff]
        %v2811 = vld [vmem:[%s4 + $0x38] sm:$0xff]
        %v2812 = vld [vmem:[%s4 + $0x40] sm:$0xff]
        %v2813 = vld [vmem:[%s4 + $0x48] sm:$0xff]
        %v2814 = vld [vmem:[%s4 + $0x50] sm:$0xff]
        %v2815 = vld [vmem:[%s4 + $0x58] sm:$0xff]
        %v2816 = vld [vmem:[%s4 + $0x60] sm:$0xff]
        %v2817 = vld [vmem:[%s4 + $0x68] sm:$0xff]
        %v2818 = vld [vmem:[%s4 + $0x70] sm:$0xff]
        %v2819 = vld [vmem:[%s4 + $0x78] sm:$0xff]
        %v2820 = vmul.f32 %v2788, %v2804
        %v2821 = vmul.f32 %v2789, %v2805
        %v2822 = vmul.f32 %v2790, %v2806
        %v2823 = vmul.f32 %v2791, %v2807
        %v2824 = vmul.f32 %v2792, %v2808
        %v2825 = vmul.f32 %v2793, %v2809
        %v2826 = vmul.f32 %v2794, %v2810
        %v2827 = vmul.f32 %v2795, %v2811
        %v2828 = vmul.f32 %v2796, %v2812
        %v2829 = vmul.f32 %v2797, %v2813
        %v2830 = vmul.f32 %v2798, %v2814
        %v2831 = vmul.f32 %v2799, %v2815
        %v2832 = vmul.f32 %v2800, %v2816
        %v2833 = vmul.f32 %v2801, %v2817
        %v2834 = vmul.f32 %v2802, %v2818
        %v2835 = vmul.f32 %v2803, %v2819
        %2836 = vst [vmem:[%s303] sm:$0xff] %v2820
        %2837 = vst [vmem:[%s303 + $0x8] sm:$0xff] %v2821
        %2838 = vst [vmem:[%s303 + $0x10] sm:$0xff] %v2822
        %2839 = vst [vmem:[%s303 + $0x18] sm:$0xff] %v2823
        %2840 = vst [vmem:[%s303 + $0x20] sm:$0xff] %v2824
        %2841 = vst [vmem:[%s303 + $0x28] sm:$0xff] %v2825
        %2842 = vst [vmem:[%s303 + $0x30] sm:$0xff] %v2826
        %2843 = vst [vmem:[%s303 + $0x38] sm:$0xff] %v2827
        %2844 = vst [vmem:[%s303 + $0x40] sm:$0xff] %v2828
        %2845 = vst [vmem:[%s303 + $0x48] sm:$0xff] %v2829
        %2846 = vst [vmem:[%s303 + $0x50] sm:$0xff] %v2830
        %2847 = vst [vmem:[%s303 + $0x58] sm:$0xff] %v2831
        %2848 = vst [vmem:[%s303 + $0x60] sm:$0xff] %v2832
        %2849 = vst [vmem:[%s303 + $0x68] sm:$0xff] %v2833
        %2850 = vst [vmem:[%s303 + $0x70] sm:$0xff] %v2834
        %2851 = vst [vmem:[%s303 + $0x78] sm:$0xff] %v2835
      $region48: #{spec_bunn_forward.2} parent=39 // pred_fallthru
        _
      %s2852 = smul.u32 16, %s20
      %p2853 = scmp.lt.s32.totalorder %s2852, 31
      %s2854 = scalar_select %p2853, %s2852, 31
      %s2855 = smul.addr %s2854, 8
      %s2856 = scalar_lea.vmem %s5, %s2855
      // Predicated region
      $region49: #{spec_bunn_forward.2} parent=39 // pred_check
        %p2857 = pneg %p172
      $region50: #{spec_bunn_forward.2} parent=39 // pred_check_branch
        %2859 = sbr.rel (%p2857) target = $region52
      $region51: #{spec_bunn_forward.2} parent=39 // pred_region
        %s2860 = smul.u32 16, %s20
      $region52: #{spec_bunn_forward.2} parent=39 // pred_fallthru
        _
    $region40: #{spec_bunn_forward.2} parent=5 // pred_fallthru
      _
    %p2861 = scmp.le.s32.totalorder 2, %s11
    // Predicated region
    $region53: #{spec_bunn_forward.2} parent=5 // pred_check
      %p2862 = pneg %p2861
    $region54: #{spec_bunn_forward.2} parent=5 // pred_check_branch
      %2864 = sbr.rel (%p2862) target = $region56
    $region55: #{spec_bunn_forward.2} parent=5 // pred_region
      %s2865 = ssub.s32 %s11, 2
      // Predicated region
      $region57: #{spec_bunn_forward.2} parent=55 // pred_check
        %p2866 = pneg %p178
      $region58: #{spec_bunn_forward.2} parent=55 // pred_check_branch
        %2868 = sbr.rel (%p2866) target = $region60
      $region59: #{spec_bunn_forward.2} parent=55 // pred_region
        %s2869 = smul.u32 16, %s22
        %p2870 = scmp.lt.s32.totalorder %s2869, 31
        %s2871 = scalar_select %p2870, %s2869, 31
        %s2872 = smul.addr %s2871, 8
        %s2873 = scalar_lea.vmem %s5, %s2872
      $region60: #{spec_bunn_forward.2} parent=55 // pred_fallthru
        _
    $region56: #{spec_bunn_forward.2} parent=5 // pred_fallthru
      _
  $region6: #{spec_bunn_forward.2} parent=0 // loop_footer
    %s15 = sadd.s32 1, %s11
  $region7: #{spec_bunn_forward.2} parent=0 // loop_footer_branch
    %10 = sbr.rel target = $region3
  $region8: #{spec_bunn_forward.2} parent=0 // loop_exit
    _

// kernel: spec_bunn_forward.3
$region0: #{spec_bunn_forward.3}
  #allocation0 [shape = 'u32[]', space=smem, size = 0x4, offset = 0x4, fixed_abs, tag = 'smem constant byte address 0x4 - core index']
  #allocation1 [shape = 'u32[144,128]{1,0:T(1,128)}', space=vmem, size = 0x12000, scoped, tag = 'internal scratch']
  %s0 = inlined_call_operand.vmem [shape: bf16[1024,128], index: 0, kind: input, shape index: {}]
  %s1 = inlined_call_operand.vmem [shape: f32[1024,16], index: 1, kind: input, shape index: {}]
  %s2 = inlined_call_operand.vmem [shape: bf16[128,256], index: 2, kind: input, shape index: {}]
  %s3 = inlined_call_operand.vmem [shape: f32[1,256], index: 3, kind: input, shape index: {}]
  %s4 = inlined_call_operand.vmem [shape: bf16[256,128], index: 4, kind: input, shape index: {}]
  %s5 = inlined_call_operand.vmem [shape: f32[1,128], index: 5, kind: input, shape index: {}]
  %s6 = inlined_call_operand.vmem [shape: f32[16,384], index: 6, kind: input, shape index: {}]
  %s7 = inlined_call_operand.hbm [shape: f32[1024,128], index: 7, kind: output, shape index: {}]
  %s8 = sld [smem:[#allocation0]]
  $region61: #{spec_bunn_forward.3} parent=0
    _
  %s10 = ssub.s32 1, %s8
  %s11 = scalar_select 0, %s10, %s8
  $region1: #{spec_bunn_forward.3} parent=0
    #allocation2 [shape = 'u8[524288]{0}', space=vmem, size = 0x80000, scoped, tag = 'output window, operand 0']
    #allocation3 [shape = 's32[2]{0}', space=sflag, size = 0x8, scoped, tag = 'scoped memory for spec_bunn_forward.3']
    %12 = vsyncpa [#allocation3], 0
    %s13 = scalar_lea.sflag [#allocation3], 1
    %14 = vsyncpa %s13, 0
    loop: start=0, step=1, limit=4
    $region2: #{spec_bunn_forward.3} parent=1 // loop_pre_header
      _
    $region3: #{spec_bunn_forward.3} parent=1 // loop_header
      %s16 = sphi 0, %s20
      %p17 = scmp.ge.s32.totalorder %s16, 4
      %s26 = sphi 0, %s28
      %s29 = sphi 0, %s26
      %s30 = sphi 0, %s29
      %s46 = sphi 0, %s30
      %s52 = sphi 0, %s54
      %s55 = sphi 0, %s52
      %s56 = sphi 0, %s55
      %s72 = sphi 0, %s56
      %s76 = sphi 0, %s76
      %s78 = sphi 0, %s76
      %s79 = sphi 0, %s78
      %s93 = sphi 0, %s79
      %s97 = sphi 0, %s97
      %s99 = sphi 0, %s97
      %s100 = sphi 0, %s99
      %s114 = sphi 0, %s100
      %s118 = sphi 0, %s118
      %s120 = sphi 0, %s118
      %s121 = sphi 0, %s120
      %s135 = sphi 0, %s121
      %s139 = sphi 0, %s139
      %s141 = sphi 0, %s139
      %s142 = sphi 0, %s141
      %s156 = sphi 0, %s142
      %s160 = sphi 0, %s160
      %s162 = sphi 0, %s160
      %s163 = sphi 0, %s162
      %s177 = sphi 0, %s163
      %s183 = sphi 0, %s185
      %s186 = sphi 0, %s183
      %s187 = sphi 0, %s186
      %s203 = sphi 0, %s187
    $region4: #{spec_bunn_forward.3} parent=1 // loop_header_branch
      %19 = sbr.rel (%p17) target = $region8
    $region5: #{spec_bunn_forward.3} parent=1 // loop_body
      %s21 = ssub.s32 %s16, 1
      %s22 = ssub.s32 %s16, 2
      %s23 = sadd.s32 %s16, 1
      %s24 = ssub.s32 %s16, %s23
      %p25 = scmp.eq.s32.totalorder %s24, 0
      %s27 = sadd.s32 %s26, 1
      %s28 = scalar_select %p25, %s26, %s27
      %p31 = pneg %p25
      %p32 = scmp.eq.s32.totalorder %s16, 1
      %p33 = por %p31, %p32
      %p34 = scmp.ne.s32.totalorder %s26, %s29
      %p35 = scmp.eq.s32.totalorder %s16, 0
      %p36 = por %p34, %p35
      %p37 = scmp.ne.s32.totalorder %s26, %s29
      %p38 = scmp.eq.s32.totalorder %s21, 1
      %p39 = por %p37, %p38
      %p40 = scmp.ne.s32.totalorder %s29, %s30
      %p41 = scmp.eq.s32.totalorder %s21, 0
      %p42 = por %p40, %p41
      %p43 = scmp.ne.s32.totalorder %s29, %s30
      %p44 = scmp.eq.s32.totalorder %s22, 1
      %p45 = por %p43, %p44
      %p47 = scmp.ne.s32.totalorder %s30, %s46
      %p48 = scmp.eq.s32.totalorder %s22, 0
      %p49 = por %p47, %p48
      %s50 = ssub.s32 %s16, %s23
      %p51 = scmp.eq.s32.totalorder %s50, 0
      %s53 = sadd.s32 %s52, 1
      %s54 = scalar_select %p51, %s52, %s53
      %p57 = pneg %p51
      %p58 = scmp.eq.s32.totalorder %s16, 1
      %p59 = por %p57, %p58
      %p60 = scmp.ne.s32.totalorder %s52, %s55
      %p61 = scmp.eq.s32.totalorder %s16, 0
      %p62 = por %p60, %p61
      %p63 = scmp.ne.s32.totalorder %s52, %s55
      %p64 = scmp.eq.s32.totalorder %s21, 1
      %p65 = por %p63, %p64
      %p66 = scmp.ne.s32.totalorder %s55, %s56
      %p67 = scmp.eq.s32.totalorder %s21, 0
      %p68 = por %p66, %p67
      %p69 = scmp.ne.s32.totalorder %s55, %s56
      %p70 = scmp.eq.s32.totalorder %s22, 1
      %p71 = por %p69, %p70
      %p73 = scmp.ne.s32.totalorder %s56, %s72
      %p74 = scmp.eq.s32.totalorder %s22, 0
      %p75 = por %p73, %p74
      %s77 = sadd.s32 %s76, 1
      %p80 = scmp.eq.s32.totalorder %s16, 1
      %p81 = scmp.ne.s32.totalorder %s76, %s78
      %p82 = scmp.eq.s32.totalorder %s16, 0
      %p83 = por %p81, %p82
      %p84 = scmp.ne.s32.totalorder %s76, %s78
      %p85 = scmp.eq.s32.totalorder %s21, 1
      %p86 = por %p84, %p85
      %p87 = scmp.ne.s32.totalorder %s78, %s79
      %p88 = scmp.eq.s32.totalorder %s21, 0
      %p89 = por %p87, %p88
      %p90 = scmp.ne.s32.totalorder %s78, %s79
      %p91 = scmp.eq.s32.totalorder %s22, 1
      %p92 = por %p90, %p91
      %p94 = scmp.ne.s32.totalorder %s79, %s93
      %p95 = scmp.eq.s32.totalorder %s22, 0
      %p96 = por %p94, %p95
      %s98 = sadd.s32 %s97, 1
      %p101 = scmp.eq.s32.totalorder %s16, 1
      %p102 = scmp.ne.s32.totalorder %s97, %s99
      %p103 = scmp.eq.s32.totalorder %s16, 0
      %p104 = por %p102, %p103
      %p105 = scmp.ne.s32.totalorder %s97, %s99
      %p106 = scmp.eq.s32.totalorder %s21, 1
      %p107 = por %p105, %p106
      %p108 = scmp.ne.s32.totalorder %s99, %s100
      %p109 = scmp.eq.s32.totalorder %s21, 0
      %p110 = por %p108, %p109
      %p111 = scmp.ne.s32.totalorder %s99, %s100
      %p112 = scmp.eq.s32.totalorder %s22, 1
      %p113 = por %p111, %p112
      %p115 = scmp.ne.s32.totalorder %s100, %s114
      %p116 = scmp.eq.s32.totalorder %s22, 0
      %p117 = por %p115, %p116
      %s119 = sadd.s32 %s118, 1
      %p122 = scmp.eq.s32.totalorder %s16, 1
      %p123 = scmp.ne.s32.totalorder %s118, %s120
      %p124 = scmp.eq.s32.totalorder %s16, 0
      %p125 = por %p123, %p124
      %p126 = scmp.ne.s32.totalorder %s118, %s120
      %p127 = scmp.eq.s32.totalorder %s21, 1
      %p128 = por %p126, %p127
      %p129 = scmp.ne.s32.totalorder %s120, %s121
      %p130 = scmp.eq.s32.totalorder %s21, 0
      %p131 = por %p129, %p130
      %p132 = scmp.ne.s32.totalorder %s120, %s121
      %p133 = scmp.eq.s32.totalorder %s22, 1
      %p134 = por %p132, %p133
      %p136 = scmp.ne.s32.totalorder %s121, %s135
      %p137 = scmp.eq.s32.totalorder %s22, 0
      %p138 = por %p136, %p137
      %s140 = sadd.s32 %s139, 1
      %p143 = scmp.eq.s32.totalorder %s16, 1
      %p144 = scmp.ne.s32.totalorder %s139, %s141
      %p145 = scmp.eq.s32.totalorder %s16, 0
      %p146 = por %p144, %p145
      %p147 = scmp.ne.s32.totalorder %s139, %s141
      %p148 = scmp.eq.s32.totalorder %s21, 1
      %p149 = por %p147, %p148
      %p150 = scmp.ne.s32.totalorder %s141, %s142
      %p151 = scmp.eq.s32.totalorder %s21, 0
      %p152 = por %p150, %p151
      %p153 = scmp.ne.s32.totalorder %s141, %s142
      %p154 = scmp.eq.s32.totalorder %s22, 1
      %p155 = por %p153, %p154
      %p157 = scmp.ne.s32.totalorder %s142, %s156
      %p158 = scmp.eq.s32.totalorder %s22, 0
      %p159 = por %p157, %p158
      %s161 = sadd.s32 %s160, 1
      %p164 = scmp.eq.s32.totalorder %s16, 1
      %p165 = scmp.ne.s32.totalorder %s160, %s162
      %p166 = scmp.eq.s32.totalorder %s16, 0
      %p167 = por %p165, %p166
      %p168 = scmp.ne.s32.totalorder %s160, %s162
      %p169 = scmp.eq.s32.totalorder %s21, 1
      %p170 = por %p168, %p169
      %p171 = scmp.ne.s32.totalorder %s162, %s163
      %p172 = scmp.eq.s32.totalorder %s21, 0
      %p173 = por %p171, %p172
      %p174 = scmp.ne.s32.totalorder %s162, %s163
      %p175 = scmp.eq.s32.totalorder %s22, 1
      %p176 = por %p174, %p175
      %p178 = scmp.ne.s32.totalorder %s163, %s177
      %p179 = scmp.eq.s32.totalorder %s22, 0
      %p180 = por %p178, %p179
      %s181 = ssub.s32 %s16, %s23
      %p182 = scmp.eq.s32.totalorder %s181, 0
      %s184 = sadd.s32 %s183, 1
      %s185 = scalar_select %p182, %s183, %s184
      %p188 = pneg %p182
      %p189 = scmp.eq.s32.totalorder %s16, 1
      %p190 = por %p188, %p189
      %p191 = scmp.ne.s32.totalorder %s183, %s186
      %p192 = scmp.eq.s32.totalorder %s16, 0
      %p193 = por %p191, %p192
      %p194 = scmp.ne.s32.totalorder %s183, %s186
      %p195 = scmp.eq.s32.totalorder %s21, 1
      %p196 = por %p194, %p195
      %p197 = scmp.ne.s32.totalorder %s186, %s187
      %p198 = scmp.eq.s32.totalorder %s21, 0
      %p199 = por %p197, %p198
      %p200 = scmp.ne.s32.totalorder %s186, %s187
      %p201 = scmp.eq.s32.totalorder %s22, 1
      %p202 = por %p200, %p201
      %p204 = scmp.ne.s32.totalorder %s187, %s203
      %p205 = scmp.eq.s32.totalorder %s22, 0
      %p206 = por %p204, %p205
      %p207 = scmp.le.s32.totalorder 1, %s16
      %p208 = scmp.lt.s32.totalorder %s16, 3
      %p209 = pnand %p207, %p208
      %p210 = pneg %p209
      // Predicated region
      $region9: #{spec_bunn_forward.3} parent=5 // pred_check
        _
      $region10: #{spec_bunn_forward.3} parent=5 // pred_check_branch
        %212 = sbr.rel (%p209) target = $region12
      $region11: #{spec_bunn_forward.3} parent=5 // pred_region
        %s213 = ssub.s32 %s16, 1
        // Predicated region
        $region13: #{spec_bunn_forward.3} parent=11 // pred_check
          %p214 = pneg %p89
        $region14: #{spec_bunn_forward.3} parent=11 // pred_check_branch
          %216 = sbr.rel (%p214) target = $region16
        $region15: #{spec_bunn_forward.3} parent=11 // pred_region
          _
        $region16: #{spec_bunn_forward.3} parent=11 // pred_fallthru
          _
        // Predicated region
        $region17: #{spec_bunn_forward.3} parent=11 // pred_check
          %p217 = pneg %p110
        $region18: #{spec_bunn_forward.3} parent=11 // pred_check_branch
          %219 = sbr.rel (%p217) target = $region20
        $region19: #{spec_bunn_forward.3} parent=11 // pred_region
          _
        $region20: #{spec_bunn_forward.3} parent=11 // pred_fallthru
          _
        // Predicated region
        $region21: #{spec_bunn_forward.3} parent=11 // pred_check
          %p220 = pneg %p131
        $region22: #{spec_bunn_forward.3} parent=11 // pred_check_branch
          %222 = sbr.rel (%p220) target = $region24
        $region23: #{spec_bunn_forward.3} parent=11 // pred_region
          _
        $region24: #{spec_bunn_forward.3} parent=11 // pred_fallthru
          _
        // Predicated region
        $region25: #{spec_bunn_forward.3} parent=11 // pred_check
          %p223 = pneg %p152
        $region26: #{spec_bunn_forward.3} parent=11 // pred_check_branch
          %225 = sbr.rel (%p223) target = $region28
        $region27: #{spec_bunn_forward.3} parent=11 // pred_region
          _
        $region28: #{spec_bunn_forward.3} parent=11 // pred_fallthru
          _
        // Predicated region
        $region29: #{spec_bunn_forward.3} parent=11 // pred_check
          %p226 = pneg %p173
        $region30: #{spec_bunn_forward.3} parent=11 // pred_check_branch
          %228 = sbr.rel (%p226) target = $region32
        $region31: #{spec_bunn_forward.3} parent=11 // pred_region
          _
        $region32: #{spec_bunn_forward.3} parent=11 // pred_fallthru
          _
      $region12: #{spec_bunn_forward.3} parent=5 // pred_fallthru
        _
      %p229 = scmp.lt.s32.totalorder %s16, 2
      // Predicated region
      $region33: #{spec_bunn_forward.3} parent=5 // pred_check
        %p230 = pneg %p229
      $region34: #{spec_bunn_forward.3} parent=5 // pred_check_branch
        %232 = sbr.rel (%p230) target = $region36
      $region35: #{spec_bunn_forward.3} parent=5 // pred_region
        // Predicated region
        $region37: #{spec_bunn_forward.3} parent=35 // pred_check
          %p233 = pneg %p36
        $region38: #{spec_bunn_forward.3} parent=35 // pred_check_branch
          %235 = sbr.rel (%p233) target = $region40
        $region39: #{spec_bunn_forward.3} parent=35 // pred_region
          %s236 = smul.u32 64, %s16
          %p237 = scmp.lt.s32.totalorder %s236, 127
          %s238 = scalar_select %p237, %s236, 127
          %s239 = smul.addr %s238, 4
          %s240 = scalar_lea.vmem %s0, %s239
          %s241 = smul.u32 64, %s16
        $region40: #{spec_bunn_forward.3} parent=35 // pred_fallthru
          _
        // Predicated region
        $region41: #{spec_bunn_forward.3} parent=35 // pred_check
          %p242 = pneg %p62
        $region42: #{spec_bunn_forward.3} parent=35 // pred_check_branch
          %244 = sbr.rel (%p242) target = $region44
        $region43: #{spec_bunn_forward.3} parent=35 // pred_region
          %s245 = smul.u32 64, %s16
          %p246 = scmp.lt.s32.totalorder %s245, 127
          %s247 = scalar_select %p246, %s245, 127
          %s248 = smul.addr %s247, 8
          %s249 = scalar_lea.vmem %s1, %s248
          %s250 = smul.u32 64, %s16
        $region44: #{spec_bunn_forward.3} parent=35 // pred_fallthru
          _
      $region36: #{spec_bunn_forward.3} parent=5 // pred_fallthru
        _
      %p251 = scmp.le.s32.totalorder 1, %s16
      %p252 = scmp.lt.s32.totalorder %s16, 3
      %p253 = pnand %p251, %p252
      %p254 = pneg %p253
      // Predicated region
      $region45: #{spec_bunn_forward.3} parent=5 // pred_check
        _
      $region46: #{spec_bunn_forward.3} parent=5 // pred_check_branch
        %256 = sbr.rel (%p253) target = $region48
      $region47: #{spec_bunn_forward.3} parent=5 // pred_region
        %s257 = ssub.s32 %s16, 1
        %s258 = smul.u32 64, %s21
        %p259 = scmp.lt.s32.totalorder %s258, 127
        %s260 = scalar_select %p259, %s258, 127
        %s261 = smul.addr %s260, 4
        %s262 = scalar_lea.vmem %s0, %s261
        %p263 = pneg %p42
        %p264 = pneg %p39
        %s265 = smul.u32 64, %s21
        %p266 = scmp.lt.s32.totalorder %s265, 127
        %s267 = scalar_select %p266, %s265, 127
        %s268 = smul.addr %s267, 8
        %s269 = scalar_lea.vmem %s1, %s268
        %p270 = pneg %p68
        %p271 = pneg %p65
        %p272 = pneg %p89
        %p273 = pneg %p86
        %p274 = pneg %p110
        %p275 = pneg %p107
        %p276 = pneg %p131
        %p277 = pneg %p128
        %p278 = pneg %p152
        %p279 = pneg %p149
        %p280 = pneg %p173
        %p281 = pneg %p170
        %p282 = pneg %p199
        %p283 = pneg %p196
        %s284 = sand.u32 %s186, 1
        %s285 = scalar_lea.sflag [#allocation3], %s284
        %s286 = sand.u32 %s186, 1
        %s287 = smul.addr %s286, 512
        %s288 = scalar_lea.vmem [#allocation2], %s287
        %s289 = smul.u32 64, %s21
        %p290 = scmp.lt.s32.totalorder %s289, 127
        %s291 = scalar_select %p290, %s289, 127
        %s292 = smul.addr %s291, 4
        %s293 = scalar_lea.vmem %s0, %s292
        %s294 = smul.u32 64, %s21
        %s295 = smul.u32 64, %s21
        %p296 = scmp.lt.s32.totalorder %s295, 127
        %s297 = scalar_select %p296, %s295, 127
        %s298 = smul.addr %s297, 8
        %s299 = scalar_lea.vmem %s1, %s298
        %s300 = smul.u32 64, %s21
        %s301 = smul.u32 64, %s21
        %v303 = vld [vmem:[%s293] sm:$0xf]
        %v304 = vld [vmem:[%s293 + $0x4] sm:$0xf]
        %v305 = vld [vmem:[%s293 + $0x8] sm:$0xf]
        %v306 = vld [vmem:[%s293 + $0xc] sm:$0xf]
        %v307 = vld [vmem:[%s293 + $0x10] sm:$0xf]
        %v308 = vld [vmem:[%s293 + $0x14] sm:$0xf]
        %v309 = vld [vmem:[%s293 + $0x18] sm:$0xf]
        %v310 = vld [vmem:[%s293 + $0x1c] sm:$0xf]
        %v311 = vld [vmem:[%s293 + $0x20] sm:$0xf]
        %v312 = vld [vmem:[%s293 + $0x24] sm:$0xf]
        %v313 = vld [vmem:[%s293 + $0x28] sm:$0xf]
        %v314 = vld [vmem:[%s293 + $0x2c] sm:$0xf]
        %v315 = vld [vmem:[%s293 + $0x30] sm:$0xf]
        %v316 = vld [vmem:[%s293 + $0x34] sm:$0xf]
        %v317 = vld [vmem:[%s293 + $0x38] sm:$0xf]
        %v318 = vld [vmem:[%s293 + $0x3c] sm:$0xf]
        %v319 = vld [vmem:[%s293 + $0x40] sm:$0xf]
        %v320 = vld [vmem:[%s293 + $0x44] sm:$0xf]
        %v321 = vld [vmem:[%s293 + $0x48] sm:$0xf]
        %v322 = vld [vmem:[%s293 + $0x4c] sm:$0xf]
        %v323 = vld [vmem:[%s293 + $0x50] sm:$0xf]
        %v324 = vld [vmem:[%s293 + $0x54] sm:$0xf]
        %v325 = vld [vmem:[%s293 + $0x58] sm:$0xf]
        %v326 = vld [vmem:[%s293 + $0x5c] sm:$0xf]
        %v327 = vld [vmem:[%s293 + $0x60] sm:$0xf]
        %v328 = vld [vmem:[%s293 + $0x64] sm:$0xf]
        %v329 = vld [vmem:[%s293 + $0x68] sm:$0xf]
        %v330 = vld [vmem:[%s293 + $0x6c] sm:$0xf]
        %v331 = vld [vmem:[%s293 + $0x70] sm:$0xf]
        %v332 = vld [vmem:[%s293 + $0x74] sm:$0xf]
        %v333 = vld [vmem:[%s293 + $0x78] sm:$0xf]
        %v334 = vld [vmem:[%s293 + $0x7c] sm:$0xf]
        %v335 = vld [vmem:[%s293 + $0x80] sm:$0xf]
        %v336 = vld [vmem:[%s293 + $0x84] sm:$0xf]
        %v337 = vld [vmem:[%s293 + $0x88] sm:$0xf]
        %v338 = vld [vmem:[%s293 + $0x8c] sm:$0xf]
        %v339 = vld [vmem:[%s293 + $0x90] sm:$0xf]
        %v340 = vld [vmem:[%s293 + $0x94] sm:$0xf]
        %v341 = vld [vmem:[%s293 + $0x98] sm:$0xf]
        %v342 = vld [vmem:[%s293 + $0x9c] sm:$0xf]
        %v343 = vld [vmem:[%s293 + $0xa0] sm:$0xf]
        %v344 = vld [vmem:[%s293 + $0xa4] sm:$0xf]
        %v345 = vld [vmem:[%s293 + $0xa8] sm:$0xf]
        %v346 = vld [vmem:[%s293 + $0xac] sm:$0xf]
        %v347 = vld [vmem:[%s293 + $0xb0] sm:$0xf]
        %v348 = vld [vmem:[%s293 + $0xb4] sm:$0xf]
        %v349 = vld [vmem:[%s293 + $0xb8] sm:$0xf]
        %v350 = vld [vmem:[%s293 + $0xbc] sm:$0xf]
        %v351 = vld [vmem:[%s293 + $0xc0] sm:$0xf]
        %v352 = vld [vmem:[%s293 + $0xc4] sm:$0xf]
        %v353 = vld [vmem:[%s293 + $0xc8] sm:$0xf]
        %v354 = vld [vmem:[%s293 + $0xcc] sm:$0xf]
        %v355 = vld [vmem:[%s293 + $0xd0] sm:$0xf]
        %v356 = vld [vmem:[%s293 + $0xd4] sm:$0xf]
        %v357 = vld [vmem:[%s293 + $0xd8] sm:$0xf]
        %v358 = vld [vmem:[%s293 + $0xdc] sm:$0xf]
        %v359 = vld [vmem:[%s293 + $0xe0] sm:$0xf]
        %v360 = vld [vmem:[%s293 + $0xe4] sm:$0xf]
        %v361 = vld [vmem:[%s293 + $0xe8] sm:$0xf]
        %v362 = vld [vmem:[%s293 + $0xec] sm:$0xf]
        %v363 = vld [vmem:[%s293 + $0xf0] sm:$0xf]
        %v364 = vld [vmem:[%s293 + $0xf4] sm:$0xf]
        %v365 = vld [vmem:[%s293 + $0xf8] sm:$0xf]
        %v366 = vld [vmem:[%s293 + $0xfc] sm:$0xf]
        %v367 = vld [vmem:[%s2] sm:$0xff]
        %v368 = vld [vmem:[%s2 + $0x8] sm:$0xff]
        %v369 = vld [vmem:[%s2 + $0x10] sm:$0xff]
        %v370 = vld [vmem:[%s2 + $0x18] sm:$0xff]
        %v371 = vld [vmem:[%s2 + $0x20] sm:$0xff]
        %v372 = vld [vmem:[%s2 + $0x28] sm:$0xff]
        %v373 = vld [vmem:[%s2 + $0x30] sm:$0xff]
        %v374 = vld [vmem:[%s2 + $0x38] sm:$0xff]
        %v375 = vld [vmem:[%s2 + $0x40] sm:$0xff]
        %v376 = vld [vmem:[%s2 + $0x48] sm:$0xff]
        %v377 = vld [vmem:[%s2 + $0x50] sm:$0xff]
        %v378 = vld [vmem:[%s2 + $0x58] sm:$0xff]
        %v379 = vld [vmem:[%s2 + $0x60] sm:$0xff]
        %v380 = vld [vmem:[%s2 + $0x68] sm:$0xff]
        %v381 = vld [vmem:[%s2 + $0x70] sm:$0xff]
        %v382 = vld [vmem:[%s2 + $0x78] sm:$0xff]
        %v383 = vld [vmem:[%s3] sm:$0x3]
        %v385 = vlaneseq
        %v386 = vshrl.u32 %v385, 7
        %v387 = vsub.s32 0, %v386
        %v388 = vrot.slane %v383, %v387
        %v389 = vlaneseq
        %v390 = vshrl.u32 %v389, 7
        %v391 = vsub.s32 1, %v390
        %v392 = vrot.slane %v383, %v391
        %v459 = vunpack.c.l.b16 %v303
        %v460 = vunpack.c.l.b16 %v304
        %v461 = vunpack.c.l.b16 %v305
        %v462 = vunpack.c.l.b16 %v306
        %v463 = vunpack.c.l.b16 %v307
        %v464 = vunpack.c.l.b16 %v308
        %v465 = vunpack.c.l.b16 %v309
        %v466 = vunpack.c.l.b16 %v310
        %v467 = vunpack.c.l.b16 %v311
        %v468 = vunpack.c.l.b16 %v312
        %v469 = vunpack.c.l.b16 %v313
        %v470 = vunpack.c.l.b16 %v314
        %v471 = vunpack.c.l.b16 %v315
        %v472 = vunpack.c.l.b16 %v316
        %v473 = vunpack.c.l.b16 %v317
        %v474 = vunpack.c.l.b16 %v318
        %v475 = vunpack.c.l.b16 %v319
        %v476 = vunpack.c.l.b16 %v320
        %v477 = vunpack.c.l.b16 %v321
        %v478 = vunpack.c.l.b16 %v322
        %v479 = vunpack.c.l.b16 %v323
        %v480 = vunpack.c.l.b16 %v324
        %v481 = vunpack.c.l.b16 %v325
        %v482 = vunpack.c.l.b16 %v326
        %v483 = vunpack.c.l.b16 %v327
        %v484 = vunpack.c.l.b16 %v328
        %v485 = vunpack.c.l.b16 %v329
        %v486 = vunpack.c.l.b16 %v330
        %v487 = vunpack.c.l.b16 %v331
        %v488 = vunpack.c.l.b16 %v332
        %v489 = vunpack.c.l.b16 %v333
        %v490 = vunpack.c.l.b16 %v334
        %v491 = vunpack.c.l.b16 %v335
        %v492 = vunpack.c.l.b16 %v336
        %v493 = vunpack.c.l.b16 %v337
        %v494 = vunpack.c.l.b16 %v338
        %v495 = vunpack.c.l.b16 %v339
        %v496 = vunpack.c.l.b16 %v340
        %v497 = vunpack.c.l.b16 %v341
        %v498 = vunpack.c.l.b16 %v342
        %v499 = vunpack.c.l.b16 %v343
        %v500 = vunpack.c.l.b16 %v344
        %v501 = vunpack.c.l.b16 %v345
        %v502 = vunpack.c.l.b16 %v346
        %v503 = vunpack.c.l.b16 %v347
        %v504 = vunpack.c.l.b16 %v348
        %v505 = vunpack.c.l.b16 %v349
        %v506 = vunpack.c.l.b16 %v350
        %v507 = vunpack.c.l.b16 %v351
        %v508 = vunpack.c.l.b16 %v352
        %v509 = vunpack.c.l.b16 %v353
        %v510 = vunpack.c.l.b16 %v354
        %v511 = vunpack.c.l.b16 %v355
        %v512 = vunpack.c.l.b16 %v356
        %v513 = vunpack.c.l.b16 %v357
        %v514 = vunpack.c.l.b16 %v358
        %v515 = vunpack.c.l.b16 %v359
        %v516 = vunpack.c.l.b16 %v360
        %v517 = vunpack.c.l.b16 %v361
        %v518 = vunpack.c.l.b16 %v362
        %v519 = vunpack.c.l.b16 %v363
        %v520 = vunpack.c.l.b16 %v364
        %v521 = vunpack.c.l.b16 %v365
        %v522 = vunpack.c.l.b16 %v366
        %v523 = vpack.c.b16 %v460, %v459
        %v524 = vpack.c.b16 %v462, %v461
        %v525 = vpack.c.b16 %v464, %v463
        %v526 = vpack.c.b16 %v466, %v465
        %v527 = vpack.c.b16 %v468, %v467
        %v528 = vpack.c.b16 %v470, %v469
        %v529 = vpack.c.b16 %v472, %v471
        %v530 = vpack.c.b16 %v474, %v473
        %v531 = vpack.c.b16 %v476, %v475
        %v532 = vpack.c.b16 %v478, %v477
        %v533 = vpack.c.b16 %v480, %v479
        %v534 = vpack.c.b16 %v482, %v481
        %v535 = vpack.c.b16 %v484, %v483
        %v536 = vpack.c.b16 %v486, %v485
        %v537 = vpack.c.b16 %v488, %v487
        %v538 = vpack.c.b16 %v490, %v489
        %v539 = vpack.c.b16 %v492, %v491
        %v540 = vpack.c.b16 %v494, %v493
        %v541 = vpack.c.b16 %v496, %v495
        %v542 = vpack.c.b16 %v498, %v497
        %v543 = vpack.c.b16 %v500, %v499
        %v544 = vpack.c.b16 %v502, %v501
        %v545 = vpack.c.b16 %v504, %v503
        %v546 = vpack.c.b16 %v506, %v505
        %v547 = vpack.c.b16 %v508, %v507
        %v548 = vpack.c.b16 %v510, %v509
        %v549 = vpack.c.b16 %v512, %v511
        %v550 = vpack.c.b16 %v514, %v513
        %v551 = vpack.c.b16 %v516, %v515
        %v552 = vpack.c.b16 %v518, %v517
        %v553 = vpack.c.b16 %v520, %v519
        %v554 = vpack.c.b16 %v522, %v521
        %v603 = vunpack.c.l.b16 %v367
        %v604 = vunpack.c.h.b16 %v367
        %v605 = vunpack.c.l.b16 %v368
        %v606 = vunpack.c.h.b16 %v368
        %v607 = vunpack.c.l.b16 %v369
        %v608 = vunpack.c.h.b16 %v369
        %v609 = vunpack.c.l.b16 %v370
        %v610 = vunpack.c.h.b16 %v370
        %v611 = vunpack.c.l.b16 %v371
        %v612 = vunpack.c.h.b16 %v371
        %v613 = vunpack.c.l.b16 %v372
        %v614 = vunpack.c.h.b16 %v372
        %v615 = vunpack.c.l.b16 %v373
        %v616 = vunpack.c.h.b16 %v373
        %v617 = vunpack.c.l.b16 %v374
        %v618 = vunpack.c.h.b16 %v374
        %v619 = vunpack.c.l.b16 %v375
        %v620 = vunpack.c.h.b16 %v375
        %v621 = vunpack.c.l.b16 %v376
        %v622 = vunpack.c.h.b16 %v376
        %v623 = vunpack.c.l.b16 %v377
        %v624 = vunpack.c.h.b16 %v377
        %v625 = vunpack.c.l.b16 %v378
        %v626 = vunpack.c.h.b16 %v378
        %v627 = vunpack.c.l.b16 %v379
        %v628 = vunpack.c.h.b16 %v379
        %v629 = vunpack.c.l.b16 %v380
        %v630 = vunpack.c.h.b16 %v380
        %v631 = vunpack.c.l.b16 %v381
        %v632 = vunpack.c.h.b16 %v381
        %v633 = vunpack.c.l.b16 %v382
        %v634 = vunpack.c.h.b16 %v382
        %v635 = vpack.c.b16 %v605, %v603
        %v636 = vpack.c.b16 %v606, %v604
        %v637 = vpack.c.b16 %v609, %v607
        %v638 = vpack.c.b16 %v610, %v608
        %v639 = vpack.c.b16 %v613, %v611
        %v640 = vpack.c.b16 %v614, %v612
        %v641 = vpack.c.b16 %v617, %v615
        %v642 = vpack.c.b16 %v618, %v616
        %v643 = vpack.c.b16 %v621, %v619
        %v644 = vpack.c.b16 %v622, %v620
        %v645 = vpack.c.b16 %v625, %v623
        %v646 = vpack.c.b16 %v626, %v624
        %v647 = vpack.c.b16 %v629, %v627
        %v648 = vpack.c.b16 %v630, %v628
        %v649 = vpack.c.b16 %v633, %v631
        %v650 = vpack.c.b16 %v634, %v632
        %667 = vmatprep.subr.bf16.mxu0 %v636
        %668 = vmatpush1.bf16.msra.mxu0 %v635
        %669 = vmatprep.subr.bf16.mxu0 %v638
        %670 = vmatpush1.bf16.msra.mxu0 %v637
        %671 = vmatprep.subr.bf16.mxu0 %v640
        %672 = vmatpush1.bf16.msra.mxu0 %v639
        %673 = vmatprep.subr.bf16.mxu0 %v642
        %674 = vmatpush1.bf16.msra.mxu0 %v641
        %675 = vmatprep.subr.bf16.mxu0 %v644
        %676 = vmatpush1.bf16.msra.mxu0 %v643
        %677 = vmatprep.subr.bf16.mxu0 %v646
        %678 = vmatpush1.bf16.msra.mxu0 %v645
        %679 = vmatprep.subr.bf16.mxu0 %v648
        %680 = vmatpush1.bf16.msra.mxu0 %v647
        %681 = vmatprep.subr.bf16.mxu0 %v650
        %682 = vmatpush1.bf16.msra.mxu0 %v649
        %683 = vmatprep.subr.bf16.mxu0 0
        %684 = vmatpush1.bf16.msra.mxu0 0
        %685 = vmatprep.subr.bf16.mxu0 0
        %686 = vmatpush1.bf16.msra.mxu0 0
        %687 = vmatprep.subr.bf16.mxu0 0
        %688 = vmatpush1.bf16.msra.mxu0 0
        %689 = vmatprep.subr.bf16.mxu0 0
        %690 = vmatpush1.bf16.msra.mxu0 0
        %691 = vmatprep.subr.bf16.mxu0 0
        %692 = vmatpush1.bf16.msra.mxu0 0
        %693 = vmatprep.subr.bf16.mxu0 0
        %694 = vmatpush1.bf16.msra.mxu0 0
        %695 = vmatprep.subr.bf16.mxu0 0
        %696 = vmatpush1.bf16.msra.mxu0 0
        %697 = vmatprep.subr.bf16.mxu0 0
        %698 = vmatpush1.bf16.msra.mxu0 0
        %699 = vmatprep.mubr.bf16.mxu0 0
        %700 = vmatmul.mubr.bf16.gmra.mrb[0].mxu0 %v523
        %v701 = vpop.f32.mrb[0].mxu0
        %v702 = vadd.f32 %v388, %v701
        %v703 = vpop.f32.mrb[0].mxu0
        %v704 = vadd.f32 %v392, %v703
        %v705 = vpop.f32.mrb[0].mxu0
        %v706 = vadd.f32 %v388, %v705
        %v707 = vpop.f32.mrb[0].mxu0
        %v708 = vadd.f32 %v392, %v707
        %709 = vmatprep.mubr.bf16.mxu0 0
        %710 = vmatmul.mubr.bf16.gmra.mrb[0].mxu0 %v524
        %v711 = vpop.f32.mrb[0].mxu0
        %v712 = vadd.f32 %v388, %v711
        %v713 = vpop.f32.mrb[0].mxu0
        %v714 = vadd.f32 %v392, %v713
        %v715 = vpop.f32.mrb[0].mxu0
        %v716 = vadd.f32 %v388, %v715
        %v717 = vpop.f32.mrb[0].mxu0
        %v718 = vadd.f32 %v392, %v717
        %719 = vmatprep.mubr.bf16.mxu0 0
        %720 = vmatmul.mubr.bf16.gmra.mrb[0].mxu0 %v525
        %v721 = vpop.f32.mrb[0].mxu0
        %v722 = vadd.f32 %v388, %v721
        %v723 = vpop.f32.mrb[0].mxu0
        %v724 = vadd.f32 %v392, %v723
        %v725 = vpop.f32.mrb[0].mxu0
        %v726 = vadd.f32 %v388, %v725
        %v727 = vpop.f32.mrb[0].mxu0
        %v728 = vadd.f32 %v392, %v727
        %729 = vmatprep.mubr.bf16.mxu0 0
        %730 = vmatmul.mubr.bf16.gmra.mrb[0].mxu0 %v526
        %v731 = vpop.f32.mrb[0].mxu0
        %v732 = vadd.f32 %v388, %v731
        %v733 = vpop.f32.mrb[0].mxu0
        %v734 = vadd.f32 %v392, %v733
        %v735 = vpop.f32.mrb[0].mxu0
        %v736 = vadd.f32 %v388, %v735
        %v737 = vpop.f32.mrb[0].mxu0
        %v738 = vadd.f32 %v392, %v737
        %739 = vmatprep.mubr.bf16.mxu0 0
        %740 = vmatmul.mubr.bf16.gmra.mrb[0].mxu0 %v527
        %v741 = vpop.f32.mrb[0].mxu0
        %v742 = vadd.f32 %v388, %v741
        %v743 = vpop.f32.mrb[0].mxu0
        %v744 = vadd.f32 %v392, %v743
        %v745 = vpop.f32.mrb[0].mxu0
        %v746 = vadd.f32 %v388, %v745
        %v747 = vpop.f32.mrb[0].mxu0
        %v748 = vadd.f32 %v392, %v747
        %749 = vmatprep.mubr.bf16.mxu0 0
        %750 = vmatmul.mubr.bf16.gmra.mrb[0].mxu0 %v528
        %v751 = vpop.f32.mrb[0].mxu0
        %v752 = vadd.f32 %v388, %v751
        %v753 = vpop.f32.mrb[0].mxu0
        %v754 = vadd.f32 %v392, %v753
        %v755 = vpop.f32.mrb[0].mxu0
        %v756 = vadd.f32 %v388, %v755
        %v757 = vpop.f32.mrb[0].mxu0
        %v758 = vadd.f32 %v392, %v757
        %759 = vmatprep.mubr.bf16.mxu0 0
        %760 = vmatmul.mubr.bf16.gmra.mrb[0].mxu0 %v529
        %v761 = vpop.f32.mrb[0].mxu0
        %v762 = vadd.f32 %v388, %v761
        %v763 = vpop.f32.mrb[0].mxu0
        %v764 = vadd.f32 %v392, %v763
        %v765 = vpop.f32.mrb[0].mxu0
        %v766 = vadd.f32 %v388, %v765
        %v767 = vpop.f32.mrb[0].mxu0
        %v768 = vadd.f32 %v392, %v767
        %769 = vmatprep.mubr.bf16.mxu0 0
        %770 = vmatmul.mubr.bf16.gmra.mrb[0].mxu0 %v530
        %v771 = vpop.f32.mrb[0].mxu0
        %v772 = vadd.f32 %v388, %v771
        %v773 = vpop.f32.mrb[0].mxu0
        %v774 = vadd.f32 %v392, %v773
        %v775 = vpop.f32.mrb[0].mxu0
        %v776 = vadd.f32 %v388, %v775
        %v777 = vpop.f32.mrb[0].mxu0
        %v778 = vadd.f32 %v392, %v777
        %779 = vmatprep.mubr.bf16.mxu0 0
        %780 = vmatmul.mubr.bf16.gmra.mrb[0].mxu0 %v531
        %v781 = vpop.f32.mrb[0].mxu0
        %v782 = vadd.f32 %v388, %v781
        %v783 = vpop.f32.mrb[0].mxu0
        %v784 = vadd.f32 %v392, %v783
        %v785 = vpop.f32.mrb[0].mxu0
        %v786 = vadd.f32 %v388, %v785
        %v787 = vpop.f32.mrb[0].mxu0
        %v788 = vadd.f32 %v392, %v787
        %789 = vmatprep.mubr.bf16.mxu0 0
        %790 = vmatmul.mubr.bf16.gmra.mrb[0].mxu0 %v532
        %v791 = vpop.f32.mrb[0].mxu0
        %v792 = vadd.f32 %v388, %v791
        %v793 = vpop.f32.mrb[0].mxu0
        %v794 = vadd.f32 %v392, %v793
        %v795 = vpop.f32.mrb[0].mxu0
        %v796 = vadd.f32 %v388, %v795
        %v797 = vpop.f32.mrb[0].mxu0
        %v798 = vadd.f32 %v392, %v797
        %799 = vmatprep.mubr.bf16.mxu0 0
        %800 = vmatmul.mubr.bf16.gmra.mrb[0].mxu0 %v533
        %v801 = vpop.f32.mrb[0].mxu0
        %v802 = vadd.f32 %v388, %v801
        %v803 = vpop.f32.mrb[0].mxu0
        %v804 = vadd.f32 %v392, %v803
        %v805 = vpop.f32.mrb[0].mxu0
        %v806 = vadd.f32 %v388, %v805
        %v807 = vpop.f32.mrb[0].mxu0
        %v808 = vadd.f32 %v392, %v807
        %809 = vmatprep.mubr.bf16.mxu0 0
        %810 = vmatmul.mubr.bf16.gmra.mrb[0].mxu0 %v534
        %v811 = vpop.f32.mrb[0].mxu0
        %v812 = vadd.f32 %v388, %v811
        %v813 = vpop.f32.mrb[0].mxu0
        %v814 = vadd.f32 %v392, %v813
        %v815 = vpop.f32.mrb[0].mxu0
        %v816 = vadd.f32 %v388, %v815
        %v817 = vpop.f32.mrb[0].mxu0
        %v818 = vadd.f32 %v392, %v817
        %819 = vmatprep.mubr.bf16.mxu0 0
        %820 = vmatmul.mubr.bf16.gmra.mrb[0].mxu0 %v535
        %v821 = vpop.f32.mrb[0].mxu0
        %v822 = vadd.f32 %v388, %v821
        %v823 = vpop.f32.mrb[0].mxu0
        %v824 = vadd.f32 %v392, %v823
        %v825 = vpop.f32.mrb[0].mxu0
        %v826 = vadd.f32 %v388, %v825
        %v827 = vpop.f32.mrb[0].mxu0
        %v828 = vadd.f32 %v392, %v827
        %829 = vmatprep.mubr.bf16.mxu0 0
        %830 = vmatmul.mubr.bf16.gmra.mrb[0].mxu0 %v536
        %v831 = vpop.f32.mrb[0].mxu0
        %v832 = vadd.f32 %v388, %v831
        %v833 = vpop.f32.mrb[0].mxu0
        %v834 = vadd.f32 %v392, %v833
        %v835 = vpop.f32.mrb[0].mxu0
        %v836 = vadd.f32 %v388, %v835
        %v837 = vpop.f32.mrb[0].mxu0
        %v838 = vadd.f32 %v392, %v837
        %839 = vmatprep.mubr.bf16.mxu0 0
        %840 = vmatmul.mubr.bf16.gmra.mrb[0].mxu0 %v537
        %v841 = vpop.f32.mrb[0].mxu0
        %v842 = vadd.f32 %v388, %v841
        %v843 = vpop.f32.mrb[0].mxu0
        %v844 = vadd.f32 %v392, %v843
        %v845 = vpop.f32.mrb[0].mxu0
        %v846 = vadd.f32 %v388, %v845
        %v847 = vpop.f32.mrb[0].mxu0
        %v848 = vadd.f32 %v392, %v847
        %849 = vmatprep.mubr.bf16.mxu0 0
        %850 = vmatmul.mubr.bf16.gmra.mrb[0].mxu0 %v538
        %v851 = vpop.f32.mrb[0].mxu0
        %v852 = vadd.f32 %v388, %v851
        %v853 = vpop.f32.mrb[0].mxu0
        %v854 = vadd.f32 %v392, %v853
        %v855 = vpop.f32.mrb[0].mxu0
        %v856 = vadd.f32 %v388, %v855
        %v857 = vpop.f32.mrb[0].mxu0
        %v858 = vadd.f32 %v392, %v857
        %859 = vmatprep.mubr.bf16.mxu0 0
        %860 = vmatmul.mubr.bf16.gmra.mrb[0].mxu0 %v539
        %v861 = vpop.f32.mrb[0].mxu0
        %v862 = vadd.f32 %v388, %v861
        %v863 = vpop.f32.mrb[0].mxu0
        %v864 = vadd.f32 %v392, %v863
        %v865 = vpop.f32.mrb[0].mxu0
        %v866 = vadd.f32 %v388, %v865
        %v867 = vpop.f32.mrb[0].mxu0
        %v868 = vadd.f32 %v392, %v867
        %869 = vmatprep.mubr.bf16.mxu0 0
        %870 = vmatmul.mubr.bf16.gmra.mrb[0].mxu0 %v540
        %v871 = vpop.f32.mrb[0].mxu0
        %v872 = vadd.f32 %v388, %v871
        %v873 = vpop.f32.mrb[0].mxu0
        %v874 = vadd.f32 %v392, %v873
        %v875 = vpop.f32.mrb[0].mxu0
        %v876 = vadd.f32 %v388, %v875
        %v877 = vpop.f32.mrb[0].mxu0
        %v878 = vadd.f32 %v392, %v877
        %879 = vmatprep.mubr.bf16.mxu0 0
        %880 = vmatmul.mubr.bf16.gmra.mrb[0].mxu0 %v541
        %v881 = vpop.f32.mrb[0].mxu0
        %v882 = vadd.f32 %v388, %v881
        %v883 = vpop.f32.mrb[0].mxu0
        %v884 = vadd.f32 %v392, %v883
        %v885 = vpop.f32.mrb[0].mxu0
        %v886 = vadd.f32 %v388, %v885
        %v887 = vpop.f32.mrb[0].mxu0
        %v888 = vadd.f32 %v392, %v887
        %889 = vmatprep.mubr.bf16.mxu0 0
        %890 = vmatmul.mubr.bf16.gmra.mrb[0].mxu0 %v542
        %v891 = vpop.f32.mrb[0].mxu0
        %v892 = vadd.f32 %v388, %v891
        %v893 = vpop.f32.mrb[0].mxu0
        %v894 = vadd.f32 %v392, %v893
        %v895 = vpop.f32.mrb[0].mxu0
        %v896 = vadd.f32 %v388, %v895
        %v897 = vpop.f32.mrb[0].mxu0
        %v898 = vadd.f32 %v392, %v897
        %899 = vmatprep.mubr.bf16.mxu0 0
        %900 = vmatmul.mubr.bf16.gmra.mrb[0].mxu0 %v543
        %v901 = vpop.f32.mrb[0].mxu0
        %v902 = vadd.f32 %v388, %v901
        %v903 = vpop.f32.mrb[0].mxu0
        %v904 = vadd.f32 %v392, %v903
        %v905 = vpop.f32.mrb[0].mxu0
        %v906 = vadd.f32 %v388, %v905
        %v907 = vpop.f32.mrb[0].mxu0
        %v908 = vadd.f32 %v392, %v907
        %909 = vmatprep.mubr.bf16.mxu0 0
        %910 = vmatmul.mubr.bf16.gmra.mrb[0].mxu0 %v544
        %v911 = vpop.f32.mrb[0].mxu0
        %v912 = vadd.f32 %v388, %v911
        %v913 = vpop.f32.mrb[0].mxu0
        %v914 = vadd.f32 %v392, %v913
        %v915 = vpop.f32.mrb[0].mxu0
        %v916 = vadd.f32 %v388, %v915
        %v917 = vpop.f32.mrb[0].mxu0
        %v918 = vadd.f32 %v392, %v917
        %919 = vmatprep.mubr.bf16.mxu0 0
        %920 = vmatmul.mubr.bf16.gmra.mrb[0].mxu0 %v545
        %v921 = vpop.f32.mrb[0].mxu0
        %v922 = vadd.f32 %v388, %v921
        %v923 = vpop.f32.mrb[0].mxu0
        %v924 = vadd.f32 %v392, %v923
        %v925 = vpop.f32.mrb[0].mxu0
        %v926 = vadd.f32 %v388, %v925
        %v927 = vpop.f32.mrb[0].mxu0
        %v928 = vadd.f32 %v392, %v927
        %929 = vmatprep.mubr.bf16.mxu0 0
        %930 = vmatmul.mubr.bf16.gmra.mrb[0].mxu0 %v546
        %v931 = vpop.f32.mrb[0].mxu0
        %v932 = vadd.f32 %v388, %v931
        %v933 = vpop.f32.mrb[0].mxu0
        %v934 = vadd.f32 %v392, %v933
        %v935 = vpop.f32.mrb[0].mxu0
        %v936 = vadd.f32 %v388, %v935
        %v937 = vpop.f32.mrb[0].mxu0
        %v938 = vadd.f32 %v392, %v937
        %939 = vmatprep.mubr.bf16.mxu0 0
        %940 = vmatmul.mubr.bf16.gmra.mrb[0].mxu0 %v547
        %v941 = vpop.f32.mrb[0].mxu0
        %v942 = vadd.f32 %v388, %v941
        %v943 = vpop.f32.mrb[0].mxu0
        %v944 = vadd.f32 %v392, %v943
        %v945 = vpop.f32.mrb[0].mxu0
        %v946 = vadd.f32 %v388, %v945
        %v947 = vpop.f32.mrb[0].mxu0
        %v948 = vadd.f32 %v392, %v947
        %949 = vmatprep.mubr.bf16.mxu0 0
        %950 = vmatmul.mubr.bf16.gmra.mrb[0].mxu0 %v548
        %v951 = vpop.f32.mrb[0].mxu0
        %v952 = vadd.f32 %v388, %v951
        %v953 = vpop.f32.mrb[0].mxu0
        %v954 = vadd.f32 %v392, %v953
        %v955 = vpop.f32.mrb[0].mxu0
        %v956 = vadd.f32 %v388, %v955
        %v957 = vpop.f32.mrb[0].mxu0
        %v958 = vadd.f32 %v392, %v957
        %959 = vmatprep.mubr.bf16.mxu0 0
        %960 = vmatmul.mubr.bf16.gmra.mrb[0].mxu0 %v549
        %v961 = vpop.f32.mrb[0].mxu0
        %v962 = vadd.f32 %v388, %v961
        %v963 = vpop.f32.mrb[0].mxu0
        %v964 = vadd.f32 %v392, %v963
        %v965 = vpop.f32.mrb[0].mxu0
        %v966 = vadd.f32 %v388, %v965
        %v967 = vpop.f32.mrb[0].mxu0
        %v968 = vadd.f32 %v392, %v967
        %969 = vmatprep.mubr.bf16.mxu0 0
        %970 = vmatmul.mubr.bf16.gmra.mrb[0].mxu0 %v550
        %v971 = vpop.f32.mrb[0].mxu0
        %v972 = vadd.f32 %v388, %v971
        %v973 = vpop.f32.mrb[0].mxu0
        %v974 = vadd.f32 %v392, %v973
        %v975 = vpop.f32.mrb[0].mxu0
        %v976 = vadd.f32 %v388, %v975
        %v977 = vpop.f32.mrb[0].mxu0
        %v978 = vadd.f32 %v392, %v977
        %979 = vmatprep.mubr.bf16.mxu0 0
        %980 = vmatmul.mubr.bf16.gmra.mrb[0].mxu0 %v551
        %v981 = vpop.f32.mrb[0].mxu0
        %v982 = vadd.f32 %v388, %v981
        %v983 = vpop.f32.mrb[0].mxu0
        %v984 = vadd.f32 %v392, %v983
        %v985 = vpop.f32.mrb[0].mxu0
        %v986 = vadd.f32 %v388, %v985
        %v987 = vpop.f32.mrb[0].mxu0
        %v988 = vadd.f32 %v392, %v987
        %989 = vmatprep.mubr.bf16.mxu0 0
        %990 = vmatmul.mubr.bf16.gmra.mrb[0].mxu0 %v552
        %v991 = vpop.f32.mrb[0].mxu0
        %v992 = vadd.f32 %v388, %v991
        %v993 = vpop.f32.mrb[0].mxu0
        %v994 = vadd.f32 %v392, %v993
        %v995 = vpop.f32.mrb[0].mxu0
        %v996 = vadd.f32 %v388, %v995
        %v997 = vpop.f32.mrb[0].mxu0
        %v998 = vadd.f32 %v392, %v997
        %999 = vmatprep.mubr.bf16.mxu0 0
        %1000 = vmatmul.mubr.bf16.gmra.mrb[0].mxu0 %v553
        %v1001 = vpop.f32.mrb[0].mxu0
        %v1002 = vadd.f32 %v388, %v1001
        %v1003 = vpop.f32.mrb[0].mxu0
        %v1004 = vadd.f32 %v392, %v1003
        %v1005 = vpop.f32.mrb[0].mxu0
        %v1006 = vadd.f32 %v388, %v1005
        %v1007 = vpop.f32.mrb[0].mxu0
        %v1008 = vadd.f32 %v392, %v1007
        %1009 = vmatprep.mubr.bf16.mxu0 0
        %1010 = vmatmul.mubr.bf16.gmra.mrb[0].mxu0 %v554
        %v1011 = vpop.f32.mrb[0].mxu0
        %v1012 = vadd.f32 %v388, %v1011
        %v1013 = vpop.f32.mrb[0].mxu0
        %v1014 = vadd.f32 %v392, %v1013
        %v1015 = vpop.f32.mrb[0].mxu0
        %v1016 = vadd.f32 %v388, %v1015
        %v1017 = vpop.f32.mrb[0].mxu0
        %v1018 = vadd.f32 %v392, %v1017
        %1019 = vdwg.mxu0
        %v1020 = vld [vmem:[%s299] sm:$0xff]
        %v1021 = vld [vmem:[%s299 + $0x8] sm:$0xff]
        %v1022 = vld [vmem:[%s299 + $0x10] sm:$0xff]
        %v1023 = vld [vmem:[%s299 + $0x18] sm:$0xff]
        %v1024 = vld [vmem:[%s299 + $0x20] sm:$0xff]
        %v1025 = vld [vmem:[%s299 + $0x28] sm:$0xff]
        %v1026 = vld [vmem:[%s299 + $0x30] sm:$0xff]
        %v1027 = vld [vmem:[%s299 + $0x38] sm:$0xff]
        %v1028 = vld [vmem:[%s299 + $0x40] sm:$0xff]
        %v1029 = vld [vmem:[%s299 + $0x48] sm:$0xff]
        %v1030 = vld [vmem:[%s299 + $0x50] sm:$0xff]
        %v1031 = vld [vmem:[%s299 + $0x58] sm:$0xff]
        %v1032 = vld [vmem:[%s299 + $0x60] sm:$0xff]
        %v1033 = vld [vmem:[%s299 + $0x68] sm:$0xff]
        %v1034 = vld [vmem:[%s299 + $0x70] sm:$0xff]
        %v1035 = vld [vmem:[%s299 + $0x78] sm:$0xff]
        %v1036 = vld [vmem:[%s299 + $0x80] sm:$0xff]
        %v1037 = vld [vmem:[%s299 + $0x88] sm:$0xff]
        %v1038 = vld [vmem:[%s299 + $0x90] sm:$0xff]
        %v1039 = vld [vmem:[%s299 + $0x98] sm:$0xff]
        %v1040 = vld [vmem:[%s299 + $0xa0] sm:$0xff]
        %v1041 = vld [vmem:[%s299 + $0xa8] sm:$0xff]
        %v1042 = vld [vmem:[%s299 + $0xb0] sm:$0xff]
        %v1043 = vld [vmem:[%s299 + $0xb8] sm:$0xff]
        %v1044 = vld [vmem:[%s299 + $0xc0] sm:$0xff]
        %v1045 = vld [vmem:[%s299 + $0xc8] sm:$0xff]
        %v1046 = vld [vmem:[%s299 + $0xd0] sm:$0xff]
        %v1047 = vld [vmem:[%s299 + $0xd8] sm:$0xff]
        %v1048 = vld [vmem:[%s299 + $0xe0] sm:$0xff]
        %v1049 = vld [vmem:[%s299 + $0xe8] sm:$0xff]
        %v1050 = vld [vmem:[%s299 + $0xf0] sm:$0xff]
        %v1051 = vld [vmem:[%s299 + $0xf8] sm:$0xff]
        %v1052 = vld [vmem:[%s299 + $0x100] sm:$0xff]
        %v1053 = vld [vmem:[%s299 + $0x108] sm:$0xff]
        %v1054 = vld [vmem:[%s299 + $0x110] sm:$0xff]
        %v1055 = vld [vmem:[%s299 + $0x118] sm:$0xff]
        %v1056 = vld [vmem:[%s299 + $0x120] sm:$0xff]
        %v1057 = vld [vmem:[%s299 + $0x128] sm:$0xff]
        %v1058 = vld [vmem:[%s299 + $0x130] sm:$0xff]
        %v1059 = vld [vmem:[%s299 + $0x138] sm:$0xff]
        %v1060 = vld [vmem:[%s299 + $0x140] sm:$0xff]
        %v1061 = vld [vmem:[%s299 + $0x148] sm:$0xff]
        %v1062 = vld [vmem:[%s299 + $0x150] sm:$0xff]
        %v1063 = vld [vmem:[%s299 + $0x158] sm:$0xff]
        %v1064 = vld [vmem:[%s299 + $0x160] sm:$0xff]
        %v1065 = vld [vmem:[%s299 + $0x168] sm:$0xff]
        %v1066 = vld [vmem:[%s299 + $0x170] sm:$0xff]
        %v1067 = vld [vmem:[%s299 + $0x178] sm:$0xff]
        %v1068 = vld [vmem:[%s299 + $0x180] sm:$0xff]
        %v1069 = vld [vmem:[%s299 + $0x188] sm:$0xff]
        %v1070 = vld [vmem:[%s299 + $0x190] sm:$0xff]
        %v1071 = vld [vmem:[%s299 + $0x198] sm:$0xff]
        %v1072 = vld [vmem:[%s299 + $0x1a0] sm:$0xff]
        %v1073 = vld [vmem:[%s299 + $0x1a8] sm:$0xff]
        %v1074 = vld [vmem:[%s299 + $0x1b0] sm:$0xff]
        %v1075 = vld [vmem:[%s299 + $0x1b8] sm:$0xff]
        %v1076 = vld [vmem:[%s299 + $0x1c0] sm:$0xff]
        %v1077 = vld [vmem:[%s299 + $0x1c8] sm:$0xff]
        %v1078 = vld [vmem:[%s299 + $0x1d0] sm:$0xff]
        %v1079 = vld [vmem:[%s299 + $0x1d8] sm:$0xff]
        %v1080 = vld [vmem:[%s299 + $0x1e0] sm:$0xff]
        %v1081 = vld [vmem:[%s299 + $0x1e8] sm:$0xff]
        %v1082 = vld [vmem:[%s299 + $0x1f0] sm:$0xff]
        %v1083 = vld [vmem:[%s299 + $0x1f8] sm:$0xff]
        %v1084 = vmul.f32 %v702, 0.5
        %v1085 = vmul.f32 %v704, 0.5
        %v1086 = vmul.f32 %v706, 0.5
        %v1087 = vmul.f32 %v708, 0.5
        %v1088 = vmul.f32 %v712, 0.5
        %v1089 = vmul.f32 %v714, 0.5
        %v1090 = vmul.f32 %v716, 0.5
        %v1091 = vmul.f32 %v718, 0.5
        %v1092 = vmul.f32 %v722, 0.5
        %v1093 = vmul.f32 %v724, 0.5
        %v1094 = vmul.f32 %v726, 0.5
        %v1095 = vmul.f32 %v728, 0.5
        %v1096 = vmul.f32 %v732, 0.5
        %v1097 = vmul.f32 %v734, 0.5
        %v1098 = vmul.f32 %v736, 0.5
        %v1099 = vmul.f32 %v738, 0.5
        %v1100 = vmul.f32 %v742, 0.5
        %v1101 = vmul.f32 %v744, 0.5
        %v1102 = vmul.f32 %v746, 0.5
        %v1103 = vmul.f32 %v748, 0.5
        %v1104 = vmul.f32 %v752, 0.5
        %v1105 = vmul.f32 %v754, 0.5
        %v1106 = vmul.f32 %v756, 0.5
        %v1107 = vmul.f32 %v758, 0.5
        %v1108 = vmul.f32 %v762, 0.5
        %v1109 = vmul.f32 %v764, 0.5
        %v1110 = vmul.f32 %v766, 0.5
        %v1111 = vmul.f32 %v768, 0.5
        %v1112 = vmul.f32 %v772, 0.5
        %v1113 = vmul.f32 %v774, 0.5
        %v1114 = vmul.f32 %v776, 0.5
        %v1115 = vmul.f32 %v778, 0.5
        %v1116 = vmul.f32 %v782, 0.5
        %v1117 = vmul.f32 %v784, 0.5
        %v1118 = vmul.f32 %v786, 0.5
        %v1119 = vmul.f32 %v788, 0.5
        %v1120 = vmul.f32 %v792, 0.5
        %v1121 = vmul.f32 %v794, 0.5
        %v1122 = vmul.f32 %v796, 0.5
        %v1123 = vmul.f32 %v798, 0.5
        %v1124 = vmul.f32 %v802, 0.5
        %v1125 = vmul.f32 %v804, 0.5
        %v1126 = vmul.f32 %v806, 0.5
        %v1127 = vmul.f32 %v808, 0.5
        %v1128 = vmul.f32 %v812, 0.5
        %v1129 = vmul.f32 %v814, 0.5
        %v1130 = vmul.f32 %v816, 0.5
        %v1131 = vmul.f32 %v818, 0.5
        %v1132 = vmul.f32 %v822, 0.5
        %v1133 = vmul.f32 %v824, 0.5
        %v1134 = vmul.f32 %v826, 0.5
        %v1135 = vmul.f32 %v828, 0.5
        %v1136 = vmul.f32 %v832, 0.5
        %v1137 = vmul.f32 %v834, 0.5
        %v1138 = vmul.f32 %v836, 0.5
        %v1139 = vmul.f32 %v838, 0.5
        %v1140 = vmul.f32 %v842, 0.5
        %v1141 = vmul.f32 %v844, 0.5
        %v1142 = vmul.f32 %v846, 0.5
        %v1143 = vmul.f32 %v848, 0.5
        %v1144 = vmul.f32 %v852, 0.5
        %v1145 = vmul.f32 %v854, 0.5
        %v1146 = vmul.f32 %v856, 0.5
        %v1147 = vmul.f32 %v858, 0.5
        %v1148 = vmul.f32 %v862, 0.5
        %v1149 = vmul.f32 %v864, 0.5
        %v1150 = vmul.f32 %v866, 0.5
        %v1151 = vmul.f32 %v868, 0.5
        %v1152 = vmul.f32 %v872, 0.5
        %v1153 = vmul.f32 %v874, 0.5
        %v1154 = vmul.f32 %v876, 0.5
        %v1155 = vmul.f32 %v878, 0.5
        %v1156 = vmul.f32 %v882, 0.5
        %v1157 = vmul.f32 %v884, 0.5
        %v1158 = vmul.f32 %v886, 0.5
        %v1159 = vmul.f32 %v888, 0.5
        %v1160 = vmul.f32 %v892, 0.5
        %v1161 = vmul.f32 %v894, 0.5
        %v1162 = vmul.f32 %v896, 0.5
        %v1163 = vmul.f32 %v898, 0.5
        %v1164 = vmul.f32 %v902, 0.5
        %v1165 = vmul.f32 %v904, 0.5
        %v1166 = vmul.f32 %v906, 0.5
        %v1167 = vmul.f32 %v908, 0.5
        %v1168 = vmul.f32 %v912, 0.5
        %v1169 = vmul.f32 %v914, 0.5
        %v1170 = vmul.f32 %v916, 0.5
        %v1171 = vmul.f32 %v918, 0.5
        %v1172 = vmul.f32 %v922, 0.5
        %v1173 = vmul.f32 %v924, 0.5
        %v1174 = vmul.f32 %v926, 0.5
        %v1175 = vmul.f32 %v928, 0.5
        %v1176 = vmul.f32 %v932, 0.5
        %v1177 = vmul.f32 %v934, 0.5
        %v1178 = vmul.f32 %v936, 0.5
        %v1179 = vmul.f32 %v938, 0.5
        %v1180 = vmul.f32 %v942, 0.5
        %v1181 = vmul.f32 %v944, 0.5
        %v1182 = vmul.f32 %v946, 0.5
        %v1183 = vmul.f32 %v948, 0.5
        %v1184 = vmul.f32 %v952, 0.5
        %v1185 = vmul.f32 %v954, 0.5
        %v1186 = vmul.f32 %v956, 0.5
        %v1187 = vmul.f32 %v958, 0.5
        %v1188 = vmul.f32 %v962, 0.5
        %v1189 = vmul.f32 %v964, 0.5
        %v1190 = vmul.f32 %v966, 0.5
        %v1191 = vmul.f32 %v968, 0.5
        %v1192 = vmul.f32 %v972, 0.5
        %v1193 = vmul.f32 %v974, 0.5
        %v1194 = vmul.f32 %v976, 0.5
        %v1195 = vmul.f32 %v978, 0.5
        %v1196 = vmul.f32 %v982, 0.5
        %v1197 = vmul.f32 %v984, 0.5
        %v1198 = vmul.f32 %v986, 0.5
        %v1199 = vmul.f32 %v988, 0.5
        %v1200 = vmul.f32 %v992, 0.5
        %v1201 = vmul.f32 %v994, 0.5
        %v1202 = vmul.f32 %v996, 0.5
        %v1203 = vmul.f32 %v998, 0.5
        %v1204 = vmul.f32 %v1002, 0.5
        %v1205 = vmul.f32 %v1004, 0.5
        %v1206 = vmul.f32 %v1006, 0.5
        %v1207 = vmul.f32 %v1008, 0.5
        %v1208 = vmul.f32 %v1012, 0.5
        %v1209 = vmul.f32 %v1014, 0.5
        %v1210 = vmul.f32 %v1016, 0.5
        %v1211 = vmul.f32 %v1018, 0.5
        %v1212 = vmul.f32 %v702, 0.70710677
        %v1213 = vmul.f32 %v704, 0.70710677
        %v1214 = vmul.f32 %v706, 0.70710677
        %v1215 = vmul.f32 %v708, 0.70710677
        %v1216 = vmul.f32 %v712, 0.70710677
        %v1217 = vmul.f32 %v714, 0.70710677
        %v1218 = vmul.f32 %v716, 0.70710677
        %v1219 = vmul.f32 %v718, 0.70710677
        %v1220 = vmul.f32 %v722, 0.70710677
        %v1221 = vmul.f32 %v724, 0.70710677
        %v1222 = vmul.f32 %v726, 0.70710677
        %v1223 = vmul.f32 %v728, 0.70710677
        %v1224 = vmul.f32 %v732, 0.70710677
        %v1225 = vmul.f32 %v734, 0.70710677
        %v1226 = vmul.f32 %v736, 0.70710677
        %v1227 = vmul.f32 %v738, 0.70710677
        %v1228 = vmul.f32 %v742, 0.70710677
        %v1229 = vmul.f32 %v744, 0.70710677
        %v1230 = vmul.f32 %v746, 0.70710677
        %v1231 = vmul.f32 %v748, 0.70710677
        %v1232 = vmul.f32 %v752, 0.70710677
        %v1233 = vmul.f32 %v754, 0.70710677
        %v1234 = vmul.f32 %v756, 0.70710677
        %v1235 = vmul.f32 %v758, 0.70710677
        %v1236 = vmul.f32 %v762, 0.70710677
        %v1237 = vmul.f32 %v764, 0.70710677
        %v1238 = vmul.f32 %v766, 0.70710677
        %v1239 = vmul.f32 %v768, 0.70710677
        %v1240 = vmul.f32 %v772, 0.70710677
        %v1241 = vmul.f32 %v774, 0.70710677
        %v1242 = vmul.f32 %v776, 0.70710677
        %v1243 = vmul.f32 %v778, 0.70710677
        %v1244 = vmul.f32 %v782, 0.70710677
        %v1245 = vmul.f32 %v784, 0.70710677
        %v1246 = vmul.f32 %v786, 0.70710677
        %v1247 = vmul.f32 %v788, 0.70710677
        %v1248 = vmul.f32 %v792, 0.70710677
        %v1249 = vmul.f32 %v794, 0.70710677
        %v1250 = vmul.f32 %v796, 0.70710677
        %v1251 = vmul.f32 %v798, 0.70710677
        %v1252 = vmul.f32 %v802, 0.70710677
        %v1253 = vmul.f32 %v804, 0.70710677
        %v1254 = vmul.f32 %v806, 0.70710677
        %v1255 = vmul.f32 %v808, 0.70710677
        %v1256 = vmul.f32 %v812, 0.70710677
        %v1257 = vmul.f32 %v814, 0.70710677
        %v1258 = vmul.f32 %v816, 0.70710677
        %v1259 = vmul.f32 %v818, 0.70710677
        %v1260 = vmul.f32 %v822, 0.70710677
        %v1261 = vmul.f32 %v824, 0.70710677
        %v1262 = vmul.f32 %v826, 0.70710677
        %v1263 = vmul.f32 %v828, 0.70710677
        %v1264 = vmul.f32 %v832, 0.70710677
        %v1265 = vmul.f32 %v834, 0.70710677
        %v1266 = vmul.f32 %v836, 0.70710677
        %v1267 = vmul.f32 %v838, 0.70710677
        %v1268 = vmul.f32 %v842, 0.70710677
        %v1269 = vmul.f32 %v844, 0.70710677
        %v1270 = vmul.f32 %v846, 0.70710677
        %v1271 = vmul.f32 %v848, 0.70710677
        %v1272 = vmul.f32 %v852, 0.70710677
        %v1273 = vmul.f32 %v854, 0.70710677
        %v1274 = vmul.f32 %v856, 0.70710677
        %v1275 = vmul.f32 %v858, 0.70710677
        %v1276 = vmul.f32 %v862, 0.70710677
        %v1277 = vmul.f32 %v864, 0.70710677
        %v1278 = vmul.f32 %v866, 0.70710677
        %v1279 = vmul.f32 %v868, 0.70710677
        %v1280 = vmul.f32 %v872, 0.70710677
        %v1281 = vmul.f32 %v874, 0.70710677
        %v1282 = vmul.f32 %v876, 0.70710677
        %v1283 = vmul.f32 %v878, 0.70710677
        %v1284 = vmul.f32 %v882, 0.70710677
        %v1285 = vmul.f32 %v884, 0.70710677
        %v1286 = vmul.f32 %v886, 0.70710677
        %v1287 = vmul.f32 %v888, 0.70710677
        %v1288 = vmul.f32 %v892, 0.70710677
        %v1289 = vmul.f32 %v894, 0.70710677
        %v1290 = vmul.f32 %v896, 0.70710677
        %v1291 = vmul.f32 %v898, 0.70710677
        %v1292 = vmul.f32 %v902, 0.70710677
        %v1293 = vmul.f32 %v904, 0.70710677
        %v1294 = vmul.f32 %v906, 0.70710677
        %v1295 = vmul.f32 %v908, 0.70710677
        %v1296 = vmul.f32 %v912, 0.70710677
        %v1297 = vmul.f32 %v914, 0.70710677
        %v1298 = vmul.f32 %v916, 0.70710677
        %v1299 = vmul.f32 %v918, 0.70710677
        %v1300 = vmul.f32 %v922, 0.70710677
        %v1301 = vmul.f32 %v924, 0.70710677
        %v1302 = vmul.f32 %v926, 0.70710677
        %v1303 = vmul.f32 %v928, 0.70710677
        %v1304 = vmul.f32 %v932, 0.70710677
        %v1305 = vmul.f32 %v934, 0.70710677
        %v1306 = vmul.f32 %v936, 0.70710677
        %v1307 = vmul.f32 %v938, 0.70710677
        %v1308 = vmul.f32 %v942, 0.70710677
        %v1309 = vmul.f32 %v944, 0.70710677
        %v1310 = vmul.f32 %v946, 0.70710677
        %v1311 = vmul.f32 %v948, 0.70710677
        %v1312 = vmul.f32 %v952, 0.70710677
        %v1313 = vmul.f32 %v954, 0.70710677
        %v1314 = vmul.f32 %v956, 0.70710677
        %v1315 = vmul.f32 %v958, 0.70710677
        %v1316 = vmul.f32 %v962, 0.70710677
        %v1317 = vmul.f32 %v964, 0.70710677
        %v1318 = vmul.f32 %v966, 0.70710677
        %v1319 = vmul.f32 %v968, 0.70710677
        %v1320 = vmul.f32 %v972, 0.70710677
        %v1321 = vmul.f32 %v974, 0.70710677
        %v1322 = vmul.f32 %v976, 0.70710677
        %v1323 = vmul.f32 %v978, 0.70710677
        %v1324 = vmul.f32 %v982, 0.70710677
        %v1325 = vmul.f32 %v984, 0.70710677
        %v1326 = vmul.f32 %v986, 0.70710677
        %v1327 = vmul.f32 %v988, 0.70710677
        %v1328 = vmul.f32 %v992, 0.70710677
        %v1329 = vmul.f32 %v994, 0.70710677
        %v1330 = vmul.f32 %v996, 0.70710677
        %v1331 = vmul.f32 %v998, 0.70710677
        %v1332 = vmul.f32 %v1002, 0.70710677
        %v1333 = vmul.f32 %v1004, 0.70710677
        %v1334 = vmul.f32 %v1006, 0.70710677
        %v1335 = vmul.f32 %v1008, 0.70710677
        %v1336 = vmul.f32 %v1012, 0.70710677
        %v1337 = vmul.f32 %v1014, 0.70710677
        %v1338 = vmul.f32 %v1016, 0.70710677
        %v1339 = vmul.f32 %v1018, 0.70710677
        %vm1340 = vcmp.ge.f32.partialorder %v1212, 0.0
        %vm1341 = vcmp.ge.f32.partialorder %v1213, 0.0
        %vm1342 = vcmp.ge.f32.partialorder %v1214, 0.0
        %vm1343 = vcmp.ge.f32.partialorder %v1215, 0.0
        %vm1344 = vcmp.ge.f32.partialorder %v1216, 0.0
        %vm1345 = vcmp.ge.f32.partialorder %v1217, 0.0
        %vm1346 = vcmp.ge.f32.partialorder %v1218, 0.0
        %vm1347 = vcmp.ge.f32.partialorder %v1219, 0.0
        %vm1348 = vcmp.ge.f32.partialorder %v1220, 0.0
        %vm1349 = vcmp.ge.f32.partialorder %v1221, 0.0
        %vm1350 = vcmp.ge.f32.partialorder %v1222, 0.0
        %vm1351 = vcmp.ge.f32.partialorder %v1223, 0.0
        %vm1352 = vcmp.ge.f32.partialorder %v1224, 0.0
        %vm1353 = vcmp.ge.f32.partialorder %v1225, 0.0
        %vm1354 = vcmp.ge.f32.partialorder %v1226, 0.0
        %vm1355 = vcmp.ge.f32.partialorder %v1227, 0.0
        %vm1356 = vcmp.ge.f32.partialorder %v1228, 0.0
        %vm1357 = vcmp.ge.f32.partialorder %v1229, 0.0
        %vm1358 = vcmp.ge.f32.partialorder %v1230, 0.0
        %vm1359 = vcmp.ge.f32.partialorder %v1231, 0.0
        %vm1360 = vcmp.ge.f32.partialorder %v1232, 0.0
        %vm1361 = vcmp.ge.f32.partialorder %v1233, 0.0
        %vm1362 = vcmp.ge.f32.partialorder %v1234, 0.0
        %vm1363 = vcmp.ge.f32.partialorder %v1235, 0.0
        %vm1364 = vcmp.ge.f32.partialorder %v1236, 0.0
        %vm1365 = vcmp.ge.f32.partialorder %v1237, 0.0
        %vm1366 = vcmp.ge.f32.partialorder %v1238, 0.0
        %vm1367 = vcmp.ge.f32.partialorder %v1239, 0.0
        %vm1368 = vcmp.ge.f32.partialorder %v1240, 0.0
        %vm1369 = vcmp.ge.f32.partialorder %v1241, 0.0
        %vm1370 = vcmp.ge.f32.partialorder %v1242, 0.0
        %vm1371 = vcmp.ge.f32.partialorder %v1243, 0.0
        %vm1372 = vcmp.ge.f32.partialorder %v1244, 0.0
        %vm1373 = vcmp.ge.f32.partialorder %v1245, 0.0
        %vm1374 = vcmp.ge.f32.partialorder %v1246, 0.0
        %vm1375 = vcmp.ge.f32.partialorder %v1247, 0.0
        %vm1376 = vcmp.ge.f32.partialorder %v1248, 0.0
        %vm1377 = vcmp.ge.f32.partialorder %v1249, 0.0
        %vm1378 = vcmp.ge.f32.partialorder %v1250, 0.0
        %vm1379 = vcmp.ge.f32.partialorder %v1251, 0.0
        %vm1380 = vcmp.ge.f32.partialorder %v1252, 0.0
        %vm1381 = vcmp.ge.f32.partialorder %v1253, 0.0
        %vm1382 = vcmp.ge.f32.partialorder %v1254, 0.0
        %vm1383 = vcmp.ge.f32.partialorder %v1255, 0.0
        %vm1384 = vcmp.ge.f32.partialorder %v1256, 0.0
        %vm1385 = vcmp.ge.f32.partialorder %v1257, 0.0
        %vm1386 = vcmp.ge.f32.partialorder %v1258, 0.0
        %vm1387 = vcmp.ge.f32.partialorder %v1259, 0.0
        %vm1388 = vcmp.ge.f32.partialorder %v1260, 0.0
        %vm1389 = vcmp.ge.f32.partialorder %v1261, 0.0
        %vm1390 = vcmp.ge.f32.partialorder %v1262, 0.0
        %vm1391 = vcmp.ge.f32.partialorder %v1263, 0.0
        %vm1392 = vcmp.ge.f32.partialorder %v1264, 0.0
        %vm1393 = vcmp.ge.f32.partialorder %v1265, 0.0
        %vm1394 = vcmp.ge.f32.partialorder %v1266, 0.0
        %vm1395 = vcmp.ge.f32.partialorder %v1267, 0.0
        %vm1396 = vcmp.ge.f32.partialorder %v1268, 0.0
        %vm1397 = vcmp.ge.f32.partialorder %v1269, 0.0
        %vm1398 = vcmp.ge.f32.partialorder %v1270, 0.0
        %vm1399 = vcmp.ge.f32.partialorder %v1271, 0.0
        %vm1400 = vcmp.ge.f32.partialorder %v1272, 0.0
        %vm1401 = vcmp.ge.f32.partialorder %v1273, 0.0
        %vm1402 = vcmp.ge.f32.partialorder %v1274, 0.0
        %vm1403 = vcmp.ge.f32.partialorder %v1275, 0.0
        %vm1404 = vcmp.ge.f32.partialorder %v1276, 0.0
        %vm1405 = vcmp.ge.f32.partialorder %v1277, 0.0
        %vm1406 = vcmp.ge.f32.partialorder %v1278, 0.0
        %vm1407 = vcmp.ge.f32.partialorder %v1279, 0.0
        %vm1408 = vcmp.ge.f32.partialorder %v1280, 0.0
        %vm1409 = vcmp.ge.f32.partialorder %v1281, 0.0
        %vm1410 = vcmp.ge.f32.partialorder %v1282, 0.0
        %vm1411 = vcmp.ge.f32.partialorder %v1283, 0.0
        %vm1412 = vcmp.ge.f32.partialorder %v1284, 0.0
        %vm1413 = vcmp.ge.f32.partialorder %v1285, 0.0
        %vm1414 = vcmp.ge.f32.partialorder %v1286, 0.0
        %vm1415 = vcmp.ge.f32.partialorder %v1287, 0.0
        %vm1416 = vcmp.ge.f32.partialorder %v1288, 0.0
        %vm1417 = vcmp.ge.f32.partialorder %v1289, 0.0
        %vm1418 = vcmp.ge.f32.partialorder %v1290, 0.0
        %vm1419 = vcmp.ge.f32.partialorder %v1291, 0.0
        %vm1420 = vcmp.ge.f32.partialorder %v1292, 0.0
        %vm1421 = vcmp.ge.f32.partialorder %v1293, 0.0
        %vm1422 = vcmp.ge.f32.partialorder %v1294, 0.0
        %vm1423 = vcmp.ge.f32.partialorder %v1295, 0.0
        %vm1424 = vcmp.ge.f32.partialorder %v1296, 0.0
        %vm1425 = vcmp.ge.f32.partialorder %v1297, 0.0
        %vm1426 = vcmp.ge.f32.partialorder %v1298, 0.0
        %vm1427 = vcmp.ge.f32.partialorder %v1299, 0.0
        %vm1428 = vcmp.ge.f32.partialorder %v1300, 0.0
        %vm1429 = vcmp.ge.f32.partialorder %v1301, 0.0
        %vm1430 = vcmp.ge.f32.partialorder %v1302, 0.0
        %vm1431 = vcmp.ge.f32.partialorder %v1303, 0.0
        %vm1432 = vcmp.ge.f32.partialorder %v1304, 0.0
        %vm1433 = vcmp.ge.f32.partialorder %v1305, 0.0
        %vm1434 = vcmp.ge.f32.partialorder %v1306, 0.0
        %vm1435 = vcmp.ge.f32.partialorder %v1307, 0.0
        %vm1436 = vcmp.ge.f32.partialorder %v1308, 0.0
        %vm1437 = vcmp.ge.f32.partialorder %v1309, 0.0
        %vm1438 = vcmp.ge.f32.partialorder %v1310, 0.0
        %vm1439 = vcmp.ge.f32.partialorder %v1311, 0.0
        %vm1440 = vcmp.ge.f32.partialorder %v1312, 0.0
        %vm1441 = vcmp.ge.f32.partialorder %v1313, 0.0
        %vm1442 = vcmp.ge.f32.partialorder %v1314, 0.0
        %vm1443 = vcmp.ge.f32.partialorder %v1315, 0.0
        %vm1444 = vcmp.ge.f32.partialorder %v1316, 0.0
        %vm1445 = vcmp.ge.f32.partialorder %v1317, 0.0
        %vm1446 = vcmp.ge.f32.partialorder %v1318, 0.0
        %vm1447 = vcmp.ge.f32.partialorder %v1319, 0.0
        %vm1448 = vcmp.ge.f32.partialorder %v1320, 0.0
        %vm1449 = vcmp.ge.f32.partialorder %v1321, 0.0
        %vm1450 = vcmp.ge.f32.partialorder %v1322, 0.0
        %vm1451 = vcmp.ge.f32.partialorder %v1323, 0.0
        %vm1452 = vcmp.ge.f32.partialorder %v1324, 0.0
        %vm1453 = vcmp.ge.f32.partialorder %v1325, 0.0
        %vm1454 = vcmp.ge.f32.partialorder %v1326, 0.0
        %vm1455 = vcmp.ge.f32.partialorder %v1327, 0.0
        %vm1456 = vcmp.ge.f32.partialorder %v1328, 0.0
        %vm1457 = vcmp.ge.f32.partialorder %v1329, 0.0
        %vm1458 = vcmp.ge.f32.partialorder %v1330, 0.0
        %vm1459 = vcmp.ge.f32.partialorder %v1331, 0.0
        %vm1460 = vcmp.ge.f32.partialorder %v1332, 0.0
        %vm1461 = vcmp.ge.f32.partialorder %v1333, 0.0
        %vm1462 = vcmp.ge.f32.partialorder %v1334, 0.0
        %vm1463 = vcmp.ge.f32.partialorder %v1335, 0.0
        %vm1464 = vcmp.ge.f32.partialorder %v1336, 0.0
        %vm1465 = vcmp.ge.f32.partialorder %v1337, 0.0
        %vm1466 = vcmp.ge.f32.partialorder %v1338, 0.0
        %vm1467 = vcmp.ge.f32.partialorder %v1339, 0.0
        %v1468 = vsel %vm1340, 1.0, -1.0
        %v1469 = vsel %vm1341, 1.0, -1.0
        %v1470 = vsel %vm1342, 1.0, -1.0
        %v1471 = vsel %vm1343, 1.0, -1.0
        %v1472 = vsel %vm1344, 1.0, -1.0
        %v1473 = vsel %vm1345, 1.0, -1.0
        %v1474 = vsel %vm1346, 1.0, -1.0
        %v1475 = vsel %vm1347, 1.0, -1.0
        %v1476 = vsel %vm1348, 1.0, -1.0
        %v1477 = vsel %vm1349, 1.0, -1.0
        %v1478 = vsel %vm1350, 1.0, -1.0
        %v1479 = vsel %vm1351, 1.0, -1.0
        %v1480 = vsel %vm1352, 1.0, -1.0
        %v1481 = vsel %vm1353, 1.0, -1.0
        %v1482 = vsel %vm1354, 1.0, -1.0
        %v1483 = vsel %vm1355, 1.0, -1.0
        %v1484 = vsel %vm1356, 1.0, -1.0
        %v1485 = vsel %vm1357, 1.0, -1.0
        %v1486 = vsel %vm1358, 1.0, -1.0
        %v1487 = vsel %vm1359, 1.0, -1.0
        %v1488 = vsel %vm1360, 1.0, -1.0
        %v1489 = vsel %vm1361, 1.0, -1.0
        %v1490 = vsel %vm1362, 1.0, -1.0
        %v1491 = vsel %vm1363, 1.0, -1.0
        %v1492 = vsel %vm1364, 1.0, -1.0
        %v1493 = vsel %vm1365, 1.0, -1.0
        %v1494 = vsel %vm1366, 1.0, -1.0
        %v1495 = vsel %vm1367, 1.0, -1.0
        %v1496 = vsel %vm1368, 1.0, -1.0
        %v1497 = vsel %vm1369, 1.0, -1.0
        %v1498 = vsel %vm1370, 1.0, -1.0
        %v1499 = vsel %vm1371, 1.0, -1.0
        %v1500 = vsel %vm1372, 1.0, -1.0
        %v1501 = vsel %vm1373, 1.0, -1.0
        %v1502 = vsel %vm1374, 1.0, -1.0
        %v1503 = vsel %vm1375, 1.0, -1.0
        %v1504 = vsel %vm1376, 1.0, -1.0
        %v1505 = vsel %vm1377, 1.0, -1.0
        %v1506 = vsel %vm1378, 1.0, -1.0
        %v1507 = vsel %vm1379, 1.0, -1.0
        %v1508 = vsel %vm1380, 1.0, -1.0
        %v1509 = vsel %vm1381, 1.0, -1.0
        %v1510 = vsel %vm1382, 1.0, -1.0
        %v1511 = vsel %vm1383, 1.0, -1.0
        %v1512 = vsel %vm1384, 1.0, -1.0
        %v1513 = vsel %vm1385, 1.0, -1.0
        %v1514 = vsel %vm1386, 1.0, -1.0
        %v1515 = vsel %vm1387, 1.0, -1.0
        %v1516 = vsel %vm1388, 1.0, -1.0
        %v1517 = vsel %vm1389, 1.0, -1.0
        %v1518 = vsel %vm1390, 1.0, -1.0
        %v1519 = vsel %vm1391, 1.0, -1.0
        %v1520 = vsel %vm1392, 1.0, -1.0
        %v1521 = vsel %vm1393, 1.0, -1.0
        %v1522 = vsel %vm1394, 1.0, -1.0
        %v1523 = vsel %vm1395, 1.0, -1.0
        %v1524 = vsel %vm1396, 1.0, -1.0
        %v1525 = vsel %vm1397, 1.0, -1.0
        %v1526 = vsel %vm1398, 1.0, -1.0
        %v1527 = vsel %vm1399, 1.0, -1.0
        %v1528 = vsel %vm1400, 1.0, -1.0
        %v1529 = vsel %vm1401, 1.0, -1.0
        %v1530 = vsel %vm1402, 1.0, -1.0
        %v1531 = vsel %vm1403, 1.0, -1.0
        %v1532 = vsel %vm1404, 1.0, -1.0
        %v1533 = vsel %vm1405, 1.0, -1.0
        %v1534 = vsel %vm1406, 1.0, -1.0
        %v1535 = vsel %vm1407, 1.0, -1.0
        %v1536 = vsel %vm1408, 1.0, -1.0
        %v1537 = vsel %vm1409, 1.0, -1.0
        %v1538 = vsel %vm1410, 1.0, -1.0
        %v1539 = vsel %vm1411, 1.0, -1.0
        %v1540 = vsel %vm1412, 1.0, -1.0
        %v1541 = vsel %vm1413, 1.0, -1.0
        %v1542 = vsel %vm1414, 1.0, -1.0
        %v1543 = vsel %vm1415, 1.0, -1.0
        %v1544 = vsel %vm1416, 1.0, -1.0
        %v1545 = vsel %vm1417, 1.0, -1.0
        %v1546 = vsel %vm1418, 1.0, -1.0
        %v1547 = vsel %vm1419, 1.0, -1.0
        %v1548 = vsel %vm1420, 1.0, -1.0
        %v1549 = vsel %vm1421, 1.0, -1.0
        %v1550 = vsel %vm1422, 1.0, -1.0
        %v1551 = vsel %vm1423, 1.0, -1.0
        %v1552 = vsel %vm1424, 1.0, -1.0
        %v1553 = vsel %vm1425, 1.0, -1.0
        %v1554 = vsel %vm1426, 1.0, -1.0
        %v1555 = vsel %vm1427, 1.0, -1.0
        %v1556 = vsel %vm1428, 1.0, -1.0
        %v1557 = vsel %vm1429, 1.0, -1.0
        %v1558 = vsel %vm1430, 1.0, -1.0
        %v1559 = vsel %vm1431, 1.0, -1.0
        %v1560 = vsel %vm1432, 1.0, -1.0
        %v1561 = vsel %vm1433, 1.0, -1.0
        %v1562 = vsel %vm1434, 1.0, -1.0
        %v1563 = vsel %vm1435, 1.0, -1.0
        %v1564 = vsel %vm1436, 1.0, -1.0
        %v1565 = vsel %vm1437, 1.0, -1.0
        %v1566 = vsel %vm1438, 1.0, -1.0
        %v1567 = vsel %vm1439, 1.0, -1.0
        %v1568 = vsel %vm1440, 1.0, -1.0
        %v1569 = vsel %vm1441, 1.0, -1.0
        %v1570 = vsel %vm1442, 1.0, -1.0
        %v1571 = vsel %vm1443, 1.0, -1.0
        %v1572 = vsel %vm1444, 1.0, -1.0
        %v1573 = vsel %vm1445, 1.0, -1.0
        %v1574 = vsel %vm1446, 1.0, -1.0
        %v1575 = vsel %vm1447, 1.0, -1.0
        %v1576 = vsel %vm1448, 1.0, -1.0
        %v1577 = vsel %vm1449, 1.0, -1.0
        %v1578 = vsel %vm1450, 1.0, -1.0
        %v1579 = vsel %vm1451, 1.0, -1.0
        %v1580 = vsel %vm1452, 1.0, -1.0
        %v1581 = vsel %vm1453, 1.0, -1.0
        %v1582 = vsel %vm1454, 1.0, -1.0
        %v1583 = vsel %vm1455, 1.0, -1.0
        %v1584 = vsel %vm1456, 1.0, -1.0
        %v1585 = vsel %vm1457, 1.0, -1.0
        %v1586 = vsel %vm1458, 1.0, -1.0
        %v1587 = vsel %vm1459, 1.0, -1.0
        %v1588 = vsel %vm1460, 1.0, -1.0
        %v1589 = vsel %vm1461, 1.0, -1.0
        %v1590 = vsel %vm1462, 1.0, -1.0
        %v1591 = vsel %vm1463, 1.0, -1.0
        %v1592 = vsel %vm1464, 1.0, -1.0
        %v1593 = vsel %vm1465, 1.0, -1.0
        %v1594 = vsel %vm1466, 1.0, -1.0
        %v1595 = vsel %vm1467, 1.0, -1.0
        %v1596 = vand.u32 2147483647, %v1212
        %v1597 = vand.u32 2147483647, %v1213
        %v1598 = vand.u32 2147483647, %v1214
        %v1599 = vand.u32 2147483647, %v1215
        %v1600 = vand.u32 2147483647, %v1216
        %v1601 = vand.u32 2147483647, %v1217
        %v1602 = vand.u32 2147483647, %v1218
        %v1603 = vand.u32 2147483647, %v1219
        %v1604 = vand.u32 2147483647, %v1220
        %v1605 = vand.u32 2147483647, %v1221
        %v1606 = vand.u32 2147483647, %v1222
        %v1607 = vand.u32 2147483647, %v1223
        %v1608 = vand.u32 2147483647, %v1224
        %v1609 = vand.u32 2147483647, %v1225
        %v1610 = vand.u32 2147483647, %v1226
        %v1611 = vand.u32 2147483647, %v1227
        %v1612 = vand.u32 2147483647, %v1228
        %v1613 = vand.u32 2147483647, %v1229
        %v1614 = vand.u32 2147483647, %v1230
        %v1615 = vand.u32 2147483647, %v1231
        %v1616 = vand.u32 2147483647, %v1232
        %v1617 = vand.u32 2147483647, %v1233
        %v1618 = vand.u32 2147483647, %v1234
        %v1619 = vand.u32 2147483647, %v1235
        %v1620 = vand.u32 2147483647, %v1236
        %v1621 = vand.u32 2147483647, %v1237
        %v1622 = vand.u32 2147483647, %v1238
        %v1623 = vand.u32 2147483647, %v1239
        %v1624 = vand.u32 2147483647, %v1240
        %v1625 = vand.u32 2147483647, %v1241
        %v1626 = vand.u32 2147483647, %v1242
        %v1627 = vand.u32 2147483647, %v1243
        %v1628 = vand.u32 2147483647, %v1244
        %v1629 = vand.u32 2147483647, %v1245
        %v1630 = vand.u32 2147483647, %v1246
        %v1631 = vand.u32 2147483647, %v1247
        %v1632 = vand.u32 2147483647, %v1248
        %v1633 = vand.u32 2147483647, %v1249
        %v1634 = vand.u32 2147483647, %v1250
        %v1635 = vand.u32 2147483647, %v1251
        %v1636 = vand.u32 2147483647, %v1252
        %v1637 = vand.u32 2147483647, %v1253
        %v1638 = vand.u32 2147483647, %v1254
        %v1639 = vand.u32 2147483647, %v1255
        %v1640 = vand.u32 2147483647, %v1256
        %v1641 = vand.u32 2147483647, %v1257
        %v1642 = vand.u32 2147483647, %v1258
        %v1643 = vand.u32 2147483647, %v1259
        %v1644 = vand.u32 2147483647, %v1260
        %v1645 = vand.u32 2147483647, %v1261
        %v1646 = vand.u32 2147483647, %v1262
        %v1647 = vand.u32 2147483647, %v1263
        %v1648 = vand.u32 2147483647, %v1264
        %v1649 = vand.u32 2147483647, %v1265
        %v1650 = vand.u32 2147483647, %v1266
        %v1651 = vand.u32 2147483647, %v1267
        %v1652 = vand.u32 2147483647, %v1268
        %v1653 = vand.u32 2147483647, %v1269
        %v1654 = vand.u32 2147483647, %v1270
        %v1655 = vand.u32 2147483647, %v1271
        %v1656 = vand.u32 2147483647, %v1272
        %v1657 = vand.u32 2147483647, %v1273
        %v1658 = vand.u32 2147483647, %v1274
        %v1659 = vand.u32 2147483647, %v1275
        %v1660 = vand.u32 2147483647, %v1276
        %v1661 = vand.u32 2147483647, %v1277
        %v1662 = vand.u32 2147483647, %v1278
        %v1663 = vand.u32 2147483647, %v1279
        %v1664 = vand.u32 2147483647, %v1280
        %v1665 = vand.u32 2147483647, %v1281
        %v1666 = vand.u32 2147483647, %v1282
        %v1667 = vand.u32 2147483647, %v1283
        %v1668 = vand.u32 2147483647, %v1284
        %v1669 = vand.u32 2147483647, %v1285
        %v1670 = vand.u32 2147483647, %v1286
        %v1671 = vand.u32 2147483647, %v1287
        %v1672 = vand.u32 2147483647, %v1288
        %v1673 = vand.u32 2147483647, %v1289
        %v1674 = vand.u32 2147483647, %v1290
        %v1675 = vand.u32 2147483647, %v1291
        %v1676 = vand.u32 2147483647, %v1292
        %v1677 = vand.u32 2147483647, %v1293
        %v1678 = vand.u32 2147483647, %v1294
        %v1679 = vand.u32 2147483647, %v1295
        %v1680 = vand.u32 2147483647, %v1296
        %v1681 = vand.u32 2147483647, %v1297
        %v1682 = vand.u32 2147483647, %v1298
        %v1683 = vand.u32 2147483647, %v1299
        %v1684 = vand.u32 2147483647, %v1300
        %v1685 = vand.u32 2147483647, %v1301
        %v1686 = vand.u32 2147483647, %v1302
        %v1687 = vand.u32 2147483647, %v1303
        %v1688 = vand.u32 2147483647, %v1304
        %v1689 = vand.u32 2147483647, %v1305
        %v1690 = vand.u32 2147483647, %v1306
        %v1691 = vand.u32 2147483647, %v1307
        %v1692 = vand.u32 2147483647, %v1308
        %v1693 = vand.u32 2147483647, %v1309
        %v1694 = vand.u32 2147483647, %v1310
        %v1695 = vand.u32 2147483647, %v1311
        %v1696 = vand.u32 2147483647, %v1312
        %v1697 = vand.u32 2147483647, %v1313
        %v1698 = vand.u32 2147483647, %v1314
        %v1699 = vand.u32 2147483647, %v1315
        %v1700 = vand.u32 2147483647, %v1316
        %v1701 = vand.u32 2147483647, %v1317
        %v1702 = vand.u32 2147483647, %v1318
        %v1703 = vand.u32 2147483647, %v1319
        %v1704 = vand.u32 2147483647, %v1320
        %v1705 = vand.u32 2147483647, %v1321
        %v1706 = vand.u32 2147483647, %v1322
        %v1707 = vand.u32 2147483647, %v1323
        %v1708 = vand.u32 2147483647, %v1324
        %v1709 = vand.u32 2147483647, %v1325
        %v1710 = vand.u32 2147483647, %v1326
        %v1711 = vand.u32 2147483647, %v1327
        %v1712 = vand.u32 2147483647, %v1328
        %v1713 = vand.u32 2147483647, %v1329
        %v1714 = vand.u32 2147483647, %v1330
        %v1715 = vand.u32 2147483647, %v1331
        %v1716 = vand.u32 2147483647, %v1332
        %v1717 = vand.u32 2147483647, %v1333
        %v1718 = vand.u32 2147483647, %v1334
        %v1719 = vand.u32 2147483647, %v1335
        %v1720 = vand.u32 2147483647, %v1336
        %v1721 = vand.u32 2147483647, %v1337
        %v1722 = vand.u32 2147483647, %v1338
        %v1723 = vand.u32 2147483647, %v1339
        %v1724 = vmul.f32 %v1596, 0.3275911
        %v1725 = vmul.f32 %v1597, 0.3275911
        %v1726 = vmul.f32 %v1598, 0.3275911
        %v1727 = vmul.f32 %v1599, 0.3275911
        %v1728 = vmul.f32 %v1600, 0.3275911
        %v1729 = vmul.f32 %v1601, 0.3275911
        %v1730 = vmul.f32 %v1602, 0.3275911
        %v1731 = vmul.f32 %v1603, 0.3275911
        %v1732 = vmul.f32 %v1604, 0.3275911
        %v1733 = vmul.f32 %v1605, 0.3275911
        %v1734 = vmul.f32 %v1606, 0.3275911
        %v1735 = vmul.f32 %v1607, 0.3275911
        %v1736 = vmul.f32 %v1608, 0.3275911
        %v1737 = vmul.f32 %v1609, 0.3275911
        %v1738 = vmul.f32 %v1610, 0.3275911
        %v1739 = vmul.f32 %v1611, 0.3275911
        %v1740 = vmul.f32 %v1612, 0.3275911
        %v1741 = vmul.f32 %v1613, 0.3275911
        %v1742 = vmul.f32 %v1614, 0.3275911
        %v1743 = vmul.f32 %v1615, 0.3275911
        %v1744 = vmul.f32 %v1616, 0.3275911
        %v1745 = vmul.f32 %v1617, 0.3275911
        %v1746 = vmul.f32 %v1618, 0.3275911
        %v1747 = vmul.f32 %v1619, 0.3275911
        %v1748 = vmul.f32 %v1620, 0.3275911
        %v1749 = vmul.f32 %v1621, 0.3275911
        %v1750 = vmul.f32 %v1622, 0.3275911
        %v1751 = vmul.f32 %v1623, 0.3275911
        %v1752 = vmul.f32 %v1624, 0.3275911
        %v1753 = vmul.f32 %v1625, 0.3275911
        %v1754 = vmul.f32 %v1626, 0.3275911
        %v1755 = vmul.f32 %v1627, 0.3275911
        %v1756 = vmul.f32 %v1628, 0.3275911
        %v1757 = vmul.f32 %v1629, 0.3275911
        %v1758 = vmul.f32 %v1630, 0.3275911
        %v1759 = vmul.f32 %v1631, 0.3275911
        %v1760 = vmul.f32 %v1632, 0.3275911
        %v1761 = vmul.f32 %v1633, 0.3275911
        %v1762 = vmul.f32 %v1634, 0.3275911
        %v1763 = vmul.f32 %v1635, 0.3275911
        %v1764 = vmul.f32 %v1636, 0.3275911
        %v1765 = vmul.f32 %v1637, 0.3275911
        %v1766 = vmul.f32 %v1638, 0.3275911
        %v1767 = vmul.f32 %v1639, 0.3275911
        %v1768 = vmul.f32 %v1640, 0.3275911
        %v1769 = vmul.f32 %v1641, 0.3275911
        %v1770 = vmul.f32 %v1642, 0.3275911
        %v1771 = vmul.f32 %v1643, 0.3275911
        %v1772 = vmul.f32 %v1644, 0.3275911
        %v1773 = vmul.f32 %v1645, 0.3275911
        %v1774 = vmul.f32 %v1646, 0.3275911
        %v1775 = vmul.f32 %v1647, 0.3275911
        %v1776 = vmul.f32 %v1648, 0.3275911
        %v1777 = vmul.f32 %v1649, 0.3275911
        %v1778 = vmul.f32 %v1650, 0.3275911
        %v1779 = vmul.f32 %v1651, 0.3275911
        %v1780 = vmul.f32 %v1652, 0.3275911
        %v1781 = vmul.f32 %v1653, 0.3275911
        %v1782 = vmul.f32 %v1654, 0.3275911
        %v1783 = vmul.f32 %v1655, 0.3275911
        %v1784 = vmul.f32 %v1656, 0.3275911
        %v1785 = vmul.f32 %v1657, 0.3275911
        %v1786 = vmul.f32 %v1658, 0.3275911
        %v1787 = vmul.f32 %v1659, 0.3275911
        %v1788 = vmul.f32 %v1660, 0.3275911
        %v1789 = vmul.f32 %v1661, 0.3275911
        %v1790 = vmul.f32 %v1662, 0.3275911
        %v1791 = vmul.f32 %v1663, 0.3275911
        %v1792 = vmul.f32 %v1664, 0.3275911
        %v1793 = vmul.f32 %v1665, 0.3275911
        %v1794 = vmul.f32 %v1666, 0.3275911
        %v1795 = vmul.f32 %v1667, 0.3275911
        %v1796 = vmul.f32 %v1668, 0.3275911
        %v1797 = vmul.f32 %v1669, 0.3275911
        %v1798 = vmul.f32 %v1670, 0.3275911
        %v1799 = vmul.f32 %v1671, 0.3275911
        %v1800 = vmul.f32 %v1672, 0.3275911
        %v1801 = vmul.f32 %v1673, 0.3275911
        %v1802 = vmul.f32 %v1674, 0.3275911
        %v1803 = vmul.f32 %v1675, 0.3275911
        %v1804 = vmul.f32 %v1676, 0.3275911
        %v1805 = vmul.f32 %v1677, 0.3275911
        %v1806 = vmul.f32 %v1678, 0.3275911
        %v1807 = vmul.f32 %v1679, 0.3275911
        %v1808 = vmul.f32 %v1680, 0.3275911
        %v1809 = vmul.f32 %v1681, 0.3275911
        %v1810 = vmul.f32 %v1682, 0.3275911
        %v1811 = vmul.f32 %v1683, 0.3275911
        %v1812 = vmul.f32 %v1684, 0.3275911
        %v1813 = vmul.f32 %v1685, 0.3275911
        %v1814 = vmul.f32 %v1686, 0.3275911
        %v1815 = vmul.f32 %v1687, 0.3275911
        %v1816 = vmul.f32 %v1688, 0.3275911
        %v1817 = vmul.f32 %v1689, 0.3275911
        %v1818 = vmul.f32 %v1690, 0.3275911
        %v1819 = vmul.f32 %v1691, 0.3275911
        %v1820 = vmul.f32 %v1692, 0.3275911
        %v1821 = vmul.f32 %v1693, 0.3275911
        %v1822 = vmul.f32 %v1694, 0.3275911
        %v1823 = vmul.f32 %v1695, 0.3275911
        %v1824 = vmul.f32 %v1696, 0.3275911
        %v1825 = vmul.f32 %v1697, 0.3275911
        %v1826 = vmul.f32 %v1698, 0.3275911
        %v1827 = vmul.f32 %v1699, 0.3275911
        %v1828 = vmul.f32 %v1700, 0.3275911
        %v1829 = vmul.f32 %v1701, 0.3275911
        %v1830 = vmul.f32 %v1702, 0.3275911
        %v1831 = vmul.f32 %v1703, 0.3275911
        %v1832 = vmul.f32 %v1704, 0.3275911
        %v1833 = vmul.f32 %v1705, 0.3275911
        %v1834 = vmul.f32 %v1706, 0.3275911
        %v1835 = vmul.f32 %v1707, 0.3275911
        %v1836 = vmul.f32 %v1708, 0.3275911
        %v1837 = vmul.f32 %v1709, 0.3275911
        %v1838 = vmul.f32 %v1710, 0.3275911
        %v1839 = vmul.f32 %v1711, 0.3275911
        %v1840 = vmul.f32 %v1712, 0.3275911
        %v1841 = vmul.f32 %v1713, 0.3275911
        %v1842 = vmul.f32 %v1714, 0.3275911
        %v1843 = vmul.f32 %v1715, 0.3275911
        %v1844 = vmul.f32 %v1716, 0.3275911
        %v1845 = vmul.f32 %v1717, 0.3275911
        %v1846 = vmul.f32 %v1718, 0.3275911
        %v1847 = vmul.f32 %v1719, 0.3275911
        %v1848 = vmul.f32 %v1720, 0.3275911
        %v1849 = vmul.f32 %v1721, 0.3275911
        %v1850 = vmul.f32 %v1722, 0.3275911
        %v1851 = vmul.f32 %v1723, 0.3275911
        %v1852 = vadd.f32 %v1724, 1.0
        %v1853 = vadd.f32 %v1725, 1.0
        %v1854 = vadd.f32 %v1726, 1.0
        %v1855 = vadd.f32 %v1727, 1.0
        %v1856 = vadd.f32 %v1728, 1.0
        %v1857 = vadd.f32 %v1729, 1.0
        %v1858 = vadd.f32 %v1730, 1.0
        %v1859 = vadd.f32 %v1731, 1.0
        %v1860 = vadd.f32 %v1732, 1.0
        %v1861 = vadd.f32 %v1733, 1.0
        %v1862 = vadd.f32 %v1734, 1.0
        %v1863 = vadd.f32 %v1735, 1.0
        %v1864 = vadd.f32 %v1736, 1.0
        %v1865 = vadd.f32 %v1737, 1.0
        %v1866 = vadd.f32 %v1738, 1.0
        %v1867 = vadd.f32 %v1739, 1.0
        %v1868 = vadd.f32 %v1740, 1.0
        %v1869 = vadd.f32 %v1741, 1.0
        %v1870 = vadd.f32 %v1742, 1.0
        %v1871 = vadd.f32 %v1743, 1.0
        %v1872 = vadd.f32 %v1744, 1.0
        %v1873 = vadd.f32 %v1745, 1.0
        %v1874 = vadd.f32 %v1746, 1.0
        %v1875 = vadd.f32 %v1747, 1.0
        %v1876 = vadd.f32 %v1748, 1.0
        %v1877 = vadd.f32 %v1749, 1.0
        %v1878 = vadd.f32 %v1750, 1.0
        %v1879 = vadd.f32 %v1751, 1.0
        %v1880 = vadd.f32 %v1752, 1.0
        %v1881 = vadd.f32 %v1753, 1.0
        %v1882 = vadd.f32 %v1754, 1.0
        %v1883 = vadd.f32 %v1755, 1.0
        %v1884 = vadd.f32 %v1756, 1.0
        %v1885 = vadd.f32 %v1757, 1.0
        %v1886 = vadd.f32 %v1758, 1.0
        %v1887 = vadd.f32 %v1759, 1.0
        %v1888 = vadd.f32 %v1760, 1.0
        %v1889 = vadd.f32 %v1761, 1.0
        %v1890 = vadd.f32 %v1762, 1.0
        %v1891 = vadd.f32 %v1763, 1.0
        %v1892 = vadd.f32 %v1764, 1.0
        %v1893 = vadd.f32 %v1765, 1.0
        %v1894 = vadd.f32 %v1766, 1.0
        %v1895 = vadd.f32 %v1767, 1.0
        %v1896 = vadd.f32 %v1768, 1.0
        %v1897 = vadd.f32 %v1769, 1.0
        %v1898 = vadd.f32 %v1770, 1.0
        %v1899 = vadd.f32 %v1771, 1.0
        %v1900 = vadd.f32 %v1772, 1.0
        %v1901 = vadd.f32 %v1773, 1.0
        %v1902 = vadd.f32 %v1774, 1.0
        %v1903 = vadd.f32 %v1775, 1.0
        %v1904 = vadd.f32 %v1776, 1.0
        %v1905 = vadd.f32 %v1777, 1.0
        %v1906 = vadd.f32 %v1778, 1.0
        %v1907 = vadd.f32 %v1779, 1.0
        %v1908 = vadd.f32 %v1780, 1.0
        %v1909 = vadd.f32 %v1781, 1.0
        %v1910 = vadd.f32 %v1782, 1.0
        %v1911 = vadd.f32 %v1783, 1.0
        %v1912 = vadd.f32 %v1784, 1.0
        %v1913 = vadd.f32 %v1785, 1.0
        %v1914 = vadd.f32 %v1786, 1.0
        %v1915 = vadd.f32 %v1787, 1.0
        %v1916 = vadd.f32 %v1788, 1.0
        %v1917 = vadd.f32 %v1789, 1.0
        %v1918 = vadd.f32 %v1790, 1.0
        %v1919 = vadd.f32 %v1791, 1.0
        %v1920 = vadd.f32 %v1792, 1.0
        %v1921 = vadd.f32 %v1793, 1.0
        %v1922 = vadd.f32 %v1794, 1.0
        %v1923 = vadd.f32 %v1795, 1.0
        %v1924 = vadd.f32 %v1796, 1.0
        %v1925 = vadd.f32 %v1797, 1.0
        %v1926 = vadd.f32 %v1798, 1.0
        %v1927 = vadd.f32 %v1799, 1.0
        %v1928 = vadd.f32 %v1800, 1.0
        %v1929 = vadd.f32 %v1801, 1.0
        %v1930 = vadd.f32 %v1802, 1.0
        %v1931 = vadd.f32 %v1803, 1.0
        %v1932 = vadd.f32 %v1804, 1.0
        %v1933 = vadd.f32 %v1805, 1.0
        %v1934 = vadd.f32 %v1806, 1.0
        %v1935 = vadd.f32 %v1807, 1.0
        %v1936 = vadd.f32 %v1808, 1.0
        %v1937 = vadd.f32 %v1809, 1.0
        %v1938 = vadd.f32 %v1810, 1.0
        %v1939 = vadd.f32 %v1811, 1.0
        %v1940 = vadd.f32 %v1812, 1.0
        %v1941 = vadd.f32 %v1813, 1.0
        %v1942 = vadd.f32 %v1814, 1.0
        %v1943 = vadd.f32 %v1815, 1.0
        %v1944 = vadd.f32 %v1816, 1.0
        %v1945 = vadd.f32 %v1817, 1.0
        %v1946 = vadd.f32 %v1818, 1.0
        %v1947 = vadd.f32 %v1819, 1.0
        %v1948 = vadd.f32 %v1820, 1.0
        %v1949 = vadd.f32 %v1821, 1.0
        %v1950 = vadd.f32 %v1822, 1.0
        %v1951 = vadd.f32 %v1823, 1.0
        %v1952 = vadd.f32 %v1824, 1.0
        %v1953 = vadd.f32 %v1825, 1.0
        %v1954 = vadd.f32 %v1826, 1.0
        %v1955 = vadd.f32 %v1827, 1.0
        %v1956 = vadd.f32 %v1828, 1.0
        %v1957 = vadd.f32 %v1829, 1.0
        %v1958 = vadd.f32 %v1830, 1.0
        %v1959 = vadd.f32 %v1831, 1.0
        %v1960 = vadd.f32 %v1832, 1.0
        %v1961 = vadd.f32 %v1833, 1.0
        %v1962 = vadd.f32 %v1834, 1.0
        %v1963 = vadd.f32 %v1835, 1.0
        %v1964 = vadd.f32 %v1836, 1.0
        %v1965 = vadd.f32 %v1837, 1.0
        %v1966 = vadd.f32 %v1838, 1.0
        %v1967 = vadd.f32 %v1839, 1.0
        %v1968 = vadd.f32 %v1840, 1.0
        %v1969 = vadd.f32 %v1841, 1.0
        %v1970 = vadd.f32 %v1842, 1.0
        %v1971 = vadd.f32 %v1843, 1.0
        %v1972 = vadd.f32 %v1844, 1.0
        %v1973 = vadd.f32 %v1845, 1.0
        %v1974 = vadd.f32 %v1846, 1.0
        %v1975 = vadd.f32 %v1847, 1.0
        %v1976 = vadd.f32 %v1848, 1.0
        %v1977 = vadd.f32 %v1849, 1.0
        %v1978 = vadd.f32 %v1850, 1.0
        %v1979 = vadd.f32 %v1851, 1.0
        %v1980 = vrcp.pop %v1852
        %v1981 = vrcp.pop %v1853
        %v1982 = vrcp.pop %v1854
        %v1983 = vrcp.pop %v1855
        %v1984 = vrcp.pop %v1856
        %v1985 = vrcp.pop %v1857
        %v1986 = vrcp.pop %v1858
        %v1987 = vrcp.pop %v1859
        %v1988 = vrcp.pop %v1860
        %v1989 = vrcp.pop %v1861
        %v1990 = vrcp.pop %v1862
        %v1991 = vrcp.pop %v1863
        %v1992 = vrcp.pop %v1864
        %v1993 = vrcp.pop %v1865
        %v1994 = vrcp.pop %v1866
        %v1995 = vrcp.pop %v1867
        %v1996 = vrcp.pop %v1868
        %v1997 = vrcp.pop %v1869
        %v1998 = vrcp.pop %v1870
        %v1999 = vrcp.pop %v1871
        %v2000 = vrcp.pop %v1872
        %v2001 = vrcp.pop %v1873
        %v2002 = vrcp.pop %v1874
        %v2003 = vrcp.pop %v1875
        %v2004 = vrcp.pop %v1876
        %v2005 = vrcp.pop %v1877
        %v2006 = vrcp.pop %v1878
        %v2007 = vrcp.pop %v1879
        %v2008 = vrcp.pop %v1880
        %v2009 = vrcp.pop %v1881
        %v2010 = vrcp.pop %v1882
        %v2011 = vrcp.pop %v1883
        %v2012 = vrcp.pop %v1884
        %v2013 = vrcp.pop %v1885
        %v2014 = vrcp.pop %v1886
        %v2015 = vrcp.pop %v1887
        %v2016 = vrcp.pop %v1888
        %v2017 = vrcp.pop %v1889
        %v2018 = vrcp.pop %v1890
        %v2019 = vrcp.pop %v1891
        %v2020 = vrcp.pop %v1892
        %v2021 = vrcp.pop %v1893
        %v2022 = vrcp.pop %v1894
        %v2023 = vrcp.pop %v1895
        %v2024 = vrcp.pop %v1896
        %v2025 = vrcp.pop %v1897
        %v2026 = vrcp.pop %v1898
        %v2027 = vrcp.pop %v1899
        %v2028 = vrcp.pop %v1900
        %v2029 = vrcp.pop %v1901
        %v2030 = vrcp.pop %v1902
        %v2031 = vrcp.pop %v1903
        %v2032 = vrcp.pop %v1904
        %v2033 = vrcp.pop %v1905
        %v2034 = vrcp.pop %v1906
        %v2035 = vrcp.pop %v1907
        %v2036 = vrcp.pop %v1908
        %v2037 = vrcp.pop %v1909
        %v2038 = vrcp.pop %v1910
        %v2039 = vrcp.pop %v1911
        %v2040 = vrcp.pop %v1912
        %v2041 = vrcp.pop %v1913
        %v2042 = vrcp.pop %v1914
        %v2043 = vrcp.pop %v1915
        %v2044 = vrcp.pop %v1916
        %v2045 = vrcp.pop %v1917
        %v2046 = vrcp.pop %v1918
        %v2047 = vrcp.pop %v1919
        %v2048 = vrcp.pop %v1920
        %v2049 = vrcp.pop %v1921
        %v2050 = vrcp.pop %v1922
        %v2051 = vrcp.pop %v1923
        %v2052 = vrcp.pop %v1924
        %v2053 = vrcp.pop %v1925
        %v2054 = vrcp.pop %v1926
        %v2055 = vrcp.pop %v1927
        %v2056 = vrcp.pop %v1928
        %v2057 = vrcp.pop %v1929
        %v2058 = vrcp.pop %v1930
        %v2059 = vrcp.pop %v1931
        %v2060 = vrcp.pop %v1932
        %v2061 = vrcp.pop %v1933
        %v2062 = vrcp.pop %v1934
        %v2063 = vrcp.pop %v1935
        %v2064 = vrcp.pop %v1936
        %v2065 = vrcp.pop %v1937
        %v2066 = vrcp.pop %v1938
        %v2067 = vrcp.pop %v1939
        %v2068 = vrcp.pop %v1940
        %v2069 = vrcp.pop %v1941
        %v2070 = vrcp.pop %v1942
        %v2071 = vrcp.pop %v1943
        %v2072 = vrcp.pop %v1944
        %v2073 = vrcp.pop %v1945
        %v2074 = vrcp.pop %v1946
        %v2075 = vrcp.pop %v1947
        %v2076 = vrcp.pop %v1948
        %v2077 = vrcp.pop %v1949
        %v2078 = vrcp.pop %v1950
        %v2079 = vrcp.pop %v1951
        %v2080 = vrcp.pop %v1952
        %v2081 = vrcp.pop %v1953
        %v2082 = vrcp.pop %v1954
        %v2083 = vrcp.pop %v1955
        %v2084 = vrcp.pop %v1956
        %v2085 = vrcp.pop %v1957
        %v2086 = vrcp.pop %v1958
        %v2087 = vrcp.pop %v1959
        %v2088 = vrcp.pop %v1960
        %v2089 = vrcp.pop %v1961
        %v2090 = vrcp.pop %v1962
        %v2091 = vrcp.pop %v1963
        %v2092 = vrcp.pop %v1964
        %v2093 = vrcp.pop %v1965
        %v2094 = vrcp.pop %v1966
        %v2095 = vrcp.pop %v1967
        %v2096 = vrcp.pop %v1968
        %v2097 = vrcp.pop %v1969
        %v2098 = vrcp.pop %v1970
        %v2099 = vrcp.pop %v1971
        %v2100 = vrcp.pop %v1972
        %v2101 = vrcp.pop %v1973
        %v2102 = vrcp.pop %v1974
        %v2103 = vrcp.pop %v1975
        %v2104 = vrcp.pop %v1976
        %v2105 = vrcp.pop %v1977
        %v2106 = vrcp.pop %v1978
        %v2107 = vrcp.pop %v1979
        %v2108 = vmul.f32 %v1980, 1.0614054
        %v2109 = vmul.f32 %v1981, 1.0614054
        %v2110 = vmul.f32 %v1982, 1.0614054
        %v2111 = vmul.f32 %v1983, 1.0614054
        %v2112 = vmul.f32 %v1984, 1.0614054
        %v2113 = vmul.f32 %v1985, 1.0614054
        %v2114 = vmul.f32 %v1986, 1.0614054
        %v2115 = vmul.f32 %v1987, 1.0614054
        %v2116 = vmul.f32 %v1988, 1.0614054
        %v2117 = vmul.f32 %v1989, 1.0614054
        %v2118 = vmul.f32 %v1990, 1.0614054
        %v2119 = vmul.f32 %v1991, 1.0614054
        %v2120 = vmul.f32 %v1992, 1.0614054
        %v2121 = vmul.f32 %v1993, 1.0614054
        %v2122 = vmul.f32 %v1994, 1.0614054
        %v2123 = vmul.f32 %v1995, 1.0614054
        %v2124 = vmul.f32 %v1996, 1.0614054
        %v2125 = vmul.f32 %v1997, 1.0614054
        %v2126 = vmul.f32 %v1998, 1.0614054
        %v2127 = vmul.f32 %v1999, 1.0614054
        %v2128 = vmul.f32 %v2000, 1.0614054
        %v2129 = vmul.f32 %v2001, 1.0614054
        %v2130 = vmul.f32 %v2002, 1.0614054
        %v2131 = vmul.f32 %v2003, 1.0614054
        %v2132 = vmul.f32 %v2004, 1.0614054
        %v2133 = vmul.f32 %v2005, 1.0614054
        %v2134 = vmul.f32 %v2006, 1.0614054
        %v2135 = vmul.f32 %v2007, 1.0614054
        %v2136 = vmul.f32 %v2008, 1.0614054
        %v2137 = vmul.f32 %v2009, 1.0614054
        %v2138 = vmul.f32 %v2010, 1.0614054
        %v2139 = vmul.f32 %v2011, 1.0614054
        %v2140 = vmul.f32 %v2012, 1.0614054
        %v2141 = vmul.f32 %v2013, 1.0614054
        %v2142 = vmul.f32 %v2014, 1.0614054
        %v2143 = vmul.f32 %v2015, 1.0614054
        %v2144 = vmul.f32 %v2016, 1.0614054
        %v2145 = vmul.f32 %v2017, 1.0614054
        %v2146 = vmul.f32 %v2018, 1.0614054
        %v2147 = vmul.f32 %v2019, 1.0614054
        %v2148 = vmul.f32 %v2020, 1.0614054
        %v2149 = vmul.f32 %v2021, 1.0614054
        %v2150 = vmul.f32 %v2022, 1.0614054
        %v2151 = vmul.f32 %v2023, 1.0614054
        %v2152 = vmul.f32 %v2024, 1.0614054
        %v2153 = vmul.f32 %v2025, 1.0614054
        %v2154 = vmul.f32 %v2026, 1.0614054
        %v2155 = vmul.f32 %v2027, 1.0614054
        %v2156 = vmul.f32 %v2028, 1.0614054
        %v2157 = vmul.f32 %v2029, 1.0614054
        %v2158 = vmul.f32 %v2030, 1.0614054
        %v2159 = vmul.f32 %v2031, 1.0614054
        %v2160 = vmul.f32 %v2032, 1.0614054
        %v2161 = vmul.f32 %v2033, 1.0614054
        %v2162 = vmul.f32 %v2034, 1.0614054
        %v2163 = vmul.f32 %v2035, 1.0614054
        %v2164 = vmul.f32 %v2036, 1.0614054
        %v2165 = vmul.f32 %v2037, 1.0614054
        %v2166 = vmul.f32 %v2038, 1.0614054
        %v2167 = vmul.f32 %v2039, 1.0614054
        %v2168 = vmul.f32 %v2040, 1.0614054
        %v2169 = vmul.f32 %v2041, 1.0614054
        %v2170 = vmul.f32 %v2042, 1.0614054
        %v2171 = vmul.f32 %v2043, 1.0614054
        %v2172 = vmul.f32 %v2044, 1.0614054
        %v2173 = vmul.f32 %v2045, 1.0614054
        %v2174 = vmul.f32 %v2046, 1.0614054
        %v2175 = vmul.f32 %v2047, 1.0614054
        %v2176 = vmul.f32 %v2048, 1.0614054
        %v2177 = vmul.f32 %v2049, 1.0614054
        %v2178 = vmul.f32 %v2050, 1.0614054
        %v2179 = vmul.f32 %v2051, 1.0614054
        %v2180 = vmul.f32 %v2052, 1.0614054
        %v2181 = vmul.f32 %v2053, 1.0614054
        %v2182 = vmul.f32 %v2054, 1.0614054
        %v2183 = vmul.f32 %v2055, 1.0614054
        %v2184 = vmul.f32 %v2056, 1.0614054
        %v2185 = vmul.f32 %v2057, 1.0614054
        %v2186 = vmul.f32 %v2058, 1.0614054
        %v2187 = vmul.f32 %v2059, 1.0614054
        %v2188 = vmul.f32 %v2060, 1.0614054
        %v2189 = vmul.f32 %v2061, 1.0614054
        %v2190 = vmul.f32 %v2062, 1.0614054
        %v2191 = vmul.f32 %v2063, 1.0614054
        %v2192 = vmul.f32 %v2064, 1.0614054
        %v2193 = vmul.f32 %v2065, 1.0614054
        %v2194 = vmul.f32 %v2066, 1.0614054
        %v2195 = vmul.f32 %v2067, 1.0614054
        %v2196 = vmul.f32 %v2068, 1.0614054
        %v2197 = vmul.f32 %v2069, 1.0614054
        %v2198 = vmul.f32 %v2070, 1.0614054
        %v2199 = vmul.f32 %v2071, 1.0614054
        %v2200 = vmul.f32 %v2072, 1.0614054
        %v2201 = vmul.f32 %v2073, 1.0614054
        %v2202 = vmul.f32 %v2074, 1.0614054
        %v2203 = vmul.f32 %v2075, 1.0614054
        %v2204 = vmul.f32 %v2076, 1.0614054
        %v2205 = vmul.f32 %v2077, 1.0614054
        %v2206 = vmul.f32 %v2078, 1.0614054
        %v2207 = vmul.f32 %v2079, 1.0614054
        %v2208 = vmul.f32 %v2080, 1.0614054
        %v2209 = vmul.f32 %v2081, 1.0614054
        %v2210 = vmul.f32 %v2082, 1.0614054
        %v2211 = vmul.f32 %v2083, 1.0614054
        %v2212 = vmul.f32 %v2084, 1.0614054
        %v2213 = vmul.f32 %v2085, 1.0614054
        %v2214 = vmul.f32 %v2086, 1.0614054
        %v2215 = vmul.f32 %v2087, 1.0614054
        %v2216 = vmul.f32 %v2088, 1.0614054
        %v2217 = vmul.f32 %v2089, 1.0614054
        %v2218 = vmul.f32 %v2090, 1.0614054
        %v2219 = vmul.f32 %v2091, 1.0614054
        %v2220 = vmul.f32 %v2092, 1.0614054
        %v2221 = vmul.f32 %v2093, 1.0614054
        %v2222 = vmul.f32 %v2094, 1.0614054
        %v2223 = vmul.f32 %v2095, 1.0614054
        %v2224 = vmul.f32 %v2096, 1.0614054
        %v2225 = vmul.f32 %v2097, 1.0614054
        %v2226 = vmul.f32 %v2098, 1.0614054
        %v2227 = vmul.f32 %v2099, 1.0614054
        %v2228 = vmul.f32 %v2100, 1.0614054
        %v2229 = vmul.f32 %v2101, 1.0614054
        %v2230 = vmul.f32 %v2102, 1.0614054
        %v2231 = vmul.f32 %v2103, 1.0614054
        %v2232 = vmul.f32 %v2104, 1.0614054
        %v2233 = vmul.f32 %v2105, 1.0614054
        %v2234 = vmul.f32 %v2106, 1.0614054
        %v2235 = vmul.f32 %v2107, 1.0614054
        %v2236 = vadd.f32 %v2108, -1.4531521
        %v2237 = vadd.f32 %v2109, -1.4531521
        %v2238 = vadd.f32 %v2110, -1.4531521
        %v2239 = vadd.f32 %v2111, -1.4531521
        %v2240 = vadd.f32 %v2112, -1.4531521
        %v2241 = vadd.f32 %v2113, -1.4531521
        %v2242 = vadd.f32 %v2114, -1.4531521
        %v2243 = vadd.f32 %v2115, -1.4531521
        %v2244 = vadd.f32 %v2116, -1.4531521
        %v2245 = vadd.f32 %v2117, -1.4531521
        %v2246 = vadd.f32 %v2118, -1.4531521
        %v2247 = vadd.f32 %v2119, -1.4531521
        %v2248 = vadd.f32 %v2120, -1.4531521
        %v2249 = vadd.f32 %v2121, -1.4531521
        %v2250 = vadd.f32 %v2122, -1.4531521
        %v2251 = vadd.f32 %v2123, -1.4531521
        %v2252 = vadd.f32 %v2124, -1.4531521
        %v2253 = vadd.f32 %v2125, -1.4531521
        %v2254 = vadd.f32 %v2126, -1.4531521
        %v2255 = vadd.f32 %v2127, -1.4531521
        %v2256 = vadd.f32 %v2128, -1.4531521
        %v2257 = vadd.f32 %v2129, -1.4531521
        %v2258 = vadd.f32 %v2130, -1.4531521
        %v2259 = vadd.f32 %v2131, -1.4531521
        %v2260 = vadd.f32 %v2132, -1.4531521
        %v2261 = vadd.f32 %v2133, -1.4531521
        %v2262 = vadd.f32 %v2134, -1.4531521
        %v2263 = vadd.f32 %v2135, -1.4531521
        %v2264 = vadd.f32 %v2136, -1.4531521
        %v2265 = vadd.f32 %v2137, -1.4531521
        %v2266 = vadd.f32 %v2138, -1.4531521
        %v2267 = vadd.f32 %v2139, -1.4531521
        %v2268 = vadd.f32 %v2140, -1.4531521
        %v2269 = vadd.f32 %v2141, -1.4531521
        %v2270 = vadd.f32 %v2142, -1.4531521
        %v2271 = vadd.f32 %v2143, -1.4531521
        %v2272 = vadd.f32 %v2144, -1.4531521
        %v2273 = vadd.f32 %v2145, -1.4531521
        %v2274 = vadd.f32 %v2146, -1.4531521
        %v2275 = vadd.f32 %v2147, -1.4531521
        %v2276 = vadd.f32 %v2148, -1.4531521
        %v2277 = vadd.f32 %v2149, -1.4531521
        %v2278 = vadd.f32 %v2150, -1.4531521
        %v2279 = vadd.f32 %v2151, -1.4531521
        %v2280 = vadd.f32 %v2152, -1.4531521
        %v2281 = vadd.f32 %v2153, -1.4531521
        %v2282 = vadd.f32 %v2154, -1.4531521
        %v2283 = vadd.f32 %v2155, -1.4531521
        %v2284 = vadd.f32 %v2156, -1.4531521
        %v2285 = vadd.f32 %v2157, -1.4531521
        %v2286 = vadd.f32 %v2158, -1.4531521
        %v2287 = vadd.f32 %v2159, -1.4531521
        %v2288 = vadd.f32 %v2160, -1.4531521
        %v2289 = vadd.f32 %v2161, -1.4531521
        %v2290 = vadd.f32 %v2162, -1.4531521
        %v2291 = vadd.f32 %v2163, -1.4531521
        %v2292 = vadd.f32 %v2164, -1.4531521
        %v2293 = vadd.f32 %v2165, -1.4531521
        %v2294 = vadd.f32 %v2166, -1.4531521
        %v2295 = vadd.f32 %v2167, -1.4531521
        %v2296 = vadd.f32 %v2168, -1.4531521
        %v2297 = vadd.f32 %v2169, -1.4531521
        %v2298 = vadd.f32 %v2170, -1.4531521
        %v2299 = vadd.f32 %v2171, -1.4531521
        %v2300 = vadd.f32 %v2172, -1.4531521
        %v2301 = vadd.f32 %v2173, -1.4531521
        %v2302 = vadd.f32 %v2174, -1.4531521
        %v2303 = vadd.f32 %v2175, -1.4531521
        %v2304 = vadd.f32 %v2176, -1.4531521
        %v2305 = vadd.f32 %v2177, -1.4531521
        %v2306 = vadd.f32 %v2178, -1.4531521
        %v2307 = vadd.f32 %v2179, -1.4531521
        %v2308 = vadd.f32 %v2180, -1.4531521
        %v2309 = vadd.f32 %v2181, -1.4531521
        %v2310 = vadd.f32 %v2182, -1.4531521
        %v2311 = vadd.f32 %v2183, -1.4531521
        %v2312 = vadd.f32 %v2184, -1.4531521
        %v2313 = vadd.f32 %v2185, -1.4531521
        %v2314 = vadd.f32 %v2186, -1.4531521
        %v2315 = vadd.f32 %v2187, -1.4531521
        %v2316 = vadd.f32 %v2188, -1.4531521
        %v2317 = vadd.f32 %v2189, -1.4531521
        %v2318 = vadd.f32 %v2190, -1.4531521
        %v2319 = vadd.f32 %v2191, -1.4531521
        %v2320 = vadd.f32 %v2192, -1.4531521
        %v2321 = vadd.f32 %v2193, -1.4531521
        %v2322 = vadd.f32 %v2194, -1.4531521
        %v2323 = vadd.f32 %v2195, -1.4531521
        %v2324 = vadd.f32 %v2196, -1.4531521
        %v2325 = vadd.f32 %v2197, -1.4531521
        %v2326 = vadd.f32 %v2198, -1.4531521
        %v2327 = vadd.f32 %v2199, -1.4531521
        %v2328 = vadd.f32 %v2200, -1.4531521
        %v2329 = vadd.f32 %v2201, -1.4531521
        %v2330 = vadd.f32 %v2202, -1.4531521
        %v2331 = vadd.f32 %v2203, -1.4531521
        %v2332 = vadd.f32 %v2204, -1.4531521
        %v2333 = vadd.f32 %v2205, -1.4531521
        %v2334 = vadd.f32 %v2206, -1.4531521
        %v2335 = vadd.f32 %v2207, -1.4531521
        %v2336 = vadd.f32 %v2208, -1.4531521
        %v2337 = vadd.f32 %v2209, -1.4531521
        %v2338 = vadd.f32 %v2210, -1.4531521
        %v2339 = vadd.f32 %v2211, -1.4531521
        %v2340 = vadd.f32 %v2212, -1.4531521
        %v2341 = vadd.f32 %v2213, -1.4531521
        %v2342 = vadd.f32 %v2214, -1.4531521
        %v2343 = vadd.f32 %v2215, -1.4531521
        %v2344 = vadd.f32 %v2216, -1.4531521
        %v2345 = vadd.f32 %v2217, -1.4531521
        %v2346 = vadd.f32 %v2218, -1.4531521
        %v2347 = vadd.f32 %v2219, -1.4531521
        %v2348 = vadd.f32 %v2220, -1.4531521
        %v2349 = vadd.f32 %v2221, -1.4531521
        %v2350 = vadd.f32 %v2222, -1.4531521
        %v2351 = vadd.f32 %v2223, -1.4531521
        %v2352 = vadd.f32 %v2224, -1.4531521
        %v2353 = vadd.f32 %v2225, -1.4531521
        %v2354 = vadd.f32 %v2226, -1.4531521
        %v2355 = vadd.f32 %v2227, -1.4531521
        %v2356 = vadd.f32 %v2228, -1.4531521
        %v2357 = vadd.f32 %v2229, -1.4531521
        %v2358 = vadd.f32 %v2230, -1.4531521
        %v2359 = vadd.f32 %v2231, -1.4531521
        %v2360 = vadd.f32 %v2232, -1.4531521
        %v2361 = vadd.f32 %v2233, -1.4531521
        %v2362 = vadd.f32 %v2234, -1.4531521
        %v2363 = vadd.f32 %v2235, -1.4531521
        %v2364 = vmul.f32 %v2236, %v1980
        %v2365 = vmul.f32 %v2237, %v1981
        %v2366 = vmul.f32 %v2238, %v1982
        %v2367 = vmul.f32 %v2239, %v1983
        %v2368 = vmul.f32 %v2240, %v1984
        %v2369 = vmul.f32 %v2241, %v1985
        %v2370 = vmul.f32 %v2242, %v1986
        %v2371 = vmul.f32 %v2243, %v1987
        %v2372 = vmul.f32 %v2244, %v1988
        %v2373 = vmul.f32 %v2245, %v1989
        %v2374 = vmul.f32 %v2246, %v1990
        %v2375 = vmul.f32 %v2247, %v1991
        %v2376 = vmul.f32 %v2248, %v1992
        %v2377 = vmul.f32 %v2249, %v1993
        %v2378 = vmul.f32 %v2250, %v1994
        %v2379 = vmul.f32 %v2251, %v1995
        %v2380 = vmul.f32 %v2252, %v1996
        %v2381 = vmul.f32 %v2253, %v1997
        %v2382 = vmul.f32 %v2254, %v1998
        %v2383 = vmul.f32 %v2255, %v1999
        %v2384 = vmul.f32 %v2256, %v2000
        %v2385 = vmul.f32 %v2257, %v2001
        %v2386 = vmul.f32 %v2258, %v2002
        %v2387 = vmul.f32 %v2259, %v2003
        %v2388 = vmul.f32 %v2260, %v2004
        %v2389 = vmul.f32 %v2261, %v2005
        %v2390 = vmul.f32 %v2262, %v2006
        %v2391 = vmul.f32 %v2263, %v2007
        %v2392 = vmul.f32 %v2264, %v2008
        %v2393 = vmul.f32 %v2265, %v2009
        %v2394 = vmul.f32 %v2266, %v2010
        %v2395 = vmul.f32 %v2267, %v2011
        %v2396 = vmul.f32 %v2268, %v2012
        %v2397 = vmul.f32 %v2269, %v2013
        %v2398 = vmul.f32 %v2270, %v2014
        %v2399 = vmul.f32 %v2271, %v2015
        %v2400 = vmul.f32 %v2272, %v2016
        %v2401 = vmul.f32 %v2273, %v2017
        %v2402 = vmul.f32 %v2274, %v2018
        %v2403 = vmul.f32 %v2275, %v2019
        %v2404 = vmul.f32 %v2276, %v2020
        %v2405 = vmul.f32 %v2277, %v2021
        %v2406 = vmul.f32 %v2278, %v2022
        %v2407 = vmul.f32 %v2279, %v2023
        %v2408 = vmul.f32 %v2280, %v2024
        %v2409 = vmul.f32 %v2281, %v2025
        %v2410 = vmul.f32 %v2282, %v2026
        %v2411 = vmul.f32 %v2283, %v2027
        %v2412 = vmul.f32 %v2284, %v2028
        %v2413 = vmul.f32 %v2285, %v2029
        %v2414 = vmul.f32 %v2286, %v2030
        %v2415 = vmul.f32 %v2287, %v2031
        %v2416 = vmul.f32 %v2288, %v2032
        %v2417 = vmul.f32 %v2289, %v2033
        %v2418 = vmul.f32 %v2290, %v2034
        %v2419 = vmul.f32 %v2291, %v2035
        %v2420 = vmul.f32 %v2292, %v2036
        %v2421 = vmul.f32 %v2293, %v2037
        %v2422 = vmul.f32 %v2294, %v2038
        %v2423 = vmul.f32 %v2295, %v2039
        %v2424 = vmul.f32 %v2296, %v2040
        %v2425 = vmul.f32 %v2297, %v2041
        %v2426 = vmul.f32 %v2298, %v2042
        %v2427 = vmul.f32 %v2299, %v2043
        %v2428 = vmul.f32 %v2300, %v2044
        %v2429 = vmul.f32 %v2301, %v2045
        %v2430 = vmul.f32 %v2302, %v2046
        %v2431 = vmul.f32 %v2303, %v2047
        %v2432 = vmul.f32 %v2304, %v2048
        %v2433 = vmul.f32 %v2305, %v2049
        %v2434 = vmul.f32 %v2306, %v2050
        %v2435 = vmul.f32 %v2307, %v2051
        %v2436 = vmul.f32 %v2308, %v2052
        %v2437 = vmul.f32 %v2309, %v2053
        %v2438 = vmul.f32 %v2310, %v2054
        %v2439 = vmul.f32 %v2311, %v2055
        %v2440 = vmul.f32 %v2312, %v2056
        %v2441 = vmul.f32 %v2313, %v2057
        %v2442 = vmul.f32 %v2314, %v2058
        %v2443 = vmul.f32 %v2315, %v2059
        %v2444 = vmul.f32 %v2316, %v2060
        %v2445 = vmul.f32 %v2317, %v2061
        %v2446 = vmul.f32 %v2318, %v2062
        %v2447 = vmul.f32 %v2319, %v2063
        %v2448 = vmul.f32 %v2320, %v2064
        %v2449 = vmul.f32 %v2321, %v2065
        %v2450 = vmul.f32 %v2322, %v2066
        %v2451 = vmul.f32 %v2323, %v2067
        %v2452 = vmul.f32 %v2324, %v2068
        %v2453 = vmul.f32 %v2325, %v2069
        %v2454 = vmul.f32 %v2326, %v2070
        %v2455 = vmul.f32 %v2327, %v2071
        %v2456 = vmul.f32 %v2328, %v2072
        %v2457 = vmul.f32 %v2329, %v2073
        %v2458 = vmul.f32 %v2330, %v2074
        %v2459 = vmul.f32 %v2331, %v2075
        %v2460 = vmul.f32 %v2332, %v2076
        %v2461 = vmul.f32 %v2333, %v2077
        %v2462 = vmul.f32 %v2334, %v2078
        %v2463 = vmul.f32 %v2335, %v2079
        %v2464 = vmul.f32 %v2336, %v2080
        %v2465 = vmul.f32 %v2337, %v2081
        %v2466 = vmul.f32 %v2338, %v2082
        %v2467 = vmul.f32 %v2339, %v2083
        %v2468 = vmul.f32 %v2340, %v2084
        %v2469 = vmul.f32 %v2341, %v2085
        %v2470 = vmul.f32 %v2342, %v2086
        %v2471 = vmul.f32 %v2343, %v2087
        %v2472 = vmul.f32 %v2344, %v2088
        %v2473 = vmul.f32 %v2345, %v2089
        %v2474 = vmul.f32 %v2346, %v2090
        %v2475 = vmul.f32 %v2347, %v2091
        %v2476 = vmul.f32 %v2348, %v2092
        %v2477 = vmul.f32 %v2349, %v2093
        %v2478 = vmul.f32 %v2350, %v2094
        %v2479 = vmul.f32 %v2351, %v2095
        %v2480 = vmul.f32 %v2352, %v2096
        %v2481 = vmul.f32 %v2353, %v2097
        %v2482 = vmul.f32 %v2354, %v2098
        %v2483 = vmul.f32 %v2355, %v2099
        %v2484 = vmul.f32 %v2356, %v2100
        %v2485 = vmul.f32 %v2357, %v2101
        %v2486 = vmul.f32 %v2358, %v2102
        %v2487 = vmul.f32 %v2359, %v2103
        %v2488 = vmul.f32 %v2360, %v2104
        %v2489 = vmul.f32 %v2361, %v2105
        %v2490 = vmul.f32 %v2362, %v2106
        %v2491 = vmul.f32 %v2363, %v2107
        %v2492 = vadd.f32 %v2364, 1.4214138
        %v2493 = vadd.f32 %v2365, 1.4214138
        %v2494 = vadd.f32 %v2366, 1.4214138
        %v2495 = vadd.f32 %v2367, 1.4214138
        %v2496 = vadd.f32 %v2368, 1.4214138
        %v2497 = vadd.f32 %v2369, 1.4214138
        %v2498 = vadd.f32 %v2370, 1.4214138
        %v2499 = vadd.f32 %v2371, 1.4214138
        %v2500 = vadd.f32 %v2372, 1.4214138
        %v2501 = vadd.f32 %v2373, 1.4214138
        %v2502 = vadd.f32 %v2374, 1.4214138
        %v2503 = vadd.f32 %v2375, 1.4214138
        %v2504 = vadd.f32 %v2376, 1.4214138
        %v2505 = vadd.f32 %v2377, 1.4214138
        %v2506 = vadd.f32 %v2378, 1.4214138
        %v2507 = vadd.f32 %v2379, 1.4214138
        %v2508 = vadd.f32 %v2380, 1.4214138
        %v2509 = vadd.f32 %v2381, 1.4214138
        %v2510 = vadd.f32 %v2382, 1.4214138
        %v2511 = vadd.f32 %v2383, 1.4214138
        %v2512 = vadd.f32 %v2384, 1.4214138
        %v2513 = vadd.f32 %v2385, 1.4214138
        %v2514 = vadd.f32 %v2386, 1.4214138
        %v2515 = vadd.f32 %v2387, 1.4214138
        %v2516 = vadd.f32 %v2388, 1.4214138
        %v2517 = vadd.f32 %v2389, 1.4214138
        %v2518 = vadd.f32 %v2390, 1.4214138
        %v2519 = vadd.f32 %v2391, 1.4214138
        %v2520 = vadd.f32 %v2392, 1.4214138
        %v2521 = vadd.f32 %v2393, 1.4214138
        %v2522 = vadd.f32 %v2394, 1.4214138
        %v2523 = vadd.f32 %v2395, 1.4214138
        %v2524 = vadd.f32 %v2396, 1.4214138
        %v2525 = vadd.f32 %v2397, 1.4214138
        %v2526 = vadd.f32 %v2398, 1.4214138
        %v2527 = vadd.f32 %v2399, 1.4214138
        %v2528 = vadd.f32 %v2400, 1.4214138
        %v2529 = vadd.f32 %v2401, 1.4214138
        %v2530 = vadd.f32 %v2402, 1.4214138
        %v2531 = vadd.f32 %v2403, 1.4214138
        %v2532 = vadd.f32 %v2404, 1.4214138
        %v2533 = vadd.f32 %v2405, 1.4214138
        %v2534 = vadd.f32 %v2406, 1.4214138
        %v2535 = vadd.f32 %v2407, 1.4214138
        %v2536 = vadd.f32 %v2408, 1.4214138
        %v2537 = vadd.f32 %v2409, 1.4214138
        %v2538 = vadd.f32 %v2410, 1.4214138
        %v2539 = vadd.f32 %v2411, 1.4214138
        %v2540 = vadd.f32 %v2412, 1.4214138
        %v2541 = vadd.f32 %v2413, 1.4214138
        %v2542 = vadd.f32 %v2414, 1.4214138
        %v2543 = vadd.f32 %v2415, 1.4214138
        %v2544 = vadd.f32 %v2416, 1.4214138
        %v2545 = vadd.f32 %v2417, 1.4214138
        %v2546 = vadd.f32 %v2418, 1.4214138
        %v2547 = vadd.f32 %v2419, 1.4214138
        %v2548 = vadd.f32 %v2420, 1.4214138
        %v2549 = vadd.f32 %v2421, 1.4214138
        %v2550 = vadd.f32 %v2422, 1.4214138
        %v2551 = vadd.f32 %v2423, 1.4214138
        %v2552 = vadd.f32 %v2424, 1.4214138
        %v2553 = vadd.f32 %v2425, 1.4214138
        %v2554 = vadd.f32 %v2426, 1.4214138
        %v2555 = vadd.f32 %v2427, 1.4214138
        %v2556 = vadd.f32 %v2428, 1.4214138
        %v2557 = vadd.f32 %v2429, 1.4214138
        %v2558 = vadd.f32 %v2430, 1.4214138
        %v2559 = vadd.f32 %v2431, 1.4214138
        %v2560 = vadd.f32 %v2432, 1.4214138
        %v2561 = vadd.f32 %v2433, 1.4214138
        %v2562 = vadd.f32 %v2434, 1.4214138
        %v2563 = vadd.f32 %v2435, 1.4214138
        %v2564 = vadd.f32 %v2436, 1.4214138
        %v2565 = vadd.f32 %v2437, 1.4214138
        %v2566 = vadd.f32 %v2438, 1.4214138
        %v2567 = vadd.f32 %v2439, 1.4214138
        %v2568 = vadd.f32 %v2440, 1.4214138
        %v2569 = vadd.f32 %v2441, 1.4214138
        %v2570 = vadd.f32 %v2442, 1.4214138
        %v2571 = vadd.f32 %v2443, 1.4214138
        %v2572 = vadd.f32 %v2444, 1.4214138
        %v2573 = vadd.f32 %v2445, 1.4214138
        %v2574 = vadd.f32 %v2446, 1.4214138
        %v2575 = vadd.f32 %v2447, 1.4214138
        %v2576 = vadd.f32 %v2448, 1.4214138
        %v2577 = vadd.f32 %v2449, 1.4214138
        %v2578 = vadd.f32 %v2450, 1.4214138
        %v2579 = vadd.f32 %v2451, 1.4214138
        %v2580 = vadd.f32 %v2452, 1.4214138
        %v2581 = vadd.f32 %v2453, 1.4214138
        %v2582 = vadd.f32 %v2454, 1.4214138
        %v2583 = vadd.f32 %v2455, 1.4214138
        %v2584 = vadd.f32 %v2456, 1.4214138
        %v2585 = vadd.f32 %v2457, 1.4214138
        %v2586 = vadd.f32 %v2458, 1.4214138
        %v2587 = vadd.f32 %v2459, 1.4214138
        %v2588 = vadd.f32 %v2460, 1.4214138
        %v2589 = vadd.f32 %v2461, 1.4214138
        %v2590 = vadd.f32 %v2462, 1.4214138
        %v2591 = vadd.f32 %v2463, 1.4214138
        %v2592 = vadd.f32 %v2464, 1.4214138
        %v2593 = vadd.f32 %v2465, 1.4214138
        %v2594 = vadd.f32 %v2466, 1.4214138
        %v2595 = vadd.f32 %v2467, 1.4214138
        %v2596 = vadd.f32 %v2468, 1.4214138
        %v2597 = vadd.f32 %v2469, 1.4214138
        %v2598 = vadd.f32 %v2470, 1.4214138
        %v2599 = vadd.f32 %v2471, 1.4214138
        %v2600 = vadd.f32 %v2472, 1.4214138
        %v2601 = vadd.f32 %v2473, 1.4214138
        %v2602 = vadd.f32 %v2474, 1.4214138
        %v2603 = vadd.f32 %v2475, 1.4214138
        %v2604 = vadd.f32 %v2476, 1.4214138
        %v2605 = vadd.f32 %v2477, 1.4214138
        %v2606 = vadd.f32 %v2478, 1.4214138
        %v2607 = vadd.f32 %v2479, 1.4214138
        %v2608 = vadd.f32 %v2480, 1.4214138
        %v2609 = vadd.f32 %v2481, 1.4214138
        %v2610 = vadd.f32 %v2482, 1.4214138
        %v2611 = vadd.f32 %v2483, 1.4214138
        %v2612 = vadd.f32 %v2484, 1.4214138
        %v2613 = vadd.f32 %v2485, 1.4214138
        %v2614 = vadd.f32 %v2486, 1.4214138
        %v2615 = vadd.f32 %v2487, 1.4214138
        %v2616 = vadd.f32 %v2488, 1.4214138
        %v2617 = vadd.f32 %v2489, 1.4214138
        %v2618 = vadd.f32 %v2490, 1.4214138
        %v2619 = vadd.f32 %v2491, 1.4214138
        %v2620 = vmul.f32 %v2492, %v1980
        %v2621 = vmul.f32 %v2493, %v1981
        %v2622 = vmul.f32 %v2494, %v1982
        %v2623 = vmul.f32 %v2495, %v1983
        %v2624 = vmul.f32 %v2496, %v1984
        %v2625 = vmul.f32 %v2497, %v1985
        %v2626 = vmul.f32 %v2498, %v1986
        %v2627 = vmul.f32 %v2499, %v1987
        %v2628 = vmul.f32 %v2500, %v1988
        %v2629 = vmul.f32 %v2501, %v1989
        %v2630 = vmul.f32 %v2502, %v1990
        %v2631 = vmul.f32 %v2503, %v1991
        %v2632 = vmul.f32 %v2504, %v1992
        %v2633 = vmul.f32 %v2505, %v1993
        %v2634 = vmul.f32 %v2506, %v1994
        %v2635 = vmul.f32 %v2507, %v1995
        %v2636 = vmul.f32 %v2508, %v1996
        %v2637 = vmul.f32 %v2509, %v1997
        %v2638 = vmul.f32 %v2510, %v1998
        %v2639 = vmul.f32 %v2511, %v1999
        %v2640 = vmul.f32 %v2512, %v2000
        %v2641 = vmul.f32 %v2513, %v2001
        %v2642 = vmul.f32 %v2514, %v2002
        %v2643 = vmul.f32 %v2515, %v2003
        %v2644 = vmul.f32 %v2516, %v2004
        %v2645 = vmul.f32 %v2517, %v2005
        %v2646 = vmul.f32 %v2518, %v2006
        %v2647 = vmul.f32 %v2519, %v2007
        %v2648 = vmul.f32 %v2520, %v2008
        %v2649 = vmul.f32 %v2521, %v2009
        %v2650 = vmul.f32 %v2522, %v2010
        %v2651 = vmul.f32 %v2523, %v2011
        %v2652 = vmul.f32 %v2524, %v2012
        %v2653 = vmul.f32 %v2525, %v2013
        %v2654 = vmul.f32 %v2526, %v2014
        %v2655 = vmul.f32 %v2527, %v2015
        %v2656 = vmul.f32 %v2528, %v2016
        %v2657 = vmul.f32 %v2529, %v2017
        %v2658 = vmul.f32 %v2530, %v2018
        %v2659 = vmul.f32 %v2531, %v2019
        %v2660 = vmul.f32 %v2532, %v2020
        %v2661 = vmul.f32 %v2533, %v2021
        %v2662 = vmul.f32 %v2534, %v2022
        %v2663 = vmul.f32 %v2535, %v2023
        %v2664 = vmul.f32 %v2536, %v2024
        %v2665 = vmul.f32 %v2537, %v2025
        %v2666 = vmul.f32 %v2538, %v2026
        %v2667 = vmul.f32 %v2539, %v2027
        %v2668 = vmul.f32 %v2540, %v2028
        %v2669 = vmul.f32 %v2541, %v2029
        %v2670 = vmul.f32 %v2542, %v2030
        %v2671 = vmul.f32 %v2543, %v2031
        %v2672 = vmul.f32 %v2544, %v2032
        %v2673 = vmul.f32 %v2545, %v2033
        %v2674 = vmul.f32 %v2546, %v2034
        %v2675 = vmul.f32 %v2547, %v2035
        %v2676 = vmul.f32 %v2548, %v2036
        %v2677 = vmul.f32 %v2549, %v2037
        %v2678 = vmul.f32 %v2550, %v2038
        %v2679 = vmul.f32 %v2551, %v2039
        %v2680 = vmul.f32 %v2552, %v2040
        %v2681 = vmul.f32 %v2553, %v2041
        %v2682 = vmul.f32 %v2554, %v2042
        %v2683 = vmul.f32 %v2555, %v2043
        %v2684 = vmul.f32 %v2556, %v2044
        %v2685 = vmul.f32 %v2557, %v2045
        %v2686 = vmul.f32 %v2558, %v2046
        %v2687 = vmul.f32 %v2559, %v2047
        %v2688 = vmul.f32 %v2560, %v2048
        %v2689 = vmul.f32 %v2561, %v2049
        %v2690 = vmul.f32 %v2562, %v2050
        %v2691 = vmul.f32 %v2563, %v2051
        %v2692 = vmul.f32 %v2564, %v2052
        %v2693 = vmul.f32 %v2565, %v2053
        %v2694 = vmul.f32 %v2566, %v2054
        %v2695 = vmul.f32 %v2567, %v2055
        %v2696 = vmul.f32 %v2568, %v2056
        %v2697 = vmul.f32 %v2569, %v2057
        %v2698 = vmul.f32 %v2570, %v2058
        %v2699 = vmul.f32 %v2571, %v2059
        %v2700 = vmul.f32 %v2572, %v2060
        %v2701 = vmul.f32 %v2573, %v2061
        %v2702 = vmul.f32 %v2574, %v2062
        %v2703 = vmul.f32 %v2575, %v2063
        %v2704 = vmul.f32 %v2576, %v2064
        %v2705 = vmul.f32 %v2577, %v2065
        %v2706 = vmul.f32 %v2578, %v2066
        %v2707 = vmul.f32 %v2579, %v2067
        %v2708 = vmul.f32 %v2580, %v2068
        %v2709 = vmul.f32 %v2581, %v2069
        %v2710 = vmul.f32 %v2582, %v2070
        %v2711 = vmul.f32 %v2583, %v2071
        %v2712 = vmul.f32 %v2584, %v2072
        %v2713 = vmul.f32 %v2585, %v2073
        %v2714 = vmul.f32 %v2586, %v2074
        %v2715 = vmul.f32 %v2587, %v2075
        %v2716 = vmul.f32 %v2588, %v2076
        %v2717 = vmul.f32 %v2589, %v2077
        %v2718 = vmul.f32 %v2590, %v2078
        %v2719 = vmul.f32 %v2591, %v2079
        %v2720 = vmul.f32 %v2592, %v2080
        %v2721 = vmul.f32 %v2593, %v2081
        %v2722 = vmul.f32 %v2594, %v2082
        %v2723 = vmul.f32 %v2595, %v2083
        %v2724 = vmul.f32 %v2596, %v2084
        %v2725 = vmul.f32 %v2597, %v2085
        %v2726 = vmul.f32 %v2598, %v2086
        %v2727 = vmul.f32 %v2599, %v2087
        %v2728 = vmul.f32 %v2600, %v2088
        %v2729 = vmul.f32 %v2601, %v2089
        %v2730 = vmul.f32 %v2602, %v2090
        %v2731 = vmul.f32 %v2603, %v2091
        %v2732 = vmul.f32 %v2604, %v2092
        %v2733 = vmul.f32 %v2605, %v2093
        %v2734 = vmul.f32 %v2606, %v2094
        %v2735 = vmul.f32 %v2607, %v2095
        %v2736 = vmul.f32 %v2608, %v2096
        %v2737 = vmul.f32 %v2609, %v2097
        %v2738 = vmul.f32 %v2610, %v2098
        %v2739 = vmul.f32 %v2611, %v2099
        %v2740 = vmul.f32 %v2612, %v2100
        %v2741 = vmul.f32 %v2613, %v2101
        %v2742 = vmul.f32 %v2614, %v2102
        %v2743 = vmul.f32 %v2615, %v2103
        %v2744 = vmul.f32 %v2616, %v2104
        %v2745 = vmul.f32 %v2617, %v2105
        %v2746 = vmul.f32 %v2618, %v2106
        %v2747 = vmul.f32 %v2619, %v2107
        %v2748 = vadd.f32 %v2620, -0.28449672
        %v2749 = vadd.f32 %v2621, -0.28449672
        %v2750 = vadd.f32 %v2622, -0.28449672
        %v2751 = vadd.f32 %v2623, -0.28449672
        %v2752 = vadd.f32 %v2624, -0.28449672
        %v2753 = vadd.f32 %v2625, -0.28449672
        %v2754 = vadd.f32 %v2626, -0.28449672
        %v2755 = vadd.f32 %v2627, -0.28449672
        %v2756 = vadd.f32 %v2628, -0.28449672
        %v2757 = vadd.f32 %v2629, -0.28449672
        %v2758 = vadd.f32 %v2630, -0.28449672
        %v2759 = vadd.f32 %v2631, -0.28449672
        %v2760 = vadd.f32 %v2632, -0.28449672
        %v2761 = vadd.f32 %v2633, -0.28449672
        %v2762 = vadd.f32 %v2634, -0.28449672
        %v2763 = vadd.f32 %v2635, -0.28449672
        %v2764 = vadd.f32 %v2636, -0.28449672
        %v2765 = vadd.f32 %v2637, -0.28449672
        %v2766 = vadd.f32 %v2638, -0.28449672
        %v2767 = vadd.f32 %v2639, -0.28449672
        %v2768 = vadd.f32 %v2640, -0.28449672
        %v2769 = vadd.f32 %v2641, -0.28449672
        %v2770 = vadd.f32 %v2642, -0.28449672
        %v2771 = vadd.f32 %v2643, -0.28449672
        %v2772 = vadd.f32 %v2644, -0.28449672
        %v2773 = vadd.f32 %v2645, -0.28449672
        %v2774 = vadd.f32 %v2646, -0.28449672
        %v2775 = vadd.f32 %v2647, -0.28449672
        %v2776 = vadd.f32 %v2648, -0.28449672
        %v2777 = vadd.f32 %v2649, -0.28449672
        %v2778 = vadd.f32 %v2650, -0.28449672
        %v2779 = vadd.f32 %v2651, -0.28449672
        %v2780 = vadd.f32 %v2652, -0.28449672
        %v2781 = vadd.f32 %v2653, -0.28449672
        %v2782 = vadd.f32 %v2654, -0.28449672
        %v2783 = vadd.f32 %v2655, -0.28449672
        %v2784 = vadd.f32 %v2656, -0.28449672
        %v2785 = vadd.f32 %v2657, -0.28449672
        %v2786 = vadd.f32 %v2658, -0.28449672
        %v2787 = vadd.f32 %v2659, -0.28449672
        %v2788 = vadd.f32 %v2660, -0.28449672
        %v2789 = vadd.f32 %v2661, -0.28449672
        %v2790 = vadd.f32 %v2662, -0.28449672
        %v2791 = vadd.f32 %v2663, -0.28449672
        %v2792 = vadd.f32 %v2664, -0.28449672
        %v2793 = vadd.f32 %v2665, -0.28449672
        %v2794 = vadd.f32 %v2666, -0.28449672
        %v2795 = vadd.f32 %v2667, -0.28449672
        %v2796 = vadd.f32 %v2668, -0.28449672
        %v2797 = vadd.f32 %v2669, -0.28449672
        %v2798 = vadd.f32 %v2670, -0.28449672
        %v2799 = vadd.f32 %v2671, -0.28449672
        %v2800 = vadd.f32 %v2672, -0.28449672
        %v2801 = vadd.f32 %v2673, -0.28449672
        %v2802 = vadd.f32 %v2674, -0.28449672
        %v2803 = vadd.f32 %v2675, -0.28449672
        %v2804 = vadd.f32 %v2676, -0.28449672
        %v2805 = vadd.f32 %v2677, -0.28449672
        %v2806 = vadd.f32 %v2678, -0.28449672
        %v2807 = vadd.f32 %v2679, -0.28449672
        %v2808 = vadd.f32 %v2680, -0.28449672
        %v2809 = vadd.f32 %v2681, -0.28449672
        %v2810 = vadd.f32 %v2682, -0.28449672
        %v2811 = vadd.f32 %v2683, -0.28449672
        %v2812 = vadd.f32 %v2684, -0.28449672
        %v2813 = vadd.f32 %v2685, -0.28449672
        %v2814 = vadd.f32 %v2686, -0.28449672
        %v2815 = vadd.f32 %v2687, -0.28449672
        %v2816 = vadd.f32 %v2688, -0.28449672
        %v2817 = vadd.f32 %v2689, -0.28449672
        %v2818 = vadd.f32 %v2690, -0.28449672
        %v2819 = vadd.f32 %v2691, -0.28449672
        %v2820 = vadd.f32 %v2692, -0.28449672
        %v2821 = vadd.f32 %v2693, -0.28449672
        %v2822 = vadd.f32 %v2694, -0.28449672
        %v2823 = vadd.f32 %v2695, -0.28449672
        %v2824 = vadd.f32 %v2696, -0.28449672
        %v2825 = vadd.f32 %v2697, -0.28449672
        %v2826 = vadd.f32 %v2698, -0.28449672
        %v2827 = vadd.f32 %v2699, -0.28449672
        %v2828 = vadd.f32 %v2700, -0.28449672
        %v2829 = vadd.f32 %v2701, -0.28449672
        %v2830 = vadd.f32 %v2702, -0.28449672
        %v2831 = vadd.f32 %v2703, -0.28449672
        %v2832 = vadd.f32 %v2704, -0.28449672
        %v2833 = vadd.f32 %v2705, -0.28449672
        %v2834 = vadd.f32 %v2706, -0.28449672
        %v2835 = vadd.f32 %v2707, -0.28449672
        %v2836 = vadd.f32 %v2708, -0.28449672
        %v2837 = vadd.f32 %v2709, -0.28449672
        %v2838 = vadd.f32 %v2710, -0.28449672
        %v2839 = vadd.f32 %v2711, -0.28449672
        %v2840 = vadd.f32 %v2712, -0.28449672
        %v2841 = vadd.f32 %v2713, -0.28449672
        %v2842 = vadd.f32 %v2714, -0.28449672
        %v2843 = vadd.f32 %v2715, -0.28449672
        %v2844 = vadd.f32 %v2716, -0.28449672
        %v2845 = vadd.f32 %v2717, -0.28449672
        %v2846 = vadd.f32 %v2718, -0.28449672
        %v2847 = vadd.f32 %v2719, -0.28449672
        %v2848 = vadd.f32 %v2720, -0.28449672
        %v2849 = vadd.f32 %v2721, -0.28449672
        %v2850 = vadd.f32 %v2722, -0.28449672
        %v2851 = vadd.f32 %v2723, -0.28449672
        %v2852 = vadd.f32 %v2724, -0.28449672
        %v2853 = vadd.f32 %v2725, -0.28449672
        %v2854 = vadd.f32 %v2726, -0.28449672
        %v2855 = vadd.f32 %v2727, -0.28449672
        %v2856 = vadd.f32 %v2728, -0.28449672
        %v2857 = vadd.f32 %v2729, -0.28449672
        %v2858 = vadd.f32 %v2730, -0.28449672
        %v2859 = vadd.f32 %v2731, -0.28449672
        %v2860 = vadd.f32 %v2732, -0.28449672
        %v2861 = vadd.f32 %v2733, -0.28449672
        %v2862 = vadd.f32 %v2734, -0.28449672
        %v2863 = vadd.f32 %v2735, -0.28449672
        %v2864 = vadd.f32 %v2736, -0.28449672
        %v2865 = vadd.f32 %v2737, -0.28449672
        %v2866 = vadd.f32 %v2738, -0.28449672
        %v2867 = vadd.f32 %v2739, -0.28449672
        %v2868 = vadd.f32 %v2740, -0.28449672
        %v2869 = vadd.f32 %v2741, -0.28449672
        %v2870 = vadd.f32 %v2742, -0.28449672
        %v2871 = vadd.f32 %v2743, -0.28449672
        %v2872 = vadd.f32 %v2744, -0.28449672
        %v2873 = vadd.f32 %v2745, -0.28449672
        %v2874 = vadd.f32 %v2746, -0.28449672
        %v2875 = vadd.f32 %v2747, -0.28449672
        %v2876 = vmul.f32 %v2748, %v1980
        %v2877 = vmul.f32 %v2749, %v1981
        %v2878 = vmul.f32 %v2750, %v1982
        %v2879 = vmul.f32 %v2751, %v1983
        %v2880 = vmul.f32 %v2752, %v1984
        %v2881 = vmul.f32 %v2753, %v1985
        %v2882 = vmul.f32 %v2754, %v1986
        %v2883 = vmul.f32 %v2755, %v1987
        %v2884 = vmul.f32 %v2756, %v1988
        %v2885 = vmul.f32 %v2757, %v1989
        %v2886 = vmul.f32 %v2758, %v1990
        %v2887 = vmul.f32 %v2759, %v1991
        %v2888 = vmul.f32 %v2760, %v1992
        %v2889 = vmul.f32 %v2761, %v1993
        %v2890 = vmul.f32 %v2762, %v1994
        %v2891 = vmul.f32 %v2763, %v1995
        %v2892 = vmul.f32 %v2764, %v1996
        %v2893 = vmul.f32 %v2765, %v1997
        %v2894 = vmul.f32 %v2766, %v1998
        %v2895 = vmul.f32 %v2767, %v1999
        %v2896 = vmul.f32 %v2768, %v2000
        %v2897 = vmul.f32 %v2769, %v2001
        %v2898 = vmul.f32 %v2770, %v2002
        %v2899 = vmul.f32 %v2771, %v2003
        %v2900 = vmul.f32 %v2772, %v2004
        %v2901 = vmul.f32 %v2773, %v2005
        %v2902 = vmul.f32 %v2774, %v2006
        %v2903 = vmul.f32 %v2775, %v2007
        %v2904 = vmul.f32 %v2776, %v2008
        %v2905 = vmul.f32 %v2777, %v2009
        %v2906 = vmul.f32 %v2778, %v2010
        %v2907 = vmul.f32 %v2779, %v2011
        %v2908 = vmul.f32 %v2780, %v2012
        %v2909 = vmul.f32 %v2781, %v2013
        %v2910 = vmul.f32 %v2782, %v2014
        %v2911 = vmul.f32 %v2783, %v2015
        %v2912 = vmul.f32 %v2784, %v2016
        %v2913 = vmul.f32 %v2785, %v2017
        %v2914 = vmul.f32 %v2786, %v2018
        %v2915 = vmul.f32 %v2787, %v2019
        %v2916 = vmul.f32 %v2788, %v2020
        %v2917 = vmul.f32 %v2789, %v2021
        %v2918 = vmul.f32 %v2790, %v2022
        %v2919 = vmul.f32 %v2791, %v2023
        %v2920 = vmul.f32 %v2792, %v2024
        %v2921 = vmul.f32 %v2793, %v2025
        %v2922 = vmul.f32 %v2794, %v2026
        %v2923 = vmul.f32 %v2795, %v2027
        %v2924 = vmul.f32 %v2796, %v2028
        %v2925 = vmul.f32 %v2797, %v2029
        %v2926 = vmul.f32 %v2798, %v2030
        %v2927 = vmul.f32 %v2799, %v2031
        %v2928 = vmul.f32 %v2800, %v2032
        %v2929 = vmul.f32 %v2801, %v2033
        %v2930 = vmul.f32 %v2802, %v2034
        %v2931 = vmul.f32 %v2803, %v2035
        %v2932 = vmul.f32 %v2804, %v2036
        %v2933 = vmul.f32 %v2805, %v2037
        %v2934 = vmul.f32 %v2806, %v2038
        %v2935 = vmul.f32 %v2807, %v2039
        %v2936 = vmul.f32 %v2808, %v2040
        %v2937 = vmul.f32 %v2809, %v2041
        %v2938 = vmul.f32 %v2810, %v2042
        %v2939 = vmul.f32 %v2811, %v2043
        %v2940 = vmul.f32 %v2812, %v2044
        %v2941 = vmul.f32 %v2813, %v2045
        %v2942 = vmul.f32 %v2814, %v2046
        %v2943 = vmul.f32 %v2815, %v2047
        %v2944 = vmul.f32 %v2816, %v2048
        %v2945 = vmul.f32 %v2817, %v2049
        %v2946 = vmul.f32 %v2818, %v2050
        %v2947 = vmul.f32 %v2819, %v2051
        %v2948 = vmul.f32 %v2820, %v2052
        %v2949 = vmul.f32 %v2821, %v2053
        %v2950 = vmul.f32 %v2822, %v2054
        %v2951 = vmul.f32 %v2823, %v2055
        %v2952 = vmul.f32 %v2824, %v2056
        %v2953 = vmul.f32 %v2825, %v2057
        %v2954 = vmul.f32 %v2826, %v2058
        %v2955 = vmul.f32 %v2827, %v2059
        %v2956 = vmul.f32 %v2828, %v2060
        %v2957 = vmul.f32 %v2829, %v2061
        %v2958 = vmul.f32 %v2830, %v2062
        %v2959 = vmul.f32 %v2831, %v2063
        %v2960 = vmul.f32 %v2832, %v2064
        %v2961 = vmul.f32 %v2833, %v2065
        %v2962 = vmul.f32 %v2834, %v2066
        %v2963 = vmul.f32 %v2835, %v2067
        %v2964 = vmul.f32 %v2836, %v2068
        %v2965 = vmul.f32 %v2837, %v2069
        %v2966 = vmul.f32 %v2838, %v2070
        %v2967 = vmul.f32 %v2839, %v2071
        %v2968 = vmul.f32 %v2840, %v2072
        %v2969 = vmul.f32 %v2841, %v2073
        %v2970 = vmul.f32 %v2842, %v2074
        %v2971 = vmul.f32 %v2843, %v2075
        %v2972 = vmul.f32 %v2844, %v2076
        %v2973 = vmul.f32 %v2845, %v2077
        %v2974 = vmul.f32 %v2846, %v2078
        %v2975 = vmul.f32 %v2847, %v2079
        %v2976 = vmul.f32 %v2848, %v2080
        %v2977 = vmul.f32 %v2849, %v2081
        %v2978 = vmul.f32 %v2850, %v2082
        %v2979 = vmul.f32 %v2851, %v2083
        %v2980 = vmul.f32 %v2852, %v2084
        %v2981 = vmul.f32 %v2853, %v2085
        %v2982 = vmul.f32 %v2854, %v2086
        %v2983 = vmul.f32 %v2855, %v2087
        %v2984 = vmul.f32 %v2856, %v2088
        %v2985 = vmul.f32 %v2857, %v2089
        %v2986 = vmul.f32 %v2858, %v2090
        %v2987 = vmul.f32 %v2859, %v2091
        %v2988 = vmul.f32 %v2860, %v2092
        %v2989 = vmul.f32 %v2861, %v2093
        %v2990 = vmul.f32 %v2862, %v2094
        %v2991 = vmul.f32 %v2863, %v2095
        %v2992 = vmul.f32 %v2864, %v2096
        %v2993 = vmul.f32 %v2865, %v2097
        %v2994 = vmul.f32 %v2866, %v2098
        %v2995 = vmul.f32 %v2867, %v2099
        %v2996 = vmul.f32 %v2868, %v2100
        %v2997 = vmul.f32 %v2869, %v2101
        %v2998 = vmul.f32 %v2870, %v2102
        %v2999 = vmul.f32 %v2871, %v2103
        %v3000 = vmul.f32 %v2872, %v2104
        %v3001 = vmul.f32 %v2873, %v2105
        %v3002 = vmul.f32 %v2874, %v2106
        %v3003 = vmul.f32 %v2875, %v2107
        %v3004 = vadd.f32 %v2876, 0.2548296
        %v3005 = vadd.f32 %v2877, 0.2548296
        %v3006 = vadd.f32 %v2878, 0.2548296
        %v3007 = vadd.f32 %v2879, 0.2548296
        %v3008 = vadd.f32 %v2880, 0.2548296
        %v3009 = vadd.f32 %v2881, 0.2548296
        %v3010 = vadd.f32 %v2882, 0.2548296
        %v3011 = vadd.f32 %v2883, 0.2548296
        %v3012 = vadd.f32 %v2884, 0.2548296
        %v3013 = vadd.f32 %v2885, 0.2548296
        %v3014 = vadd.f32 %v2886, 0.2548296
        %v3015 = vadd.f32 %v2887, 0.2548296
        %v3016 = vadd.f32 %v2888, 0.2548296
        %v3017 = vadd.f32 %v2889, 0.2548296
        %v3018 = vadd.f32 %v2890, 0.2548296
        %v3019 = vadd.f32 %v2891, 0.2548296
        %v3020 = vadd.f32 %v2892, 0.2548296
        %v3021 = vadd.f32 %v2893, 0.2548296
        %v3022 = vadd.f32 %v2894, 0.2548296
        %v3023 = vadd.f32 %v2895, 0.2548296
        %v3024 = vadd.f32 %v2896, 0.2548296
        %v3025 = vadd.f32 %v2897, 0.2548296
        %v3026 = vadd.f32 %v2898, 0.2548296
        %v3027 = vadd.f32 %v2899, 0.2548296
        %v3028 = vadd.f32 %v2900, 0.2548296
        %v3029 = vadd.f32 %v2901, 0.2548296
        %v3030 = vadd.f32 %v2902, 0.2548296
        %v3031 = vadd.f32 %v2903, 0.2548296
        %v3032 = vadd.f32 %v2904, 0.2548296
        %v3033 = vadd.f32 %v2905, 0.2548296
        %v3034 = vadd.f32 %v2906, 0.2548296
        %v3035 = vadd.f32 %v2907, 0.2548296
        %v3036 = vadd.f32 %v2908, 0.2548296
        %v3037 = vadd.f32 %v2909, 0.2548296
        %v3038 = vadd.f32 %v2910, 0.2548296
        %v3039 = vadd.f32 %v2911, 0.2548296
        %v3040 = vadd.f32 %v2912, 0.2548296
        %v3041 = vadd.f32 %v2913, 0.2548296
        %v3042 = vadd.f32 %v2914, 0.2548296
        %v3043 = vadd.f32 %v2915, 0.2548296
        %v3044 = vadd.f32 %v2916, 0.2548296
        %v3045 = vadd.f32 %v2917, 0.2548296
        %v3046 = vadd.f32 %v2918, 0.2548296
        %v3047 = vadd.f32 %v2919, 0.2548296
        %v3048 = vadd.f32 %v2920, 0.2548296
        %v3049 = vadd.f32 %v2921, 0.2548296
        %v3050 = vadd.f32 %v2922, 0.2548296
        %v3051 = vadd.f32 %v2923, 0.2548296
        %v3052 = vadd.f32 %v2924, 0.2548296
        %v3053 = vadd.f32 %v2925, 0.2548296
        %v3054 = vadd.f32 %v2926, 0.2548296
        %v3055 = vadd.f32 %v2927, 0.2548296
        %v3056 = vadd.f32 %v2928, 0.2548296
        %v3057 = vadd.f32 %v2929, 0.2548296
        %v3058 = vadd.f32 %v2930, 0.2548296
        %v3059 = vadd.f32 %v2931, 0.2548296
        %v3060 = vadd.f32 %v2932, 0.2548296
        %v3061 = vadd.f32 %v2933, 0.2548296
        %v3062 = vadd.f32 %v2934, 0.2548296
        %v3063 = vadd.f32 %v2935, 0.2548296
        %v3064 = vadd.f32 %v2936, 0.2548296
        %v3065 = vadd.f32 %v2937, 0.2548296
        %v3066 = vadd.f32 %v2938, 0.2548296
        %v3067 = vadd.f32 %v2939, 0.2548296
        %v3068 = vadd.f32 %v2940, 0.2548296
        %v3069 = vadd.f32 %v2941, 0.2548296
        %v3070 = vadd.f32 %v2942, 0.2548296
        %v3071 = vadd.f32 %v2943, 0.2548296
        %v3072 = vadd.f32 %v2944, 0.2548296
        %v3073 = vadd.f32 %v2945, 0.2548296
        %v3074 = vadd.f32 %v2946, 0.2548296
        %v3075 = vadd.f32 %v2947, 0.2548296
        %v3076 = vadd.f32 %v2948, 0.2548296
        %v3077 = vadd.f32 %v2949, 0.2548296
        %v3078 = vadd.f32 %v2950, 0.2548296
        %v3079 = vadd.f32 %v2951, 0.2548296
        %v3080 = vadd.f32 %v2952, 0.2548296
        %v3081 = vadd.f32 %v2953, 0.2548296
        %v3082 = vadd.f32 %v2954, 0.2548296
        %v3083 = vadd.f32 %v2955, 0.2548296
        %v3084 = vadd.f32 %v2956, 0.2548296
        %v3085 = vadd.f32 %v2957, 0.2548296
        %v3086 = vadd.f32 %v2958, 0.2548296
        %v3087 = vadd.f32 %v2959, 0.2548296
        %v3088 = vadd.f32 %v2960, 0.2548296
        %v3089 = vadd.f32 %v2961, 0.2548296
        %v3090 = vadd.f32 %v2962, 0.2548296
        %v3091 = vadd.f32 %v2963, 0.2548296
        %v3092 = vadd.f32 %v2964, 0.2548296
        %v3093 = vadd.f32 %v2965, 0.2548296
        %v3094 = vadd.f32 %v2966, 0.2548296
        %v3095 = vadd.f32 %v2967, 0.2548296
        %v3096 = vadd.f32 %v2968, 0.2548296
        %v3097 = vadd.f32 %v2969, 0.2548296
        %v3098 = vadd.f32 %v2970, 0.2548296
        %v3099 = vadd.f32 %v2971, 0.2548296
        %v3100 = vadd.f32 %v2972, 0.2548296
        %v3101 = vadd.f32 %v2973, 0.2548296
        %v3102 = vadd.f32 %v2974, 0.2548296
        %v3103 = vadd.f32 %v2975, 0.2548296
        %v3104 = vadd.f32 %v2976, 0.2548296
        %v3105 = vadd.f32 %v2977, 0.2548296
        %v3106 = vadd.f32 %v2978, 0.2548296
        %v3107 = vadd.f32 %v2979, 0.2548296
        %v3108 = vadd.f32 %v2980, 0.2548296
        %v3109 = vadd.f32 %v2981, 0.2548296
        %v3110 = vadd.f32 %v2982, 0.2548296
        %v3111 = vadd.f32 %v2983, 0.2548296
        %v3112 = vadd.f32 %v2984, 0.2548296
        %v3113 = vadd.f32 %v2985, 0.2548296
        %v3114 = vadd.f32 %v2986, 0.2548296
        %v3115 = vadd.f32 %v2987, 0.2548296
        %v3116 = vadd.f32 %v2988, 0.2548296
        %v3117 = vadd.f32 %v2989, 0.2548296
        %v3118 = vadd.f32 %v2990, 0.2548296
        %v3119 = vadd.f32 %v2991, 0.2548296
        %v3120 = vadd.f32 %v2992, 0.2548296
        %v3121 = vadd.f32 %v2993, 0.2548296
        %v3122 = vadd.f32 %v2994, 0.2548296
        %v3123 = vadd.f32 %v2995, 0.2548296
        %v3124 = vadd.f32 %v2996, 0.2548296
        %v3125 = vadd.f32 %v2997, 0.2548296
        %v3126 = vadd.f32 %v2998, 0.2548296
        %v3127 = vadd.f32 %v2999, 0.2548296
        %v3128 = vadd.f32 %v3000, 0.2548296
        %v3129 = vadd.f32 %v3001, 0.2548296
        %v3130 = vadd.f32 %v3002, 0.2548296
        %v3131 = vadd.f32 %v3003, 0.2548296
        %v3132 = vmul.f32 %v3004, %v1980
        %v3133 = vmul.f32 %v3005, %v1981
        %v3134 = vmul.f32 %v3006, %v1982
        %v3135 = vmul.f32 %v3007, %v1983
        %v3136 = vmul.f32 %v3008, %v1984
        %v3137 = vmul.f32 %v3009, %v1985
        %v3138 = vmul.f32 %v3010, %v1986
        %v3139 = vmul.f32 %v3011, %v1987
        %v3140 = vmul.f32 %v3012, %v1988
        %v3141 = vmul.f32 %v3013, %v1989
        %v3142 = vmul.f32 %v3014, %v1990
        %v3143 = vmul.f32 %v3015, %v1991
        %v3144 = vmul.f32 %v3016, %v1992
        %v3145 = vmul.f32 %v3017, %v1993
        %v3146 = vmul.f32 %v3018, %v1994
        %v3147 = vmul.f32 %v3019, %v1995
        %v3148 = vmul.f32 %v3020, %v1996
        %v3149 = vmul.f32 %v3021, %v1997
        %v3150 = vmul.f32 %v3022, %v1998
        %v3151 = vmul.f32 %v3023, %v1999
        %v3152 = vmul.f32 %v3024, %v2000
        %v3153 = vmul.f32 %v3025, %v2001
        %v3154 = vmul.f32 %v3026, %v2002
        %v3155 = vmul.f32 %v3027, %v2003
        %v3156 = vmul.f32 %v3028, %v2004
        %v3157 = vmul.f32 %v3029, %v2005
        %v3158 = vmul.f32 %v3030, %v2006
        %v3159 = vmul.f32 %v3031, %v2007
        %v3160 = vmul.f32 %v3032, %v2008
        %v3161 = vmul.f32 %v3033, %v2009
        %v3162 = vmul.f32 %v3034, %v2010
        %v3163 = vmul.f32 %v3035, %v2011
        %v3164 = vmul.f32 %v3036, %v2012
        %v3165 = vmul.f32 %v3037, %v2013
        %v3166 = vmul.f32 %v3038, %v2014
        %v3167 = vmul.f32 %v3039, %v2015
        %v3168 = vmul.f32 %v3040, %v2016
        %v3169 = vmul.f32 %v3041, %v2017
        %v3170 = vmul.f32 %v3042, %v2018
        %v3171 = vmul.f32 %v3043, %v2019
        %v3172 = vmul.f32 %v3044, %v2020
        %v3173 = vmul.f32 %v3045, %v2021
        %v3174 = vmul.f32 %v3046, %v2022
        %v3175 = vmul.f32 %v3047, %v2023
        %v3176 = vmul.f32 %v3048, %v2024
        %v3177 = vmul.f32 %v3049, %v2025
        %v3178 = vmul.f32 %v3050, %v2026
        %v3179 = vmul.f32 %v3051, %v2027
        %v3180 = vmul.f32 %v3052, %v2028
        %v3181 = vmul.f32 %v3053, %v2029
        %v3182 = vmul.f32 %v3054, %v2030
        %v3183 = vmul.f32 %v3055, %v2031
        %v3184 = vmul.f32 %v3056, %v2032
        %v3185 = vmul.f32 %v3057, %v2033
        %v3186 = vmul.f32 %v3058, %v2034
        %v3187 = vmul.f32 %v3059, %v2035
        %v3188 = vmul.f32 %v3060, %v2036
        %v3189 = vmul.f32 %v3061, %v2037
        %v3190 = vmul.f32 %v3062, %v2038
        %v3191 = vmul.f32 %v3063, %v2039
        %v3192 = vmul.f32 %v3064, %v2040
        %v3193 = vmul.f32 %v3065, %v2041
        %v3194 = vmul.f32 %v3066, %v2042
        %v3195 = vmul.f32 %v3067, %v2043
        %v3196 = vmul.f32 %v3068, %v2044
        %v3197 = vmul.f32 %v3069, %v2045
        %v3198 = vmul.f32 %v3070, %v2046
        %v3199 = vmul.f32 %v3071, %v2047
        %v3200 = vmul.f32 %v3072, %v2048
        %v3201 = vmul.f32 %v3073, %v2049
        %v3202 = vmul.f32 %v3074, %v2050
        %v3203 = vmul.f32 %v3075, %v2051
        %v3204 = vmul.f32 %v3076, %v2052
        %v3205 = vmul.f32 %v3077, %v2053
        %v3206 = vmul.f32 %v3078, %v2054
        %v3207 = vmul.f32 %v3079, %v2055
        %v3208 = vmul.f32 %v3080, %v2056
        %v3209 = vmul.f32 %v3081, %v2057
        %v3210 = vmul.f32 %v3082, %v2058
        %v3211 = vmul.f32 %v3083, %v2059
        %v3212 = vmul.f32 %v3084, %v2060
        %v3213 = vmul.f32 %v3085, %v2061
        %v3214 = vmul.f32 %v3086, %v2062
        %v3215 = vmul.f32 %v3087, %v2063
        %v3216 = vmul.f32 %v3088, %v2064
        %v3217 = vmul.f32 %v3089, %v2065
        %v3218 = vmul.f32 %v3090, %v2066
        %v3219 = vmul.f32 %v3091, %v2067
        %v3220 = vmul.f32 %v3092, %v2068
        %v3221 = vmul.f32 %v3093, %v2069
        %v3222 = vmul.f32 %v3094, %v2070
        %v3223 = vmul.f32 %v3095, %v2071
        %v3224 = vmul.f32 %v3096, %v2072
        %v3225 = vmul.f32 %v3097, %v2073
        %v3226 = vmul.f32 %v3098, %v2074
        %v3227 = vmul.f32 %v3099, %v2075
        %v3228 = vmul.f32 %v3100, %v2076
        %v3229 = vmul.f32 %v3101, %v2077
        %v3230 = vmul.f32 %v3102, %v2078
        %v3231 = vmul.f32 %v3103, %v2079
        %v3232 = vmul.f32 %v3104, %v2080
        %v3233 = vmul.f32 %v3105, %v2081
        %v3234 = vmul.f32 %v3106, %v2082
        %v3235 = vmul.f32 %v3107, %v2083
        %v3236 = vmul.f32 %v3108, %v2084
        %v3237 = vmul.f32 %v3109, %v2085
        %v3238 = vmul.f32 %v3110, %v2086
        %v3239 = vmul.f32 %v3111, %v2087
        %v3240 = vmul.f32 %v3112, %v2088
        %v3241 = vmul.f32 %v3113, %v2089
        %v3242 = vmul.f32 %v3114, %v2090
        %v3243 = vmul.f32 %v3115, %v2091
        %v3244 = vmul.f32 %v3116, %v2092
        %v3245 = vmul.f32 %v3117, %v2093
        %v3246 = vmul.f32 %v3118, %v2094
        %v3247 = vmul.f32 %v3119, %v2095
        %v3248 = vmul.f32 %v3120, %v2096
        %v3249 = vmul.f32 %v3121, %v2097
        %v3250 = vmul.f32 %v3122, %v2098
        %v3251 = vmul.f32 %v3123, %v2099
        %v3252 = vmul.f32 %v3124, %v2100
        %v3253 = vmul.f32 %v3125, %v2101
        %v3254 = vmul.f32 %v3126, %v2102
        %v3255 = vmul.f32 %v3127, %v2103
        %v3256 = vmul.f32 %v3128, %v2104
        %v3257 = vmul.f32 %v3129, %v2105
        %v3258 = vmul.f32 %v3130, %v2106
        %v3259 = vmul.f32 %v3131, %v2107
        %v3260 = vsub.f32 0.0, %v1596
        %v3261 = vsub.f32 0.0, %v1597
        %v3262 = vsub.f32 0.0, %v1598
        %v3263 = vsub.f32 0.0, %v1599
        %v3264 = vsub.f32 0.0, %v1600
        %v3265 = vsub.f32 0.0, %v1601
        %v3266 = vsub.f32 0.0, %v1602
        %v3267 = vsub.f32 0.0, %v1603
        %v3268 = vsub.f32 0.0, %v1604
        %v3269 = vsub.f32 0.0, %v1605
        %v3270 = vsub.f32 0.0, %v1606
        %v3271 = vsub.f32 0.0, %v1607
        %v3272 = vsub.f32 0.0, %v1608
        %v3273 = vsub.f32 0.0, %v1609
        %v3274 = vsub.f32 0.0, %v1610
        %v3275 = vsub.f32 0.0, %v1611
        %v3276 = vsub.f32 0.0, %v1612
        %v3277 = vsub.f32 0.0, %v1613
        %v3278 = vsub.f32 0.0, %v1614
        %v3279 = vsub.f32 0.0, %v1615
        %v3280 = vsub.f32 0.0, %v1616
        %v3281 = vsub.f32 0.0, %v1617
        %v3282 = vsub.f32 0.0, %v1618
        %v3283 = vsub.f32 0.0, %v1619
        %v3284 = vsub.f32 0.0, %v1620
        %v3285 = vsub.f32 0.0, %v1621
        %v3286 = vsub.f32 0.0, %v1622
        %v3287 = vsub.f32 0.0, %v1623
        %v3288 = vsub.f32 0.0, %v1624
        %v3289 = vsub.f32 0.0, %v1625
        %v3290 = vsub.f32 0.0, %v1626
        %v3291 = vsub.f32 0.0, %v1627
        %v3292 = vsub.f32 0.0, %v1628
        %v3293 = vsub.f32 0.0, %v1629
        %v3294 = vsub.f32 0.0, %v1630
        %v3295 = vsub.f32 0.0, %v1631
        %v3296 = vsub.f32 0.0, %v1632
        %v3297 = vsub.f32 0.0, %v1633
        %v3298 = vsub.f32 0.0, %v1634
        %v3299 = vsub.f32 0.0, %v1635
        %v3300 = vsub.f32 0.0, %v1636
        %v3301 = vsub.f32 0.0, %v1637
        %v3302 = vsub.f32 0.0, %v1638
        %v3303 = vsub.f32 0.0, %v1639
        %v3304 = vsub.f32 0.0, %v1640
        %v3305 = vsub.f32 0.0, %v1641
        %v3306 = vsub.f32 0.0, %v1642
        %v3307 = vsub.f32 0.0, %v1643
        %v3308 = vsub.f32 0.0, %v1644
        %v3309 = vsub.f32 0.0, %v1645
        %v3310 = vsub.f32 0.0, %v1646
        %v3311 = vsub.f32 0.0, %v1647
        %v3312 = vsub.f32 0.0, %v1648
        %v3313 = vsub.f32 0.0, %v1649
        %v3314 = vsub.f32 0.0, %v1650
        %v3315 = vsub.f32 0.0, %v1651
        %v3316 = vsub.f32 0.0, %v1652
        %v3317 = vsub.f32 0.0, %v1653
        %v3318 = vsub.f32 0.0, %v1654
        %v3319 = vsub.f32 0.0, %v1655
        %v3320 = vsub.f32 0.0, %v1656
        %v3321 = vsub.f32 0.0, %v1657
        %v3322 = vsub.f32 0.0, %v1658
        %v3323 = vsub.f32 0.0, %v1659
        %v3324 = vsub.f32 0.0, %v1660
        %v3325 = vsub.f32 0.0, %v1661
        %v3326 = vsub.f32 0.0, %v1662
        %v3327 = vsub.f32 0.0, %v1663
        %v3328 = vsub.f32 0.0, %v1664
        %v3329 = vsub.f32 0.0, %v1665
        %v3330 = vsub.f32 0.0, %v1666
        %v3331 = vsub.f32 0.0, %v1667
        %v3332 = vsub.f32 0.0, %v1668
        %v3333 = vsub.f32 0.0, %v1669
        %v3334 = vsub.f32 0.0, %v1670
        %v3335 = vsub.f32 0.0, %v1671
        %v3336 = vsub.f32 0.0, %v1672
        %v3337 = vsub.f32 0.0, %v1673
        %v3338 = vsub.f32 0.0, %v1674
        %v3339 = vsub.f32 0.0, %v1675
        %v3340 = vsub.f32 0.0, %v1676
        %v3341 = vsub.f32 0.0, %v1677
        %v3342 = vsub.f32 0.0, %v1678
        %v3343 = vsub.f32 0.0, %v1679
        %v3344 = vsub.f32 0.0, %v1680
        %v3345 = vsub.f32 0.0, %v1681
        %v3346 = vsub.f32 0.0, %v1682
        %v3347 = vsub.f32 0.0, %v1683
        %v3348 = vsub.f32 0.0, %v1684
        %v3349 = vsub.f32 0.0, %v1685
        %v3350 = vsub.f32 0.0, %v1686
        %v3351 = vsub.f32 0.0, %v1687
        %v3352 = vsub.f32 0.0, %v1688
        %v3353 = vsub.f32 0.0, %v1689
        %v3354 = vsub.f32 0.0, %v1690
        %v3355 = vsub.f32 0.0, %v1691
        %v3356 = vsub.f32 0.0, %v1692
        %v3357 = vsub.f32 0.0, %v1693
        %v3358 = vsub.f32 0.0, %v1694
        %v3359 = vsub.f32 0.0, %v1695
        %v3360 = vsub.f32 0.0, %v1696
        %v3361 = vsub.f32 0.0, %v1697
        %v3362 = vsub.f32 0.0, %v1698
        %v3363 = vsub.f32 0.0, %v1699
        %v3364 = vsub.f32 0.0, %v1700
        %v3365 = vsub.f32 0.0, %v1701
        %v3366 = vsub.f32 0.0, %v1702
        %v3367 = vsub.f32 0.0, %v1703
        %v3368 = vsub.f32 0.0, %v1704
        %v3369 = vsub.f32 0.0, %v1705
        %v3370 = vsub.f32 0.0, %v1706
        %v3371 = vsub.f32 0.0, %v1707
        %v3372 = vsub.f32 0.0, %v1708
        %v3373 = vsub.f32 0.0, %v1709
        %v3374 = vsub.f32 0.0, %v1710
        %v3375 = vsub.f32 0.0, %v1711
        %v3376 = vsub.f32 0.0, %v1712
        %v3377 = vsub.f32 0.0, %v1713
        %v3378 = vsub.f32 0.0, %v1714
        %v3379 = vsub.f32 0.0, %v1715
        %v3380 = vsub.f32 0.0, %v1716
        %v3381 = vsub.f32 0.0, %v1717
        %v3382 = vsub.f32 0.0, %v1718
        %v3383 = vsub.f32 0.0, %v1719
        %v3384 = vsub.f32 0.0, %v1720
        %v3385 = vsub.f32 0.0, %v1721
        %v3386 = vsub.f32 0.0, %v1722
        %v3387 = vsub.f32 0.0, %v1723
        %v3388 = vmul.f32 %v3260, %v1596
        %v3389 = vmul.f32 %v3261, %v1597
        %v3390 = vmul.f32 %v3262, %v1598
        %v3391 = vmul.f32 %v3263, %v1599
        %v3392 = vmul.f32 %v3264, %v1600
        %v3393 = vmul.f32 %v3265, %v1601
        %v3394 = vmul.f32 %v3266, %v1602
        %v3395 = vmul.f32 %v3267, %v1603
        %v3396 = vmul.f32 %v3268, %v1604
        %v3397 = vmul.f32 %v3269, %v1605
        %v3398 = vmul.f32 %v3270, %v1606
        %v3399 = vmul.f32 %v3271, %v1607
        %v3400 = vmul.f32 %v3272, %v1608
        %v3401 = vmul.f32 %v3273, %v1609
        %v3402 = vmul.f32 %v3274, %v1610
        %v3403 = vmul.f32 %v3275, %v1611
        %v3404 = vmul.f32 %v3276, %v1612
        %v3405 = vmul.f32 %v3277, %v1613
        %v3406 = vmul.f32 %v3278, %v1614
        %v3407 = vmul.f32 %v3279, %v1615
        %v3408 = vmul.f32 %v3280, %v1616
        %v3409 = vmul.f32 %v3281, %v1617
        %v3410 = vmul.f32 %v3282, %v1618
        %v3411 = vmul.f32 %v3283, %v1619
        %v3412 = vmul.f32 %v3284, %v1620
        %v3413 = vmul.f32 %v3285, %v1621
        %v3414 = vmul.f32 %v3286, %v1622
        %v3415 = vmul.f32 %v3287, %v1623
        %v3416 = vmul.f32 %v3288, %v1624
        %v3417 = vmul.f32 %v3289, %v1625
        %v3418 = vmul.f32 %v3290, %v1626
        %v3419 = vmul.f32 %v3291, %v1627
        %v3420 = vmul.f32 %v3292, %v1628
        %v3421 = vmul.f32 %v3293, %v1629
        %v3422 = vmul.f32 %v3294, %v1630
        %v3423 = vmul.f32 %v3295, %v1631
        %v3424 = vmul.f32 %v3296, %v1632
        %v3425 = vmul.f32 %v3297, %v1633
        %v3426 = vmul.f32 %v3298, %v1634
        %v3427 = vmul.f32 %v3299, %v1635
        %v3428 = vmul.f32 %v3300, %v1636
        %v3429 = vmul.f32 %v3301, %v1637
        %v3430 = vmul.f32 %v3302, %v1638
        %v3431 = vmul.f32 %v3303, %v1639
        %v3432 = vmul.f32 %v3304, %v1640
        %v3433 = vmul.f32 %v3305, %v1641
        %v3434 = vmul.f32 %v3306, %v1642
        %v3435 = vmul.f32 %v3307, %v1643
        %v3436 = vmul.f32 %v3308, %v1644
        %v3437 = vmul.f32 %v3309, %v1645
        %v3438 = vmul.f32 %v3310, %v1646
        %v3439 = vmul.f32 %v3311, %v1647
        %v3440 = vmul.f32 %v3312, %v1648
        %v3441 = vmul.f32 %v3313, %v1649
        %v3442 = vmul.f32 %v3314, %v1650
        %v3443 = vmul.f32 %v3315, %v1651
        %v3444 = vmul.f32 %v3316, %v1652
        %v3445 = vmul.f32 %v3317, %v1653
        %v3446 = vmul.f32 %v3318, %v1654
        %v3447 = vmul.f32 %v3319, %v1655
        %v3448 = vmul.f32 %v3320, %v1656
        %v3449 = vmul.f32 %v3321, %v1657
        %v3450 = vmul.f32 %v3322, %v1658
        %v3451 = vmul.f32 %v3323, %v1659
        %v3452 = vmul.f32 %v3324, %v1660
        %v3453 = vmul.f32 %v3325, %v1661
        %v3454 = vmul.f32 %v3326, %v1662
        %v3455 = vmul.f32 %v3327, %v1663
        %v3456 = vmul.f32 %v3328, %v1664
        %v3457 = vmul.f32 %v3329, %v1665
        %v3458 = vmul.f32 %v3330, %v1666
        %v3459 = vmul.f32 %v3331, %v1667
        %v3460 = vmul.f32 %v3332, %v1668
        %v3461 = vmul.f32 %v3333, %v1669
        %v3462 = vmul.f32 %v3334, %v1670
        %v3463 = vmul.f32 %v3335, %v1671
        %v3464 = vmul.f32 %v3336, %v1672
        %v3465 = vmul.f32 %v3337, %v1673
        %v3466 = vmul.f32 %v3338, %v1674
        %v3467 = vmul.f32 %v3339, %v1675
        %v3468 = vmul.f32 %v3340, %v1676
        %v3469 = vmul.f32 %v3341, %v1677
        %v3470 = vmul.f32 %v3342, %v1678
        %v3471 = vmul.f32 %v3343, %v1679
        %v3472 = vmul.f32 %v3344, %v1680
        %v3473 = vmul.f32 %v3345, %v1681
        %v3474 = vmul.f32 %v3346, %v1682
        %v3475 = vmul.f32 %v3347, %v1683
        %v3476 = vmul.f32 %v3348, %v1684
        %v3477 = vmul.f32 %v3349, %v1685
        %v3478 = vmul.f32 %v3350, %v1686
        %v3479 = vmul.f32 %v3351, %v1687
        %v3480 = vmul.f32 %v3352, %v1688
        %v3481 = vmul.f32 %v3353, %v1689
        %v3482 = vmul.f32 %v3354, %v1690
        %v3483 = vmul.f32 %v3355, %v1691
        %v3484 = vmul.f32 %v3356, %v1692
        %v3485 = vmul.f32 %v3357, %v1693
        %v3486 = vmul.f32 %v3358, %v1694
        %v3487 = vmul.f32 %v3359, %v1695
        %v3488 = vmul.f32 %v3360, %v1696
        %v3489 = vmul.f32 %v3361, %v1697
        %v3490 = vmul.f32 %v3362, %v1698
        %v3491 = vmul.f32 %v3363, %v1699
        %v3492 = vmul.f32 %v3364, %v1700
        %v3493 = vmul.f32 %v3365, %v1701
        %v3494 = vmul.f32 %v3366, %v1702
        %v3495 = vmul.f32 %v3367, %v1703
        %v3496 = vmul.f32 %v3368, %v1704
        %v3497 = vmul.f32 %v3369, %v1705
        %v3498 = vmul.f32 %v3370, %v1706
        %v3499 = vmul.f32 %v3371, %v1707
        %v3500 = vmul.f32 %v3372, %v1708
        %v3501 = vmul.f32 %v3373, %v1709
        %v3502 = vmul.f32 %v3374, %v1710
        %v3503 = vmul.f32 %v3375, %v1711
        %v3504 = vmul.f32 %v3376, %v1712
        %v3505 = vmul.f32 %v3377, %v1713
        %v3506 = vmul.f32 %v3378, %v1714
        %v3507 = vmul.f32 %v3379, %v1715
        %v3508 = vmul.f32 %v3380, %v1716
        %v3509 = vmul.f32 %v3381, %v1717
        %v3510 = vmul.f32 %v3382, %v1718
        %v3511 = vmul.f32 %v3383, %v1719
        %v3512 = vmul.f32 %v3384, %v1720
        %v3513 = vmul.f32 %v3385, %v1721
        %v3514 = vmul.f32 %v3386, %v1722
        %v3515 = vmul.f32 %v3387, %v1723
        %v3516 = vmul.f32 %v3388, 1.442695
        %v3517 = vpow.pop %v3516
        %v3518 = vmul.f32 %v3389, 1.442695
        %v3519 = vpow.pop %v3518
        %v3520 = vmul.f32 %v3390, 1.442695
        %v3521 = vpow.pop %v3520
        %v3522 = vmul.f32 %v3391, 1.442695
        %v3523 = vpow.pop %v3522
        %v3524 = vmul.f32 %v3392, 1.442695
        %v3525 = vpow.pop %v3524
        %v3526 = vmul.f32 %v3393, 1.442695
        %v3527 = vpow.pop %v3526
        %v3528 = vmul.f32 %v3394, 1.442695
        %v3529 = vpow.pop %v3528
        %v3530 = vmul.f32 %v3395, 1.442695
        %v3531 = vpow.pop %v3530
        %v3532 = vmul.f32 %v3396, 1.442695
        %v3533 = vpow.pop %v3532
        %v3534 = vmul.f32 %v3397, 1.442695
        %v3535 = vpow.pop %v3534
        %v3536 = vmul.f32 %v3398, 1.442695
        %v3537 = vpow.pop %v3536
        %v3538 = vmul.f32 %v3399, 1.442695
        %v3539 = vpow.pop %v3538
        %v3540 = vmul.f32 %v3400, 1.442695
        %v3541 = vpow.pop %v3540
        %v3542 = vmul.f32 %v3401, 1.442695
        %v3543 = vpow.pop %v3542
        %v3544 = vmul.f32 %v3402, 1.442695
        %v3545 = vpow.pop %v3544
        %v3546 = vmul.f32 %v3403, 1.442695
        %v3547 = vpow.pop %v3546
        %v3548 = vmul.f32 %v3404, 1.442695
        %v3549 = vpow.pop %v3548
        %v3550 = vmul.f32 %v3405, 1.442695
        %v3551 = vpow.pop %v3550
        %v3552 = vmul.f32 %v3406, 1.442695
        %v3553 = vpow.pop %v3552
        %v3554 = vmul.f32 %v3407, 1.442695
        %v3555 = vpow.pop %v3554
        %v3556 = vmul.f32 %v3408, 1.442695
        %v3557 = vpow.pop %v3556
        %v3558 = vmul.f32 %v3409, 1.442695
        %v3559 = vpow.pop %v3558
        %v3560 = vmul.f32 %v3410, 1.442695
        %v3561 = vpow.pop %v3560
        %v3562 = vmul.f32 %v3411, 1.442695
        %v3563 = vpow.pop %v3562
        %v3564 = vmul.f32 %v3412, 1.442695
        %v3565 = vpow.pop %v3564
        %v3566 = vmul.f32 %v3413, 1.442695
        %v3567 = vpow.pop %v3566
        %v3568 = vmul.f32 %v3414, 1.442695
        %v3569 = vpow.pop %v3568
        %v3570 = vmul.f32 %v3415, 1.442695
        %v3571 = vpow.pop %v3570
        %v3572 = vmul.f32 %v3416, 1.442695
        %v3573 = vpow.pop %v3572
        %v3574 = vmul.f32 %v3417, 1.442695
        %v3575 = vpow.pop %v3574
        %v3576 = vmul.f32 %v3418, 1.442695
        %v3577 = vpow.pop %v3576
        %v3578 = vmul.f32 %v3419, 1.442695
        %v3579 = vpow.pop %v3578
        %v3580 = vmul.f32 %v3420, 1.442695
        %v3581 = vpow.pop %v3580
        %v3582 = vmul.f32 %v3421, 1.442695
        %v3583 = vpow.pop %v3582
        %v3584 = vmul.f32 %v3422, 1.442695
        %v3585 = vpow.pop %v3584
        %v3586 = vmul.f32 %v3423, 1.442695
        %v3587 = vpow.pop %v3586
        %v3588 = vmul.f32 %v3424, 1.442695
        %v3589 = vpow.pop %v3588
        %v3590 = vmul.f32 %v3425, 1.442695
        %v3591 = vpow.pop %v3590
        %v3592 = vmul.f32 %v3426, 1.442695
        %v3593 = vpow.pop %v3592
        %v3594 = vmul.f32 %v3427, 1.442695
        %v3595 = vpow.pop %v3594
        %v3596 = vmul.f32 %v3428, 1.442695
        %v3597 = vpow.pop %v3596
        %v3598 = vmul.f32 %v3429, 1.442695
        %v3599 = vpow.pop %v3598
        %v3600 = vmul.f32 %v3430, 1.442695
        %v3601 = vpow.pop %v3600
        %v3602 = vmul.f32 %v3431, 1.442695
        %v3603 = vpow.pop %v3602
        %v3604 = vmul.f32 %v3432, 1.442695
        %v3605 = vpow.pop %v3604
        %v3606 = vmul.f32 %v3433, 1.442695
        %v3607 = vpow.pop %v3606
        %v3608 = vmul.f32 %v3434, 1.442695
        %v3609 = vpow.pop %v3608
        %v3610 = vmul.f32 %v3435, 1.442695
        %v3611 = vpow.pop %v3610
        %v3612 = vmul.f32 %v3436, 1.442695
        %v3613 = vpow.pop %v3612
        %v3614 = vmul.f32 %v3437, 1.442695
        %v3615 = vpow.pop %v3614
        %v3616 = vmul.f32 %v3438, 1.442695
        %v3617 = vpow.pop %v3616
        %v3618 = vmul.f32 %v3439, 1.442695
        %v3619 = vpow.pop %v3618
        %v3620 = vmul.f32 %v3440, 1.442695
        %v3621 = vpow.pop %v3620
        %v3622 = vmul.f32 %v3441, 1.442695
        %v3623 = vpow.pop %v3622
        %v3624 = vmul.f32 %v3442, 1.442695
        %v3625 = vpow.pop %v3624
        %v3626 = vmul.f32 %v3443, 1.442695
        %v3627 = vpow.pop %v3626
        %v3628 = vmul.f32 %v3444, 1.442695
        %v3629 = vpow.pop %v3628
        %v3630 = vmul.f32 %v3445, 1.442695
        %v3631 = vpow.pop %v3630
        %v3632 = vmul.f32 %v3446, 1.442695
        %v3633 = vpow.pop %v3632
        %v3634 = vmul.f32 %v3447, 1.442695
        %v3635 = vpow.pop %v3634
        %v3636 = vmul.f32 %v3448, 1.442695
        %v3637 = vpow.pop %v3636
        %v3638 = vmul.f32 %v3449, 1.442695
        %v3639 = vpow.pop %v3638
        %v3640 = vmul.f32 %v3450, 1.442695
        %v3641 = vpow.pop %v3640
        %v3642 = vmul.f32 %v3451, 1.442695
        %v3643 = vpow.pop %v3642
        %v3644 = vmul.f32 %v3452, 1.442695
        %v3645 = vpow.pop %v3644
        %v3646 = vmul.f32 %v3453, 1.442695
        %v3647 = vpow.pop %v3646
        %v3648 = vmul.f32 %v3454, 1.442695
        %v3649 = vpow.pop %v3648
        %v3650 = vmul.f32 %v3455, 1.442695
        %v3651 = vpow.pop %v3650
        %v3652 = vmul.f32 %v3456, 1.442695
        %v3653 = vpow.pop %v3652
        %v3654 = vmul.f32 %v3457, 1.442695
        %v3655 = vpow.pop %v3654
        %v3656 = vmul.f32 %v3458, 1.442695
        %v3657 = vpow.pop %v3656
        %v3658 = vmul.f32 %v3459, 1.442695
        %v3659 = vpow.pop %v3658
        %v3660 = vmul.f32 %v3460, 1.442695
        %v3661 = vpow.pop %v3660
        %v3662 = vmul.f32 %v3461, 1.442695
        %v3663 = vpow.pop %v3662
        %v3664 = vmul.f32 %v3462, 1.442695
        %v3665 = vpow.pop %v3664
        %v3666 = vmul.f32 %v3463, 1.442695
        %v3667 = vpow.pop %v3666
        %v3668 = vmul.f32 %v3464, 1.442695
        %v3669 = vpow.pop %v3668
        %v3670 = vmul.f32 %v3465, 1.442695
        %v3671 = vpow.pop %v3670
        %v3672 = vmul.f32 %v3466, 1.442695
        %v3673 = vpow.pop %v3672
        %v3674 = vmul.f32 %v3467, 1.442695
        %v3675 = vpow.pop %v3674
        %v3676 = vmul.f32 %v3468, 1.442695
        %v3677 = vpow.pop %v3676
        %v3678 = vmul.f32 %v3469, 1.442695
        %v3679 = vpow.pop %v3678
        %v3680 = vmul.f32 %v3470, 1.442695
        %v3681 = vpow.pop %v3680
        %v3682 = vmul.f32 %v3471, 1.442695
        %v3683 = vpow.pop %v3682
        %v3684 = vmul.f32 %v3472, 1.442695
        %v3685 = vpow.pop %v3684
        %v3686 = vmul.f32 %v3473, 1.442695
        %v3687 = vpow.pop %v3686
        %v3688 = vmul.f32 %v3474, 1.442695
        %v3689 = vpow.pop %v3688
        %v3690 = vmul.f32 %v3475, 1.442695
        %v3691 = vpow.pop %v3690
        %v3692 = vmul.f32 %v3476, 1.442695
        %v3693 = vpow.pop %v3692
        %v3694 = vmul.f32 %v3477, 1.442695
        %v3695 = vpow.pop %v3694
        %v3696 = vmul.f32 %v3478, 1.442695
        %v3697 = vpow.pop %v3696
        %v3698 = vmul.f32 %v3479, 1.442695
        %v3699 = vpow.pop %v3698
        %v3700 = vmul.f32 %v3480, 1.442695
        %v3701 = vpow.pop %v3700
        %v3702 = vmul.f32 %v3481, 1.442695
        %v3703 = vpow.pop %v3702
        %v3704 = vmul.f32 %v3482, 1.442695
        %v3705 = vpow.pop %v3704
        %v3706 = vmul.f32 %v3483, 1.442695
        %v3707 = vpow.pop %v3706
        %v3708 = vmul.f32 %v3484, 1.442695
        %v3709 = vpow.pop %v3708
        %v3710 = vmul.f32 %v3485, 1.442695
        %v3711 = vpow.pop %v3710
        %v3712 = vmul.f32 %v3486, 1.442695
        %v3713 = vpow.pop %v3712
        %v3714 = vmul.f32 %v3487, 1.442695
        %v3715 = vpow.pop %v3714
        %v3716 = vmul.f32 %v3488, 1.442695
        %v3717 = vpow.pop %v3716
        %v3718 = vmul.f32 %v3489, 1.442695
        %v3719 = vpow.pop %v3718
        %v3720 = vmul.f32 %v3490, 1.442695
        %v3721 = vpow.pop %v3720
        %v3722 = vmul.f32 %v3491, 1.442695
        %v3723 = vpow.pop %v3722
        %v3724 = vmul.f32 %v3492, 1.442695
        %v3725 = vpow.pop %v3724
        %v3726 = vmul.f32 %v3493, 1.442695
        %v3727 = vpow.pop %v3726
        %v3728 = vmul.f32 %v3494, 1.442695
        %v3729 = vpow.pop %v3728
        %v3730 = vmul.f32 %v3495, 1.442695
        %v3731 = vpow.pop %v3730
        %v3732 = vmul.f32 %v3496, 1.442695
        %v3733 = vpow.pop %v3732
        %v3734 = vmul.f32 %v3497, 1.442695
        %v3735 = vpow.pop %v3734
        %v3736 = vmul.f32 %v3498, 1.442695
        %v3737 = vpow.pop %v3736
        %v3738 = vmul.f32 %v3499, 1.442695
        %v3739 = vpow.pop %v3738
        %v3740 = vmul.f32 %v3500, 1.442695
        %v3741 = vpow.pop %v3740
        %v3742 = vmul.f32 %v3501, 1.442695
        %v3743 = vpow.pop %v3742
        %v3744 = vmul.f32 %v3502, 1.442695
        %v3745 = vpow.pop %v3744
        %v3746 = vmul.f32 %v3503, 1.442695
        %v3747 = vpow.pop %v3746
        %v3748 = vmul.f32 %v3504, 1.442695
        %v3749 = vpow.pop %v3748
        %v3750 = vmul.f32 %v3505, 1.442695
        %v3751 = vpow.pop %v3750
        %v3752 = vmul.f32 %v3506, 1.442695
        %v3753 = vpow.pop %v3752
        %v3754 = vmul.f32 %v3507, 1.442695
        %v3755 = vpow.pop %v3754
        %v3756 = vmul.f32 %v3508, 1.442695
        %v3757 = vpow.pop %v3756
        %v3758 = vmul.f32 %v3509, 1.442695
        %v3759 = vpow.pop %v3758
        %v3760 = vmul.f32 %v3510, 1.442695
        %v3761 = vpow.pop %v3760
        %v3762 = vmul.f32 %v3511, 1.442695
        %v3763 = vpow.pop %v3762
        %v3764 = vmul.f32 %v3512, 1.442695
        %v3765 = vpow.pop %v3764
        %v3766 = vmul.f32 %v3513, 1.442695
        %v3767 = vpow.pop %v3766
        %v3768 = vmul.f32 %v3514, 1.442695
        %v3769 = vpow.pop %v3768
        %v3770 = vmul.f32 %v3515, 1.442695
        %v3771 = vpow.pop %v3770
        %v3772 = vmul.f32 %v3132, %v3517
        %v3773 = vmul.f32 %v3133, %v3519
        %v3774 = vmul.f32 %v3134, %v3521
        %v3775 = vmul.f32 %v3135, %v3523
        %v3776 = vmul.f32 %v3136, %v3525
        %v3777 = vmul.f32 %v3137, %v3527
        %v3778 = vmul.f32 %v3138, %v3529
        %v3779 = vmul.f32 %v3139, %v3531
        %v3780 = vmul.f32 %v3140, %v3533
        %v3781 = vmul.f32 %v3141, %v3535
        %v3782 = vmul.f32 %v3142, %v3537
        %v3783 = vmul.f32 %v3143, %v3539
        %v3784 = vmul.f32 %v3144, %v3541
        %v3785 = vmul.f32 %v3145, %v3543
        %v3786 = vmul.f32 %v3146, %v3545
        %v3787 = vmul.f32 %v3147, %v3547
        %v3788 = vmul.f32 %v3148, %v3549
        %v3789 = vmul.f32 %v3149, %v3551
        %v3790 = vmul.f32 %v3150, %v3553
        %v3791 = vmul.f32 %v3151, %v3555
        %v3792 = vmul.f32 %v3152, %v3557
        %v3793 = vmul.f32 %v3153, %v3559
        %v3794 = vmul.f32 %v3154, %v3561
        %v3795 = vmul.f32 %v3155, %v3563
        %v3796 = vmul.f32 %v3156, %v3565
        %v3797 = vmul.f32 %v3157, %v3567
        %v3798 = vmul.f32 %v3158, %v3569
        %v3799 = vmul.f32 %v3159, %v3571
        %v3800 = vmul.f32 %v3160, %v3573
        %v3801 = vmul.f32 %v3161, %v3575
        %v3802 = vmul.f32 %v3162, %v3577
        %v3803 = vmul.f32 %v3163, %v3579
        %v3804 = vmul.f32 %v3164, %v3581
        %v3805 = vmul.f32 %v3165, %v3583
        %v3806 = vmul.f32 %v3166, %v3585
        %v3807 = vmul.f32 %v3167, %v3587
        %v3808 = vmul.f32 %v3168, %v3589
        %v3809 = vmul.f32 %v3169, %v3591
        %v3810 = vmul.f32 %v3170, %v3593
        %v3811 = vmul.f32 %v3171, %v3595
        %v3812 = vmul.f32 %v3172, %v3597
        %v3813 = vmul.f32 %v3173, %v3599
        %v3814 = vmul.f32 %v3174, %v3601
        %v3815 = vmul.f32 %v3175, %v3603
        %v3816 = vmul.f32 %v3176, %v3605
        %v3817 = vmul.f32 %v3177, %v3607
        %v3818 = vmul.f32 %v3178, %v3609
        %v3819 = vmul.f32 %v3179, %v3611
        %v3820 = vmul.f32 %v3180, %v3613
        %v3821 = vmul.f32 %v3181, %v3615
        %v3822 = vmul.f32 %v3182, %v3617
        %v3823 = vmul.f32 %v3183, %v3619
        %v3824 = vmul.f32 %v3184, %v3621
        %v3825 = vmul.f32 %v3185, %v3623
        %v3826 = vmul.f32 %v3186, %v3625
        %v3827 = vmul.f32 %v3187, %v3627
        %v3828 = vmul.f32 %v3188, %v3629
        %v3829 = vmul.f32 %v3189, %v3631
        %v3830 = vmul.f32 %v3190, %v3633
        %v3831 = vmul.f32 %v3191, %v3635
        %v3832 = vmul.f32 %v3192, %v3637
        %v3833 = vmul.f32 %v3193, %v3639
        %v3834 = vmul.f32 %v3194, %v3641
        %v3835 = vmul.f32 %v3195, %v3643
        %v3836 = vmul.f32 %v3196, %v3645
        %v3837 = vmul.f32 %v3197, %v3647
        %v3838 = vmul.f32 %v3198, %v3649
        %v3839 = vmul.f32 %v3199, %v3651
        %v3840 = vmul.f32 %v3200, %v3653
        %v3841 = vmul.f32 %v3201, %v3655
        %v3842 = vmul.f32 %v3202, %v3657
        %v3843 = vmul.f32 %v3203, %v3659
        %v3844 = vmul.f32 %v3204, %v3661
        %v3845 = vmul.f32 %v3205, %v3663
        %v3846 = vmul.f32 %v3206, %v3665
        %v3847 = vmul.f32 %v3207, %v3667
        %v3848 = vmul.f32 %v3208, %v3669
        %v3849 = vmul.f32 %v3209, %v3671
        %v3850 = vmul.f32 %v3210, %v3673
        %v3851 = vmul.f32 %v3211, %v3675
        %v3852 = vmul.f32 %v3212, %v3677
        %v3853 = vmul.f32 %v3213, %v3679
        %v3854 = vmul.f32 %v3214, %v3681
        %v3855 = vmul.f32 %v3215, %v3683
        %v3856 = vmul.f32 %v3216, %v3685
        %v3857 = vmul.f32 %v3217, %v3687
        %v3858 = vmul.f32 %v3218, %v3689
        %v3859 = vmul.f32 %v3219, %v3691
        %v3860 = vmul.f32 %v3220, %v3693
        %v3861 = vmul.f32 %v3221, %v3695
        %v3862 = vmul.f32 %v3222, %v3697
        %v3863 = vmul.f32 %v3223, %v3699
        %v3864 = vmul.f32 %v3224, %v3701
        %v3865 = vmul.f32 %v3225, %v3703
        %v3866 = vmul.f32 %v3226, %v3705
        %v3867 = vmul.f32 %v3227, %v3707
        %v3868 = vmul.f32 %v3228, %v3709
        %v3869 = vmul.f32 %v3229, %v3711
        %v3870 = vmul.f32 %v3230, %v3713
        %v3871 = vmul.f32 %v3231, %v3715
        %v3872 = vmul.f32 %v3232, %v3717
        %v3873 = vmul.f32 %v3233, %v3719
        %v3874 = vmul.f32 %v3234, %v3721
        %v3875 = vmul.f32 %v3235, %v3723
        %v3876 = vmul.f32 %v3236, %v3725
        %v3877 = vmul.f32 %v3237, %v3727
        %v3878 = vmul.f32 %v3238, %v3729
        %v3879 = vmul.f32 %v3239, %v3731
        %v3880 = vmul.f32 %v3240, %v3733
        %v3881 = vmul.f32 %v3241, %v3735
        %v3882 = vmul.f32 %v3242, %v3737
        %v3883 = vmul.f32 %v3243, %v3739
        %v3884 = vmul.f32 %v3244, %v3741
        %v3885 = vmul.f32 %v3245, %v3743
        %v3886 = vmul.f32 %v3246, %v3745
        %v3887 = vmul.f32 %v3247, %v3747
        %v3888 = vmul.f32 %v3248, %v3749
        %v3889 = vmul.f32 %v3249, %v3751
        %v3890 = vmul.f32 %v3250, %v3753
        %v3891 = vmul.f32 %v3251, %v3755
        %v3892 = vmul.f32 %v3252, %v3757
        %v3893 = vmul.f32 %v3253, %v3759
        %v3894 = vmul.f32 %v3254, %v3761
        %v3895 = vmul.f32 %v3255, %v3763
        %v3896 = vmul.f32 %v3256, %v3765
        %v3897 = vmul.f32 %v3257, %v3767
        %v3898 = vmul.f32 %v3258, %v3769
        %v3899 = vmul.f32 %v3259, %v3771
        %v3900 = vsub.f32 1.0, %v3772
        %v3901 = vsub.f32 1.0, %v3773
        %v3902 = vsub.f32 1.0, %v3774
        %v3903 = vsub.f32 1.0, %v3775
        %v3904 = vsub.f32 1.0, %v3776
        %v3905 = vsub.f32 1.0, %v3777
        %v3906 = vsub.f32 1.0, %v3778
        %v3907 = vsub.f32 1.0, %v3779
        %v3908 = vsub.f32 1.0, %v3780
        %v3909 = vsub.f32 1.0, %v3781
        %v3910 = vsub.f32 1.0, %v3782
        %v3911 = vsub.f32 1.0, %v3783
        %v3912 = vsub.f32 1.0, %v3784
        %v3913 = vsub.f32 1.0, %v3785
        %v3914 = vsub.f32 1.0, %v3786
        %v3915 = vsub.f32 1.0, %v3787
        %v3916 = vsub.f32 1.0, %v3788
        %v3917 = vsub.f32 1.0, %v3789
        %v3918 = vsub.f32 1.0, %v3790
        %v3919 = vsub.f32 1.0, %v3791
        %v3920 = vsub.f32 1.0, %v3792
        %v3921 = vsub.f32 1.0, %v3793
        %v3922 = vsub.f32 1.0, %v3794
        %v3923 = vsub.f32 1.0, %v3795
        %v3924 = vsub.f32 1.0, %v3796
        %v3925 = vsub.f32 1.0, %v3797
        %v3926 = vsub.f32 1.0, %v3798
        %v3927 = vsub.f32 1.0, %v3799
        %v3928 = vsub.f32 1.0, %v3800
        %v3929 = vsub.f32 1.0, %v3801
        %v3930 = vsub.f32 1.0, %v3802
        %v3931 = vsub.f32 1.0, %v3803
        %v3932 = vsub.f32 1.0, %v3804
        %v3933 = vsub.f32 1.0, %v3805
        %v3934 = vsub.f32 1.0, %v3806
        %v3935 = vsub.f32 1.0, %v3807
        %v3936 = vsub.f32 1.0, %v3808
        %v3937 = vsub.f32 1.0, %v3809
        %v3938 = vsub.f32 1.0, %v3810
        %v3939 = vsub.f32 1.0, %v3811
        %v3940 = vsub.f32 1.0, %v3812
        %v3941 = vsub.f32 1.0, %v3813
        %v3942 = vsub.f32 1.0, %v3814
        %v3943 = vsub.f32 1.0, %v3815
        %v3944 = vsub.f32 1.0, %v3816
        %v3945 = vsub.f32 1.0, %v3817
        %v3946 = vsub.f32 1.0, %v3818
        %v3947 = vsub.f32 1.0, %v3819
        %v3948 = vsub.f32 1.0, %v3820
        %v3949 = vsub.f32 1.0, %v3821
        %v3950 = vsub.f32 1.0, %v3822
        %v3951 = vsub.f32 1.0, %v3823
        %v3952 = vsub.f32 1.0, %v3824
        %v3953 = vsub.f32 1.0, %v3825
        %v3954 = vsub.f32 1.0, %v3826
        %v3955 = vsub.f32 1.0, %v3827
        %v3956 = vsub.f32 1.0, %v3828
        %v3957 = vsub.f32 1.0, %v3829
        %v3958 = vsub.f32 1.0, %v3830
        %v3959 = vsub.f32 1.0, %v3831
        %v3960 = vsub.f32 1.0, %v3832
        %v3961 = vsub.f32 1.0, %v3833
        %v3962 = vsub.f32 1.0, %v3834
        %v3963 = vsub.f32 1.0, %v3835
        %v3964 = vsub.f32 1.0, %v3836
        %v3965 = vsub.f32 1.0, %v3837
        %v3966 = vsub.f32 1.0, %v3838
        %v3967 = vsub.f32 1.0, %v3839
        %v3968 = vsub.f32 1.0, %v3840
        %v3969 = vsub.f32 1.0, %v3841
        %v3970 = vsub.f32 1.0, %v3842
        %v3971 = vsub.f32 1.0, %v3843
        %v3972 = vsub.f32 1.0, %v3844
        %v3973 = vsub.f32 1.0, %v3845
        %v3974 = vsub.f32 1.0, %v3846
        %v3975 = vsub.f32 1.0, %v3847
        %v3976 = vsub.f32 1.0, %v3848
        %v3977 = vsub.f32 1.0, %v3849
        %v3978 = vsub.f32 1.0, %v3850
        %v3979 = vsub.f32 1.0, %v3851
        %v3980 = vsub.f32 1.0, %v3852
        %v3981 = vsub.f32 1.0, %v3853
        %v3982 = vsub.f32 1.0, %v3854
        %v3983 = vsub.f32 1.0, %v3855
        %v3984 = vsub.f32 1.0, %v3856
        %v3985 = vsub.f32 1.0, %v3857
        %v3986 = vsub.f32 1.0, %v3858
        %v3987 = vsub.f32 1.0, %v3859
        %v3988 = vsub.f32 1.0, %v3860
        %v3989 = vsub.f32 1.0, %v3861
        %v3990 = vsub.f32 1.0, %v3862
        %v3991 = vsub.f32 1.0, %v3863
        %v3992 = vsub.f32 1.0, %v3864
        %v3993 = vsub.f32 1.0, %v3865
        %v3994 = vsub.f32 1.0, %v3866
        %v3995 = vsub.f32 1.0, %v3867
        %v3996 = vsub.f32 1.0, %v3868
        %v3997 = vsub.f32 1.0, %v3869
        %v3998 = vsub.f32 1.0, %v3870
        %v3999 = vsub.f32 1.0, %v3871
        %v4000 = vsub.f32 1.0, %v3872
        %v4001 = vsub.f32 1.0, %v3873
        %v4002 = vsub.f32 1.0, %v3874
        %v4003 = vsub.f32 1.0, %v3875
        %v4004 = vsub.f32 1.0, %v3876
        %v4005 = vsub.f32 1.0, %v3877
        %v4006 = vsub.f32 1.0, %v3878
        %v4007 = vsub.f32 1.0, %v3879
        %v4008 = vsub.f32 1.0, %v3880
        %v4009 = vsub.f32 1.0, %v3881
        %v4010 = vsub.f32 1.0, %v3882
        %v4011 = vsub.f32 1.0, %v3883
        %v4012 = vsub.f32 1.0, %v3884
        %v4013 = vsub.f32 1.0, %v3885
        %v4014 = vsub.f32 1.0, %v3886
        %v4015 = vsub.f32 1.0, %v3887
        %v4016 = vsub.f32 1.0, %v3888
        %v4017 = vsub.f32 1.0, %v3889
        %v4018 = vsub.f32 1.0, %v3890
        %v4019 = vsub.f32 1.0, %v3891
        %v4020 = vsub.f32 1.0, %v3892
        %v4021 = vsub.f32 1.0, %v3893
        %v4022 = vsub.f32 1.0, %v3894
        %v4023 = vsub.f32 1.0, %v3895
        %v4024 = vsub.f32 1.0, %v3896
        %v4025 = vsub.f32 1.0, %v3897
        %v4026 = vsub.f32 1.0, %v3898
        %v4027 = vsub.f32 1.0, %v3899
        %v4028 = vmul.f32 %v1468, %v3900
        %v4029 = vmul.f32 %v1469, %v3901
        %v4030 = vmul.f32 %v1470, %v3902
        %v4031 = vmul.f32 %v1471, %v3903
        %v4032 = vmul.f32 %v1472, %v3904
        %v4033 = vmul.f32 %v1473, %v3905
        %v4034 = vmul.f32 %v1474, %v3906
        %v4035 = vmul.f32 %v1475, %v3907
        %v4036 = vmul.f32 %v1476, %v3908
        %v4037 = vmul.f32 %v1477, %v3909
        %v4038 = vmul.f32 %v1478, %v3910
        %v4039 = vmul.f32 %v1479, %v3911
        %v4040 = vmul.f32 %v1480, %v3912
        %v4041 = vmul.f32 %v1481, %v3913
        %v4042 = vmul.f32 %v1482, %v3914
        %v4043 = vmul.f32 %v1483, %v3915
        %v4044 = vmul.f32 %v1484, %v3916
        %v4045 = vmul.f32 %v1485, %v3917
        %v4046 = vmul.f32 %v1486, %v3918
        %v4047 = vmul.f32 %v1487, %v3919
        %v4048 = vmul.f32 %v1488, %v3920
        %v4049 = vmul.f32 %v1489, %v3921
        %v4050 = vmul.f32 %v1490, %v3922
        %v4051 = vmul.f32 %v1491, %v3923
        %v4052 = vmul.f32 %v1492, %v3924
        %v4053 = vmul.f32 %v1493, %v3925
        %v4054 = vmul.f32 %v1494, %v3926
        %v4055 = vmul.f32 %v1495, %v3927
        %v4056 = vmul.f32 %v1496, %v3928
        %v4057 = vmul.f32 %v1497, %v3929
        %v4058 = vmul.f32 %v1498, %v3930
        %v4059 = vmul.f32 %v1499, %v3931
        %v4060 = vmul.f32 %v1500, %v3932
        %v4061 = vmul.f32 %v1501, %v3933
        %v4062 = vmul.f32 %v1502, %v3934
        %v4063 = vmul.f32 %v1503, %v3935
        %v4064 = vmul.f32 %v1504, %v3936
        %v4065 = vmul.f32 %v1505, %v3937
        %v4066 = vmul.f32 %v1506, %v3938
        %v4067 = vmul.f32 %v1507, %v3939
        %v4068 = vmul.f32 %v1508, %v3940
        %v4069 = vmul.f32 %v1509, %v3941
        %v4070 = vmul.f32 %v1510, %v3942
        %v4071 = vmul.f32 %v1511, %v3943
        %v4072 = vmul.f32 %v1512, %v3944
        %v4073 = vmul.f32 %v1513, %v3945
        %v4074 = vmul.f32 %v1514, %v3946
        %v4075 = vmul.f32 %v1515, %v3947
        %v4076 = vmul.f32 %v1516, %v3948
        %v4077 = vmul.f32 %v1517, %v3949
        %v4078 = vmul.f32 %v1518, %v3950
        %v4079 = vmul.f32 %v1519, %v3951
        %v4080 = vmul.f32 %v1520, %v3952
        %v4081 = vmul.f32 %v1521, %v3953
        %v4082 = vmul.f32 %v1522, %v3954
        %v4083 = vmul.f32 %v1523, %v3955
        %v4084 = vmul.f32 %v1524, %v3956
        %v4085 = vmul.f32 %v1525, %v3957
        %v4086 = vmul.f32 %v1526, %v3958
        %v4087 = vmul.f32 %v1527, %v3959
        %v4088 = vmul.f32 %v1528, %v3960
        %v4089 = vmul.f32 %v1529, %v3961
        %v4090 = vmul.f32 %v1530, %v3962
        %v4091 = vmul.f32 %v1531, %v3963
        %v4092 = vmul.f32 %v1532, %v3964
        %v4093 = vmul.f32 %v1533, %v3965
        %v4094 = vmul.f32 %v1534, %v3966
        %v4095 = vmul.f32 %v1535, %v3967
        %v4096 = vmul.f32 %v1536, %v3968
        %v4097 = vmul.f32 %v1537, %v3969
        %v4098 = vmul.f32 %v1538, %v3970
        %v4099 = vmul.f32 %v1539, %v3971
        %v4100 = vmul.f32 %v1540, %v3972
        %v4101 = vmul.f32 %v1541, %v3973
        %v4102 = vmul.f32 %v1542, %v3974
        %v4103 = vmul.f32 %v1543, %v3975
        %v4104 = vmul.f32 %v1544, %v3976
        %v4105 = vmul.f32 %v1545, %v3977
        %v4106 = vmul.f32 %v1546, %v3978
        %v4107 = vmul.f32 %v1547, %v3979
        %v4108 = vmul.f32 %v1548, %v3980
        %v4109 = vmul.f32 %v1549, %v3981
        %v4110 = vmul.f32 %v1550, %v3982
        %v4111 = vmul.f32 %v1551, %v3983
        %v4112 = vmul.f32 %v1552, %v3984
        %v4113 = vmul.f32 %v1553, %v3985
        %v4114 = vmul.f32 %v1554, %v3986
        %v4115 = vmul.f32 %v1555, %v3987
        %v4116 = vmul.f32 %v1556, %v3988
        %v4117 = vmul.f32 %v1557, %v3989
        %v4118 = vmul.f32 %v1558, %v3990
        %v4119 = vmul.f32 %v1559, %v3991
        %v4120 = vmul.f32 %v1560, %v3992
        %v4121 = vmul.f32 %v1561, %v3993
        %v4122 = vmul.f32 %v1562, %v3994
        %v4123 = vmul.f32 %v1563, %v3995
        %v4124 = vmul.f32 %v1564, %v3996
        %v4125 = vmul.f32 %v1565, %v3997
        %v4126 = vmul.f32 %v1566, %v3998
        %v4127 = vmul.f32 %v1567, %v3999
        %v4128 = vmul.f32 %v1568, %v4000
        %v4129 = vmul.f32 %v1569, %v4001
        %v4130 = vmul.f32 %v1570, %v4002
        %v4131 = vmul.f32 %v1571, %v4003
        %v4132 = vmul.f32 %v1572, %v4004
        %v4133 = vmul.f32 %v1573, %v4005
        %v4134 = vmul.f32 %v1574, %v4006
        %v4135 = vmul.f32 %v1575, %v4007
        %v4136 = vmul.f32 %v1576, %v4008
        %v4137 = vmul.f32 %v1577, %v4009
        %v4138 = vmul.f32 %v1578, %v4010
        %v4139 = vmul.f32 %v1579, %v4011
        %v4140 = vmul.f32 %v1580, %v4012
        %v4141 = vmul.f32 %v1581, %v4013
        %v4142 = vmul.f32 %v1582, %v4014
        %v4143 = vmul.f32 %v1583, %v4015
        %v4144 = vmul.f32 %v1584, %v4016
        %v4145 = vmul.f32 %v1585, %v4017
        %v4146 = vmul.f32 %v1586, %v4018
        %v4147 = vmul.f32 %v1587, %v4019
        %v4148 = vmul.f32 %v1588, %v4020
        %v4149 = vmul.f32 %v1589, %v4021
        %v4150 = vmul.f32 %v1590, %v4022
        %v4151 = vmul.f32 %v1591, %v4023
        %v4152 = vmul.f32 %v1592, %v4024
        %v4153 = vmul.f32 %v1593, %v4025
        %v4154 = vmul.f32 %v1594, %v4026
        %v4155 = vmul.f32 %v1595, %v4027
        %v4156 = vadd.f32 %v4028, 1.0
        %v4157 = vadd.f32 %v4029, 1.0
        %v4158 = vadd.f32 %v4030, 1.0
        %v4159 = vadd.f32 %v4031, 1.0
        %v4160 = vadd.f32 %v4032, 1.0
        %v4161 = vadd.f32 %v4033, 1.0
        %v4162 = vadd.f32 %v4034, 1.0
        %v4163 = vadd.f32 %v4035, 1.0
        %v4164 = vadd.f32 %v4036, 1.0
        %v4165 = vadd.f32 %v4037, 1.0
        %v4166 = vadd.f32 %v4038, 1.0
        %v4167 = vadd.f32 %v4039, 1.0
        %v4168 = vadd.f32 %v4040, 1.0
        %v4169 = vadd.f32 %v4041, 1.0
        %v4170 = vadd.f32 %v4042, 1.0
        %v4171 = vadd.f32 %v4043, 1.0
        %v4172 = vadd.f32 %v4044, 1.0
        %v4173 = vadd.f32 %v4045, 1.0
        %v4174 = vadd.f32 %v4046, 1.0
        %v4175 = vadd.f32 %v4047, 1.0
        %v4176 = vadd.f32 %v4048, 1.0
        %v4177 = vadd.f32 %v4049, 1.0
        %v4178 = vadd.f32 %v4050, 1.0
        %v4179 = vadd.f32 %v4051, 1.0
        %v4180 = vadd.f32 %v4052, 1.0
        %v4181 = vadd.f32 %v4053, 1.0
        %v4182 = vadd.f32 %v4054, 1.0
        %v4183 = vadd.f32 %v4055, 1.0
        %v4184 = vadd.f32 %v4056, 1.0
        %v4185 = vadd.f32 %v4057, 1.0
        %v4186 = vadd.f32 %v4058, 1.0
        %v4187 = vadd.f32 %v4059, 1.0
        %v4188 = vadd.f32 %v4060, 1.0
        %v4189 = vadd.f32 %v4061, 1.0
        %v4190 = vadd.f32 %v4062, 1.0
        %v4191 = vadd.f32 %v4063, 1.0
        %v4192 = vadd.f32 %v4064, 1.0
        %v4193 = vadd.f32 %v4065, 1.0
        %v4194 = vadd.f32 %v4066, 1.0
        %v4195 = vadd.f32 %v4067, 1.0
        %v4196 = vadd.f32 %v4068, 1.0
        %v4197 = vadd.f32 %v4069, 1.0
        %v4198 = vadd.f32 %v4070, 1.0
        %v4199 = vadd.f32 %v4071, 1.0
        %v4200 = vadd.f32 %v4072, 1.0
        %v4201 = vadd.f32 %v4073, 1.0
        %v4202 = vadd.f32 %v4074, 1.0
        %v4203 = vadd.f32 %v4075, 1.0
        %v4204 = vadd.f32 %v4076, 1.0
        %v4205 = vadd.f32 %v4077, 1.0
        %v4206 = vadd.f32 %v4078, 1.0
        %v4207 = vadd.f32 %v4079, 1.0
        %v4208 = vadd.f32 %v4080, 1.0
        %v4209 = vadd.f32 %v4081, 1.0
        %v4210 = vadd.f32 %v4082, 1.0
        %v4211 = vadd.f32 %v4083, 1.0
        %v4212 = vadd.f32 %v4084, 1.0
        %v4213 = vadd.f32 %v4085, 1.0
        %v4214 = vadd.f32 %v4086, 1.0
        %v4215 = vadd.f32 %v4087, 1.0
        %v4216 = vadd.f32 %v4088, 1.0
        %v4217 = vadd.f32 %v4089, 1.0
        %v4218 = vadd.f32 %v4090, 1.0
        %v4219 = vadd.f32 %v4091, 1.0
        %v4220 = vadd.f32 %v4092, 1.0
        %v4221 = vadd.f32 %v4093, 1.0
        %v4222 = vadd.f32 %v4094, 1.0
        %v4223 = vadd.f32 %v4095, 1.0
        %v4224 = vadd.f32 %v4096, 1.0
        %v4225 = vadd.f32 %v4097, 1.0
        %v4226 = vadd.f32 %v4098, 1.0
        %v4227 = vadd.f32 %v4099, 1.0
        %v4228 = vadd.f32 %v4100, 1.0
        %v4229 = vadd.f32 %v4101, 1.0
        %v4230 = vadd.f32 %v4102, 1.0
        %v4231 = vadd.f32 %v4103, 1.0
        %v4232 = vadd.f32 %v4104, 1.0
        %v4233 = vadd.f32 %v4105, 1.0
        %v4234 = vadd.f32 %v4106, 1.0
        %v4235 = vadd.f32 %v4107, 1.0
        %v4236 = vadd.f32 %v4108, 1.0
        %v4237 = vadd.f32 %v4109, 1.0
        %v4238 = vadd.f32 %v4110, 1.0
        %v4239 = vadd.f32 %v4111, 1.0
        %v4240 = vadd.f32 %v4112, 1.0
        %v4241 = vadd.f32 %v4113, 1.0
        %v4242 = vadd.f32 %v4114, 1.0
        %v4243 = vadd.f32 %v4115, 1.0
        %v4244 = vadd.f32 %v4116, 1.0
        %v4245 = vadd.f32 %v4117, 1.0
        %v4246 = vadd.f32 %v4118, 1.0
        %v4247 = vadd.f32 %v4119, 1.0
        %v4248 = vadd.f32 %v4120, 1.0
        %v4249 = vadd.f32 %v4121, 1.0
        %v4250 = vadd.f32 %v4122, 1.0
        %v4251 = vadd.f32 %v4123, 1.0
        %v4252 = vadd.f32 %v4124, 1.0
        %v4253 = vadd.f32 %v4125, 1.0
        %v4254 = vadd.f32 %v4126, 1.0
        %v4255 = vadd.f32 %v4127, 1.0
        %v4256 = vadd.f32 %v4128, 1.0
        %v4257 = vadd.f32 %v4129, 1.0
        %v4258 = vadd.f32 %v4130, 1.0
        %v4259 = vadd.f32 %v4131, 1.0
        %v4260 = vadd.f32 %v4132, 1.0
        %v4261 = vadd.f32 %v4133, 1.0
        %v4262 = vadd.f32 %v4134, 1.0
        %v4263 = vadd.f32 %v4135, 1.0
        %v4264 = vadd.f32 %v4136, 1.0
        %v4265 = vadd.f32 %v4137, 1.0
        %v4266 = vadd.f32 %v4138, 1.0
        %v4267 = vadd.f32 %v4139, 1.0
        %v4268 = vadd.f32 %v4140, 1.0
        %v4269 = vadd.f32 %v4141, 1.0
        %v4270 = vadd.f32 %v4142, 1.0
        %v4271 = vadd.f32 %v4143, 1.0
        %v4272 = vadd.f32 %v4144, 1.0
        %v4273 = vadd.f32 %v4145, 1.0
        %v4274 = vadd.f32 %v4146, 1.0
        %v4275 = vadd.f32 %v4147, 1.0
        %v4276 = vadd.f32 %v4148, 1.0
        %v4277 = vadd.f32 %v4149, 1.0
        %v4278 = vadd.f32 %v4150, 1.0
        %v4279 = vadd.f32 %v4151, 1.0
        %v4280 = vadd.f32 %v4152, 1.0
        %v4281 = vadd.f32 %v4153, 1.0
        %v4282 = vadd.f32 %v4154, 1.0
        %v4283 = vadd.f32 %v4155, 1.0
        %v4284 = vmul.f32 %v1084, %v4156
        %v4285 = vmul.f32 %v1085, %v4157
        %v4286 = vmul.f32 %v1086, %v4158
        %v4287 = vmul.f32 %v1087, %v4159
        %v4288 = vmul.f32 %v1088, %v4160
        %v4289 = vmul.f32 %v1089, %v4161
        %v4290 = vmul.f32 %v1090, %v4162
        %v4291 = vmul.f32 %v1091, %v4163
        %v4292 = vmul.f32 %v1092, %v4164
        %v4293 = vmul.f32 %v1093, %v4165
        %v4294 = vmul.f32 %v1094, %v4166
        %v4295 = vmul.f32 %v1095, %v4167
        %v4296 = vmul.f32 %v1096, %v4168
        %v4297 = vmul.f32 %v1097, %v4169
        %v4298 = vmul.f32 %v1098, %v4170
        %v4299 = vmul.f32 %v1099, %v4171
        %v4300 = vmul.f32 %v1100, %v4172
        %v4301 = vmul.f32 %v1101, %v4173
        %v4302 = vmul.f32 %v1102, %v4174
        %v4303 = vmul.f32 %v1103, %v4175
        %v4304 = vmul.f32 %v1104, %v4176
        %v4305 = vmul.f32 %v1105, %v4177
        %v4306 = vmul.f32 %v1106, %v4178
        %v4307 = vmul.f32 %v1107, %v4179
        %v4308 = vmul.f32 %v1108, %v4180
        %v4309 = vmul.f32 %v1109, %v4181
        %v4310 = vmul.f32 %v1110, %v4182
        %v4311 = vmul.f32 %v1111, %v4183
        %v4312 = vmul.f32 %v1112, %v4184
        %v4313 = vmul.f32 %v1113, %v4185
        %v4314 = vmul.f32 %v1114, %v4186
        %v4315 = vmul.f32 %v1115, %v4187
        %v4316 = vmul.f32 %v1116, %v4188
        %v4317 = vmul.f32 %v1117, %v4189
        %v4318 = vmul.f32 %v1118, %v4190
        %v4319 = vmul.f32 %v1119, %v4191
        %v4320 = vmul.f32 %v1120, %v4192
        %v4321 = vmul.f32 %v1121, %v4193
        %v4322 = vmul.f32 %v1122, %v4194
        %v4323 = vmul.f32 %v1123, %v4195
        %v4324 = vmul.f32 %v1124, %v4196
        %v4325 = vmul.f32 %v1125, %v4197
        %v4326 = vmul.f32 %v1126, %v4198
        %v4327 = vmul.f32 %v1127, %v4199
        %v4328 = vmul.f32 %v1128, %v4200
        %v4329 = vmul.f32 %v1129, %v4201
        %v4330 = vmul.f32 %v1130, %v4202
        %v4331 = vmul.f32 %v1131, %v4203
        %v4332 = vmul.f32 %v1132, %v4204
        %v4333 = vmul.f32 %v1133, %v4205
        %v4334 = vmul.f32 %v1134, %v4206
        %v4335 = vmul.f32 %v1135, %v4207
        %v4336 = vmul.f32 %v1136, %v4208
        %v4337 = vmul.f32 %v1137, %v4209
        %v4338 = vmul.f32 %v1138, %v4210
        %v4339 = vmul.f32 %v1139, %v4211
        %v4340 = vmul.f32 %v1140, %v4212
        %v4341 = vmul.f32 %v1141, %v4213
        %v4342 = vmul.f32 %v1142, %v4214
        %v4343 = vmul.f32 %v1143, %v4215
        %v4344 = vmul.f32 %v1144, %v4216
        %v4345 = vmul.f32 %v1145, %v4217
        %v4346 = vmul.f32 %v1146, %v4218
        %v4347 = vmul.f32 %v1147, %v4219
        %v4348 = vmul.f32 %v1148, %v4220
        %v4349 = vmul.f32 %v1149, %v4221
        %v4350 = vmul.f32 %v1150, %v4222
        %v4351 = vmul.f32 %v1151, %v4223
        %v4352 = vmul.f32 %v1152, %v4224
        %v4353 = vmul.f32 %v1153, %v4225
        %v4354 = vmul.f32 %v1154, %v4226
        %v4355 = vmul.f32 %v1155, %v4227
        %v4356 = vmul.f32 %v1156, %v4228
        %v4357 = vmul.f32 %v1157, %v4229
        %v4358 = vmul.f32 %v1158, %v4230
        %v4359 = vmul.f32 %v1159, %v4231
        %v4360 = vmul.f32 %v1160, %v4232
        %v4361 = vmul.f32 %v1161, %v4233
        %v4362 = vmul.f32 %v1162, %v4234
        %v4363 = vmul.f32 %v1163, %v4235
        %v4364 = vmul.f32 %v1164, %v4236
        %v4365 = vmul.f32 %v1165, %v4237
        %v4366 = vmul.f32 %v1166, %v4238
        %v4367 = vmul.f32 %v1167, %v4239
        %v4368 = vmul.f32 %v1168, %v4240
        %v4369 = vmul.f32 %v1169, %v4241
        %v4370 = vmul.f32 %v1170, %v4242
        %v4371 = vmul.f32 %v1171, %v4243
        %v4372 = vmul.f32 %v1172, %v4244
        %v4373 = vmul.f32 %v1173, %v4245
        %v4374 = vmul.f32 %v1174, %v4246
        %v4375 = vmul.f32 %v1175, %v4247
        %v4376 = vmul.f32 %v1176, %v4248
        %v4377 = vmul.f32 %v1177, %v4249
        %v4378 = vmul.f32 %v1178, %v4250
        %v4379 = vmul.f32 %v1179, %v4251
        %v4380 = vmul.f32 %v1180, %v4252
        %v4381 = vmul.f32 %v1181, %v4253
        %v4382 = vmul.f32 %v1182, %v4254
        %v4383 = vmul.f32 %v1183, %v4255
        %v4384 = vmul.f32 %v1184, %v4256
        %v4385 = vmul.f32 %v1185, %v4257
        %v4386 = vmul.f32 %v1186, %v4258
        %v4387 = vmul.f32 %v1187, %v4259
        %v4388 = vmul.f32 %v1188, %v4260
        %v4389 = vmul.f32 %v1189, %v4261
        %v4390 = vmul.f32 %v1190, %v4262
        %v4391 = vmul.f32 %v1191, %v4263
        %v4392 = vmul.f32 %v1192, %v4264
        %v4393 = vmul.f32 %v1193, %v4265
        %v4394 = vmul.f32 %v1194, %v4266
        %v4395 = vmul.f32 %v1195, %v4267
        %v4396 = vmul.f32 %v1196, %v4268
        %v4397 = vmul.f32 %v1197, %v4269
        %v4398 = vmul.f32 %v1198, %v4270
        %v4399 = vmul.f32 %v1199, %v4271
        %v4400 = vmul.f32 %v1200, %v4272
        %v4401 = vmul.f32 %v1201, %v4273
        %v4402 = vmul.f32 %v1202, %v4274
        %v4403 = vmul.f32 %v1203, %v4275
        %v4404 = vmul.f32 %v1204, %v4276
        %v4405 = vmul.f32 %v1205, %v4277
        %v4406 = vmul.f32 %v1206, %v4278
        %v4407 = vmul.f32 %v1207, %v4279
        %v4408 = vmul.f32 %v1208, %v4280
        %v4409 = vmul.f32 %v1209, %v4281
        %v4410 = vmul.f32 %v1210, %v4282
        %v4411 = vmul.f32 %v1211, %v4283
        %v4412 = vpack.c.bf16 %v4286, %v4284
        %v4413 = vpack.c.bf16 %v4287, %v4285
        %v4414 = vpack.c.bf16 %v4290, %v4288
        %v4415 = vpack.c.bf16 %v4291, %v4289
        %v4416 = vpack.c.bf16 %v4294, %v4292
        %v4417 = vpack.c.bf16 %v4295, %v4293
        %v4418 = vpack.c.bf16 %v4298, %v4296
        %v4419 = vpack.c.bf16 %v4299, %v4297
        %v4420 = vpack.c.bf16 %v4302, %v4300
        %v4421 = vpack.c.bf16 %v4303, %v4301
        %v4422 = vpack.c.bf16 %v4306, %v4304
        %v4423 = vpack.c.bf16 %v4307, %v4305
        %v4424 = vpack.c.bf16 %v4310, %v4308
        %v4425 = vpack.c.bf16 %v4311, %v4309
        %v4426 = vpack.c.bf16 %v4314, %v4312
        %v4427 = vpack.c.bf16 %v4315, %v4313
        %v4428 = vpack.c.bf16 %v4318, %v4316
        %v4429 = vpack.c.bf16 %v4319, %v4317
        %v4430 = vpack.c.bf16 %v4322, %v4320
        %v4431 = vpack.c.bf16 %v4323, %v4321
        %v4432 = vpack.c.bf16 %v4326, %v4324
        %v4433 = vpack.c.bf16 %v4327, %v4325
        %v4434 = vpack.c.bf16 %v4330, %v4328
        %v4435 = vpack.c.bf16 %v4331, %v4329
        %v4436 = vpack.c.bf16 %v4334, %v4332
        %v4437 = vpack.c.bf16 %v4335, %v4333
        %v4438 = vpack.c.bf16 %v4338, %v4336
        %v4439 = vpack.c.bf16 %v4339, %v4337
        %v4440 = vpack.c.bf16 %v4342, %v4340
        %v4441 = vpack.c.bf16 %v4343, %v4341
        %v4442 = vpack.c.bf16 %v4346, %v4344
        %v4443 = vpack.c.bf16 %v4347, %v4345
        %v4444 = vpack.c.bf16 %v4350, %v4348
        %v4445 = vpack.c.bf16 %v4351, %v4349
        %v4446 = vpack.c.bf16 %v4354, %v4352
        %v4447 = vpack.c.bf16 %v4355, %v4353
        %v4448 = vpack.c.bf16 %v4358, %v4356
        %v4449 = vpack.c.bf16 %v4359, %v4357
        %v4450 = vpack.c.bf16 %v4362, %v4360
        %v4451 = vpack.c.bf16 %v4363, %v4361
        %v4452 = vpack.c.bf16 %v4366, %v4364
        %v4453 = vpack.c.bf16 %v4367, %v4365
        %v4454 = vpack.c.bf16 %v4370, %v4368
        %v4455 = vpack.c.bf16 %v4371, %v4369
        %v4456 = vpack.c.bf16 %v4374, %v4372
        %v4457 = vpack.c.bf16 %v4375, %v4373
        %v4458 = vpack.c.bf16 %v4378, %v4376
        %v4459 = vpack.c.bf16 %v4379, %v4377
        %v4460 = vpack.c.bf16 %v4382, %v4380
        %v4461 = vpack.c.bf16 %v4383, %v4381
        %v4462 = vpack.c.bf16 %v4386, %v4384
        %v4463 = vpack.c.bf16 %v4387, %v4385
        %v4464 = vpack.c.bf16 %v4390, %v4388
        %v4465 = vpack.c.bf16 %v4391, %v4389
        %v4466 = vpack.c.bf16 %v4394, %v4392
        %v4467 = vpack.c.bf16 %v4395, %v4393
        %v4468 = vpack.c.bf16 %v4398, %v4396
        %v4469 = vpack.c.bf16 %v4399, %v4397
        %v4470 = vpack.c.bf16 %v4402, %v4400
        %v4471 = vpack.c.bf16 %v4403, %v4401
        %v4472 = vpack.c.bf16 %v4406, %v4404
        %v4473 = vpack.c.bf16 %v4407, %v4405
        %v4474 = vpack.c.bf16 %v4410, %v4408
        %v4475 = vpack.c.bf16 %v4411, %v4409
        %v4476 = vld [vmem:[%s4] sm:$0xf]
        %v4477 = vld [vmem:[%s4 + $0x4] sm:$0xf]
        %v4478 = vld [vmem:[%s4 + $0x8] sm:$0xf]
        %v4479 = vld [vmem:[%s4 + $0xc] sm:$0xf]
        %v4480 = vld [vmem:[%s4 + $0x10] sm:$0xf]
        %v4481 = vld [vmem:[%s4 + $0x14] sm:$0xf]
        %v4482 = vld [vmem:[%s4 + $0x18] sm:$0xf]
        %v4483 = vld [vmem:[%s4 + $0x1c] sm:$0xf]
        %v4484 = vld [vmem:[%s4 + $0x20] sm:$0xf]
        %v4485 = vld [vmem:[%s4 + $0x24] sm:$0xf]
        %v4486 = vld [vmem:[%s4 + $0x28] sm:$0xf]
        %v4487 = vld [vmem:[%s4 + $0x2c] sm:$0xf]
        %v4488 = vld [vmem:[%s4 + $0x30] sm:$0xf]
        %v4489 = vld [vmem:[%s4 + $0x34] sm:$0xf]
        %v4490 = vld [vmem:[%s4 + $0x38] sm:$0xf]
        %v4491 = vld [vmem:[%s4 + $0x3c] sm:$0xf]
        %v4492 = vld [vmem:[%s4 + $0x40] sm:$0xf]
        %v4493 = vld [vmem:[%s4 + $0x44] sm:$0xf]
        %v4494 = vld [vmem:[%s4 + $0x48] sm:$0xf]
        %v4495 = vld [vmem:[%s4 + $0x4c] sm:$0xf]
        %v4496 = vld [vmem:[%s4 + $0x50] sm:$0xf]
        %v4497 = vld [vmem:[%s4 + $0x54] sm:$0xf]
        %v4498 = vld [vmem:[%s4 + $0x58] sm:$0xf]
        %v4499 = vld [vmem:[%s4 + $0x5c] sm:$0xf]
        %v4500 = vld [vmem:[%s4 + $0x60] sm:$0xf]
        %v4501 = vld [vmem:[%s4 + $0x64] sm:$0xf]
        %v4502 = vld [vmem:[%s4 + $0x68] sm:$0xf]
        %v4503 = vld [vmem:[%s4 + $0x6c] sm:$0xf]
        %v4504 = vld [vmem:[%s4 + $0x70] sm:$0xf]
        %v4505 = vld [vmem:[%s4 + $0x74] sm:$0xf]
        %v4506 = vld [vmem:[%s4 + $0x78] sm:$0xf]
        %v4507 = vld [vmem:[%s4 + $0x7c] sm:$0xf]
        %v4508 = vld [vmem:[%s5] sm:$0x1]
        %v4510 = vlaneseq
        %v4511 = vshrl.u32 %v4510, 7
        %v4512 = vsub.s32 0, %v4511
        %v4513 = vrot.slane %v4508, %v4512
        %v4547 = vunpack.c.l.b16 %v4476
        %v4548 = vunpack.c.l.b16 %v4477
        %v4549 = vunpack.c.l.b16 %v4478
        %v4550 = vunpack.c.l.b16 %v4479
        %v4551 = vunpack.c.l.b16 %v4480
        %v4552 = vunpack.c.l.b16 %v4481
        %v4553 = vunpack.c.l.b16 %v4482
        %v4554 = vunpack.c.l.b16 %v4483
        %v4555 = vunpack.c.l.b16 %v4484
        %v4556 = vunpack.c.l.b16 %v4485
        %v4557 = vunpack.c.l.b16 %v4486
        %v4558 = vunpack.c.l.b16 %v4487
        %v4559 = vunpack.c.l.b16 %v4488
        %v4560 = vunpack.c.l.b16 %v4489
        %v4561 = vunpack.c.l.b16 %v4490
        %v4562 = vunpack.c.l.b16 %v4491
        %v4563 = vunpack.c.l.b16 %v4492
        %v4564 = vunpack.c.l.b16 %v4493
        %v4565 = vunpack.c.l.b16 %v4494
        %v4566 = vunpack.c.l.b16 %v4495
        %v4567 = vunpack.c.l.b16 %v4496
        %v4568 = vunpack.c.l.b16 %v4497
        %v4569 = vunpack.c.l.b16 %v4498
        %v4570 = vunpack.c.l.b16 %v4499
        %v4571 = vunpack.c.l.b16 %v4500
        %v4572 = vunpack.c.l.b16 %v4501
        %v4573 = vunpack.c.l.b16 %v4502
        %v4574 = vunpack.c.l.b16 %v4503
        %v4575 = vunpack.c.l.b16 %v4504
        %v4576 = vunpack.c.l.b16 %v4505
        %v4577 = vunpack.c.l.b16 %v4506
        %v4578 = vunpack.c.l.b16 %v4507
        %v4579 = vpack.c.b16 %v4548, %v4547
        %v4580 = vpack.c.b16 %v4550, %v4549
        %v4581 = vpack.c.b16 %v4552, %v4551
        %v4582 = vpack.c.b16 %v4554, %v4553
        %v4583 = vpack.c.b16 %v4556, %v4555
        %v4584 = vpack.c.b16 %v4558, %v4557
        %v4585 = vpack.c.b16 %v4560, %v4559
        %v4586 = vpack.c.b16 %v4562, %v4561
        %v4587 = vpack.c.b16 %v4564, %v4563
        %v4588 = vpack.c.b16 %v4566, %v4565
        %v4589 = vpack.c.b16 %v4568, %v4567
        %v4590 = vpack.c.b16 %v4570, %v4569
        %v4591 = vpack.c.b16 %v4572, %v4571
        %v4592 = vpack.c.b16 %v4574, %v4573
        %v4593 = vpack.c.b16 %v4576, %v4575
        %v4594 = vpack.c.b16 %v4578, %v4577
        %4611 = vmatprep.subr.bf16.mxu0 0
        %4612 = vmatpush1.bf16.msra.mxu0 %v4579
        %4613 = vmatprep.subr.bf16.mxu0 0
        %4614 = vmatpush1.bf16.msra.mxu0 %v4580
        %4615 = vmatprep.subr.bf16.mxu0 0
        %4616 = vmatpush1.bf16.msra.mxu0 %v4581
        %4617 = vmatprep.subr.bf16.mxu0 0
        %4618 = vmatpush1.bf16.msra.mxu0 %v4582
        %4619 = vmatprep.subr.bf16.mxu0 0
        %4620 = vmatpush1.bf16.msra.mxu0 %v4583
        %4621 = vmatprep.subr.bf16.mxu0 0
        %4622 = vmatpush1.bf16.msra.mxu0 %v4584
        %4623 = vmatprep.subr.bf16.mxu0 0
        %4624 = vmatpush1.bf16.msra.mxu0 %v4585
        %4625 = vmatprep.subr.bf16.mxu0 0
        %4626 = vmatpush1.bf16.msra.mxu0 %v4586
        %4627 = vmatprep.subr.bf16.mxu0 0
        %4628 = vmatpush1.bf16.msra.mxu0 %v4587
        %4629 = vmatprep.subr.bf16.mxu0 0
        %4630 = vmatpush1.bf16.msra.mxu0 %v4588
        %4631 = vmatprep.subr.bf16.mxu0 0
        %4632 = vmatpush1.bf16.msra.mxu0 %v4589
        %4633 = vmatprep.subr.bf16.mxu0 0
        %4634 = vmatpush1.bf16.msra.mxu0 %v4590
        %4635 = vmatprep.subr.bf16.mxu0 0
        %4636 = vmatpush1.bf16.msra.mxu0 %v4591
        %4637 = vmatprep.subr.bf16.mxu0 0
        %4638 = vmatpush1.bf16.msra.mxu0 %v4592
        %4639 = vmatprep.subr.bf16.mxu0 0
        %4640 = vmatpush1.bf16.msra.mxu0 %v4593
        %4641 = vmatprep.subr.bf16.mxu0 0
        %4642 = vmatpush1.bf16.msra.mxu0 %v4594
        %4643 = vmatprep.mubr.bf16.mxu0 %v4413
        %4644 = vmatmul.mubr.bf16.gmra.mrb[0].mxu0 %v4412
        %v4645 = vpop.f32.mrb[0].mxu0
        %v4646 = vadd.f32 %v4513, %v4645
        %v4647 = vpop.f32.mrb[0].mxu0
        %v4648 = vpop.f32.mrb[0].mxu0
        %v4649 = vadd.f32 %v4513, %v4648
        %v4650 = vpop.f32.mrb[0].mxu0
        %4651 = vmatprep.mubr.bf16.mxu0 %v4415
        %4652 = vmatmul.mubr.bf16.gmra.mrb[0].mxu0 %v4414
        %v4653 = vpop.f32.mrb[0].mxu0
        %v4654 = vadd.f32 %v4513, %v4653
        %v4655 = vpop.f32.mrb[0].mxu0
        %v4656 = vpop.f32.mrb[0].mxu0
        %v4657 = vadd.f32 %v4513, %v4656
        %v4658 = vpop.f32.mrb[0].mxu0
        %4659 = vmatprep.mubr.bf16.mxu0 %v4417
        %4660 = vmatmul.mubr.bf16.gmra.mrb[0].mxu0 %v4416
        %v4661 = vpop.f32.mrb[0].mxu0
        %v4662 = vadd.f32 %v4513, %v4661
        %v4663 = vpop.f32.mrb[0].mxu0
        %v4664 = vpop.f32.mrb[0].mxu0
        %v4665 = vadd.f32 %v4513, %v4664
        %v4666 = vpop.f32.mrb[0].mxu0
        %4667 = vmatprep.mubr.bf16.mxu0 %v4419
        %4668 = vmatmul.mubr.bf16.gmra.mrb[0].mxu0 %v4418
        %v4669 = vpop.f32.mrb[0].mxu0
        %v4670 = vadd.f32 %v4513, %v4669
        %v4671 = vpop.f32.mrb[0].mxu0
        %v4672 = vpop.f32.mrb[0].mxu0
        %v4673 = vadd.f32 %v4513, %v4672
        %v4674 = vpop.f32.mrb[0].mxu0
        %4675 = vmatprep.mubr.bf16.mxu0 %v4421
        %4676 = vmatmul.mubr.bf16.gmra.mrb[0].mxu0 %v4420
        %v4677 = vpop.f32.mrb[0].mxu0
        %v4678 = vadd.f32 %v4513, %v4677
        %v4679 = vpop.f32.mrb[0].mxu0
        %v4680 = vpop.f32.mrb[0].mxu0
        %v4681 = vadd.f32 %v4513, %v4680
        %v4682 = vpop.f32.mrb[0].mxu0
        %4683 = vmatprep.mubr.bf16.mxu0 %v4423
        %4684 = vmatmul.mubr.bf16.gmra.mrb[0].mxu0 %v4422
        %v4685 = vpop.f32.mrb[0].mxu0
        %v4686 = vadd.f32 %v4513, %v4685
        %v4687 = vpop.f32.mrb[0].mxu0
        %v4688 = vpop.f32.mrb[0].mxu0
        %v4689 = vadd.f32 %v4513, %v4688
        %v4690 = vpop.f32.mrb[0].mxu0
        %4691 = vmatprep.mubr.bf16.mxu0 %v4425
        %4692 = vmatmul.mubr.bf16.gmra.mrb[0].mxu0 %v4424
        %v4693 = vpop.f32.mrb[0].mxu0
        %v4694 = vadd.f32 %v4513, %v4693
        %v4695 = vpop.f32.mrb[0].mxu0
        %v4696 = vpop.f32.mrb[0].mxu0
        %v4697 = vadd.f32 %v4513, %v4696
        %v4698 = vpop.f32.mrb[0].mxu0
        %4699 = vmatprep.mubr.bf16.mxu0 %v4427
        %4700 = vmatmul.mubr.bf16.gmra.mrb[0].mxu0 %v4426
        %v4701 = vpop.f32.mrb[0].mxu0
        %v4702 = vadd.f32 %v4513, %v4701
        %v4703 = vpop.f32.mrb[0].mxu0
        %v4704 = vpop.f32.mrb[0].mxu0
        %v4705 = vadd.f32 %v4513, %v4704
        %v4706 = vpop.f32.mrb[0].mxu0
        %4707 = vmatprep.mubr.bf16.mxu0 %v4429
        %4708 = vmatmul.mubr.bf16.gmra.mrb[0].mxu0 %v4428
        %v4709 = vpop.f32.mrb[0].mxu0
        %v4710 = vadd.f32 %v4513, %v4709
        %v4711 = vpop.f32.mrb[0].mxu0
        %v4712 = vpop.f32.mrb[0].mxu0
        %v4713 = vadd.f32 %v4513, %v4712
        %v4714 = vpop.f32.mrb[0].mxu0
        %4715 = vmatprep.mubr.bf16.mxu0 %v4431
        %4716 = vmatmul.mubr.bf16.gmra.mrb[0].mxu0 %v4430
        %v4717 = vpop.f32.mrb[0].mxu0
        %v4718 = vadd.f32 %v4513, %v4717
        %v4719 = vpop.f32.mrb[0].mxu0
        %v4720 = vpop.f32.mrb[0].mxu0
        %v4721 = vadd.f32 %v4513, %v4720
        %v4722 = vpop.f32.mrb[0].mxu0
        %4723 = vmatprep.mubr.bf16.mxu0 %v4433
        %4724 = vmatmul.mubr.bf16.gmra.mrb[0].mxu0 %v4432
        %v4725 = vpop.f32.mrb[0].mxu0
        %v4726 = vadd.f32 %v4513, %v4725
        %v4727 = vpop.f32.mrb[0].mxu0
        %v4728 = vpop.f32.mrb[0].mxu0
        %v4729 = vadd.f32 %v4513, %v4728
        %v4730 = vpop.f32.mrb[0].mxu0
        %4731 = vmatprep.mubr.bf16.mxu0 %v4435
        %4732 = vmatmul.mubr.bf16.gmra.mrb[0].mxu0 %v4434
        %v4733 = vpop.f32.mrb[0].mxu0
        %v4734 = vadd.f32 %v4513, %v4733
        %v4735 = vpop.f32.mrb[0].mxu0
        %v4736 = vpop.f32.mrb[0].mxu0
        %v4737 = vadd.f32 %v4513, %v4736
        %v4738 = vpop.f32.mrb[0].mxu0
        %4739 = vmatprep.mubr.bf16.mxu0 %v4437
        %4740 = vmatmul.mubr.bf16.gmra.mrb[0].mxu0 %v4436
        %v4741 = vpop.f32.mrb[0].mxu0
        %v4742 = vadd.f32 %v4513, %v4741
        %v4743 = vpop.f32.mrb[0].mxu0
        %v4744 = vpop.f32.mrb[0].mxu0
        %v4745 = vadd.f32 %v4513, %v4744
        %v4746 = vpop.f32.mrb[0].mxu0
        %4747 = vmatprep.mubr.bf16.mxu0 %v4439
        %4748 = vmatmul.mubr.bf16.gmra.mrb[0].mxu0 %v4438
        %v4749 = vpop.f32.mrb[0].mxu0
        %v4750 = vadd.f32 %v4513, %v4749
        %v4751 = vpop.f32.mrb[0].mxu0
        %v4752 = vpop.f32.mrb[0].mxu0
        %v4753 = vadd.f32 %v4513, %v4752
        %v4754 = vpop.f32.mrb[0].mxu0
        %4755 = vmatprep.mubr.bf16.mxu0 %v4441
        %4756 = vmatmul.mubr.bf16.gmra.mrb[0].mxu0 %v4440
        %v4757 = vpop.f32.mrb[0].mxu0
        %v4758 = vadd.f32 %v4513, %v4757
        %v4759 = vpop.f32.mrb[0].mxu0
        %v4760 = vpop.f32.mrb[0].mxu0
        %v4761 = vadd.f32 %v4513, %v4760
        %v4762 = vpop.f32.mrb[0].mxu0
        %4763 = vmatprep.mubr.bf16.mxu0 %v4443
        %4764 = vmatmul.mubr.bf16.gmra.mrb[0].mxu0 %v4442
        %v4765 = vpop.f32.mrb[0].mxu0
        %v4766 = vadd.f32 %v4513, %v4765
        %v4767 = vpop.f32.mrb[0].mxu0
        %v4768 = vpop.f32.mrb[0].mxu0
        %v4769 = vadd.f32 %v4513, %v4768
        %v4770 = vpop.f32.mrb[0].mxu0
        %4771 = vmatprep.mubr.bf16.mxu0 %v4445
        %4772 = vmatmul.mubr.bf16.gmra.mrb[0].mxu0 %v4444
        %v4773 = vpop.f32.mrb[0].mxu0
        %v4774 = vadd.f32 %v4513, %v4773
        %v4775 = vpop.f32.mrb[0].mxu0
        %v4776 = vpop.f32.mrb[0].mxu0
        %v4777 = vadd.f32 %v4513, %v4776
        %v4778 = vpop.f32.mrb[0].mxu0
        %4779 = vmatprep.mubr.bf16.mxu0 %v4447
        %4780 = vmatmul.mubr.bf16.gmra.mrb[0].mxu0 %v4446
        %v4781 = vpop.f32.mrb[0].mxu0
        %v4782 = vadd.f32 %v4513, %v4781
        %v4783 = vpop.f32.mrb[0].mxu0
        %v4784 = vpop.f32.mrb[0].mxu0
        %v4785 = vadd.f32 %v4513, %v4784
        %v4786 = vpop.f32.mrb[0].mxu0
        %4787 = vmatprep.mubr.bf16.mxu0 %v4449
        %4788 = vmatmul.mubr.bf16.gmra.mrb[0].mxu0 %v4448
        %v4789 = vpop.f32.mrb[0].mxu0
        %v4790 = vadd.f32 %v4513, %v4789
        %v4791 = vpop.f32.mrb[0].mxu0
        %v4792 = vpop.f32.mrb[0].mxu0
        %v4793 = vadd.f32 %v4513, %v4792
        %v4794 = vpop.f32.mrb[0].mxu0
        %4795 = vmatprep.mubr.bf16.mxu0 %v4451
        %4796 = vmatmul.mubr.bf16.gmra.mrb[0].mxu0 %v4450
        %v4797 = vpop.f32.mrb[0].mxu0
        %v4798 = vadd.f32 %v4513, %v4797
        %v4799 = vpop.f32.mrb[0].mxu0
        %v4800 = vpop.f32.mrb[0].mxu0
        %v4801 = vadd.f32 %v4513, %v4800
        %v4802 = vpop.f32.mrb[0].mxu0
        %4803 = vmatprep.mubr.bf16.mxu0 %v4453
        %4804 = vmatmul.mubr.bf16.gmra.mrb[0].mxu0 %v4452
        %v4805 = vpop.f32.mrb[0].mxu0
        %v4806 = vadd.f32 %v4513, %v4805
        %v4807 = vpop.f32.mrb[0].mxu0
        %v4808 = vpop.f32.mrb[0].mxu0
        %v4809 = vadd.f32 %v4513, %v4808
        %v4810 = vpop.f32.mrb[0].mxu0
        %4811 = vmatprep.mubr.bf16.mxu0 %v4455
        %4812 = vmatmul.mubr.bf16.gmra.mrb[0].mxu0 %v4454
        %v4813 = vpop.f32.mrb[0].mxu0
        %v4814 = vadd.f32 %v4513, %v4813
        %v4815 = vpop.f32.mrb[0].mxu0
        %v4816 = vpop.f32.mrb[0].mxu0
        %v4817 = vadd.f32 %v4513, %v4816
        %v4818 = vpop.f32.mrb[0].mxu0
        %4819 = vmatprep.mubr.bf16.mxu0 %v4457
        %4820 = vmatmul.mubr.bf16.gmra.mrb[0].mxu0 %v4456
        %v4821 = vpop.f32.mrb[0].mxu0
        %v4822 = vadd.f32 %v4513, %v4821
        %v4823 = vpop.f32.mrb[0].mxu0
        %v4824 = vpop.f32.mrb[0].mxu0
        %v4825 = vadd.f32 %v4513, %v4824
        %v4826 = vpop.f32.mrb[0].mxu0
        %4827 = vmatprep.mubr.bf16.mxu0 %v4459
        %4828 = vmatmul.mubr.bf16.gmra.mrb[0].mxu0 %v4458
        %v4829 = vpop.f32.mrb[0].mxu0
        %v4830 = vadd.f32 %v4513, %v4829
        %v4831 = vpop.f32.mrb[0].mxu0
        %v4832 = vpop.f32.mrb[0].mxu0
        %v4833 = vadd.f32 %v4513, %v4832
        %v4834 = vpop.f32.mrb[0].mxu0
        %4835 = vmatprep.mubr.bf16.mxu0 %v4461
        %4836 = vmatmul.mubr.bf16.gmra.mrb[0].mxu0 %v4460
        %v4837 = vpop.f32.mrb[0].mxu0
        %v4838 = vadd.f32 %v4513, %v4837
        %v4839 = vpop.f32.mrb[0].mxu0
        %v4840 = vpop.f32.mrb[0].mxu0
        %v4841 = vadd.f32 %v4513, %v4840
        %v4842 = vpop.f32.mrb[0].mxu0
        %4843 = vmatprep.mubr.bf16.mxu0 %v4463
        %4844 = vmatmul.mubr.bf16.gmra.mrb[0].mxu0 %v4462
        %v4845 = vpop.f32.mrb[0].mxu0
        %v4846 = vadd.f32 %v4513, %v4845
        %v4847 = vpop.f32.mrb[0].mxu0
        %v4848 = vpop.f32.mrb[0].mxu0
        %v4849 = vadd.f32 %v4513, %v4848
        %v4850 = vpop.f32.mrb[0].mxu0
        %4851 = vmatprep.mubr.bf16.mxu0 %v4465
        %4852 = vmatmul.mubr.bf16.gmra.mrb[0].mxu0 %v4464
        %v4853 = vpop.f32.mrb[0].mxu0
        %v4854 = vadd.f32 %v4513, %v4853
        %v4855 = vpop.f32.mrb[0].mxu0
        %v4856 = vpop.f32.mrb[0].mxu0
        %v4857 = vadd.f32 %v4513, %v4856
        %v4858 = vpop.f32.mrb[0].mxu0
        %4859 = vmatprep.mubr.bf16.mxu0 %v4467
        %4860 = vmatmul.mubr.bf16.gmra.mrb[0].mxu0 %v4466
        %v4861 = vpop.f32.mrb[0].mxu0
        %v4862 = vadd.f32 %v4513, %v4861
        %v4863 = vpop.f32.mrb[0].mxu0
        %v4864 = vpop.f32.mrb[0].mxu0
        %v4865 = vadd.f32 %v4513, %v4864
        %v4866 = vpop.f32.mrb[0].mxu0
        %4867 = vmatprep.mubr.bf16.mxu0 %v4469
        %4868 = vmatmul.mubr.bf16.gmra.mrb[0].mxu0 %v4468
        %v4869 = vpop.f32.mrb[0].mxu0
        %v4870 = vadd.f32 %v4513, %v4869
        %v4871 = vpop.f32.mrb[0].mxu0
        %v4872 = vpop.f32.mrb[0].mxu0
        %v4873 = vadd.f32 %v4513, %v4872
        %v4874 = vpop.f32.mrb[0].mxu0
        %4875 = vmatprep.mubr.bf16.mxu0 %v4471
        %4876 = vmatmul.mubr.bf16.gmra.mrb[0].mxu0 %v4470
        %v4877 = vpop.f32.mrb[0].mxu0
        %v4878 = vadd.f32 %v4513, %v4877
        %v4879 = vpop.f32.mrb[0].mxu0
        %v4880 = vpop.f32.mrb[0].mxu0
        %v4881 = vadd.f32 %v4513, %v4880
        %v4882 = vpop.f32.mrb[0].mxu0
        %4883 = vmatprep.mubr.bf16.mxu0 %v4473
        %4884 = vmatmul.mubr.bf16.gmra.mrb[0].mxu0 %v4472
        %v4885 = vpop.f32.mrb[0].mxu0
        %v4886 = vadd.f32 %v4513, %v4885
        %v4887 = vpop.f32.mrb[0].mxu0
        %v4888 = vpop.f32.mrb[0].mxu0
        %v4889 = vadd.f32 %v4513, %v4888
        %v4890 = vpop.f32.mrb[0].mxu0
        %4891 = vmatprep.mubr.bf16.mxu0 %v4475
        %4892 = vmatmul.mubr.bf16.gmra.mrb[0].mxu0 %v4474
        %v4893 = vpop.f32.mrb[0].mxu0
        %v4894 = vadd.f32 %v4513, %v4893
        %v4895 = vpop.f32.mrb[0].mxu0
        %v4896 = vpop.f32.mrb[0].mxu0
        %v4897 = vadd.f32 %v4513, %v4896
        %v4898 = vpop.f32.mrb[0].mxu0
        %4899 = vdwg.mxu0
        %v4900 = vld [vmem:[%s6] sm:$0xff]
        %v4901 = vld [vmem:[%s6 + $0x8] sm:$0xff]
        %v4902 = vld [vmem:[%s6 + $0x10] sm:$0xff]
        %v4903 = vld [vmem:[%s6 + $0x18] sm:$0xff]
        %v4904 = vld [vmem:[%s6 + $0x20] sm:$0xff]
        %v4905 = vld [vmem:[%s6 + $0x28] sm:$0xff]
        %vm4906 = vcmask 130048
        %v4908 = vsel %vm4906, %v1020, 0
        %v4911 = vsel %vm4906, %v1021, 0
        %v4914 = vsel %vm4906, %v1022, 0
        %v4917 = vsel %vm4906, %v1023, 0
        %v4920 = vsel %vm4906, %v1024, 0
        %v4923 = vsel %vm4906, %v1025, 0
        %v4926 = vsel %vm4906, %v1026, 0
        %v4929 = vsel %vm4906, %v1027, 0
        %v4932 = vsel %vm4906, %v1028, 0
        %v4935 = vsel %vm4906, %v1029, 0
        %v4938 = vsel %vm4906, %v1030, 0
        %v4941 = vsel %vm4906, %v1031, 0
        %v4944 = vsel %vm4906, %v1032, 0
        %v4947 = vsel %vm4906, %v1033, 0
        %v4950 = vsel %vm4906, %v1034, 0
        %v4953 = vsel %vm4906, %v1035, 0
        %v4956 = vsel %vm4906, %v1036, 0
        %v4959 = vsel %vm4906, %v1037, 0
        %v4962 = vsel %vm4906, %v1038, 0
        %v4965 = vsel %vm4906, %v1039, 0
        %v4968 = vsel %vm4906, %v1040, 0
        %v4971 = vsel %vm4906, %v1041, 0
        %v4974 = vsel %vm4906, %v1042, 0
        %v4977 = vsel %vm4906, %v1043, 0
        %v4980 = vsel %vm4906, %v1044, 0
        %v4983 = vsel %vm4906, %v1045, 0
        %v4986 = vsel %vm4906, %v1046, 0
        %v4989 = vsel %vm4906, %v1047, 0
        %v4992 = vsel %vm4906, %v1048, 0
        %v4995 = vsel %vm4906, %v1049, 0
        %v4998 = vsel %vm4906, %v1050, 0
        %v5001 = vsel %vm4906, %v1051, 0
        %v5004 = vsel %vm4906, %v1052, 0
        %v5007 = vsel %vm4906, %v1053, 0
        %v5010 = vsel %vm4906, %v1054, 0
        %v5013 = vsel %vm4906, %v1055, 0
        %v5016 = vsel %vm4906, %v1056, 0
        %v5019 = vsel %vm4906, %v1057, 0
        %v5022 = vsel %vm4906, %v1058, 0
        %v5025 = vsel %vm4906, %v1059, 0
        %v5028 = vsel %vm4906, %v1060, 0
        %v5031 = vsel %vm4906, %v1061, 0
        %v5034 = vsel %vm4906, %v1062, 0
        %v5037 = vsel %vm4906, %v1063, 0
        %v5040 = vsel %vm4906, %v1064, 0
        %v5043 = vsel %vm4906, %v1065, 0
        %v5046 = vsel %vm4906, %v1066, 0
        %v5049 = vsel %vm4906, %v1067, 0
        %v5052 = vsel %vm4906, %v1068, 0
        %v5055 = vsel %vm4906, %v1069, 0
        %v5058 = vsel %vm4906, %v1070, 0
        %v5061 = vsel %vm4906, %v1071, 0
        %v5064 = vsel %vm4906, %v1072, 0
        %v5067 = vsel %vm4906, %v1073, 0
        %v5070 = vsel %vm4906, %v1074, 0
        %v5073 = vsel %vm4906, %v1075, 0
        %v5076 = vsel %vm4906, %v1076, 0
        %v5079 = vsel %vm4906, %v1077, 0
        %v5082 = vsel %vm4906, %v1078, 0
        %v5085 = vsel %vm4906, %v1079, 0
        %v5088 = vsel %vm4906, %v1080, 0
        %v5091 = vsel %vm4906, %v1081, 0
        %v5094 = vsel %vm4906, %v1082, 0
        %v5097 = vsel %vm4906, %v1083, 0
        %5099 = vmatprep.subr.mxu0 %v4901
        %5100 = vmatpush1.msra.mxu0 %v4900
        %5101 = vmatprep.subr.mxu0 %v4904
        %5102 = vmatpush1.msra.mxu0 %v4903
        %5103 = vmatprep.subr.mxu0 0.0
        %5104 = vmatpush1.msra.mxu0 0.0
        %5105 = vmatprep.subr.mxu0 0.0
        %5106 = vmatpush1.msra.mxu0 0.0
        %5107 = vmatprep.subr.mxu0 0.0
        %5108 = vmatpush1.msra.mxu0 0.0
        %5109 = vmatprep.subr.mxu0 0.0
        %5110 = vmatpush1.msra.mxu0 0.0
        %5111 = vmatprep.subr.mxu0 0.0
        %5112 = vmatpush1.msra.mxu0 0.0
        %5113 = vmatprep.subr.mxu0 0.0
        %5114 = vmatpush1.msra.mxu0 0.0
        %5115 = vmatprep.subr.mxu0 0.0
        %5116 = vmatpush1.msra.mxu0 0.0
        %5117 = vmatprep.subr.mxu0 0.0
        %5118 = vmatpush1.msra.mxu0 0.0
        %5119 = vmatprep.subr.mxu0 0.0
        %5120 = vmatpush1.msra.mxu0 0.0
        %5121 = vmatprep.subr.mxu0 0.0
        %5122 = vmatpush1.msra.mxu0 0.0
        %5123 = vmatprep.subr.mxu0 0.0
        %5124 = vmatpush1.msra.mxu0 0.0
        %5125 = vmatprep.subr.mxu0 0.0
        %5126 = vmatpush1.msra.mxu0 0.0
        %5127 = vmatprep.subr.mxu0 0.0
        %5128 = vmatpush1.msra.mxu0 0.0
        %5129 = vmatprep.subr.mxu0 0.0
        %5130 = vmatpush1.msra.mxu0 0.0
        %5131 = vmatprep.subr.mxu0 0.0
        %5132 = vmatpush1.msra.mxu0 0.0
        %5133 = vmatprep.subr.mxu0 0.0
        %5134 = vmatpush1.msra.mxu0 0.0
        %5135 = vmatprep.subr.mxu0 0.0
        %5136 = vmatpush1.msra.mxu0 0.0
        %5137 = vmatprep.subr.mxu0 0.0
        %5138 = vmatpush1.msra.mxu0 0.0
        %5139 = vmatprep.subr.mxu0 0.0
        %5140 = vmatpush1.msra.mxu0 0.0
        %5141 = vmatprep.subr.mxu0 0.0
        %5142 = vmatpush1.msra.mxu0 0.0
        %5143 = vmatprep.subr.mxu0 0.0
        %5144 = vmatpush1.msra.mxu0 0.0
        %5145 = vmatprep.subr.mxu0 0.0
        %5146 = vmatpush1.msra.mxu0 0.0
        %5147 = vmatprep.subr.mxu0 0.0
        %5148 = vmatpush1.msra.mxu0 0.0
        %5149 = vmatprep.subr.mxu0 0.0
        %5150 = vmatpush1.msra.mxu0 0.0
        %5151 = vmatprep.subr.mxu0 0.0
        %5152 = vmatpush1.msra.mxu0 0.0
        %5153 = vmatprep.subr.mxu0 0.0
        %5154 = vmatpush1.msra.mxu0 0.0
        %5155 = vmatprep.subr.mxu0 0.0
        %5156 = vmatpush1.msra.mxu0 0.0
        %5157 = vmatprep.subr.mxu0 0.0
        %5158 = vmatpush1.msra.mxu0 0.0
        %5159 = vmatprep.subr.mxu0 0.0
        %5160 = vmatpush1.msra.mxu0 0.0
        %5161 = vmatprep.subr.mxu0 0.0
        %5162 = vmatpush1.msra.mxu0 0.0
        %5163 = vmatprep.mubr.f32.mxu0 0.0
        %5164 = vmatmul.mubr.f32.gmra.mrb[0].mxu0 %v4908
        %v5165 = vpop.f32.mrb[0].mxu0
        %v5166 = vadd.f32 0.0, %v5165
        %v5167 = vpop.f32.mrb[0].mxu0
        %v5168 = vadd.f32 0.0, %v5167
        %5169 = vmatprep.mubr.f32.mxu0 0.0
        %5170 = vmatmul.mubr.f32.gmra.mrb[0].mxu0 %v4911
        %v5171 = vpop.f32.mrb[0].mxu0
        %v5172 = vadd.f32 0.0, %v5171
        %v5173 = vpop.f32.mrb[0].mxu0
        %v5174 = vadd.f32 0.0, %v5173
        %5175 = vmatprep.mubr.f32.mxu0 0.0
        %5176 = vmatmul.mubr.f32.gmra.mrb[0].mxu0 %v4914
        %v5177 = vpop.f32.mrb[0].mxu0
        %v5178 = vadd.f32 0.0, %v5177
        %v5179 = vpop.f32.mrb[0].mxu0
        %v5180 = vadd.f32 0.0, %v5179
        %5181 = vmatprep.mubr.f32.mxu0 0.0
        %5182 = vmatmul.mubr.f32.gmra.mrb[0].mxu0 %v4917
        %v5183 = vpop.f32.mrb[0].mxu0
        %v5184 = vadd.f32 0.0, %v5183
        %v5185 = vpop.f32.mrb[0].mxu0
        %v5186 = vadd.f32 0.0, %v5185
        %5187 = vmatprep.mubr.f32.mxu0 0.0
        %5188 = vmatmul.mubr.f32.gmra.mrb[0].mxu0 %v4920
        %v5189 = vpop.f32.mrb[0].mxu0
        %v5190 = vadd.f32 0.0, %v5189
        %v5191 = vpop.f32.mrb[0].mxu0
        %v5192 = vadd.f32 0.0, %v5191
        %5193 = vmatprep.mubr.f32.mxu0 0.0
        %5194 = vmatmul.mubr.f32.gmra.mrb[0].mxu0 %v4923
        %v5195 = vpop.f32.mrb[0].mxu0
        %v5196 = vadd.f32 0.0, %v5195
        %v5197 = vpop.f32.mrb[0].mxu0
        %v5198 = vadd.f32 0.0, %v5197
        %5199 = vmatprep.mubr.f32.mxu0 0.0
        %5200 = vmatmul.mubr.f32.gmra.mrb[0].mxu0 %v4926
        %v5201 = vpop.f32.mrb[0].mxu0
        %v5202 = vadd.f32 0.0, %v5201
        %v5203 = vpop.f32.mrb[0].mxu0
        %v5204 = vadd.f32 0.0, %v5203
        %5205 = vmatprep.mubr.f32.mxu0 0.0
        %5206 = vmatmul.mubr.f32.gmra.mrb[0].mxu0 %v4929
        %v5207 = vpop.f32.mrb[0].mxu0
        %v5208 = vadd.f32 0.0, %v5207
        %v5209 = vpop.f32.mrb[0].mxu0
        %v5210 = vadd.f32 0.0, %v5209
        %5211 = vmatprep.mubr.f32.mxu0 0.0
        %5212 = vmatmul.mubr.f32.gmra.mrb[0].mxu0 %v4932
        %v5213 = vpop.f32.mrb[0].mxu0
        %v5214 = vadd.f32 0.0, %v5213
        %v5215 = vpop.f32.mrb[0].mxu0
        %v5216 = vadd.f32 0.0, %v5215
        %5217 = vmatprep.mubr.f32.mxu0 0.0
        %5218 = vmatmul.mubr.f32.gmra.mrb[0].mxu0 %v4935
        %v5219 = vpop.f32.mrb[0].mxu0
        %v5220 = vadd.f32 0.0, %v5219
        %v5221 = vpop.f32.mrb[0].mxu0
        %v5222 = vadd.f32 0.0, %v5221
        %5223 = vmatprep.mubr.f32.mxu0 0.0
        %5224 = vmatmul.mubr.f32.gmra.mrb[0].mxu0 %v4938
        %v5225 = vpop.f32.mrb[0].mxu0
        %v5226 = vadd.f32 0.0, %v5225
        %v5227 = vpop.f32.mrb[0].mxu0
        %v5228 = vadd.f32 0.0, %v5227
        %5229 = vmatprep.mubr.f32.mxu0 0.0
        %5230 = vmatmul.mubr.f32.gmra.mrb[0].mxu0 %v4941
        %v5231 = vpop.f32.mrb[0].mxu0
        %v5232 = vadd.f32 0.0, %v5231
        %v5233 = vpop.f32.mrb[0].mxu0
        %v5234 = vadd.f32 0.0, %v5233
        %5235 = vmatprep.mubr.f32.mxu0 0.0
        %5236 = vmatmul.mubr.f32.gmra.mrb[0].mxu0 %v4944
        %v5237 = vpop.f32.mrb[0].mxu0
        %v5238 = vadd.f32 0.0, %v5237
        %v5239 = vpop.f32.mrb[0].mxu0
        %v5240 = vadd.f32 0.0, %v5239
        %5241 = vmatprep.mubr.f32.mxu0 0.0
        %5242 = vmatmul.mubr.f32.gmra.mrb[0].mxu0 %v4947
        %v5243 = vpop.f32.mrb[0].mxu0
        %v5244 = vadd.f32 0.0, %v5243
        %v5245 = vpop.f32.mrb[0].mxu0
        %v5246 = vadd.f32 0.0, %v5245
        %5247 = vmatprep.mubr.f32.mxu0 0.0
        %5248 = vmatmul.mubr.f32.gmra.mrb[0].mxu0 %v4950
        %v5249 = vpop.f32.mrb[0].mxu0
        %v5250 = vadd.f32 0.0, %v5249
        %v5251 = vpop.f32.mrb[0].mxu0
        %v5252 = vadd.f32 0.0, %v5251
        %5253 = vmatprep.mubr.f32.mxu0 0.0
        %5254 = vmatmul.mubr.f32.gmra.mrb[0].mxu0 %v4953
        %v5255 = vpop.f32.mrb[0].mxu0
        %v5256 = vadd.f32 0.0, %v5255
        %v5257 = vpop.f32.mrb[0].mxu0
        %v5258 = vadd.f32 0.0, %v5257
        %5259 = vmatprep.mubr.f32.mxu0 0.0
        %5260 = vmatmul.mubr.f32.gmra.mrb[0].mxu0 %v4956
        %v5261 = vpop.f32.mrb[0].mxu0
        %v5262 = vadd.f32 0.0, %v5261
        %v5263 = vpop.f32.mrb[0].mxu0
        %v5264 = vadd.f32 0.0, %v5263
        %5265 = vmatprep.mubr.f32.mxu0 0.0
        %5266 = vmatmul.mubr.f32.gmra.mrb[0].mxu0 %v4959
        %v5267 = vpop.f32.mrb[0].mxu0
        %v5268 = vadd.f32 0.0, %v5267
        %v5269 = vpop.f32.mrb[0].mxu0
        %v5270 = vadd.f32 0.0, %v5269
        %5271 = vmatprep.mubr.f32.mxu0 0.0
        %5272 = vmatmul.mubr.f32.gmra.mrb[0].mxu0 %v4962
        %v5273 = vpop.f32.mrb[0].mxu0
        %v5274 = vadd.f32 0.0, %v5273
        %v5275 = vpop.f32.mrb[0].mxu0
        %v5276 = vadd.f32 0.0, %v5275
        %5277 = vmatprep.mubr.f32.mxu0 0.0
        %5278 = vmatmul.mubr.f32.gmra.mrb[0].mxu0 %v4965
        %v5279 = vpop.f32.mrb[0].mxu0
        %v5280 = vadd.f32 0.0, %v5279
        %v5281 = vpop.f32.mrb[0].mxu0
        %v5282 = vadd.f32 0.0, %v5281
        %5283 = vmatprep.mubr.f32.mxu0 0.0
        %5284 = vmatmul.mubr.f32.gmra.mrb[0].mxu0 %v4968
        %v5285 = vpop.f32.mrb[0].mxu0
        %v5286 = vadd.f32 0.0, %v5285
        %v5287 = vpop.f32.mrb[0].mxu0
        %v5288 = vadd.f32 0.0, %v5287
        %5289 = vmatprep.mubr.f32.mxu0 0.0
        %5290 = vmatmul.mubr.f32.gmra.mrb[0].mxu0 %v4971
        %v5291 = vpop.f32.mrb[0].mxu0
        %v5292 = vadd.f32 0.0, %v5291
        %v5293 = vpop.f32.mrb[0].mxu0
        %v5294 = vadd.f32 0.0, %v5293
        %5295 = vmatprep.mubr.f32.mxu0 0.0
        %5296 = vmatmul.mubr.f32.gmra.mrb[0].mxu0 %v4974
        %v5297 = vpop.f32.mrb[0].mxu0
        %v5298 = vadd.f32 0.0, %v5297
        %v5299 = vpop.f32.mrb[0].mxu0
        %v5300 = vadd.f32 0.0, %v5299
        %5301 = vmatprep.mubr.f32.mxu0 0.0
        %5302 = vmatmul.mubr.f32.gmra.mrb[0].mxu0 %v4977
        %v5303 = vpop.f32.mrb[0].mxu0
        %v5304 = vadd.f32 0.0, %v5303
        %v5305 = vpop.f32.mrb[0].mxu0
        %v5306 = vadd.f32 0.0, %v5305
        %5307 = vmatprep.mubr.f32.mxu0 0.0
        %5308 = vmatmul.mubr.f32.gmra.mrb[0].mxu0 %v4980
        %v5309 = vpop.f32.mrb[0].mxu0
        %v5310 = vadd.f32 0.0, %v5309
        %v5311 = vpop.f32.mrb[0].mxu0
        %v5312 = vadd.f32 0.0, %v5311
        %5313 = vmatprep.mubr.f32.mxu0 0.0
        %5314 = vmatmul.mubr.f32.gmra.mrb[0].mxu0 %v4983
        %v5315 = vpop.f32.mrb[0].mxu0
        %v5316 = vadd.f32 0.0, %v5315
        %v5317 = vpop.f32.mrb[0].mxu0
        %v5318 = vadd.f32 0.0, %v5317
        %5319 = vmatprep.mubr.f32.mxu0 0.0
        %5320 = vmatmul.mubr.f32.gmra.mrb[0].mxu0 %v4986
        %v5321 = vpop.f32.mrb[0].mxu0
        %v5322 = vadd.f32 0.0, %v5321
        %v5323 = vpop.f32.mrb[0].mxu0
        %v5324 = vadd.f32 0.0, %v5323
        %5325 = vmatprep.mubr.f32.mxu0 0.0
        %5326 = vmatmul.mubr.f32.gmra.mrb[0].mxu0 %v4989
        %v5327 = vpop.f32.mrb[0].mxu0
        %v5328 = vadd.f32 0.0, %v5327
        %v5329 = vpop.f32.mrb[0].mxu0
        %v5330 = vadd.f32 0.0, %v5329
        %5331 = vmatprep.mubr.f32.mxu0 0.0
        %5332 = vmatmul.mubr.f32.gmra.mrb[0].mxu0 %v4992
        %v5333 = vpop.f32.mrb[0].mxu0
        %v5334 = vadd.f32 0.0, %v5333
        %v5335 = vpop.f32.mrb[0].mxu0
        %v5336 = vadd.f32 0.0, %v5335
        %5337 = vmatprep.mubr.f32.mxu0 0.0
        %5338 = vmatmul.mubr.f32.gmra.mrb[0].mxu0 %v4995
        %v5339 = vpop.f32.mrb[0].mxu0
        %v5340 = vadd.f32 0.0, %v5339
        %v5341 = vpop.f32.mrb[0].mxu0
        %v5342 = vadd.f32 0.0, %v5341
        %5343 = vmatprep.mubr.f32.mxu0 0.0
        %5344 = vmatmul.mubr.f32.gmra.mrb[0].mxu0 %v4998
        %v5345 = vpop.f32.mrb[0].mxu0
        %v5346 = vadd.f32 0.0, %v5345
        %v5347 = vpop.f32.mrb[0].mxu0
        %v5348 = vadd.f32 0.0, %v5347
        %5349 = vmatprep.mubr.f32.mxu0 0.0
        %5350 = vmatmul.mubr.f32.gmra.mrb[0].mxu0 %v5001
        %v5351 = vpop.f32.mrb[0].mxu0
        %v5352 = vadd.f32 0.0, %v5351
        %v5353 = vpop.f32.mrb[0].mxu0
        %v5354 = vadd.f32 0.0, %v5353
        %5355 = vmatprep.mubr.f32.mxu0 0.0
        %5356 = vmatmul.mubr.f32.gmra.mrb[0].mxu0 %v5004
        %v5357 = vpop.f32.mrb[0].mxu0
        %v5358 = vadd.f32 0.0, %v5357
        %v5359 = vpop.f32.mrb[0].mxu0
        %v5360 = vadd.f32 0.0, %v5359
        %5361 = vmatprep.mubr.f32.mxu0 0.0
        %5362 = vmatmul.mubr.f32.gmra.mrb[0].mxu0 %v5007
        %v5363 = vpop.f32.mrb[0].mxu0
        %v5364 = vadd.f32 0.0, %v5363
        %v5365 = vpop.f32.mrb[0].mxu0
        %v5366 = vadd.f32 0.0, %v5365
        %5367 = vmatprep.mubr.f32.mxu0 0.0
        %5368 = vmatmul.mubr.f32.gmra.mrb[0].mxu0 %v5010
        %v5369 = vpop.f32.mrb[0].mxu0
        %v5370 = vadd.f32 0.0, %v5369
        %v5371 = vpop.f32.mrb[0].mxu0
        %v5372 = vadd.f32 0.0, %v5371
        %5373 = vmatprep.mubr.f32.mxu0 0.0
        %5374 = vmatmul.mubr.f32.gmra.mrb[0].mxu0 %v5013
        %v5375 = vpop.f32.mrb[0].mxu0
        %v5376 = vadd.f32 0.0, %v5375
        %v5377 = vpop.f32.mrb[0].mxu0
        %v5378 = vadd.f32 0.0, %v5377
        %5379 = vmatprep.mubr.f32.mxu0 0.0
        %5380 = vmatmul.mubr.f32.gmra.mrb[0].mxu0 %v5016
        %v5381 = vpop.f32.mrb[0].mxu0
        %v5382 = vadd.f32 0.0, %v5381
        %v5383 = vpop.f32.mrb[0].mxu0
        %v5384 = vadd.f32 0.0, %v5383
        %5385 = vmatprep.mubr.f32.mxu0 0.0
        %5386 = vmatmul.mubr.f32.gmra.mrb[0].mxu0 %v5019
        %v5387 = vpop.f32.mrb[0].mxu0
        %v5388 = vadd.f32 0.0, %v5387
        %v5389 = vpop.f32.mrb[0].mxu0
        %v5390 = vadd.f32 0.0, %v5389
        %5391 = vmatprep.mubr.f32.mxu0 0.0
        %5392 = vmatmul.mubr.f32.gmra.mrb[0].mxu0 %v5022
        %v5393 = vpop.f32.mrb[0].mxu0
        %v5394 = vadd.f32 0.0, %v5393
        %v5395 = vpop.f32.mrb[0].mxu0
        %v5396 = vadd.f32 0.0, %v5395
        %5397 = vmatprep.mubr.f32.mxu0 0.0
        %5398 = vmatmul.mubr.f32.gmra.mrb[0].mxu0 %v5025
        %v5399 = vpop.f32.mrb[0].mxu0
        %v5400 = vadd.f32 0.0, %v5399
        %v5401 = vpop.f32.mrb[0].mxu0
        %v5402 = vadd.f32 0.0, %v5401
        %5403 = vmatprep.mubr.f32.mxu0 0.0
        %5404 = vmatmul.mubr.f32.gmra.mrb[0].mxu0 %v5028
        %v5405 = vpop.f32.mrb[0].mxu0
        %v5406 = vadd.f32 0.0, %v5405
        %v5407 = vpop.f32.mrb[0].mxu0
        %v5408 = vadd.f32 0.0, %v5407
        %5409 = vmatprep.mubr.f32.mxu0 0.0
        %5410 = vmatmul.mubr.f32.gmra.mrb[0].mxu0 %v5031
        %v5411 = vpop.f32.mrb[0].mxu0
        %v5412 = vadd.f32 0.0, %v5411
        %v5413 = vpop.f32.mrb[0].mxu0
        %v5414 = vadd.f32 0.0, %v5413
        %5415 = vmatprep.mubr.f32.mxu0 0.0
        %5416 = vmatmul.mubr.f32.gmra.mrb[0].mxu0 %v5034
        %v5417 = vpop.f32.mrb[0].mxu0
        %v5418 = vadd.f32 0.0, %v5417
        %v5419 = vpop.f32.mrb[0].mxu0
        %v5420 = vadd.f32 0.0, %v5419
        %5421 = vmatprep.mubr.f32.mxu0 0.0
        %5422 = vmatmul.mubr.f32.gmra.mrb[0].mxu0 %v5037
        %v5423 = vpop.f32.mrb[0].mxu0
        %v5424 = vadd.f32 0.0, %v5423
        %v5425 = vpop.f32.mrb[0].mxu0
        %v5426 = vadd.f32 0.0, %v5425
        %5427 = vmatprep.mubr.f32.mxu0 0.0
        %5428 = vmatmul.mubr.f32.gmra.mrb[0].mxu0 %v5040
        %v5429 = vpop.f32.mrb[0].mxu0
        %v5430 = vadd.f32 0.0, %v5429
        %v5431 = vpop.f32.mrb[0].mxu0
        %v5432 = vadd.f32 0.0, %v5431
        %5433 = vmatprep.mubr.f32.mxu0 0.0
        %5434 = vmatmul.mubr.f32.gmra.mrb[0].mxu0 %v5043
        %v5435 = vpop.f32.mrb[0].mxu0
        %v5436 = vadd.f32 0.0, %v5435
        %v5437 = vpop.f32.mrb[0].mxu0
        %v5438 = vadd.f32 0.0, %v5437
        %5439 = vmatprep.mubr.f32.mxu0 0.0
        %5440 = vmatmul.mubr.f32.gmra.mrb[0].mxu0 %v5046
        %v5441 = vpop.f32.mrb[0].mxu0
        %v5442 = vadd.f32 0.0, %v5441
        %v5443 = vpop.f32.mrb[0].mxu0
        %v5444 = vadd.f32 0.0, %v5443
        %5445 = vmatprep.mubr.f32.mxu0 0.0
        %5446 = vmatmul.mubr.f32.gmra.mrb[0].mxu0 %v5049
        %v5447 = vpop.f32.mrb[0].mxu0
        %v5448 = vadd.f32 0.0, %v5447
        %v5449 = vpop.f32.mrb[0].mxu0
        %v5450 = vadd.f32 0.0, %v5449
        %5451 = vmatprep.mubr.f32.mxu0 0.0
        %5452 = vmatmul.mubr.f32.gmra.mrb[0].mxu0 %v5052
        %v5453 = vpop.f32.mrb[0].mxu0
        %v5454 = vadd.f32 0.0, %v5453
        %v5455 = vpop.f32.mrb[0].mxu0
        %v5456 = vadd.f32 0.0, %v5455
        %5457 = vmatprep.mubr.f32.mxu0 0.0
        %5458 = vmatmul.mubr.f32.gmra.mrb[0].mxu0 %v5055
        %v5459 = vpop.f32.mrb[0].mxu0
        %v5460 = vadd.f32 0.0, %v5459
        %v5461 = vpop.f32.mrb[0].mxu0
        %v5462 = vadd.f32 0.0, %v5461
        %5463 = vmatprep.mubr.f32.mxu0 0.0
        %5464 = vmatmul.mubr.f32.gmra.mrb[0].mxu0 %v5058
        %v5465 = vpop.f32.mrb[0].mxu0
        %v5466 = vadd.f32 0.0, %v5465
        %v5467 = vpop.f32.mrb[0].mxu0
        %v5468 = vadd.f32 0.0, %v5467
        %5469 = vmatprep.mubr.f32.mxu0 0.0
        %5470 = vmatmul.mubr.f32.gmra.mrb[0].mxu0 %v5061
        %v5471 = vpop.f32.mrb[0].mxu0
        %v5472 = vadd.f32 0.0, %v5471
        %v5473 = vpop.f32.mrb[0].mxu0
        %v5474 = vadd.f32 0.0, %v5473
        %5475 = vmatprep.mubr.f32.mxu0 0.0
        %5476 = vmatmul.mubr.f32.gmra.mrb[0].mxu0 %v5064
        %v5477 = vpop.f32.mrb[0].mxu0
        %v5478 = vadd.f32 0.0, %v5477
        %v5479 = vpop.f32.mrb[0].mxu0
        %v5480 = vadd.f32 0.0, %v5479
        %5481 = vmatprep.mubr.f32.mxu0 0.0
        %5482 = vmatmul.mubr.f32.gmra.mrb[0].mxu0 %v5067
        %v5483 = vpop.f32.mrb[0].mxu0
        %v5484 = vadd.f32 0.0, %v5483
        %v5485 = vpop.f32.mrb[0].mxu0
        %v5486 = vadd.f32 0.0, %v5485
        %5487 = vmatprep.mubr.f32.mxu0 0.0
        %5488 = vmatmul.mubr.f32.gmra.mrb[0].mxu0 %v5070
        %v5489 = vpop.f32.mrb[0].mxu0
        %v5490 = vadd.f32 0.0, %v5489
        %v5491 = vpop.f32.mrb[0].mxu0
        %v5492 = vadd.f32 0.0, %v5491
        %5493 = vmatprep.mubr.f32.mxu0 0.0
        %5494 = vmatmul.mubr.f32.gmra.mrb[0].mxu0 %v5073
        %v5495 = vpop.f32.mrb[0].mxu0
        %v5496 = vadd.f32 0.0, %v5495
        %v5497 = vpop.f32.mrb[0].mxu0
        %v5498 = vadd.f32 0.0, %v5497
        %5499 = vmatprep.mubr.f32.mxu0 0.0
        %5500 = vmatmul.mubr.f32.gmra.mrb[0].mxu0 %v5076
        %v5501 = vpop.f32.mrb[0].mxu0
        %v5502 = vadd.f32 0.0, %v5501
        %v5503 = vpop.f32.mrb[0].mxu0
        %v5504 = vadd.f32 0.0, %v5503
        %5505 = vmatprep.mubr.f32.mxu0 0.0
        %5506 = vmatmul.mubr.f32.gmra.mrb[0].mxu0 %v5079
        %v5507 = vpop.f32.mrb[0].mxu0
        %v5508 = vadd.f32 0.0, %v5507
        %v5509 = vpop.f32.mrb[0].mxu0
        %v5510 = vadd.f32 0.0, %v5509
        %5511 = vmatprep.mubr.f32.mxu0 0.0
        %5512 = vmatmul.mubr.f32.gmra.mrb[0].mxu0 %v5082
        %v5513 = vpop.f32.mrb[0].mxu0
        %v5514 = vadd.f32 0.0, %v5513
        %v5515 = vpop.f32.mrb[0].mxu0
        %v5516 = vadd.f32 0.0, %v5515
        %5517 = vmatprep.mubr.f32.mxu0 0.0
        %5518 = vmatmul.mubr.f32.gmra.mrb[0].mxu0 %v5085
        %v5519 = vpop.f32.mrb[0].mxu0
        %v5520 = vadd.f32 0.0, %v5519
        %v5521 = vpop.f32.mrb[0].mxu0
        %v5522 = vadd.f32 0.0, %v5521
        %5523 = vmatprep.mubr.f32.mxu0 0.0
        %5524 = vmatmul.mubr.f32.gmra.mrb[0].mxu0 %v5088
        %v5525 = vpop.f32.mrb[0].mxu0
        %v5526 = vadd.f32 0.0, %v5525
        %v5527 = vpop.f32.mrb[0].mxu0
        %v5528 = vadd.f32 0.0, %v5527
        %5529 = vmatprep.mubr.f32.mxu0 0.0
        %5530 = vmatmul.mubr.f32.gmra.mrb[0].mxu0 %v5091
        %v5531 = vpop.f32.mrb[0].mxu0
        %v5532 = vadd.f32 0.0, %v5531
        %v5533 = vpop.f32.mrb[0].mxu0
        %v5534 = vadd.f32 0.0, %v5533
        %5535 = vmatprep.mubr.f32.mxu0 0.0
        %5536 = vmatmul.mubr.f32.gmra.mrb[0].mxu0 %v5094
        %v5537 = vpop.f32.mrb[0].mxu0
        %v5538 = vadd.f32 0.0, %v5537
        %v5539 = vpop.f32.mrb[0].mxu0
        %v5540 = vadd.f32 0.0, %v5539
        %5541 = vmatprep.mubr.f32.mxu0 0.0
        %5542 = vmatmul.mubr.f32.gmra.mrb[0].mxu0 %v5097
        %v5543 = vpop.f32.mrb[0].mxu0
        %v5544 = vadd.f32 0.0, %v5543
        %v5545 = vpop.f32.mrb[0].mxu0
        %v5546 = vadd.f32 0.0, %v5545
        %5547 = vdwg.mxu0
        %5548 = vmatprep.subr.mxu0 0.0
        %5549 = vmatpush1.msra.mxu0 %v4902
        %5550 = vmatprep.subr.mxu0 0.0
        %5551 = vmatpush1.msra.mxu0 %v4905
        %5552 = vmatprep.subr.mxu0 0.0
        %5553 = vmatpush1.msra.mxu0 0.0
        %5554 = vmatprep.subr.mxu0 0.0
        %5555 = vmatpush1.msra.mxu0 0.0
        %5556 = vmatprep.subr.mxu0 0.0
        %5557 = vmatpush1.msra.mxu0 0.0
        %5558 = vmatprep.subr.mxu0 0.0
        %5559 = vmatpush1.msra.mxu0 0.0
        %5560 = vmatprep.subr.mxu0 0.0
        %5561 = vmatpush1.msra.mxu0 0.0
        %5562 = vmatprep.subr.mxu0 0.0
        %5563 = vmatpush1.msra.mxu0 0.0
        %5564 = vmatprep.subr.mxu0 0.0
        %5565 = vmatpush1.msra.mxu0 0.0
        %5566 = vmatprep.subr.mxu0 0.0
        %5567 = vmatpush1.msra.mxu0 0.0
        %5568 = vmatprep.subr.mxu0 0.0
        %5569 = vmatpush1.msra.mxu0 0.0
        %5570 = vmatprep.subr.mxu0 0.0
        %5571 = vmatpush1.msra.mxu0 0.0
        %5572 = vmatprep.subr.mxu0 0.0
        %5573 = vmatpush1.msra.mxu0 0.0
        %5574 = vmatprep.subr.mxu0 0.0
        %5575 = vmatpush1.msra.mxu0 0.0
        %5576 = vmatprep.subr.mxu0 0.0
        %5577 = vmatpush1.msra.mxu0 0.0
        %5578 = vmatprep.subr.mxu0 0.0
        %5579 = vmatpush1.msra.mxu0 0.0
        %5580 = vmatprep.subr.mxu0 0.0
        %5581 = vmatpush1.msra.mxu0 0.0
        %5582 = vmatprep.subr.mxu0 0.0
        %5583 = vmatpush1.msra.mxu0 0.0
        %5584 = vmatprep.subr.mxu0 0.0
        %5585 = vmatpush1.msra.mxu0 0.0
        %5586 = vmatprep.subr.mxu0 0.0
        %5587 = vmatpush1.msra.mxu0 0.0
        %5588 = vmatprep.subr.mxu0 0.0
        %5589 = vmatpush1.msra.mxu0 0.0
        %5590 = vmatprep.subr.mxu0 0.0
        %5591 = vmatpush1.msra.mxu0 0.0
        %5592 = vmatprep.subr.mxu0 0.0
        %5593 = vmatpush1.msra.mxu0 0.0
        %5594 = vmatprep.subr.mxu0 0.0
        %5595 = vmatpush1.msra.mxu0 0.0
        %5596 = vmatprep.subr.mxu0 0.0
        %5597 = vmatpush1.msra.mxu0 0.0
        %5598 = vmatprep.subr.mxu0 0.0
        %5599 = vmatpush1.msra.mxu0 0.0
        %5600 = vmatprep.subr.mxu0 0.0
        %5601 = vmatpush1.msra.mxu0 0.0
        %5602 = vmatprep.subr.mxu0 0.0
        %5603 = vmatpush1.msra.mxu0 0.0
        %5604 = vmatprep.subr.mxu0 0.0
        %5605 = vmatpush1.msra.mxu0 0.0
        %5606 = vmatprep.subr.mxu0 0.0
        %5607 = vmatpush1.msra.mxu0 0.0
        %5608 = vmatprep.subr.mxu0 0.0
        %5609 = vmatpush1.msra.mxu0 0.0
        %5610 = vmatprep.subr.mxu0 0.0
        %5611 = vmatpush1.msra.mxu0 0.0
        %5612 = vmatprep.mubr.f32.mxu0 0.0
        %5613 = vmatmul.mubr.f32.gmra.mrb[0].mxu0 %v4908
        %v5614 = vpop.f32.mrb[0].mxu0
        %v5615 = vadd.f32 0.0, %v5614
        %v5616 = vpop.f32.mrb[0].mxu0
        %5617 = vmatprep.mubr.f32.mxu0 0.0
        %5618 = vmatmul.mubr.f32.gmra.mrb[0].mxu0 %v4911
        %v5619 = vpop.f32.mrb[0].mxu0
        %v5620 = vadd.f32 0.0, %v5619
        %v5621 = vpop.f32.mrb[0].mxu0
        %5622 = vmatprep.mubr.f32.mxu0 0.0
        %5623 = vmatmul.mubr.f32.gmra.mrb[0].mxu0 %v4914
        %v5624 = vpop.f32.mrb[0].mxu0
        %v5625 = vadd.f32 0.0, %v5624
        %v5626 = vpop.f32.mrb[0].mxu0
        %5627 = vmatprep.mubr.f32.mxu0 0.0
        %5628 = vmatmul.mubr.f32.gmra.mrb[0].mxu0 %v4917
        %v5629 = vpop.f32.mrb[0].mxu0
        %v5630 = vadd.f32 0.0, %v5629
        %v5631 = vpop.f32.mrb[0].mxu0
        %5632 = vmatprep.mubr.f32.mxu0 0.0
        %5633 = vmatmul.mubr.f32.gmra.mrb[0].mxu0 %v4920
        %v5634 = vpop.f32.mrb[0].mxu0
        %v5635 = vadd.f32 0.0, %v5634
        %v5636 = vpop.f32.mrb[0].mxu0
        %5637 = vmatprep.mubr.f32.mxu0 0.0
        %5638 = vmatmul.mubr.f32.gmra.mrb[0].mxu0 %v4923
        %v5639 = vpop.f32.mrb[0].mxu0
        %v5640 = vadd.f32 0.0, %v5639
        %v5641 = vpop.f32.mrb[0].mxu0
        %5642 = vmatprep.mubr.f32.mxu0 0.0
        %5643 = vmatmul.mubr.f32.gmra.mrb[0].mxu0 %v4926
        %v5644 = vpop.f32.mrb[0].mxu0
        %v5645 = vadd.f32 0.0, %v5644
        %v5646 = vpop.f32.mrb[0].mxu0
        %5647 = vmatprep.mubr.f32.mxu0 0.0
        %5648 = vmatmul.mubr.f32.gmra.mrb[0].mxu0 %v4929
        %v5649 = vpop.f32.mrb[0].mxu0
        %v5650 = vadd.f32 0.0, %v5649
        %v5651 = vpop.f32.mrb[0].mxu0
        %5652 = vmatprep.mubr.f32.mxu0 0.0
        %5653 = vmatmul.mubr.f32.gmra.mrb[0].mxu0 %v4932
        %v5654 = vpop.f32.mrb[0].mxu0
        %v5655 = vadd.f32 0.0, %v5654
        %v5656 = vpop.f32.mrb[0].mxu0
        %5657 = vmatprep.mubr.f32.mxu0 0.0
        %5658 = vmatmul.mubr.f32.gmra.mrb[0].mxu0 %v4935
        %v5659 = vpop.f32.mrb[0].mxu0
        %v5660 = vadd.f32 0.0, %v5659
        %v5661 = vpop.f32.mrb[0].mxu0
        %5662 = vmatprep.mubr.f32.mxu0 0.0
        %5663 = vmatmul.mubr.f32.gmra.mrb[0].mxu0 %v4938
        %v5664 = vpop.f32.mrb[0].mxu0
        %v5665 = vadd.f32 0.0, %v5664
        %v5666 = vpop.f32.mrb[0].mxu0
        %5667 = vmatprep.mubr.f32.mxu0 0.0
        %5668 = vmatmul.mubr.f32.gmra.mrb[0].mxu0 %v4941
        %v5669 = vpop.f32.mrb[0].mxu0
        %v5670 = vadd.f32 0.0, %v5669
        %v5671 = vpop.f32.mrb[0].mxu0
        %5672 = vmatprep.mubr.f32.mxu0 0.0
        %5673 = vmatmul.mubr.f32.gmra.mrb[0].mxu0 %v4944
        %v5674 = vpop.f32.mrb[0].mxu0
        %v5675 = vadd.f32 0.0, %v5674
        %v5676 = vpop.f32.mrb[0].mxu0
        %5677 = vmatprep.mubr.f32.mxu0 0.0
        %5678 = vmatmul.mubr.f32.gmra.mrb[0].mxu0 %v4947
        %v5679 = vpop.f32.mrb[0].mxu0
        %v5680 = vadd.f32 0.0, %v5679
        %v5681 = vpop.f32.mrb[0].mxu0
        %5682 = vmatprep.mubr.f32.mxu0 0.0
        %5683 = vmatmul.mubr.f32.gmra.mrb[0].mxu0 %v4950
        %v5684 = vpop.f32.mrb[0].mxu0
        %v5685 = vadd.f32 0.0, %v5684
        %v5686 = vpop.f32.mrb[0].mxu0
        %5687 = vmatprep.mubr.f32.mxu0 0.0
        %5688 = vmatmul.mubr.f32.gmra.mrb[0].mxu0 %v4953
        %v5689 = vpop.f32.mrb[0].mxu0
        %v5690 = vadd.f32 0.0, %v5689
        %v5691 = vpop.f32.mrb[0].mxu0
        %5692 = vmatprep.mubr.f32.mxu0 0.0
        %5693 = vmatmul.mubr.f32.gmra.mrb[0].mxu0 %v4956
        %v5694 = vpop.f32.mrb[0].mxu0
        %v5695 = vadd.f32 0.0, %v5694
        %v5696 = vpop.f32.mrb[0].mxu0
        %5697 = vmatprep.mubr.f32.mxu0 0.0
        %5698 = vmatmul.mubr.f32.gmra.mrb[0].mxu0 %v4959
        %v5699 = vpop.f32.mrb[0].mxu0
        %v5700 = vadd.f32 0.0, %v5699
        %v5701 = vpop.f32.mrb[0].mxu0
        %5702 = vmatprep.mubr.f32.mxu0 0.0
        %5703 = vmatmul.mubr.f32.gmra.mrb[0].mxu0 %v4962
        %v5704 = vpop.f32.mrb[0].mxu0
        %v5705 = vadd.f32 0.0, %v5704
        %v5706 = vpop.f32.mrb[0].mxu0
        %5707 = vmatprep.mubr.f32.mxu0 0.0
        %5708 = vmatmul.mubr.f32.gmra.mrb[0].mxu0 %v4965
        %v5709 = vpop.f32.mrb[0].mxu0
        %v5710 = vadd.f32 0.0, %v5709
        %v5711 = vpop.f32.mrb[0].mxu0
        %5712 = vmatprep.mubr.f32.mxu0 0.0
        %5713 = vmatmul.mubr.f32.gmra.mrb[0].mxu0 %v4968
        %v5714 = vpop.f32.mrb[0].mxu0
        %v5715 = vadd.f32 0.0, %v5714
        %v5716 = vpop.f32.mrb[0].mxu0
        %5717 = vmatprep.mubr.f32.mxu0 0.0
        %5718 = vmatmul.mubr.f32.gmra.mrb[0].mxu0 %v4971
        %v5719 = vpop.f32.mrb[0].mxu0
        %v5720 = vadd.f32 0.0, %v5719
        %v5721 = vpop.f32.mrb[0].mxu0
        %5722 = vmatprep.mubr.f32.mxu0 0.0
        %5723 = vmatmul.mubr.f32.gmra.mrb[0].mxu0 %v4974
        %v5724 = vpop.f32.mrb[0].mxu0
        %v5725 = vadd.f32 0.0, %v5724
        %v5726 = vpop.f32.mrb[0].mxu0
        %5727 = vmatprep.mubr.f32.mxu0 0.0
        %5728 = vmatmul.mubr.f32.gmra.mrb[0].mxu0 %v4977
        %v5729 = vpop.f32.mrb[0].mxu0
        %v5730 = vadd.f32 0.0, %v5729
        %v5731 = vpop.f32.mrb[0].mxu0
        %5732 = vmatprep.mubr.f32.mxu0 0.0
        %5733 = vmatmul.mubr.f32.gmra.mrb[0].mxu0 %v4980
        %v5734 = vpop.f32.mrb[0].mxu0
        %v5735 = vadd.f32 0.0, %v5734
        %v5736 = vpop.f32.mrb[0].mxu0
        %5737 = vmatprep.mubr.f32.mxu0 0.0
        %5738 = vmatmul.mubr.f32.gmra.mrb[0].mxu0 %v4983
        %v5739 = vpop.f32.mrb[0].mxu0
        %v5740 = vadd.f32 0.0, %v5739
        %v5741 = vpop.f32.mrb[0].mxu0
        %5742 = vmatprep.mubr.f32.mxu0 0.0
        %5743 = vmatmul.mubr.f32.gmra.mrb[0].mxu0 %v4986
        %v5744 = vpop.f32.mrb[0].mxu0
        %v5745 = vadd.f32 0.0, %v5744
        %v5746 = vpop.f32.mrb[0].mxu0
        %5747 = vmatprep.mubr.f32.mxu0 0.0
        %5748 = vmatmul.mubr.f32.gmra.mrb[0].mxu0 %v4989
        %v5749 = vpop.f32.mrb[0].mxu0
        %v5750 = vadd.f32 0.0, %v5749
        %v5751 = vpop.f32.mrb[0].mxu0
        %5752 = vmatprep.mubr.f32.mxu0 0.0
        %5753 = vmatmul.mubr.f32.gmra.mrb[0].mxu0 %v4992
        %v5754 = vpop.f32.mrb[0].mxu0
        %v5755 = vadd.f32 0.0, %v5754
        %v5756 = vpop.f32.mrb[0].mxu0
        %5757 = vmatprep.mubr.f32.mxu0 0.0
        %5758 = vmatmul.mubr.f32.gmra.mrb[0].mxu0 %v4995
        %v5759 = vpop.f32.mrb[0].mxu0
        %v5760 = vadd.f32 0.0, %v5759
        %v5761 = vpop.f32.mrb[0].mxu0
        %5762 = vmatprep.mubr.f32.mxu0 0.0
        %5763 = vmatmul.mubr.f32.gmra.mrb[0].mxu0 %v4998
        %v5764 = vpop.f32.mrb[0].mxu0
        %v5765 = vadd.f32 0.0, %v5764
        %v5766 = vpop.f32.mrb[0].mxu0
        %5767 = vmatprep.mubr.f32.mxu0 0.0
        %5768 = vmatmul.mubr.f32.gmra.mrb[0].mxu0 %v5001
        %v5769 = vpop.f32.mrb[0].mxu0
        %v5770 = vadd.f32 0.0, %v5769
        %v5771 = vpop.f32.mrb[0].mxu0
        %5772 = vmatprep.mubr.f32.mxu0 0.0
        %5773 = vmatmul.mubr.f32.gmra.mrb[0].mxu0 %v5004
        %v5774 = vpop.f32.mrb[0].mxu0
        %v5775 = vadd.f32 0.0, %v5774
        %v5776 = vpop.f32.mrb[0].mxu0
        %5777 = vmatprep.mubr.f32.mxu0 0.0
        %5778 = vmatmul.mubr.f32.gmra.mrb[0].mxu0 %v5007
        %v5779 = vpop.f32.mrb[0].mxu0
        %v5780 = vadd.f32 0.0, %v5779
        %v5781 = vpop.f32.mrb[0].mxu0
        %5782 = vmatprep.mubr.f32.mxu0 0.0
        %5783 = vmatmul.mubr.f32.gmra.mrb[0].mxu0 %v5010
        %v5784 = vpop.f32.mrb[0].mxu0
        %v5785 = vadd.f32 0.0, %v5784
        %v5786 = vpop.f32.mrb[0].mxu0
        %5787 = vmatprep.mubr.f32.mxu0 0.0
        %5788 = vmatmul.mubr.f32.gmra.mrb[0].mxu0 %v5013
        %v5789 = vpop.f32.mrb[0].mxu0
        %v5790 = vadd.f32 0.0, %v5789
        %v5791 = vpop.f32.mrb[0].mxu0
        %5792 = vmatprep.mubr.f32.mxu0 0.0
        %5793 = vmatmul.mubr.f32.gmra.mrb[0].mxu0 %v5016
        %v5794 = vpop.f32.mrb[0].mxu0
        %v5795 = vadd.f32 0.0, %v5794
        %v5796 = vpop.f32.mrb[0].mxu0
        %5797 = vmatprep.mubr.f32.mxu0 0.0
        %5798 = vmatmul.mubr.f32.gmra.mrb[0].mxu0 %v5019
        %v5799 = vpop.f32.mrb[0].mxu0
        %v5800 = vadd.f32 0.0, %v5799
        %v5801 = vpop.f32.mrb[0].mxu0
        %5802 = vmatprep.mubr.f32.mxu0 0.0
        %5803 = vmatmul.mubr.f32.gmra.mrb[0].mxu0 %v5022
        %v5804 = vpop.f32.mrb[0].mxu0
        %v5805 = vadd.f32 0.0, %v5804
        %v5806 = vpop.f32.mrb[0].mxu0
        %5807 = vmatprep.mubr.f32.mxu0 0.0
        %5808 = vmatmul.mubr.f32.gmra.mrb[0].mxu0 %v5025
        %v5809 = vpop.f32.mrb[0].mxu0
        %v5810 = vadd.f32 0.0, %v5809
        %v5811 = vpop.f32.mrb[0].mxu0
        %5812 = vmatprep.mubr.f32.mxu0 0.0
        %5813 = vmatmul.mubr.f32.gmra.mrb[0].mxu0 %v5028
        %v5814 = vpop.f32.mrb[0].mxu0
        %v5815 = vadd.f32 0.0, %v5814
        %v5816 = vpop.f32.mrb[0].mxu0
        %5817 = vmatprep.mubr.f32.mxu0 0.0
        %5818 = vmatmul.mubr.f32.gmra.mrb[0].mxu0 %v5031
        %v5819 = vpop.f32.mrb[0].mxu0
        %v5820 = vadd.f32 0.0, %v5819
        %v5821 = vpop.f32.mrb[0].mxu0
        %5822 = vmatprep.mubr.f32.mxu0 0.0
        %5823 = vmatmul.mubr.f32.gmra.mrb[0].mxu0 %v5034
        %v5824 = vpop.f32.mrb[0].mxu0
        %v5825 = vadd.f32 0.0, %v5824
        %v5826 = vpop.f32.mrb[0].mxu0
        %5827 = vmatprep.mubr.f32.mxu0 0.0
        %5828 = vmatmul.mubr.f32.gmra.mrb[0].mxu0 %v5037
        %v5829 = vpop.f32.mrb[0].mxu0
        %v5830 = vadd.f32 0.0, %v5829
        %v5831 = vpop.f32.mrb[0].mxu0
        %5832 = vmatprep.mubr.f32.mxu0 0.0
        %5833 = vmatmul.mubr.f32.gmra.mrb[0].mxu0 %v5040
        %v5834 = vpop.f32.mrb[0].mxu0
        %v5835 = vadd.f32 0.0, %v5834
        %v5836 = vpop.f32.mrb[0].mxu0
        %5837 = vmatprep.mubr.f32.mxu0 0.0
        %5838 = vmatmul.mubr.f32.gmra.mrb[0].mxu0 %v5043
        %v5839 = vpop.f32.mrb[0].mxu0
        %v5840 = vadd.f32 0.0, %v5839
        %v5841 = vpop.f32.mrb[0].mxu0
        %5842 = vmatprep.mubr.f32.mxu0 0.0
        %5843 = vmatmul.mubr.f32.gmra.mrb[0].mxu0 %v5046
        %v5844 = vpop.f32.mrb[0].mxu0
        %v5845 = vadd.f32 0.0, %v5844
        %v5846 = vpop.f32.mrb[0].mxu0
        %5847 = vmatprep.mubr.f32.mxu0 0.0
        %5848 = vmatmul.mubr.f32.gmra.mrb[0].mxu0 %v5049
        %v5849 = vpop.f32.mrb[0].mxu0
        %v5850 = vadd.f32 0.0, %v5849
        %v5851 = vpop.f32.mrb[0].mxu0
        %5852 = vmatprep.mubr.f32.mxu0 0.0
        %5853 = vmatmul.mubr.f32.gmra.mrb[0].mxu0 %v5052
        %v5854 = vpop.f32.mrb[0].mxu0
        %v5855 = vadd.f32 0.0, %v5854
        %v5856 = vpop.f32.mrb[0].mxu0
        %5857 = vmatprep.mubr.f32.mxu0 0.0
        %5858 = vmatmul.mubr.f32.gmra.mrb[0].mxu0 %v5055
        %v5859 = vpop.f32.mrb[0].mxu0
        %v5860 = vadd.f32 0.0, %v5859
        %v5861 = vpop.f32.mrb[0].mxu0
        %5862 = vmatprep.mubr.f32.mxu0 0.0
        %5863 = vmatmul.mubr.f32.gmra.mrb[0].mxu0 %v5058
        %v5864 = vpop.f32.mrb[0].mxu0
        %v5865 = vadd.f32 0.0, %v5864
        %v5866 = vpop.f32.mrb[0].mxu0
        %5867 = vmatprep.mubr.f32.mxu0 0.0
        %5868 = vmatmul.mubr.f32.gmra.mrb[0].mxu0 %v5061
        %v5869 = vpop.f32.mrb[0].mxu0
        %v5870 = vadd.f32 0.0, %v5869
        %v5871 = vpop.f32.mrb[0].mxu0
        %5872 = vmatprep.mubr.f32.mxu0 0.0
        %5873 = vmatmul.mubr.f32.gmra.mrb[0].mxu0 %v5064
        %v5874 = vpop.f32.mrb[0].mxu0
        %v5875 = vadd.f32 0.0, %v5874
        %v5876 = vpop.f32.mrb[0].mxu0
        %5877 = vmatprep.mubr.f32.mxu0 0.0
        %5878 = vmatmul.mubr.f32.gmra.mrb[0].mxu0 %v5067
        %v5879 = vpop.f32.mrb[0].mxu0
        %v5880 = vadd.f32 0.0, %v5879
        %v5881 = vpop.f32.mrb[0].mxu0
        %5882 = vmatprep.mubr.f32.mxu0 0.0
        %5883 = vmatmul.mubr.f32.gmra.mrb[0].mxu0 %v5070
        %v5884 = vpop.f32.mrb[0].mxu0
        %v5885 = vadd.f32 0.0, %v5884
        %v5886 = vpop.f32.mrb[0].mxu0
        %5887 = vmatprep.mubr.f32.mxu0 0.0
        %5888 = vmatmul.mubr.f32.gmra.mrb[0].mxu0 %v5073
        %v5889 = vpop.f32.mrb[0].mxu0
        %v5890 = vadd.f32 0.0, %v5889
        %v5891 = vpop.f32.mrb[0].mxu0
        %5892 = vmatprep.mubr.f32.mxu0 0.0
        %5893 = vmatmul.mubr.f32.gmra.mrb[0].mxu0 %v5076
        %v5894 = vpop.f32.mrb[0].mxu0
        %v5895 = vadd.f32 0.0, %v5894
        %v5896 = vpop.f32.mrb[0].mxu0
        %5897 = vmatprep.mubr.f32.mxu0 0.0
        %5898 = vmatmul.mubr.f32.gmra.mrb[0].mxu0 %v5079
        %v5899 = vpop.f32.mrb[0].mxu0
        %v5900 = vadd.f32 0.0, %v5899
        %v5901 = vpop.f32.mrb[0].mxu0
        %5902 = vmatprep.mubr.f32.mxu0 0.0
        %5903 = vmatmul.mubr.f32.gmra.mrb[0].mxu0 %v5082
        %v5904 = vpop.f32.mrb[0].mxu0
        %v5905 = vadd.f32 0.0, %v5904
        %v5906 = vpop.f32.mrb[0].mxu0
        %5907 = vmatprep.mubr.f32.mxu0 0.0
        %5908 = vmatmul.mubr.f32.gmra.mrb[0].mxu0 %v5085
        %v5909 = vpop.f32.mrb[0].mxu0
        %v5910 = vadd.f32 0.0, %v5909
        %v5911 = vpop.f32.mrb[0].mxu0
        %5912 = vmatprep.mubr.f32.mxu0 0.0
        %5913 = vmatmul.mubr.f32.gmra.mrb[0].mxu0 %v5088
        %v5914 = vpop.f32.mrb[0].mxu0
        %v5915 = vadd.f32 0.0, %v5914
        %v5916 = vpop.f32.mrb[0].mxu0
        %5917 = vmatprep.mubr.f32.mxu0 0.0
        %5918 = vmatmul.mubr.f32.gmra.mrb[0].mxu0 %v5091
        %v5919 = vpop.f32.mrb[0].mxu0
        %v5920 = vadd.f32 0.0, %v5919
        %v5921 = vpop.f32.mrb[0].mxu0
        %5922 = vmatprep.mubr.f32.mxu0 0.0
        %5923 = vmatmul.mubr.f32.gmra.mrb[0].mxu0 %v5094
        %v5924 = vpop.f32.mrb[0].mxu0
        %v5925 = vadd.f32 0.0, %v5924
        %v5926 = vpop.f32.mrb[0].mxu0
        %5927 = vmatprep.mubr.f32.mxu0 0.0
        %5928 = vmatmul.mubr.f32.gmra.mrb[0].mxu0 %v5097
        %v5929 = vpop.f32.mrb[0].mxu0
        %v5930 = vadd.f32 0.0, %v5929
        %v5931 = vpop.f32.mrb[0].mxu0
        %5932 = vdwg.mxu0
        %5933 = vrot.lane.b32.xlu0 %v4646, 32
        %v5934 = vpop.permute.xlu0 %5933
        %5935 = vrot.lane.b32.xlu0 %v4649, 32
        %v5936 = vpop.permute.xlu0 %5935
        %5937 = vrot.lane.b32.xlu0 %v4654, 32
        %v5938 = vpop.permute.xlu0 %5937
        %5939 = vrot.lane.b32.xlu0 %v4657, 32
        %v5940 = vpop.permute.xlu0 %5939
        %5941 = vrot.lane.b32.xlu0 %v4662, 32
        %v5942 = vpop.permute.xlu0 %5941
        %5943 = vrot.lane.b32.xlu0 %v4665, 32
        %v5944 = vpop.permute.xlu0 %5943
        %5945 = vrot.lane.b32.xlu0 %v4670, 32
        %v5946 = vpop.permute.xlu0 %5945
        %5947 = vrot.lane.b32.xlu0 %v4673, 32
        %v5948 = vpop.permute.xlu0 %5947
        %5949 = vrot.lane.b32.xlu0 %v4678, 32
        %v5950 = vpop.permute.xlu0 %5949
        %5951 = vrot.lane.b32.xlu0 %v4681, 32
        %v5952 = vpop.permute.xlu0 %5951
        %5953 = vrot.lane.b32.xlu0 %v4686, 32
        %v5954 = vpop.permute.xlu0 %5953
        %5955 = vrot.lane.b32.xlu0 %v4689, 32
        %v5956 = vpop.permute.xlu0 %5955
        %5957 = vrot.lane.b32.xlu0 %v4694, 32
        %v5958 = vpop.permute.xlu0 %5957
        %5959 = vrot.lane.b32.xlu0 %v4697, 32
        %v5960 = vpop.permute.xlu0 %5959
        %5961 = vrot.lane.b32.xlu0 %v4702, 32
        %v5962 = vpop.permute.xlu0 %5961
        %5963 = vrot.lane.b32.xlu0 %v4705, 32
        %v5964 = vpop.permute.xlu0 %5963
        %5965 = vrot.lane.b32.xlu0 %v4710, 32
        %v5966 = vpop.permute.xlu0 %5965
        %5967 = vrot.lane.b32.xlu0 %v4713, 32
        %v5968 = vpop.permute.xlu0 %5967
        %5969 = vrot.lane.b32.xlu0 %v4718, 32
        %v5970 = vpop.permute.xlu0 %5969
        %5971 = vrot.lane.b32.xlu0 %v4721, 32
        %v5972 = vpop.permute.xlu0 %5971
        %5973 = vrot.lane.b32.xlu0 %v4726, 32
        %v5974 = vpop.permute.xlu0 %5973
        %5975 = vrot.lane.b32.xlu0 %v4729, 32
        %v5976 = vpop.permute.xlu0 %5975
        %5977 = vrot.lane.b32.xlu0 %v4734, 32
        %v5978 = vpop.permute.xlu0 %5977
        %5979 = vrot.lane.b32.xlu0 %v4737, 32
        %v5980 = vpop.permute.xlu0 %5979
        %5981 = vrot.lane.b32.xlu0 %v4742, 32
        %v5982 = vpop.permute.xlu0 %5981
        %5983 = vrot.lane.b32.xlu0 %v4745, 32
        %v5984 = vpop.permute.xlu0 %5983
        %5985 = vrot.lane.b32.xlu0 %v4750, 32
        %v5986 = vpop.permute.xlu0 %5985
        %5987 = vrot.lane.b32.xlu0 %v4753, 32
        %v5988 = vpop.permute.xlu0 %5987
        %5989 = vrot.lane.b32.xlu0 %v4758, 32
        %v5990 = vpop.permute.xlu0 %5989
        %5991 = vrot.lane.b32.xlu0 %v4761, 32
        %v5992 = vpop.permute.xlu0 %5991
        %5993 = vrot.lane.b32.xlu0 %v4766, 32
        %v5994 = vpop.permute.xlu0 %5993
        %5995 = vrot.lane.b32.xlu0 %v4769, 32
        %v5996 = vpop.permute.xlu0 %5995
        %5997 = vrot.lane.b32.xlu0 %v4774, 32
        %v5998 = vpop.permute.xlu0 %5997
        %5999 = vrot.lane.b32.xlu0 %v4777, 32
        %v6000 = vpop.permute.xlu0 %5999
        %6001 = vrot.lane.b32.xlu0 %v4782, 32
        %v6002 = vpop.permute.xlu0 %6001
        %6003 = vrot.lane.b32.xlu0 %v4785, 32
        %v6004 = vpop.permute.xlu0 %6003
        %6005 = vrot.lane.b32.xlu0 %v4790, 32
        %v6006 = vpop.permute.xlu0 %6005
        %6007 = vrot.lane.b32.xlu0 %v4793, 32
        %v6008 = vpop.permute.xlu0 %6007
        %6009 = vrot.lane.b32.xlu0 %v4798, 32
        %v6010 = vpop.permute.xlu0 %6009
        %6011 = vrot.lane.b32.xlu0 %v4801, 32
        %v6012 = vpop.permute.xlu0 %6011
        %6013 = vrot.lane.b32.xlu0 %v4806, 32
        %v6014 = vpop.permute.xlu0 %6013
        %6015 = vrot.lane.b32.xlu0 %v4809, 32
        %v6016 = vpop.permute.xlu0 %6015
        %6017 = vrot.lane.b32.xlu0 %v4814, 32
        %v6018 = vpop.permute.xlu0 %6017
        %6019 = vrot.lane.b32.xlu0 %v4817, 32
        %v6020 = vpop.permute.xlu0 %6019
        %6021 = vrot.lane.b32.xlu0 %v4822, 32
        %v6022 = vpop.permute.xlu0 %6021
        %6023 = vrot.lane.b32.xlu0 %v4825, 32
        %v6024 = vpop.permute.xlu0 %6023
        %6025 = vrot.lane.b32.xlu0 %v4830, 32
        %v6026 = vpop.permute.xlu0 %6025
        %6027 = vrot.lane.b32.xlu0 %v4833, 32
        %v6028 = vpop.permute.xlu0 %6027
        %6029 = vrot.lane.b32.xlu0 %v4838, 32
        %v6030 = vpop.permute.xlu0 %6029
        %6031 = vrot.lane.b32.xlu0 %v4841, 32
        %v6032 = vpop.permute.xlu0 %6031
        %6033 = vrot.lane.b32.xlu0 %v4846, 32
        %v6034 = vpop.permute.xlu0 %6033
        %6035 = vrot.lane.b32.xlu0 %v4849, 32
        %v6036 = vpop.permute.xlu0 %6035
        %6037 = vrot.lane.b32.xlu0 %v4854, 32
        %v6038 = vpop.permute.xlu0 %6037
        %6039 = vrot.lane.b32.xlu0 %v4857, 32
        %v6040 = vpop.permute.xlu0 %6039
        %6041 = vrot.lane.b32.xlu0 %v4862, 32
        %v6042 = vpop.permute.xlu0 %6041
        %6043 = vrot.lane.b32.xlu0 %v4865, 32
        %v6044 = vpop.permute.xlu0 %6043
        %6045 = vrot.lane.b32.xlu0 %v4870, 32
        %v6046 = vpop.permute.xlu0 %6045
        %6047 = vrot.lane.b32.xlu0 %v4873, 32
        %v6048 = vpop.permute.xlu0 %6047
        %6049 = vrot.lane.b32.xlu0 %v4878, 32
        %v6050 = vpop.permute.xlu0 %6049
        %6051 = vrot.lane.b32.xlu0 %v4881, 32
        %v6052 = vpop.permute.xlu0 %6051
        %6053 = vrot.lane.b32.xlu0 %v4886, 32
        %v6054 = vpop.permute.xlu0 %6053
        %6055 = vrot.lane.b32.xlu0 %v4889, 32
        %v6056 = vpop.permute.xlu0 %6055
        %6057 = vrot.lane.b32.xlu0 %v4894, 32
        %v6058 = vpop.permute.xlu0 %6057
        %6059 = vrot.lane.b32.xlu0 %v4897, 32
        %v6060 = vpop.permute.xlu0 %6059
        %v6061 = vmul.f32 %v5166, %v5934
        %v6062 = vmul.f32 %v5172, %v5936
        %v6063 = vmul.f32 %v5178, %v5938
        %v6064 = vmul.f32 %v5184, %v5940
        %v6065 = vmul.f32 %v5190, %v5942
        %v6066 = vmul.f32 %v5196, %v5944
        %v6067 = vmul.f32 %v5202, %v5946
        %v6068 = vmul.f32 %v5208, %v5948
        %v6069 = vmul.f32 %v5214, %v5950
        %v6070 = vmul.f32 %v5220, %v5952
        %v6071 = vmul.f32 %v5226, %v5954
        %v6072 = vmul.f32 %v5232, %v5956
        %v6073 = vmul.f32 %v5238, %v5958
        %v6074 = vmul.f32 %v5244, %v5960
        %v6075 = vmul.f32 %v5250, %v5962
        %v6076 = vmul.f32 %v5256, %v5964
        %v6077 = vmul.f32 %v5262, %v5966
        %v6078 = vmul.f32 %v5268, %v5968
        %v6079 = vmul.f32 %v5274, %v5970
        %v6080 = vmul.f32 %v5280, %v5972
        %v6081 = vmul.f32 %v5286, %v5974
        %v6082 = vmul.f32 %v5292, %v5976
        %v6083 = vmul.f32 %v5298, %v5978
        %v6084 = vmul.f32 %v5304, %v5980
        %v6085 = vmul.f32 %v5310, %v5982
        %v6086 = vmul.f32 %v5316, %v5984
        %v6087 = vmul.f32 %v5322, %v5986
        %v6088 = vmul.f32 %v5328, %v5988
        %v6089 = vmul.f32 %v5334, %v5990
        %v6090 = vmul.f32 %v5340, %v5992
        %v6091 = vmul.f32 %v5346, %v5994
        %v6092 = vmul.f32 %v5352, %v5996
        %v6093 = vmul.f32 %v5358, %v5998
        %v6094 = vmul.f32 %v5364, %v6000
        %v6095 = vmul.f32 %v5370, %v6002
        %v6096 = vmul.f32 %v5376, %v6004
        %v6097 = vmul.f32 %v5382, %v6006
        %v6098 = vmul.f32 %v5388, %v6008
        %v6099 = vmul.f32 %v5394, %v6010
        %v6100 = vmul.f32 %v5400, %v6012
        %v6101 = vmul.f32 %v5406, %v6014
        %v6102 = vmul.f32 %v5412, %v6016
        %v6103 = vmul.f32 %v5418, %v6018
        %v6104 = vmul.f32 %v5424, %v6020
        %v6105 = vmul.f32 %v5430, %v6022
        %v6106 = vmul.f32 %v5436, %v6024
        %v6107 = vmul.f32 %v5442, %v6026
        %v6108 = vmul.f32 %v5448, %v6028
        %v6109 = vmul.f32 %v5454, %v6030
        %v6110 = vmul.f32 %v5460, %v6032
        %v6111 = vmul.f32 %v5466, %v6034
        %v6112 = vmul.f32 %v5472, %v6036
        %v6113 = vmul.f32 %v5478, %v6038
        %v6114 = vmul.f32 %v5484, %v6040
        %v6115 = vmul.f32 %v5490, %v6042
        %v6116 = vmul.f32 %v5496, %v6044
        %v6117 = vmul.f32 %v5502, %v6046
        %v6118 = vmul.f32 %v5508, %v6048
        %v6119 = vmul.f32 %v5514, %v6050
        %v6120 = vmul.f32 %v5520, %v6052
        %v6121 = vmul.f32 %v5526, %v6054
        %v6122 = vmul.f32 %v5532, %v6056
        %v6123 = vmul.f32 %v5538, %v6058
        %v6124 = vmul.f32 %v5544, %v6060
        %v6125 = vadd.f32 %v6061, 0.0
        %v6126 = vadd.f32 %v6062, 0.0
        %v6127 = vadd.f32 %v6063, 0.0
        %v6128 = vadd.f32 %v6064, 0.0
        %v6129 = vadd.f32 %v6065, 0.0
        %v6130 = vadd.f32 %v6066, 0.0
        %v6131 = vadd.f32 %v6067, 0.0
        %v6132 = vadd.f32 %v6068, 0.0
        %v6133 = vadd.f32 %v6069, 0.0
        %v6134 = vadd.f32 %v6070, 0.0
        %v6135 = vadd.f32 %v6071, 0.0
        %v6136 = vadd.f32 %v6072, 0.0
        %v6137 = vadd.f32 %v6073, 0.0
        %v6138 = vadd.f32 %v6074, 0.0
        %v6139 = vadd.f32 %v6075, 0.0
        %v6140 = vadd.f32 %v6076, 0.0
        %v6141 = vadd.f32 %v6077, 0.0
        %v6142 = vadd.f32 %v6078, 0.0
        %v6143 = vadd.f32 %v6079, 0.0
        %v6144 = vadd.f32 %v6080, 0.0
        %v6145 = vadd.f32 %v6081, 0.0
        %v6146 = vadd.f32 %v6082, 0.0
        %v6147 = vadd.f32 %v6083, 0.0
        %v6148 = vadd.f32 %v6084, 0.0
        %v6149 = vadd.f32 %v6085, 0.0
        %v6150 = vadd.f32 %v6086, 0.0
        %v6151 = vadd.f32 %v6087, 0.0
        %v6152 = vadd.f32 %v6088, 0.0
        %v6153 = vadd.f32 %v6089, 0.0
        %v6154 = vadd.f32 %v6090, 0.0
        %v6155 = vadd.f32 %v6091, 0.0
        %v6156 = vadd.f32 %v6092, 0.0
        %v6157 = vadd.f32 %v6093, 0.0
        %v6158 = vadd.f32 %v6094, 0.0
        %v6159 = vadd.f32 %v6095, 0.0
        %v6160 = vadd.f32 %v6096, 0.0
        %v6161 = vadd.f32 %v6097, 0.0
        %v6162 = vadd.f32 %v6098, 0.0
        %v6163 = vadd.f32 %v6099, 0.0
        %v6164 = vadd.f32 %v6100, 0.0
        %v6165 = vadd.f32 %v6101, 0.0
        %v6166 = vadd.f32 %v6102, 0.0
        %v6167 = vadd.f32 %v6103, 0.0
        %v6168 = vadd.f32 %v6104, 0.0
        %v6169 = vadd.f32 %v6105, 0.0
        %v6170 = vadd.f32 %v6106, 0.0
        %v6171 = vadd.f32 %v6107, 0.0
        %v6172 = vadd.f32 %v6108, 0.0
        %v6173 = vadd.f32 %v6109, 0.0
        %v6174 = vadd.f32 %v6110, 0.0
        %v6175 = vadd.f32 %v6111, 0.0
        %v6176 = vadd.f32 %v6112, 0.0
        %v6177 = vadd.f32 %v6113, 0.0
        %v6178 = vadd.f32 %v6114, 0.0
        %v6179 = vadd.f32 %v6115, 0.0
        %v6180 = vadd.f32 %v6116, 0.0
        %v6181 = vadd.f32 %v6117, 0.0
        %v6182 = vadd.f32 %v6118, 0.0
        %v6183 = vadd.f32 %v6119, 0.0
        %v6184 = vadd.f32 %v6120, 0.0
        %v6185 = vadd.f32 %v6121, 0.0
        %v6186 = vadd.f32 %v6122, 0.0
        %v6187 = vadd.f32 %v6123, 0.0
        %v6188 = vadd.f32 %v6124, 0.0
        %v6189 = vmul.f32 %v5168, %v4646
        %v6190 = vmul.f32 %v5174, %v4649
        %v6191 = vmul.f32 %v5180, %v4654
        %v6192 = vmul.f32 %v5186, %v4657
        %v6193 = vmul.f32 %v5192, %v4662
        %v6194 = vmul.f32 %v5198, %v4665
        %v6195 = vmul.f32 %v5204, %v4670
        %v6196 = vmul.f32 %v5210, %v4673
        %v6197 = vmul.f32 %v5216, %v4678
        %v6198 = vmul.f32 %v5222, %v4681
        %v6199 = vmul.f32 %v5228, %v4686
        %v6200 = vmul.f32 %v5234, %v4689
        %v6201 = vmul.f32 %v5240, %v4694
        %v6202 = vmul.f32 %v5246, %v4697
        %v6203 = vmul.f32 %v5252, %v4702
        %v6204 = vmul.f32 %v5258, %v4705
        %v6205 = vmul.f32 %v5264, %v4710
        %v6206 = vmul.f32 %v5270, %v4713
        %v6207 = vmul.f32 %v5276, %v4718
        %v6208 = vmul.f32 %v5282, %v4721
        %v6209 = vmul.f32 %v5288, %v4726
        %v6210 = vmul.f32 %v5294, %v4729
        %v6211 = vmul.f32 %v5300, %v4734
        %v6212 = vmul.f32 %v5306, %v4737
        %v6213 = vmul.f32 %v5312, %v4742
        %v6214 = vmul.f32 %v5318, %v4745
        %v6215 = vmul.f32 %v5324, %v4750
        %v6216 = vmul.f32 %v5330, %v4753
        %v6217 = vmul.f32 %v5336, %v4758
        %v6218 = vmul.f32 %v5342, %v4761
        %v6219 = vmul.f32 %v5348, %v4766
        %v6220 = vmul.f32 %v5354, %v4769
        %v6221 = vmul.f32 %v5360, %v4774
        %v6222 = vmul.f32 %v5366, %v4777
        %v6223 = vmul.f32 %v5372, %v4782
        %v6224 = vmul.f32 %v5378, %v4785
        %v6225 = vmul.f32 %v5384, %v4790
        %v6226 = vmul.f32 %v5390, %v4793
        %v6227 = vmul.f32 %v5396, %v4798
        %v6228 = vmul.f32 %v5402, %v4801
        %v6229 = vmul.f32 %v5408, %v4806
        %v6230 = vmul.f32 %v5414, %v4809
        %v6231 = vmul.f32 %v5420, %v4814
        %v6232 = vmul.f32 %v5426, %v4817
        %v6233 = vmul.f32 %v5432, %v4822
        %v6234 = vmul.f32 %v5438, %v4825
        %v6235 = vmul.f32 %v5444, %v4830
        %v6236 = vmul.f32 %v5450, %v4833
        %v6237 = vmul.f32 %v5456, %v4838
        %v6238 = vmul.f32 %v5462, %v4841
        %v6239 = vmul.f32 %v5468, %v4846
        %v6240 = vmul.f32 %v5474, %v4849
        %v6241 = vmul.f32 %v5480, %v4854
        %v6242 = vmul.f32 %v5486, %v4857
        %v6243 = vmul.f32 %v5492, %v4862
        %v6244 = vmul.f32 %v5498, %v4865
        %v6245 = vmul.f32 %v5504, %v4870
        %v6246 = vmul.f32 %v5510, %v4873
        %v6247 = vmul.f32 %v5516, %v4878
        %v6248 = vmul.f32 %v5522, %v4881
        %v6249 = vmul.f32 %v5528, %v4886
        %v6250 = vmul.f32 %v5534, %v4889
        %v6251 = vmul.f32 %v5540, %v4894
        %v6252 = vmul.f32 %v5546, %v4897
        %v6253 = vadd.f32 %v6125, %v6189
        %v6254 = vadd.f32 %v6126, %v6190
        %v6255 = vadd.f32 %v6127, %v6191
        %v6256 = vadd.f32 %v6128, %v6192
        %v6257 = vadd.f32 %v6129, %v6193
        %v6258 = vadd.f32 %v6130, %v6194
        %v6259 = vadd.f32 %v6131, %v6195
        %v6260 = vadd.f32 %v6132, %v6196
        %v6261 = vadd.f32 %v6133, %v6197
        %v6262 = vadd.f32 %v6134, %v6198
        %v6263 = vadd.f32 %v6135, %v6199
        %v6264 = vadd.f32 %v6136, %v6200
        %v6265 = vadd.f32 %v6137, %v6201
        %v6266 = vadd.f32 %v6138, %v6202
        %v6267 = vadd.f32 %v6139, %v6203
        %v6268 = vadd.f32 %v6140, %v6204
        %v6269 = vadd.f32 %v6141, %v6205
        %v6270 = vadd.f32 %v6142, %v6206
        %v6271 = vadd.f32 %v6143, %v6207
        %v6272 = vadd.f32 %v6144, %v6208
        %v6273 = vadd.f32 %v6145, %v6209
        %v6274 = vadd.f32 %v6146, %v6210
        %v6275 = vadd.f32 %v6147, %v6211
        %v6276 = vadd.f32 %v6148, %v6212
        %v6277 = vadd.f32 %v6149, %v6213
        %v6278 = vadd.f32 %v6150, %v6214
        %v6279 = vadd.f32 %v6151, %v6215
        %v6280 = vadd.f32 %v6152, %v6216
        %v6281 = vadd.f32 %v6153, %v6217
        %v6282 = vadd.f32 %v6154, %v6218
        %v6283 = vadd.f32 %v6155, %v6219
        %v6284 = vadd.f32 %v6156, %v6220
        %v6285 = vadd.f32 %v6157, %v6221
        %v6286 = vadd.f32 %v6158, %v6222
        %v6287 = vadd.f32 %v6159, %v6223
        %v6288 = vadd.f32 %v6160, %v6224
        %v6289 = vadd.f32 %v6161, %v6225
        %v6290 = vadd.f32 %v6162, %v6226
        %v6291 = vadd.f32 %v6163, %v6227
        %v6292 = vadd.f32 %v6164, %v6228
        %v6293 = vadd.f32 %v6165, %v6229
        %v6294 = vadd.f32 %v6166, %v6230
        %v6295 = vadd.f32 %v6167, %v6231
        %v6296 = vadd.f32 %v6168, %v6232
        %v6297 = vadd.f32 %v6169, %v6233
        %v6298 = vadd.f32 %v6170, %v6234
        %v6299 = vadd.f32 %v6171, %v6235
        %v6300 = vadd.f32 %v6172, %v6236
        %v6301 = vadd.f32 %v6173, %v6237
        %v6302 = vadd.f32 %v6174, %v6238
        %v6303 = vadd.f32 %v6175, %v6239
        %v6304 = vadd.f32 %v6176, %v6240
        %v6305 = vadd.f32 %v6177, %v6241
        %v6306 = vadd.f32 %v6178, %v6242
        %v6307 = vadd.f32 %v6179, %v6243
        %v6308 = vadd.f32 %v6180, %v6244
        %v6309 = vadd.f32 %v6181, %v6245
        %v6310 = vadd.f32 %v6182, %v6246
        %v6311 = vadd.f32 %v6183, %v6247
        %v6312 = vadd.f32 %v6184, %v6248
        %v6313 = vadd.f32 %v6185, %v6249
        %v6314 = vadd.f32 %v6186, %v6250
        %v6315 = vadd.f32 %v6187, %v6251
        %v6316 = vadd.f32 %v6188, %v6252
        %6317 = vrot.lane.b32.xlu0 %v4646, 96
        %v6318 = vpop.permute.xlu0 %6317
        %6319 = vrot.lane.b32.xlu0 %v4649, 96
        %v6320 = vpop.permute.xlu0 %6319
        %6321 = vrot.lane.b32.xlu0 %v4654, 96
        %v6322 = vpop.permute.xlu0 %6321
        %6323 = vrot.lane.b32.xlu0 %v4657, 96
        %v6324 = vpop.permute.xlu0 %6323
        %6325 = vrot.lane.b32.xlu0 %v4662, 96
        %v6326 = vpop.permute.xlu0 %6325
        %6327 = vrot.lane.b32.xlu0 %v4665, 96
        %v6328 = vpop.permute.xlu0 %6327
        %6329 = vrot.lane.b32.xlu0 %v4670, 96
        %v6330 = vpop.permute.xlu0 %6329
        %6331 = vrot.lane.b32.xlu0 %v4673, 96
        %v6332 = vpop.permute.xlu0 %6331
        %6333 = vrot.lane.b32.xlu0 %v4678, 96
        %v6334 = vpop.permute.xlu0 %6333
        %6335 = vrot.lane.b32.xlu0 %v4681, 96
        %v6336 = vpop.permute.xlu0 %6335
        %6337 = vrot.lane.b32.xlu0 %v4686, 96
        %v6338 = vpop.permute.xlu0 %6337
        %6339 = vrot.lane.b32.xlu0 %v4689, 96
        %v6340 = vpop.permute.xlu0 %6339
        %6341 = vrot.lane.b32.xlu0 %v4694, 96
        %v6342 = vpop.permute.xlu0 %6341
        %6343 = vrot.lane.b32.xlu0 %v4697, 96
        %v6344 = vpop.permute.xlu0 %6343
        %6345 = vrot.lane.b32.xlu0 %v4702, 96
        %v6346 = vpop.permute.xlu0 %6345
        %6347 = vrot.lane.b32.xlu0 %v4705, 96
        %v6348 = vpop.permute.xlu0 %6347
        %6349 = vrot.lane.b32.xlu0 %v4710, 96
        %v6350 = vpop.permute.xlu0 %6349
        %6351 = vrot.lane.b32.xlu0 %v4713, 96
        %v6352 = vpop.permute.xlu0 %6351
        %6353 = vrot.lane.b32.xlu0 %v4718, 96
        %v6354 = vpop.permute.xlu0 %6353
        %6355 = vrot.lane.b32.xlu0 %v4721, 96
        %v6356 = vpop.permute.xlu0 %6355
        %6357 = vrot.lane.b32.xlu0 %v4726, 96
        %v6358 = vpop.permute.xlu0 %6357
        %6359 = vrot.lane.b32.xlu0 %v4729, 96
        %v6360 = vpop.permute.xlu0 %6359
        %6361 = vrot.lane.b32.xlu0 %v4734, 96
        %v6362 = vpop.permute.xlu0 %6361
        %6363 = vrot.lane.b32.xlu0 %v4737, 96
        %v6364 = vpop.permute.xlu0 %6363
        %6365 = vrot.lane.b32.xlu0 %v4742, 96
        %v6366 = vpop.permute.xlu0 %6365
        %6367 = vrot.lane.b32.xlu0 %v4745, 96
        %v6368 = vpop.permute.xlu0 %6367
        %6369 = vrot.lane.b32.xlu0 %v4750, 96
        %v6370 = vpop.permute.xlu0 %6369
        %6371 = vrot.lane.b32.xlu0 %v4753, 96
        %v6372 = vpop.permute.xlu0 %6371
        %6373 = vrot.lane.b32.xlu0 %v4758, 96
        %v6374 = vpop.permute.xlu0 %6373
        %6375 = vrot.lane.b32.xlu0 %v4761, 96
        %v6376 = vpop.permute.xlu0 %6375
        %6377 = vrot.lane.b32.xlu0 %v4766, 96
        %v6378 = vpop.permute.xlu0 %6377
        %6379 = vrot.lane.b32.xlu0 %v4769, 96
        %v6380 = vpop.permute.xlu0 %6379
        %6381 = vrot.lane.b32.xlu0 %v4774, 96
        %v6382 = vpop.permute.xlu0 %6381
        %6383 = vrot.lane.b32.xlu0 %v4777, 96
        %v6384 = vpop.permute.xlu0 %6383
        %6385 = vrot.lane.b32.xlu0 %v4782, 96
        %v6386 = vpop.permute.xlu0 %6385
        %6387 = vrot.lane.b32.xlu0 %v4785, 96
        %v6388 = vpop.permute.xlu0 %6387
        %6389 = vrot.lane.b32.xlu0 %v4790, 96
        %v6390 = vpop.permute.xlu0 %6389
        %6391 = vrot.lane.b32.xlu0 %v4793, 96
        %v6392 = vpop.permute.xlu0 %6391
        %6393 = vrot.lane.b32.xlu0 %v4798, 96
        %v6394 = vpop.permute.xlu0 %6393
        %6395 = vrot.lane.b32.xlu0 %v4801, 96
        %v6396 = vpop.permute.xlu0 %6395
        %6397 = vrot.lane.b32.xlu0 %v4806, 96
        %v6398 = vpop.permute.xlu0 %6397
        %6399 = vrot.lane.b32.xlu0 %v4809, 96
        %v6400 = vpop.permute.xlu0 %6399
        %6401 = vrot.lane.b32.xlu0 %v4814, 96
        %v6402 = vpop.permute.xlu0 %6401
        %6403 = vrot.lane.b32.xlu0 %v4817, 96
        %v6404 = vpop.permute.xlu0 %6403
        %6405 = vrot.lane.b32.xlu0 %v4822, 96
        %v6406 = vpop.permute.xlu0 %6405
        %6407 = vrot.lane.b32.xlu0 %v4825, 96
        %v6408 = vpop.permute.xlu0 %6407
        %6409 = vrot.lane.b32.xlu0 %v4830, 96
        %v6410 = vpop.permute.xlu0 %6409
        %6411 = vrot.lane.b32.xlu0 %v4833, 96
        %v6412 = vpop.permute.xlu0 %6411
        %6413 = vrot.lane.b32.xlu0 %v4838, 96
        %v6414 = vpop.permute.xlu0 %6413
        %6415 = vrot.lane.b32.xlu0 %v4841, 96
        %v6416 = vpop.permute.xlu0 %6415
        %6417 = vrot.lane.b32.xlu0 %v4846, 96
        %v6418 = vpop.permute.xlu0 %6417
        %6419 = vrot.lane.b32.xlu0 %v4849, 96
        %v6420 = vpop.permute.xlu0 %6419
        %6421 = vrot.lane.b32.xlu0 %v4854, 96
        %v6422 = vpop.permute.xlu0 %6421
        %6423 = vrot.lane.b32.xlu0 %v4857, 96
        %v6424 = vpop.permute.xlu0 %6423
        %6425 = vrot.lane.b32.xlu0 %v4862, 96
        %v6426 = vpop.permute.xlu0 %6425
        %6427 = vrot.lane.b32.xlu0 %v4865, 96
        %v6428 = vpop.permute.xlu0 %6427
        %6429 = vrot.lane.b32.xlu0 %v4870, 96
        %v6430 = vpop.permute.xlu0 %6429
        %6431 = vrot.lane.b32.xlu0 %v4873, 96
        %v6432 = vpop.permute.xlu0 %6431
        %6433 = vrot.lane.b32.xlu0 %v4878, 96
        %v6434 = vpop.permute.xlu0 %6433
        %6435 = vrot.lane.b32.xlu0 %v4881, 96
        %v6436 = vpop.permute.xlu0 %6435
        %6437 = vrot.lane.b32.xlu0 %v4886, 96
        %v6438 = vpop.permute.xlu0 %6437
        %6439 = vrot.lane.b32.xlu0 %v4889, 96
        %v6440 = vpop.permute.xlu0 %6439
        %6441 = vrot.lane.b32.xlu0 %v4894, 96
        %v6442 = vpop.permute.xlu0 %6441
        %6443 = vrot.lane.b32.xlu0 %v4897, 96
        %v6444 = vpop.permute.xlu0 %6443
        %v6445 = vmul.f32 %v5615, %v6318
        %v6446 = vmul.f32 %v5620, %v6320
        %v6447 = vmul.f32 %v5625, %v6322
        %v6448 = vmul.f32 %v5630, %v6324
        %v6449 = vmul.f32 %v5635, %v6326
        %v6450 = vmul.f32 %v5640, %v6328
        %v6451 = vmul.f32 %v5645, %v6330
        %v6452 = vmul.f32 %v5650, %v6332
        %v6453 = vmul.f32 %v5655, %v6334
        %v6454 = vmul.f32 %v5660, %v6336
        %v6455 = vmul.f32 %v5665, %v6338
        %v6456 = vmul.f32 %v5670, %v6340
        %v6457 = vmul.f32 %v5675, %v6342
        %v6458 = vmul.f32 %v5680, %v6344
        %v6459 = vmul.f32 %v5685, %v6346
        %v6460 = vmul.f32 %v5690, %v6348
        %v6461 = vmul.f32 %v5695, %v6350
        %v6462 = vmul.f32 %v5700, %v6352
        %v6463 = vmul.f32 %v5705, %v6354
        %v6464 = vmul.f32 %v5710, %v6356
        %v6465 = vmul.f32 %v5715, %v6358
        %v6466 = vmul.f32 %v5720, %v6360
        %v6467 = vmul.f32 %v5725, %v6362
        %v6468 = vmul.f32 %v5730, %v6364
        %v6469 = vmul.f32 %v5735, %v6366
        %v6470 = vmul.f32 %v5740, %v6368
        %v6471 = vmul.f32 %v5745, %v6370
        %v6472 = vmul.f32 %v5750, %v6372
        %v6473 = vmul.f32 %v5755, %v6374
        %v6474 = vmul.f32 %v5760, %v6376
        %v6475 = vmul.f32 %v5765, %v6378
        %v6476 = vmul.f32 %v5770, %v6380
        %v6477 = vmul.f32 %v5775, %v6382
        %v6478 = vmul.f32 %v5780, %v6384
        %v6479 = vmul.f32 %v5785, %v6386
        %v6480 = vmul.f32 %v5790, %v6388
        %v6481 = vmul.f32 %v5795, %v6390
        %v6482 = vmul.f32 %v5800, %v6392
        %v6483 = vmul.f32 %v5805, %v6394
        %v6484 = vmul.f32 %v5810, %v6396
        %v6485 = vmul.f32 %v5815, %v6398
        %v6486 = vmul.f32 %v5820, %v6400
        %v6487 = vmul.f32 %v5825, %v6402
        %v6488 = vmul.f32 %v5830, %v6404
        %v6489 = vmul.f32 %v5835, %v6406
        %v6490 = vmul.f32 %v5840, %v6408
        %v6491 = vmul.f32 %v5845, %v6410
        %v6492 = vmul.f32 %v5850, %v6412
        %v6493 = vmul.f32 %v5855, %v6414
        %v6494 = vmul.f32 %v5860, %v6416
        %v6495 = vmul.f32 %v5865, %v6418
        %v6496 = vmul.f32 %v5870, %v6420
        %v6497 = vmul.f32 %v5875, %v6422
        %v6498 = vmul.f32 %v5880, %v6424
        %v6499 = vmul.f32 %v5885, %v6426
        %v6500 = vmul.f32 %v5890, %v6428
        %v6501 = vmul.f32 %v5895, %v6430
        %v6502 = vmul.f32 %v5900, %v6432
        %v6503 = vmul.f32 %v5905, %v6434
        %v6504 = vmul.f32 %v5910, %v6436
        %v6505 = vmul.f32 %v5915, %v6438
        %v6506 = vmul.f32 %v5920, %v6440
        %v6507 = vmul.f32 %v5925, %v6442
        %v6508 = vmul.f32 %v5930, %v6444
        %v6509 = vadd.f32 %v6253, %v6445
        %v6510 = vadd.f32 %v6254, %v6446
        %v6511 = vadd.f32 %v6255, %v6447
        %v6512 = vadd.f32 %v6256, %v6448
        %v6513 = vadd.f32 %v6257, %v6449
        %v6514 = vadd.f32 %v6258, %v6450
        %v6515 = vadd.f32 %v6259, %v6451
        %v6516 = vadd.f32 %v6260, %v6452
        %v6517 = vadd.f32 %v6261, %v6453
        %v6518 = vadd.f32 %v6262, %v6454
        %v6519 = vadd.f32 %v6263, %v6455
        %v6520 = vadd.f32 %v6264, %v6456
        %v6521 = vadd.f32 %v6265, %v6457
        %v6522 = vadd.f32 %v6266, %v6458
        %v6523 = vadd.f32 %v6267, %v6459
        %v6524 = vadd.f32 %v6268, %v6460
        %v6525 = vadd.f32 %v6269, %v6461
        %v6526 = vadd.f32 %v6270, %v6462
        %v6527 = vadd.f32 %v6271, %v6463
        %v6528 = vadd.f32 %v6272, %v6464
        %v6529 = vadd.f32 %v6273, %v6465
        %v6530 = vadd.f32 %v6274, %v6466
        %v6531 = vadd.f32 %v6275, %v6467
        %v6532 = vadd.f32 %v6276, %v6468
        %v6533 = vadd.f32 %v6277, %v6469
        %v6534 = vadd.f32 %v6278, %v6470
        %v6535 = vadd.f32 %v6279, %v6471
        %v6536 = vadd.f32 %v6280, %v6472
        %v6537 = vadd.f32 %v6281, %v6473
        %v6538 = vadd.f32 %v6282, %v6474
        %v6539 = vadd.f32 %v6283, %v6475
        %v6540 = vadd.f32 %v6284, %v6476
        %v6541 = vadd.f32 %v6285, %v6477
        %v6542 = vadd.f32 %v6286, %v6478
        %v6543 = vadd.f32 %v6287, %v6479
        %v6544 = vadd.f32 %v6288, %v6480
        %v6545 = vadd.f32 %v6289, %v6481
        %v6546 = vadd.f32 %v6290, %v6482
        %v6547 = vadd.f32 %v6291, %v6483
        %v6548 = vadd.f32 %v6292, %v6484
        %v6549 = vadd.f32 %v6293, %v6485
        %v6550 = vadd.f32 %v6294, %v6486
        %v6551 = vadd.f32 %v6295, %v6487
        %v6552 = vadd.f32 %v6296, %v6488
        %v6553 = vadd.f32 %v6297, %v6489
        %v6554 = vadd.f32 %v6298, %v6490
        %v6555 = vadd.f32 %v6299, %v6491
        %v6556 = vadd.f32 %v6300, %v6492
        %v6557 = vadd.f32 %v6301, %v6493
        %v6558 = vadd.f32 %v6302, %v6494
        %v6559 = vadd.f32 %v6303, %v6495
        %v6560 = vadd.f32 %v6304, %v6496
        %v6561 = vadd.f32 %v6305, %v6497
        %v6562 = vadd.f32 %v6306, %v6498
        %v6563 = vadd.f32 %v6307, %v6499
        %v6564 = vadd.f32 %v6308, %v6500
        %v6565 = vadd.f32 %v6309, %v6501
        %v6566 = vadd.f32 %v6310, %v6502
        %v6567 = vadd.f32 %v6311, %v6503
        %v6568 = vadd.f32 %v6312, %v6504
        %v6569 = vadd.f32 %v6313, %v6505
        %v6570 = vadd.f32 %v6314, %v6506
        %v6571 = vadd.f32 %v6315, %v6507
        %v6572 = vadd.f32 %v6316, %v6508
        %6573 = vst [vmem:[%s288] sm:$0xff] %v6509
        %6574 = vst [vmem:[%s288 + $0x8] sm:$0xff] %v6510
        %6575 = vst [vmem:[%s288 + $0x10] sm:$0xff] %v6511
        %6576 = vst [vmem:[%s288 + $0x18] sm:$0xff] %v6512
        %6577 = vst [vmem:[%s288 + $0x20] sm:$0xff] %v6513
        %6578 = vst [vmem:[%s288 + $0x28] sm:$0xff] %v6514
        %6579 = vst [vmem:[%s288 + $0x30] sm:$0xff] %v6515
        %6580 = vst [vmem:[%s288 + $0x38] sm:$0xff] %v6516
        %6581 = vst [vmem:[%s288 + $0x40] sm:$0xff] %v6517
        %6582 = vst [vmem:[%s288 + $0x48] sm:$0xff] %v6518
        %6583 = vst [vmem:[%s288 + $0x50] sm:$0xff] %v6519
        %6584 = vst [vmem:[%s288 + $0x58] sm:$0xff] %v6520
        %6585 = vst [vmem:[%s288 + $0x60] sm:$0xff] %v6521
        %6586 = vst [vmem:[%s288 + $0x68] sm:$0xff] %v6522
        %6587 = vst [vmem:[%s288 + $0x70] sm:$0xff] %v6523
        %6588 = vst [vmem:[%s288 + $0x78] sm:$0xff] %v6524
        %6589 = vst [vmem:[%s288 + $0x80] sm:$0xff] %v6525
        %6590 = vst [vmem:[%s288 + $0x88] sm:$0xff] %v6526
        %6591 = vst [vmem:[%s288 + $0x90] sm:$0xff] %v6527
        %6592 = vst [vmem:[%s288 + $0x98] sm:$0xff] %v6528
        %6593 = vst [vmem:[%s288 + $0xa0] sm:$0xff] %v6529
        %6594 = vst [vmem:[%s288 + $0xa8] sm:$0xff] %v6530
        %6595 = vst [vmem:[%s288 + $0xb0] sm:$0xff] %v6531
        %6596 = vst [vmem:[%s288 + $0xb8] sm:$0xff] %v6532
        %6597 = vst [vmem:[%s288 + $0xc0] sm:$0xff] %v6533
        %6598 = vst [vmem:[%s288 + $0xc8] sm:$0xff] %v6534
        %6599 = vst [vmem:[%s288 + $0xd0] sm:$0xff] %v6535
        %6600 = vst [vmem:[%s288 + $0xd8] sm:$0xff] %v6536
        %6601 = vst [vmem:[%s288 + $0xe0] sm:$0xff] %v6537
        %6602 = vst [vmem:[%s288 + $0xe8] sm:$0xff] %v6538
        %6603 = vst [vmem:[%s288 + $0xf0] sm:$0xff] %v6539
        %6604 = vst [vmem:[%s288 + $0xf8] sm:$0xff] %v6540
        %6605 = vst [vmem:[%s288 + $0x100] sm:$0xff] %v6541
        %6606 = vst [vmem:[%s288 + $0x108] sm:$0xff] %v6542
        %6607 = vst [vmem:[%s288 + $0x110] sm:$0xff] %v6543
        %6608 = vst [vmem:[%s288 + $0x118] sm:$0xff] %v6544
        %6609 = vst [vmem:[%s288 + $0x120] sm:$0xff] %v6545
        %6610 = vst [vmem:[%s288 + $0x128] sm:$0xff] %v6546
        %6611 = vst [vmem:[%s288 + $0x130] sm:$0xff] %v6547
        %6612 = vst [vmem:[%s288 + $0x138] sm:$0xff] %v6548
        %6613 = vst [vmem:[%s288 + $0x140] sm:$0xff] %v6549
        %6614 = vst [vmem:[%s288 + $0x148] sm:$0xff] %v6550
        %6615 = vst [vmem:[%s288 + $0x150] sm:$0xff] %v6551
        %6616 = vst [vmem:[%s288 + $0x158] sm:$0xff] %v6552
        %6617 = vst [vmem:[%s288 + $0x160] sm:$0xff] %v6553
        %6618 = vst [vmem:[%s288 + $0x168] sm:$0xff] %v6554
        %6619 = vst [vmem:[%s288 + $0x170] sm:$0xff] %v6555
        %6620 = vst [vmem:[%s288 + $0x178] sm:$0xff] %v6556
        %6621 = vst [vmem:[%s288 + $0x180] sm:$0xff] %v6557
        %6622 = vst [vmem:[%s288 + $0x188] sm:$0xff] %v6558
        %6623 = vst [vmem:[%s288 + $0x190] sm:$0xff] %v6559
        %6624 = vst [vmem:[%s288 + $0x198] sm:$0xff] %v6560
        %6625 = vst [vmem:[%s288 + $0x1a0] sm:$0xff] %v6561
        %6626 = vst [vmem:[%s288 + $0x1a8] sm:$0xff] %v6562
        %6627 = vst [vmem:[%s288 + $0x1b0] sm:$0xff] %v6563
        %6628 = vst [vmem:[%s288 + $0x1b8] sm:$0xff] %v6564
        %6629 = vst [vmem:[%s288 + $0x1c0] sm:$0xff] %v6565
        %6630 = vst [vmem:[%s288 + $0x1c8] sm:$0xff] %v6566
        %6631 = vst [vmem:[%s288 + $0x1d0] sm:$0xff] %v6567
        %6632 = vst [vmem:[%s288 + $0x1d8] sm:$0xff] %v6568
        %6633 = vst [vmem:[%s288 + $0x1e0] sm:$0xff] %v6569
        %6634 = vst [vmem:[%s288 + $0x1e8] sm:$0xff] %v6570
        %6635 = vst [vmem:[%s288 + $0x1f0] sm:$0xff] %v6571
        %6636 = vst [vmem:[%s288 + $0x1f8] sm:$0xff] %v6572
        %s6637 = sand.u32 %s186, 1
        %s6638 = scalar_lea.sflag [#allocation3], %s6637
        %s6639 = sand.u32 %s186, 1
        %s6640 = smul.addr %s6639, 512
        %s6641 = scalar_lea.vmem [#allocation2], %s6640
        // Predicated region
        $region49: #{spec_bunn_forward.3} parent=47 // pred_check
          %p6642 = pneg %p196
        $region50: #{spec_bunn_forward.3} parent=47 // pred_check_branch
          %6644 = sbr.rel (%p6642) target = $region52
        $region51: #{spec_bunn_forward.3} parent=47 // pred_region
          %s6645 = smul.u32 64, %s21
          %s6647 = ssub.s32 8192, 8192
          %6648 = vsyncadd %s6638, %s6647
          %s6649 = smul.addr %s6645, 128
          %s6650 = scalar_lea.hbm %s7, %s6649
          %s6651 = sshll.u32 %s6641, 4
          %s6652 = int_to_ptr.vmem [resolvable:$true] %s6651
          %6657 = dma.vmem_to_hbm [thread:$0]  %s6652, 8192, %s6650, %s6638, 128, 128, 8
        $region52: #{spec_bunn_forward.3} parent=47 // pred_fallthru
          _
      $region48: #{spec_bunn_forward.3} parent=5 // pred_fallthru
        _
      %p6658 = scmp.le.s32.totalorder 2, %s16
      // Predicated region
      $region53: #{spec_bunn_forward.3} parent=5 // pred_check
        %p6659 = pneg %p6658
      $region54: #{spec_bunn_forward.3} parent=5 // pred_check_branch
        %6661 = sbr.rel (%p6659) target = $region56
      $region55: #{spec_bunn_forward.3} parent=5 // pred_region
        %s6662 = ssub.s32 %s16, 2
        // Predicated region
        $region57: #{spec_bunn_forward.3} parent=55 // pred_check
          %p6663 = pneg %p202
        $region58: #{spec_bunn_forward.3} parent=55 // pred_check_branch
          %6665 = sbr.rel (%p6663) target = $region60
        $region59: #{spec_bunn_forward.3} parent=55 // pred_region
          %s6666 = sand.u32 %s187, 1
          %s6667 = scalar_lea.sflag [#allocation3], %s6666
          %s6668 = sand.u32 %s187, 1
          %s6669 = smul.addr %s6668, 512
          %s6670 = scalar_lea.vmem [#allocation2], %s6669
          %6671 = dma.done %s6667, 8192
        $region60: #{spec_bunn_forward.3} parent=55 // pred_fallthru
          _
      $region56: #{spec_bunn_forward.3} parent=5 // pred_fallthru
        _
    $region6: #{spec_bunn_forward.3} parent=1 // loop_footer
      %s20 = sadd.s32 1, %s16
    $region7: #{spec_bunn_forward.3} parent=1 // loop_footer_branch
      %15 = sbr.rel target = $region3
    $region8: #{spec_bunn_forward.3} parent=1 // loop_exit
      _
    %6672 = vsyncpa [#allocation3], 1
    %s6673 = scalar_lea.sflag [#allocation3], 1
    %6674 = vsyncpa %s6673, 1

</llo_original>
